<compile_context>
chip_gen: v5e
topology: v5e:2x2
jax: 0.10.0
libtpu: 0.0.40
codegen_flags: <defaults>
</compile_context>

<pallas_src>
import jax
import jax.numpy as jnp
from jax.experimental import pallas as pl
from jax.experimental.pallas import tpu as pltpu

N = 2                  # real batch
NP = 8                 # padded batch (full f32 sublane tile)
C = 192                # channels (fixed by se_net / .view(-1, 192*5*5))
H = W = 5
HW = H * W             # 25
RED = 16
C_RED = C // RED       # 12
FLAT = C * HW          # 4800
FC_HID = 256           # mfm out_channels
N_ID = 10000           # fc_output dim
N_ID_PAD = 10240       # padded to a multiple of 128 / the tile size
TN = 2048              # fc_output N-tile (lane-dense, 128-aligned)


def _sigmoid(x):
    return 1.0 / (1.0 + jnp.exp(-x))


def se_fc_id_kernel(xt_ref, w1_ref, w2_ref, widt_ref, bid_ref, feat_ref):
    """Fused SE stack + flatten + mfm fc_id.

    xt_ref:   (HW, NP, C)   f32   x with spatial as the outer axis
    w1_ref:   (C, C//r)     f32   SE fc1 (no bias)
    w2_ref:   (C//r, C)     f32   SE fc2 (no bias)
    widt_ref: (HW, C, 512)  bf16  fc_id weight, (c*HW+s, o) -> (s, c, o)
    bid_ref:  (1, 512)      f32
    feat_ref: (NP, FC_HID)  bf16  mfm output
    """
    xt = xt_ref[...]
    w1 = w1_ref[...]
    w2 = w2_ref[...]

    m0 = jnp.mean(xt, axis=0)                      # (NP, C) channel means

    def gate(m):
        h = jnp.maximum(jnp.dot(m, w1, preferred_element_type=jnp.float32), 0.0)
        return 1.0 + _sigmoid(jnp.dot(h, w2, preferred_element_type=jnp.float32))

    g1 = gate(m0)
    m1 = m0 * g1
    g2 = gate(m1)
    m2 = m1 * g2
    g3 = gate(m2)
    scale = g1 * g2 * g3 + 1.0                     # out = x * scale (per-channel)

    acc = jnp.zeros((NP, 2 * FC_HID), dtype=jnp.float32)
    for s in range(HW):                            # unrolled: 25 small MXU dots
        xs = (xt[s] * scale).astype(jnp.bfloat16)  # (NP, C)
        acc = acc + jnp.dot(xs, widt_ref[s], preferred_element_type=jnp.float32)
    z = acc + bid_ref[...]
    # mfm: torch.split(z, 256, dim=1) -> elementwise max of the two halves
    feat_ref[...] = jnp.maximum(z[:, :FC_HID], z[:, FC_HID:]).astype(feat_ref.dtype)


def fc_out_kernel(feat_ref, wout_ref, bout_ref, emb_ref):
    """One N_ID tile of fc_output: emb = feat @ wout + bout."""
    emb_ref[...] = (
        jnp.dot(feat_ref[...], wout_ref[...], preferred_element_type=jnp.float32)
        + bout_ref[...]
    )


def aifr_forward(x, params):
    n = x.shape[0]
    # NCHW -> (n, C, HW); pad batch to a full sublane tile; spatial to the front.
    x3 = x.reshape(n, C, HW)
    x3 = jnp.pad(x3, ((0, NP - n), (0, 0), (0, 0)))
    xt = jnp.transpose(x3, (2, 0, 1))              # (HW, NP, C)

    feat = pl.pallas_call(
        se_fc_id_kernel,
        out_shape=jax.ShapeDtypeStruct((NP, FC_HID), jnp.bfloat16),
        in_specs=[pl.BlockSpec(memory_space=pltpu.MemorySpace.VMEM)] * 5,
        out_specs=pl.BlockSpec(memory_space=pltpu.MemorySpace.VMEM),
        compiler_params=pltpu.CompilerParams(vmem_limit_bytes=32 << 20),
    )(xt, params["se_w1"], params["se_w2"], params["widt"], params["bid"])

    grid_n = N_ID_PAD // TN
    emb_full = pl.pallas_call(
        fc_out_kernel,
        out_shape=jax.ShapeDtypeStruct((NP, N_ID_PAD), jnp.float32),
        grid=(grid_n,),
        in_specs=[
            pl.BlockSpec((NP, FC_HID), lambda j: (0, 0)),   # feat: resident
            pl.BlockSpec((FC_HID, TN), lambda j: (0, j)),   # wout: streamed
            pl.BlockSpec((1, TN), lambda j: (0, j)),        # bout: streamed
        ],
        out_specs=pl.BlockSpec((NP, TN), lambda j: (0, j)),
        compiler_params=pltpu.CompilerParams(
            dimension_semantics=("parallel",),              # v7x: use both TCs
            vmem_limit_bytes=16 << 20,
        ),
        cost_estimate=pl.CostEstimate(
            flops=2 * NP * FC_HID * N_ID_PAD,
            transcendentals=0,
            bytes_accessed=(FC_HID * N_ID_PAD * 2          # wout (bf16)
                            + NP * N_ID_PAD * 4            # emb
                            + N_ID_PAD * 4                 # bout
                            + NP * FC_HID * 2),            # feat
        ),
    )(feat, params["wout"], params["bout"])

    emb = emb_full[:n, :N_ID]
    return emb, emb, emb


def init_params(key):
    ks = jax.random.split(key, 6)

    def w(k, shape, scale):
        return scale * jax.random.normal(k, shape, dtype=jnp.float32)

    # fc_id: Linear(4800, 512) stored (in, out); fold the view(-1, 192*5*5)
    # flatten (flat index = c*25 + s) into the weight layout: (25, 192, 512).
    wid = w(ks[2], (FLAT, 2 * FC_HID), 0.01)
    widt = wid.reshape(C, HW, 2 * FC_HID).transpose(1, 0, 2).astype(jnp.bfloat16)

    # fc_output: Linear(256, 10000) stored (in, out), zero-padded to 10240 cols.
    wout = w(ks[4], (FC_HID, N_ID), 0.02)
    wout = jnp.pad(wout, ((0, 0), (0, N_ID_PAD - N_ID))).astype(jnp.bfloat16)
    bout = w(ks[5], (1, N_ID), 0.01)
    bout = jnp.pad(bout, ((0, 0), (0, N_ID_PAD - N_ID)))

    return dict(
        se_w1=w(ks[0], (C, C_RED), 0.05),          # SE fc1 (no bias)
        se_w2=w(ks[1], (C_RED, C), 0.05),          # SE fc2 (no bias)
        widt=widt,                                 # mfm fc_id weight (bf16)
        bid=w(ks[3], (1, 2 * FC_HID), 0.01),       # mfm fc_id bias
        wout=wout,                                 # fc_output weight (bf16, padded)
        bout=bout,                                 # fc_output bias (padded)
    )


if __name__ == "__main__":
    key = jax.random.PRNGKey(0)
    kx, kp = jax.random.split(key)
    x = jax.random.normal(kx, (N, C, H, W), dtype=jnp.float32)
    params = init_params(kp)

    fwd = jax.jit(lambda xx: aifr_forward(xx, params))
    emb0, emb1, emb2 = fwd(x)
    jax.block_until_ready((emb0, emb1, emb2))

    assert emb0.shape == (N, N_ID) and emb0.dtype == jnp.float32
    assert (emb0 == emb1).all() and (emb1 == emb2).all()
    print("KERNEL_OK")
</pallas_src>

<mosaic_0001>
module attributes {stable_mosaic.version = 11 : i64} {
  func.func @se_fc_id_kernel(%arg0: memref<25x8x192xf32, #tpu.memory_space<vmem>>, %arg1: memref<192x12xf32, #tpu.memory_space<vmem>>, %arg2: memref<12x192xf32, #tpu.memory_space<vmem>>, %arg3: memref<25x192x512xbf16, #tpu.memory_space<vmem>>, %arg4: memref<1x512xf32, #tpu.memory_space<vmem>>, %arg5: memref<8x256xbf16, #tpu.memory_space<vmem>>) attributes {dimension_semantics = [], scalar_prefetch = 0 : i64, scratch_operands = 0 : i64, tpu.core_type = #tpu.core_type<tc>} {
    %c0 = arith.constant 0 : index
    %c0_0 = arith.constant 0 : index
    %c0_1 = arith.constant 0 : index
    %0 = vector.load %arg0[%c0, %c0_0, %c0_1] : memref<25x8x192xf32, #tpu.memory_space<vmem>>, vector<25x8x192xf32>
    %c0_2 = arith.constant 0 : index
    %c0_3 = arith.constant 0 : index
    %1 = vector.load %arg1[%c0_2, %c0_3] : memref<192x12xf32, #tpu.memory_space<vmem>>, vector<192x12xf32>
    %c0_4 = arith.constant 0 : index
    %c0_5 = arith.constant 0 : index
    %2 = vector.load %arg2[%c0_4, %c0_5] : memref<12x192xf32, #tpu.memory_space<vmem>>, vector<12x192xf32>
    %cst = arith.constant dense<0.000000e+00> : vector<8x192xf32>
    %3 = vector.multi_reduction <add>, %0, %cst [0] : vector<25x8x192xf32> to vector<8x192xf32>
    %cst_6 = arith.constant 2.500000e+01 : f32
    %4 = vector.broadcast %cst_6 : f32 to vector<8x192xf32>
    %5 = arith.divf %3, %4 : vector<8x192xf32>
    %cst_7 = arith.constant dense<0.000000e+00> : vector<8x12xf32>
    %6 = tpu.matmul %5, %1, %cst_7 {dimension_numbers = #tpu.dot_dimension_numbers<[1], [0], [0], [1], [0, 0, 1, 1], [], []>} : vector<8x192xf32>, vector<192x12xf32>, vector<8x12xf32> -> vector<8x12xf32>
    %cst_8 = arith.constant 0.000000e+00 : f32
    %7 = vector.broadcast %cst_8 : f32 to vector<8x12xf32>
    %8 = arith.maximumf %6, %7 : vector<8x12xf32>
    %cst_9 = arith.constant dense<0.000000e+00> : vector<8x192xf32>
    %9 = tpu.matmul %8, %2, %cst_9 {dimension_numbers = #tpu.dot_dimension_numbers<[1], [0], [0], [1], [0, 0, 1, 1], [], []>} : vector<8x12xf32>, vector<12x192xf32>, vector<8x192xf32> -> vector<8x192xf32>
    %cst_10 = arith.constant 0.000000e+00 : f32
    %10 = vector.broadcast %cst_10 : f32 to vector<8x192xf32>
    %11 = arith.subf %10, %9 : vector<8x192xf32>
    %12 = math.exp %11 : vector<8x192xf32>
    %cst_11 = arith.constant 1.000000e+00 : f32
    %13 = vector.broadcast %cst_11 : f32 to vector<8x192xf32>
    %14 = arith.addf %13, %12 : vector<8x192xf32>
    %cst_12 = arith.constant 1.000000e+00 : f32
    %15 = vector.broadcast %cst_12 : f32 to vector<8x192xf32>
    %16 = arith.divf %15, %14 : vector<8x192xf32>
    %cst_13 = arith.constant 1.000000e+00 : f32
    %17 = vector.broadcast %cst_13 : f32 to vector<8x192xf32>
    %18 = arith.addf %17, %16 : vector<8x192xf32>
    %19 = arith.mulf %5, %18 : vector<8x192xf32>
    %cst_14 = arith.constant dense<0.000000e+00> : vector<8x12xf32>
    %20 = tpu.matmul %19, %1, %cst_14 {dimension_numbers = #tpu.dot_dimension_numbers<[1], [0], [0], [1], [0, 0, 1, 1], [], []>} : vector<8x192xf32>, vector<192x12xf32>, vector<8x12xf32> -> vector<8x12xf32>
    %cst_15 = arith.constant 0.000000e+00 : f32
    %21 = vector.broadcast %cst_15 : f32 to vector<8x12xf32>
    %22 = arith.maximumf %20, %21 : vector<8x12xf32>
    %cst_16 = arith.constant dense<0.000000e+00> : vector<8x192xf32>
    %23 = tpu.matmul %22, %2, %cst_16 {dimension_numbers = #tpu.dot_dimension_numbers<[1], [0], [0], [1], [0, 0, 1, 1], [], []>} : vector<8x12xf32>, vector<12x192xf32>, vector<8x192xf32> -> vector<8x192xf32>
    %cst_17 = arith.constant 0.000000e+00 : f32
    %24 = vector.broadcast %cst_17 : f32 to vector<8x192xf32>
    %25 = arith.subf %24, %23 : vector<8x192xf32>
    %26 = math.exp %25 : vector<8x192xf32>
    %cst_18 = arith.constant 1.000000e+00 : f32
    %27 = vector.broadcast %cst_18 : f32 to vector<8x192xf32>
    %28 = arith.addf %27, %26 : vector<8x192xf32>
    %cst_19 = arith.constant 1.000000e+00 : f32
    %29 = vector.broadcast %cst_19 : f32 to vector<8x192xf32>
    %30 = arith.divf %29, %28 : vector<8x192xf32>
    %cst_20 = arith.constant 1.000000e+00 : f32
    %31 = vector.broadcast %cst_20 : f32 to vector<8x192xf32>
    %32 = arith.addf %31, %30 : vector<8x192xf32>
    %33 = arith.mulf %19, %32 : vector<8x192xf32>
    %cst_21 = arith.constant dense<0.000000e+00> : vector<8x12xf32>
    %34 = tpu.matmul %33, %1, %cst_21 {dimension_numbers = #tpu.dot_dimension_numbers<[1], [0], [0], [1], [0, 0, 1, 1], [], []>} : vector<8x192xf32>, vector<192x12xf32>, vector<8x12xf32> -> vector<8x12xf32>
    %cst_22 = arith.constant 0.000000e+00 : f32
    %35 = vector.broadcast %cst_22 : f32 to vector<8x12xf32>
    %36 = arith.maximumf %34, %35 : vector<8x12xf32>
    %cst_23 = arith.constant dense<0.000000e+00> : vector<8x192xf32>
    %37 = tpu.matmul %36, %2, %cst_23 {dimension_numbers = #tpu.dot_dimension_numbers<[1], [0], [0], [1], [0, 0, 1, 1], [], []>} : vector<8x12xf32>, vector<12x192xf32>, vector<8x192xf32> -> vector<8x192xf32>
    %cst_24 = arith.constant 0.000000e+00 : f32
    %38 = vector.broadcast %cst_24 : f32 to vector<8x192xf32>
    %39 = arith.subf %38, %37 : vector<8x192xf32>
    %40 = math.exp %39 : vector<8x192xf32>
    %cst_25 = arith.constant 1.000000e+00 : f32
    %41 = vector.broadcast %cst_25 : f32 to vector<8x192xf32>
    %42 = arith.addf %41, %40 : vector<8x192xf32>
    %cst_26 = arith.constant 1.000000e+00 : f32
    %43 = vector.broadcast %cst_26 : f32 to vector<8x192xf32>
    %44 = arith.divf %43, %42 : vector<8x192xf32>
    %cst_27 = arith.constant 1.000000e+00 : f32
    %45 = vector.broadcast %cst_27 : f32 to vector<8x192xf32>
    %46 = arith.addf %45, %44 : vector<8x192xf32>
    %47 = arith.mulf %18, %32 : vector<8x192xf32>
    %48 = arith.mulf %47, %46 : vector<8x192xf32>
    %cst_28 = arith.constant 1.000000e+00 : f32
    %49 = vector.broadcast %cst_28 : f32 to vector<8x192xf32>
    %50 = arith.addf %48, %49 : vector<8x192xf32>
    %cst_29 = arith.constant 0.000000e+00 : f32
    %51 = vector.broadcast %cst_29 : f32 to vector<8x512xf32>
    %52 = vector.extract_strided_slice %0 {offsets = [0, 0, 0], sizes = [1, 8, 192], strides = [1, 1, 1]} : vector<25x8x192xf32> to vector<1x8x192xf32>
    %53 = vector.shape_cast %52 : vector<1x8x192xf32> to vector<8x192xf32>
    %54 = arith.mulf %53, %50 : vector<8x192xf32>
    %55 = arith.truncf %54 : vector<8x192xf32> to vector<8x192xbf16>
    %c0_30 = arith.constant 0 : index
    %c0_31 = arith.constant 0 : index
    %c0_32 = arith.constant 0 : index
    %56 = vector.load %arg3[%c0_30, %c0_31, %c0_32] : memref<25x192x512xbf16, #tpu.memory_space<vmem>>, vector<1x192x512xbf16>
    %57 = vector.shape_cast %56 : vector<1x192x512xbf16> to vector<192x512xbf16>
    %cst_33 = arith.constant dense<0.000000e+00> : vector<8x512xf32>
    %58 = tpu.matmul %55, %57, %cst_33 {dimension_numbers = #tpu.dot_dimension_numbers<[1], [0], [0], [1], [0, 0, 1, 1], [], []>} : vector<8x192xbf16>, vector<192x512xbf16>, vector<8x512xf32> -> vector<8x512xf32>
    %59 = arith.addf %51, %58 : vector<8x512xf32>
    %60 = vector.extract_strided_slice %0 {offsets = [1, 0, 0], sizes = [1, 8, 192], strides = [1, 1, 1]} : vector<25x8x192xf32> to vector<1x8x192xf32>
    %61 = vector.shape_cast %60 : vector<1x8x192xf32> to vector<8x192xf32>
    %62 = arith.mulf %61, %50 : vector<8x192xf32>
    %63 = arith.truncf %62 : vector<8x192xf32> to vector<8x192xbf16>
    %c1 = arith.constant 1 : index
    %c0_34 = arith.constant 0 : index
    %c0_35 = arith.constant 0 : index
    %64 = vector.load %arg3[%c1, %c0_34, %c0_35] : memref<25x192x512xbf16, #tpu.memory_space<vmem>>, vector<1x192x512xbf16>
    %65 = vector.shape_cast %64 : vector<1x192x512xbf16> to vector<192x512xbf16>
    %cst_36 = arith.constant dense<0.000000e+00> : vector<8x512xf32>
    %66 = tpu.matmul %63, %65, %cst_36 {dimension_numbers = #tpu.dot_dimension_numbers<[1], [0], [0], [1], [0, 0, 1, 1], [], []>} : vector<8x192xbf16>, vector<192x512xbf16>, vector<8x512xf32> -> vector<8x512xf32>
    %67 = arith.addf %59, %66 : vector<8x512xf32>
    %68 = vector.extract_strided_slice %0 {offsets = [2, 0, 0], sizes = [1, 8, 192], strides = [1, 1, 1]} : vector<25x8x192xf32> to vector<1x8x192xf32>
    %69 = vector.shape_cast %68 : vector<1x8x192xf32> to vector<8x192xf32>
    %70 = arith.mulf %69, %50 : vector<8x192xf32>
    %71 = arith.truncf %70 : vector<8x192xf32> to vector<8x192xbf16>
    %c2 = arith.constant 2 : index
    %c0_37 = arith.constant 0 : index
    %c0_38 = arith.constant 0 : index
    %72 = vector.load %arg3[%c2, %c0_37, %c0_38] : memref<25x192x512xbf16, #tpu.memory_space<vmem>>, vector<1x192x512xbf16>
    %73 = vector.shape_cast %72 : vector<1x192x512xbf16> to vector<192x512xbf16>
    %cst_39 = arith.constant dense<0.000000e+00> : vector<8x512xf32>
    %74 = tpu.matmul %71, %73, %cst_39 {dimension_numbers = #tpu.dot_dimension_numbers<[1], [0], [0], [1], [0, 0, 1, 1], [], []>} : vector<8x192xbf16>, vector<192x512xbf16>, vector<8x512xf32> -> vector<8x512xf32>
    %75 = arith.addf %67, %74 : vector<8x512xf32>
    %76 = vector.extract_strided_slice %0 {offsets = [3, 0, 0], sizes = [1, 8, 192], strides = [1, 1, 1]} : vector<25x8x192xf32> to vector<1x8x192xf32>
    %77 = vector.shape_cast %76 : vector<1x8x192xf32> to vector<8x192xf32>
    %78 = arith.mulf %77, %50 : vector<8x192xf32>
    %79 = arith.truncf %78 : vector<8x192xf32> to vector<8x192xbf16>
    %c3 = arith.constant 3 : index
    %c0_40 = arith.constant 0 : index
    %c0_41 = arith.constant 0 : index
    %80 = vector.load %arg3[%c3, %c0_40, %c0_41] : memref<25x192x512xbf16, #tpu.memory_space<vmem>>, vector<1x192x512xbf16>
    %81 = vector.shape_cast %80 : vector<1x192x512xbf16> to vector<192x512xbf16>
    %cst_42 = arith.constant dense<0.000000e+00> : vector<8x512xf32>
    %82 = tpu.matmul %79, %81, %cst_42 {dimension_numbers = #tpu.dot_dimension_numbers<[1], [0], [0], [1], [0, 0, 1, 1], [], []>} : vector<8x192xbf16>, vector<192x512xbf16>, vector<8x512xf32> -> vector<8x512xf32>
    %83 = arith.addf %75, %82 : vector<8x512xf32>
    %84 = vector.extract_strided_slice %0 {offsets = [4, 0, 0], sizes = [1, 8, 192], strides = [1, 1, 1]} : vector<25x8x192xf32> to vector<1x8x192xf32>
    %85 = vector.shape_cast %84 : vector<1x8x192xf32> to vector<8x192xf32>
    %86 = arith.mulf %85, %50 : vector<8x192xf32>
    %87 = arith.truncf %86 : vector<8x192xf32> to vector<8x192xbf16>
    %c4 = arith.constant 4 : index
    %c0_43 = arith.constant 0 : index
    %c0_44 = arith.constant 0 : index
    %88 = vector.load %arg3[%c4, %c0_43, %c0_44] : memref<25x192x512xbf16, #tpu.memory_space<vmem>>, vector<1x192x512xbf16>
    %89 = vector.shape_cast %88 : vector<1x192x512xbf16> to vector<192x512xbf16>
    %cst_45 = arith.constant dense<0.000000e+00> : vector<8x512xf32>
    %90 = tpu.matmul %87, %89, %cst_45 {dimension_numbers = #tpu.dot_dimension_numbers<[1], [0], [0], [1], [0, 0, 1, 1], [], []>} : vector<8x192xbf16>, vector<192x512xbf16>, vector<8x512xf32> -> vector<8x512xf32>
    %91 = arith.addf %83, %90 : vector<8x512xf32>
    %92 = vector.extract_strided_slice %0 {offsets = [5, 0, 0], sizes = [1, 8, 192], strides = [1, 1, 1]} : vector<25x8x192xf32> to vector<1x8x192xf32>
    %93 = vector.shape_cast %92 : vector<1x8x192xf32> to vector<8x192xf32>
    %94 = arith.mulf %93, %50 : vector<8x192xf32>
    %95 = arith.truncf %94 : vector<8x192xf32> to vector<8x192xbf16>
    %c5 = arith.constant 5 : index
    %c0_46 = arith.constant 0 : index
    %c0_47 = arith.constant 0 : index
    %96 = vector.load %arg3[%c5, %c0_46, %c0_47] : memref<25x192x512xbf16, #tpu.memory_space<vmem>>, vector<1x192x512xbf16>
    %97 = vector.shape_cast %96 : vector<1x192x512xbf16> to vector<192x512xbf16>
    %cst_48 = arith.constant dense<0.000000e+00> : vector<8x512xf32>
    %98 = tpu.matmul %95, %97, %cst_48 {dimension_numbers = #tpu.dot_dimension_numbers<[1], [0], [0], [1], [0, 0, 1, 1], [], []>} : vector<8x192xbf16>, vector<192x512xbf16>, vector<8x512xf32> -> vector<8x512xf32>
    %99 = arith.addf %91, %98 : vector<8x512xf32>
    %100 = vector.extract_strided_slice %0 {offsets = [6, 0, 0], sizes = [1, 8, 192], strides = [1, 1, 1]} : vector<25x8x192xf32> to vector<1x8x192xf32>
    %101 = vector.shape_cast %100 : vector<1x8x192xf32> to vector<8x192xf32>
    %102 = arith.mulf %101, %50 : vector<8x192xf32>
    %103 = arith.truncf %102 : vector<8x192xf32> to vector<8x192xbf16>
    %c6 = arith.constant 6 : index
    %c0_49 = arith.constant 0 : index
    %c0_50 = arith.constant 0 : index
    %104 = vector.load %arg3[%c6, %c0_49, %c0_50] : memref<25x192x512xbf16, #tpu.memory_space<vmem>>, vector<1x192x512xbf16>
    %105 = vector.shape_cast %104 : vector<1x192x512xbf16> to vector<192x512xbf16>
    %cst_51 = arith.constant dense<0.000000e+00> : vector<8x512xf32>
    %106 = tpu.matmul %103, %105, %cst_51 {dimension_numbers = #tpu.dot_dimension_numbers<[1], [0], [0], [1], [0, 0, 1, 1], [], []>} : vector<8x192xbf16>, vector<192x512xbf16>, vector<8x512xf32> -> vector<8x512xf32>
    %107 = arith.addf %99, %106 : vector<8x512xf32>
    %108 = vector.extract_strided_slice %0 {offsets = [7, 0, 0], sizes = [1, 8, 192], strides = [1, 1, 1]} : vector<25x8x192xf32> to vector<1x8x192xf32>
    %109 = vector.shape_cast %108 : vector<1x8x192xf32> to vector<8x192xf32>
    %110 = arith.mulf %109, %50 : vector<8x192xf32>
    %111 = arith.truncf %110 : vector<8x192xf32> to vector<8x192xbf16>
    %c7 = arith.constant 7 : index
    %c0_52 = arith.constant 0 : index
    %c0_53 = arith.constant 0 : index
    %112 = vector.load %arg3[%c7, %c0_52, %c0_53] : memref<25x192x512xbf16, #tpu.memory_space<vmem>>, vector<1x192x512xbf16>
    %113 = vector.shape_cast %112 : vector<1x192x512xbf16> to vector<192x512xbf16>
    %cst_54 = arith.constant dense<0.000000e+00> : vector<8x512xf32>
    %114 = tpu.matmul %111, %113, %cst_54 {dimension_numbers = #tpu.dot_dimension_numbers<[1], [0], [0], [1], [0, 0, 1, 1], [], []>} : vector<8x192xbf16>, vector<192x512xbf16>, vector<8x512xf32> -> vector<8x512xf32>
    %115 = arith.addf %107, %114 : vector<8x512xf32>
    %116 = vector.extract_strided_slice %0 {offsets = [8, 0, 0], sizes = [1, 8, 192], strides = [1, 1, 1]} : vector<25x8x192xf32> to vector<1x8x192xf32>
    %117 = vector.shape_cast %116 : vector<1x8x192xf32> to vector<8x192xf32>
    %118 = arith.mulf %117, %50 : vector<8x192xf32>
    %119 = arith.truncf %118 : vector<8x192xf32> to vector<8x192xbf16>
    %c8 = arith.constant 8 : index
    %c0_55 = arith.constant 0 : index
    %c0_56 = arith.constant 0 : index
    %120 = vector.load %arg3[%c8, %c0_55, %c0_56] : memref<25x192x512xbf16, #tpu.memory_space<vmem>>, vector<1x192x512xbf16>
    %121 = vector.shape_cast %120 : vector<1x192x512xbf16> to vector<192x512xbf16>
    %cst_57 = arith.constant dense<0.000000e+00> : vector<8x512xf32>
    %122 = tpu.matmul %119, %121, %cst_57 {dimension_numbers = #tpu.dot_dimension_numbers<[1], [0], [0], [1], [0, 0, 1, 1], [], []>} : vector<8x192xbf16>, vector<192x512xbf16>, vector<8x512xf32> -> vector<8x512xf32>
    %123 = arith.addf %115, %122 : vector<8x512xf32>
    %124 = vector.extract_strided_slice %0 {offsets = [9, 0, 0], sizes = [1, 8, 192], strides = [1, 1, 1]} : vector<25x8x192xf32> to vector<1x8x192xf32>
    %125 = vector.shape_cast %124 : vector<1x8x192xf32> to vector<8x192xf32>
    %126 = arith.mulf %125, %50 : vector<8x192xf32>
    %127 = arith.truncf %126 : vector<8x192xf32> to vector<8x192xbf16>
    %c9 = arith.constant 9 : index
    %c0_58 = arith.constant 0 : index
    %c0_59 = arith.constant 0 : index
    %128 = vector.load %arg3[%c9, %c0_58, %c0_59] : memref<25x192x512xbf16, #tpu.memory_space<vmem>>, vector<1x192x512xbf16>
    %129 = vector.shape_cast %128 : vector<1x192x512xbf16> to vector<192x512xbf16>
    %cst_60 = arith.constant dense<0.000000e+00> : vector<8x512xf32>
    %130 = tpu.matmul %127, %129, %cst_60 {dimension_numbers = #tpu.dot_dimension_numbers<[1], [0], [0], [1], [0, 0, 1, 1], [], []>} : vector<8x192xbf16>, vector<192x512xbf16>, vector<8x512xf32> -> vector<8x512xf32>
    %131 = arith.addf %123, %130 : vector<8x512xf32>
    %132 = vector.extract_strided_slice %0 {offsets = [10, 0, 0], sizes = [1, 8, 192], strides = [1, 1, 1]} : vector<25x8x192xf32> to vector<1x8x192xf32>
    %133 = vector.shape_cast %132 : vector<1x8x192xf32> to vector<8x192xf32>
    %134 = arith.mulf %133, %50 : vector<8x192xf32>
    %135 = arith.truncf %134 : vector<8x192xf32> to vector<8x192xbf16>
    %c10 = arith.constant 10 : index
    %c0_61 = arith.constant 0 : index
    %c0_62 = arith.constant 0 : index
    %136 = vector.load %arg3[%c10, %c0_61, %c0_62] : memref<25x192x512xbf16, #tpu.memory_space<vmem>>, vector<1x192x512xbf16>
    %137 = vector.shape_cast %136 : vector<1x192x512xbf16> to vector<192x512xbf16>
    %cst_63 = arith.constant dense<0.000000e+00> : vector<8x512xf32>
    %138 = tpu.matmul %135, %137, %cst_63 {dimension_numbers = #tpu.dot_dimension_numbers<[1], [0], [0], [1], [0, 0, 1, 1], [], []>} : vector<8x192xbf16>, vector<192x512xbf16>, vector<8x512xf32> -> vector<8x512xf32>
    %139 = arith.addf %131, %138 : vector<8x512xf32>
    %140 = vector.extract_strided_slice %0 {offsets = [11, 0, 0], sizes = [1, 8, 192], strides = [1, 1, 1]} : vector<25x8x192xf32> to vector<1x8x192xf32>
    %141 = vector.shape_cast %140 : vector<1x8x192xf32> to vector<8x192xf32>
    %142 = arith.mulf %141, %50 : vector<8x192xf32>
    %143 = arith.truncf %142 : vector<8x192xf32> to vector<8x192xbf16>
    %c11 = arith.constant 11 : index
    %c0_64 = arith.constant 0 : index
    %c0_65 = arith.constant 0 : index
    %144 = vector.load %arg3[%c11, %c0_64, %c0_65] : memref<25x192x512xbf16, #tpu.memory_space<vmem>>, vector<1x192x512xbf16>
    %145 = vector.shape_cast %144 : vector<1x192x512xbf16> to vector<192x512xbf16>
    %cst_66 = arith.constant dense<0.000000e+00> : vector<8x512xf32>
    %146 = tpu.matmul %143, %145, %cst_66 {dimension_numbers = #tpu.dot_dimension_numbers<[1], [0], [0], [1], [0, 0, 1, 1], [], []>} : vector<8x192xbf16>, vector<192x512xbf16>, vector<8x512xf32> -> vector<8x512xf32>
    %147 = arith.addf %139, %146 : vector<8x512xf32>
    %148 = vector.extract_strided_slice %0 {offsets = [12, 0, 0], sizes = [1, 8, 192], strides = [1, 1, 1]} : vector<25x8x192xf32> to vector<1x8x192xf32>
    %149 = vector.shape_cast %148 : vector<1x8x192xf32> to vector<8x192xf32>
    %150 = arith.mulf %149, %50 : vector<8x192xf32>
    %151 = arith.truncf %150 : vector<8x192xf32> to vector<8x192xbf16>
    %c12 = arith.constant 12 : index
    %c0_67 = arith.constant 0 : index
    %c0_68 = arith.constant 0 : index
    %152 = vector.load %arg3[%c12, %c0_67, %c0_68] : memref<25x192x512xbf16, #tpu.memory_space<vmem>>, vector<1x192x512xbf16>
    %153 = vector.shape_cast %152 : vector<1x192x512xbf16> to vector<192x512xbf16>
    %cst_69 = arith.constant dense<0.000000e+00> : vector<8x512xf32>
    %154 = tpu.matmul %151, %153, %cst_69 {dimension_numbers = #tpu.dot_dimension_numbers<[1], [0], [0], [1], [0, 0, 1, 1], [], []>} : vector<8x192xbf16>, vector<192x512xbf16>, vector<8x512xf32> -> vector<8x512xf32>
    %155 = arith.addf %147, %154 : vector<8x512xf32>
    %156 = vector.extract_strided_slice %0 {offsets = [13, 0, 0], sizes = [1, 8, 192], strides = [1, 1, 1]} : vector<25x8x192xf32> to vector<1x8x192xf32>
    %157 = vector.shape_cast %156 : vector<1x8x192xf32> to vector<8x192xf32>
    %158 = arith.mulf %157, %50 : vector<8x192xf32>
    %159 = arith.truncf %158 : vector<8x192xf32> to vector<8x192xbf16>
    %c13 = arith.constant 13 : index
    %c0_70 = arith.constant 0 : index
    %c0_71 = arith.constant 0 : index
    %160 = vector.load %arg3[%c13, %c0_70, %c0_71] : memref<25x192x512xbf16, #tpu.memory_space<vmem>>, vector<1x192x512xbf16>
    %161 = vector.shape_cast %160 : vector<1x192x512xbf16> to vector<192x512xbf16>
    %cst_72 = arith.constant dense<0.000000e+00> : vector<8x512xf32>
    %162 = tpu.matmul %159, %161, %cst_72 {dimension_numbers = #tpu.dot_dimension_numbers<[1], [0], [0], [1], [0, 0, 1, 1], [], []>} : vector<8x192xbf16>, vector<192x512xbf16>, vector<8x512xf32> -> vector<8x512xf32>
    %163 = arith.addf %155, %162 : vector<8x512xf32>
    %164 = vector.extract_strided_slice %0 {offsets = [14, 0, 0], sizes = [1, 8, 192], strides = [1, 1, 1]} : vector<25x8x192xf32> to vector<1x8x192xf32>
    %165 = vector.shape_cast %164 : vector<1x8x192xf32> to vector<8x192xf32>
    %166 = arith.mulf %165, %50 : vector<8x192xf32>
    %167 = arith.truncf %166 : vector<8x192xf32> to vector<8x192xbf16>
    %c14 = arith.constant 14 : index
    %c0_73 = arith.constant 0 : index
    %c0_74 = arith.constant 0 : index
    %168 = vector.load %arg3[%c14, %c0_73, %c0_74] : memref<25x192x512xbf16, #tpu.memory_space<vmem>>, vector<1x192x512xbf16>
    %169 = vector.shape_cast %168 : vector<1x192x512xbf16> to vector<192x512xbf16>
    %cst_75 = arith.constant dense<0.000000e+00> : vector<8x512xf32>
    %170 = tpu.matmul %167, %169, %cst_75 {dimension_numbers = #tpu.dot_dimension_numbers<[1], [0], [0], [1], [0, 0, 1, 1], [], []>} : vector<8x192xbf16>, vector<192x512xbf16>, vector<8x512xf32> -> vector<8x512xf32>
    %171 = arith.addf %163, %170 : vector<8x512xf32>
    %172 = vector.extract_strided_slice %0 {offsets = [15, 0, 0], sizes = [1, 8, 192], strides = [1, 1, 1]} : vector<25x8x192xf32> to vector<1x8x192xf32>
    %173 = vector.shape_cast %172 : vector<1x8x192xf32> to vector<8x192xf32>
    %174 = arith.mulf %173, %50 : vector<8x192xf32>
    %175 = arith.truncf %174 : vector<8x192xf32> to vector<8x192xbf16>
    %c15 = arith.constant 15 : index
    %c0_76 = arith.constant 0 : index
    %c0_77 = arith.constant 0 : index
    %176 = vector.load %arg3[%c15, %c0_76, %c0_77] : memref<25x192x512xbf16, #tpu.memory_space<vmem>>, vector<1x192x512xbf16>
    %177 = vector.shape_cast %176 : vector<1x192x512xbf16> to vector<192x512xbf16>
    %cst_78 = arith.constant dense<0.000000e+00> : vector<8x512xf32>
    %178 = tpu.matmul %175, %177, %cst_78 {dimension_numbers = #tpu.dot_dimension_numbers<[1], [0], [0], [1], [0, 0, 1, 1], [], []>} : vector<8x192xbf16>, vector<192x512xbf16>, vector<8x512xf32> -> vector<8x512xf32>
    %179 = arith.addf %171, %178 : vector<8x512xf32>
    %180 = vector.extract_strided_slice %0 {offsets = [16, 0, 0], sizes = [1, 8, 192], strides = [1, 1, 1]} : vector<25x8x192xf32> to vector<1x8x192xf32>
    %181 = vector.shape_cast %180 : vector<1x8x192xf32> to vector<8x192xf32>
    %182 = arith.mulf %181, %50 : vector<8x192xf32>
    %183 = arith.truncf %182 : vector<8x192xf32> to vector<8x192xbf16>
    %c16 = arith.constant 16 : index
    %c0_79 = arith.constant 0 : index
    %c0_80 = arith.constant 0 : index
    %184 = vector.load %arg3[%c16, %c0_79, %c0_80] : memref<25x192x512xbf16, #tpu.memory_space<vmem>>, vector<1x192x512xbf16>
    %185 = vector.shape_cast %184 : vector<1x192x512xbf16> to vector<192x512xbf16>
    %cst_81 = arith.constant dense<0.000000e+00> : vector<8x512xf32>
    %186 = tpu.matmul %183, %185, %cst_81 {dimension_numbers = #tpu.dot_dimension_numbers<[1], [0], [0], [1], [0, 0, 1, 1], [], []>} : vector<8x192xbf16>, vector<192x512xbf16>, vector<8x512xf32> -> vector<8x512xf32>
    %187 = arith.addf %179, %186 : vector<8x512xf32>
    %188 = vector.extract_strided_slice %0 {offsets = [17, 0, 0], sizes = [1, 8, 192], strides = [1, 1, 1]} : vector<25x8x192xf32> to vector<1x8x192xf32>
    %189 = vector.shape_cast %188 : vector<1x8x192xf32> to vector<8x192xf32>
    %190 = arith.mulf %189, %50 : vector<8x192xf32>
    %191 = arith.truncf %190 : vector<8x192xf32> to vector<8x192xbf16>
    %c17 = arith.constant 17 : index
    %c0_82 = arith.constant 0 : index
    %c0_83 = arith.constant 0 : index
    %192 = vector.load %arg3[%c17, %c0_82, %c0_83] : memref<25x192x512xbf16, #tpu.memory_space<vmem>>, vector<1x192x512xbf16>
    %193 = vector.shape_cast %192 : vector<1x192x512xbf16> to vector<192x512xbf16>
    %cst_84 = arith.constant dense<0.000000e+00> : vector<8x512xf32>
    %194 = tpu.matmul %191, %193, %cst_84 {dimension_numbers = #tpu.dot_dimension_numbers<[1], [0], [0], [1], [0, 0, 1, 1], [], []>} : vector<8x192xbf16>, vector<192x512xbf16>, vector<8x512xf32> -> vector<8x512xf32>
    %195 = arith.addf %187, %194 : vector<8x512xf32>
    %196 = vector.extract_strided_slice %0 {offsets = [18, 0, 0], sizes = [1, 8, 192], strides = [1, 1, 1]} : vector<25x8x192xf32> to vector<1x8x192xf32>
    %197 = vector.shape_cast %196 : vector<1x8x192xf32> to vector<8x192xf32>
    %198 = arith.mulf %197, %50 : vector<8x192xf32>
    %199 = arith.truncf %198 : vector<8x192xf32> to vector<8x192xbf16>
    %c18 = arith.constant 18 : index
    %c0_85 = arith.constant 0 : index
    %c0_86 = arith.constant 0 : index
    %200 = vector.load %arg3[%c18, %c0_85, %c0_86] : memref<25x192x512xbf16, #tpu.memory_space<vmem>>, vector<1x192x512xbf16>
    %201 = vector.shape_cast %200 : vector<1x192x512xbf16> to vector<192x512xbf16>
    %cst_87 = arith.constant dense<0.000000e+00> : vector<8x512xf32>
    %202 = tpu.matmul %199, %201, %cst_87 {dimension_numbers = #tpu.dot_dimension_numbers<[1], [0], [0], [1], [0, 0, 1, 1], [], []>} : vector<8x192xbf16>, vector<192x512xbf16>, vector<8x512xf32> -> vector<8x512xf32>
    %203 = arith.addf %195, %202 : vector<8x512xf32>
    %204 = vector.extract_strided_slice %0 {offsets = [19, 0, 0], sizes = [1, 8, 192], strides = [1, 1, 1]} : vector<25x8x192xf32> to vector<1x8x192xf32>
    %205 = vector.shape_cast %204 : vector<1x8x192xf32> to vector<8x192xf32>
    %206 = arith.mulf %205, %50 : vector<8x192xf32>
    %207 = arith.truncf %206 : vector<8x192xf32> to vector<8x192xbf16>
    %c19 = arith.constant 19 : index
    %c0_88 = arith.constant 0 : index
    %c0_89 = arith.constant 0 : index
    %208 = vector.load %arg3[%c19, %c0_88, %c0_89] : memref<25x192x512xbf16, #tpu.memory_space<vmem>>, vector<1x192x512xbf16>
    %209 = vector.shape_cast %208 : vector<1x192x512xbf16> to vector<192x512xbf16>
    %cst_90 = arith.constant dense<0.000000e+00> : vector<8x512xf32>
    %210 = tpu.matmul %207, %209, %cst_90 {dimension_numbers = #tpu.dot_dimension_numbers<[1], [0], [0], [1], [0, 0, 1, 1], [], []>} : vector<8x192xbf16>, vector<192x512xbf16>, vector<8x512xf32> -> vector<8x512xf32>
    %211 = arith.addf %203, %210 : vector<8x512xf32>
    %212 = vector.extract_strided_slice %0 {offsets = [20, 0, 0], sizes = [1, 8, 192], strides = [1, 1, 1]} : vector<25x8x192xf32> to vector<1x8x192xf32>
    %213 = vector.shape_cast %212 : vector<1x8x192xf32> to vector<8x192xf32>
    %214 = arith.mulf %213, %50 : vector<8x192xf32>
    %215 = arith.truncf %214 : vector<8x192xf32> to vector<8x192xbf16>
    %c20 = arith.constant 20 : index
    %c0_91 = arith.constant 0 : index
    %c0_92 = arith.constant 0 : index
    %216 = vector.load %arg3[%c20, %c0_91, %c0_92] : memref<25x192x512xbf16, #tpu.memory_space<vmem>>, vector<1x192x512xbf16>
    %217 = vector.shape_cast %216 : vector<1x192x512xbf16> to vector<192x512xbf16>
    %cst_93 = arith.constant dense<0.000000e+00> : vector<8x512xf32>
    %218 = tpu.matmul %215, %217, %cst_93 {dimension_numbers = #tpu.dot_dimension_numbers<[1], [0], [0], [1], [0, 0, 1, 1], [], []>} : vector<8x192xbf16>, vector<192x512xbf16>, vector<8x512xf32> -> vector<8x512xf32>
    %219 = arith.addf %211, %218 : vector<8x512xf32>
    %220 = vector.extract_strided_slice %0 {offsets = [21, 0, 0], sizes = [1, 8, 192], strides = [1, 1, 1]} : vector<25x8x192xf32> to vector<1x8x192xf32>
    %221 = vector.shape_cast %220 : vector<1x8x192xf32> to vector<8x192xf32>
    %222 = arith.mulf %221, %50 : vector<8x192xf32>
    %223 = arith.truncf %222 : vector<8x192xf32> to vector<8x192xbf16>
    %c21 = arith.constant 21 : index
    %c0_94 = arith.constant 0 : index
    %c0_95 = arith.constant 0 : index
    %224 = vector.load %arg3[%c21, %c0_94, %c0_95] : memref<25x192x512xbf16, #tpu.memory_space<vmem>>, vector<1x192x512xbf16>
    %225 = vector.shape_cast %224 : vector<1x192x512xbf16> to vector<192x512xbf16>
    %cst_96 = arith.constant dense<0.000000e+00> : vector<8x512xf32>
    %226 = tpu.matmul %223, %225, %cst_96 {dimension_numbers = #tpu.dot_dimension_numbers<[1], [0], [0], [1], [0, 0, 1, 1], [], []>} : vector<8x192xbf16>, vector<192x512xbf16>, vector<8x512xf32> -> vector<8x512xf32>
    %227 = arith.addf %219, %226 : vector<8x512xf32>
    %228 = vector.extract_strided_slice %0 {offsets = [22, 0, 0], sizes = [1, 8, 192], strides = [1, 1, 1]} : vector<25x8x192xf32> to vector<1x8x192xf32>
    %229 = vector.shape_cast %228 : vector<1x8x192xf32> to vector<8x192xf32>
    %230 = arith.mulf %229, %50 : vector<8x192xf32>
    %231 = arith.truncf %230 : vector<8x192xf32> to vector<8x192xbf16>
    %c22 = arith.constant 22 : index
    %c0_97 = arith.constant 0 : index
    %c0_98 = arith.constant 0 : index
    %232 = vector.load %arg3[%c22, %c0_97, %c0_98] : memref<25x192x512xbf16, #tpu.memory_space<vmem>>, vector<1x192x512xbf16>
    %233 = vector.shape_cast %232 : vector<1x192x512xbf16> to vector<192x512xbf16>
    %cst_99 = arith.constant dense<0.000000e+00> : vector<8x512xf32>
    %234 = tpu.matmul %231, %233, %cst_99 {dimension_numbers = #tpu.dot_dimension_numbers<[1], [0], [0], [1], [0, 0, 1, 1], [], []>} : vector<8x192xbf16>, vector<192x512xbf16>, vector<8x512xf32> -> vector<8x512xf32>
    %235 = arith.addf %227, %234 : vector<8x512xf32>
    %236 = vector.extract_strided_slice %0 {offsets = [23, 0, 0], sizes = [1, 8, 192], strides = [1, 1, 1]} : vector<25x8x192xf32> to vector<1x8x192xf32>
    %237 = vector.shape_cast %236 : vector<1x8x192xf32> to vector<8x192xf32>
    %238 = arith.mulf %237, %50 : vector<8x192xf32>
    %239 = arith.truncf %238 : vector<8x192xf32> to vector<8x192xbf16>
    %c23 = arith.constant 23 : index
    %c0_100 = arith.constant 0 : index
    %c0_101 = arith.constant 0 : index
    %240 = vector.load %arg3[%c23, %c0_100, %c0_101] : memref<25x192x512xbf16, #tpu.memory_space<vmem>>, vector<1x192x512xbf16>
    %241 = vector.shape_cast %240 : vector<1x192x512xbf16> to vector<192x512xbf16>
    %cst_102 = arith.constant dense<0.000000e+00> : vector<8x512xf32>
    %242 = tpu.matmul %239, %241, %cst_102 {dimension_numbers = #tpu.dot_dimension_numbers<[1], [0], [0], [1], [0, 0, 1, 1], [], []>} : vector<8x192xbf16>, vector<192x512xbf16>, vector<8x512xf32> -> vector<8x512xf32>
    %243 = arith.addf %235, %242 : vector<8x512xf32>
    %244 = vector.extract_strided_slice %0 {offsets = [24, 0, 0], sizes = [1, 8, 192], strides = [1, 1, 1]} : vector<25x8x192xf32> to vector<1x8x192xf32>
    %245 = vector.shape_cast %244 : vector<1x8x192xf32> to vector<8x192xf32>
    %246 = arith.mulf %245, %50 : vector<8x192xf32>
    %247 = arith.truncf %246 : vector<8x192xf32> to vector<8x192xbf16>
    %c24 = arith.constant 24 : index
    %c0_103 = arith.constant 0 : index
    %c0_104 = arith.constant 0 : index
    %248 = vector.load %arg3[%c24, %c0_103, %c0_104] : memref<25x192x512xbf16, #tpu.memory_space<vmem>>, vector<1x192x512xbf16>
    %249 = vector.shape_cast %248 : vector<1x192x512xbf16> to vector<192x512xbf16>
    %cst_105 = arith.constant dense<0.000000e+00> : vector<8x512xf32>
    %250 = tpu.matmul %247, %249, %cst_105 {dimension_numbers = #tpu.dot_dimension_numbers<[1], [0], [0], [1], [0, 0, 1, 1], [], []>} : vector<8x192xbf16>, vector<192x512xbf16>, vector<8x512xf32> -> vector<8x512xf32>
    %251 = arith.addf %243, %250 : vector<8x512xf32>
    %c0_106 = arith.constant 0 : index
    %c0_107 = arith.constant 0 : index
    %252 = vector.load %arg4[%c0_106, %c0_107] : memref<1x512xf32, #tpu.memory_space<vmem>>, vector<1x512xf32>
    %253 = vector.broadcast %252 : vector<1x512xf32> to vector<8x512xf32>
    %254 = arith.addf %251, %253 : vector<8x512xf32>
    %255 = vector.extract_strided_slice %254 {offsets = [0, 0], sizes = [8, 256], strides = [1, 1]} : vector<8x512xf32> to vector<8x256xf32>
    %256 = vector.extract_strided_slice %254 {offsets = [0, 256], sizes = [8, 256], strides = [1, 1]} : vector<8x512xf32> to vector<8x256xf32>
    %257 = arith.maximumf %255, %256 : vector<8x256xf32>
    %258 = arith.truncf %257 : vector<8x256xf32> to vector<8x256xbf16>
    %c0_108 = arith.constant 0 : index
    %c0_109 = arith.constant 0 : index
    %259 = vector.load %arg5[%c0_108, %c0_109] : memref<8x256xbf16, #tpu.memory_space<vmem>>, vector<8x256xbf16>
    tpu.vector_store %arg5[%c0_108, %c0_109], %258 {strides = array<i32>} : memref<8x256xbf16, #tpu.memory_space<vmem>>, vector<8x256xbf16>,
    return
  }
}

module attributes {stable_mosaic.version = 11 : i64} {
  func.func @fc_out_kernel(%arg0: i32, %arg1: memref<8x256xbf16, #tpu.memory_space<vmem>>, %arg2: memref<256x2048xbf16, #tpu.memory_space<vmem>>, %arg3: memref<1x2048xf32, #tpu.memory_space<vmem>>, %arg4: memref<8x2048xf32, #tpu.memory_space<vmem>>) attributes {dimension_semantics = [#tpu.dimension_semantics<parallel>], iteration_bounds = array<i64: 5>, scalar_prefetch = 0 : i64, scratch_operands = 0 : i64, tpu.core_type = #tpu.core_type<tc>, window_params = [{pipeline_mode = #tpu.pipeline_mode<synchronous>, transform_indices = @transform_0, window_bounds = array<i64: 8, 256>}, {transform_indices = @transform_1, window_bounds = array<i64: 256, 2048>}, {transform_indices = @transform_2, window_bounds = array<i64: 1, 2048>}, {transform_indices = @transform_3, window_bounds = array<i64: 8, 2048>}]} {
    %c0 = arith.constant 0 : index
    %c0_0 = arith.constant 0 : index
    %0 = vector.load %arg1[%c0, %c0_0] : memref<8x256xbf16, #tpu.memory_space<vmem>>, vector<8x256xbf16>
    %c0_1 = arith.constant 0 : index
    %c0_2 = arith.constant 0 : index
    %1 = vector.load %arg2[%c0_1, %c0_2] : memref<256x2048xbf16, #tpu.memory_space<vmem>>, vector<256x2048xbf16>
    %cst = arith.constant dense<0.000000e+00> : vector<8x2048xf32>
    %2 = tpu.matmul %0, %1, %cst {dimension_numbers = #tpu.dot_dimension_numbers<[1], [0], [0], [1], [0, 0, 1, 1], [], []>} : vector<8x256xbf16>, vector<256x2048xbf16>, vector<8x2048xf32> -> vector<8x2048xf32>
    %c0_3 = arith.constant 0 : index
    %c0_4 = arith.constant 0 : index
    %3 = vector.load %arg3[%c0_3, %c0_4] : memref<1x2048xf32, #tpu.memory_space<vmem>>, vector<1x2048xf32>
    %4 = vector.broadcast %3 : vector<1x2048xf32> to vector<8x2048xf32>
    %5 = arith.addf %2, %4 : vector<8x2048xf32>
    %c0_5 = arith.constant 0 : index
    %c0_6 = arith.constant 0 : index
    %6 = vector.load %arg4[%c0_5, %c0_6] : memref<8x2048xf32, #tpu.memory_space<vmem>>, vector<8x2048xf32>
    tpu.vector_store %arg4[%c0_5, %c0_6], %5 {strides = array<i32>} : memref<8x2048xf32, #tpu.memory_space<vmem>>, vector<8x2048xf32>,
    return
  }
  func.func @transform_0(%arg0: i32) -> (i32, i32) {
    %c0_i32 = arith.constant 0 : i32
    %c0_i32_0 = arith.constant 0 : i32
    %c0_i32_1 = arith.constant 0 : i32
    return %c0_i32, %c0_i32_0 : i32, i32
  }
  func.func @transform_1(%arg0: i32) -> (i32, i32) {
    %c0_i32 = arith.constant 0 : i32
    %c0_i32_0 = arith.constant 0 : i32
    return %c0_i32, %arg0 : i32, i32
  }
  func.func @transform_2(%arg0: i32) -> (i32, i32) {
    %c0_i32 = arith.constant 0 : i32
    %c0_i32_0 = arith.constant 0 : i32
    return %c0_i32, %arg0 : i32, i32
  }
  func.func @transform_3(%arg0: i32) -> (i32, i32) {
    %c0_i32 = arith.constant 0 : i32
    %c0_i32_0 = arith.constant 0 : i32
    return %c0_i32, %arg0 : i32, i32
  }
}

</mosaic_0001>

<llo_original>
// kernel: _lambda_.3
$region0: #{_lambda_.3}
  #allocation0 [shape = 'u32[]', space=smem, size = 0x4, offset = 0x4, fixed_abs, tag = 'smem constant byte address 0x4 - core index']
  #allocation1 [shape = 'u32[72,128]{1,0:T(1,128)}', space=vmem, size = 0x9000, scoped, tag = 'internal scratch']
  %s0 = inlined_call_operand.vmem [shape: bf16[8,256], index: 0, kind: input, shape index: {}]
  %s1 = inlined_call_operand.hbm [shape: bf16[256,10240], index: 1, kind: input, shape index: {}]
  %s2 = inlined_call_operand.hbm [shape: f32[1,10240], index: 2, kind: input, shape index: {}]
  %s3 = inlined_call_operand.vmem [shape: f32[8,10240], index: 3, kind: output, shape index: {}]
  %s4 = sld [smem:[#allocation0]]
  $region53: #{_lambda_.3} parent=0
    _
  %s6 = ssub.s32 1, %s4
  %s7 = scalar_select 0, %s6, %s4
  $region1: #{_lambda_.3} parent=0
    #allocation2 [shape = 'u8[2097152]{0}', space=vmem, size = 0x200000, scoped, tag = 'input window, operand 1']
    #allocation3 [shape = 's32[2]{0}', space=sflag, size = 0x8, scoped, tag = 'scoped memory for _lambda_.3']
    #allocation4 [shape = 'u8[16384]{0}', space=vmem, size = 0x4000, scoped, tag = 'input window, operand 2']
    #allocation5 [shape = 's32[2]{0}', space=sflag, size = 0x8, scoped, tag = 'scoped memory for _lambda_.3']
    %8 = vsyncpa [#allocation3], 0
    %s9 = scalar_lea.sflag [#allocation3], 1
    %10 = vsyncpa %s9, 0
    %11 = vsyncpa [#allocation5], 0
    %s12 = scalar_lea.sflag [#allocation5], 1
    %13 = vsyncpa %s12, 0
    loop: start=0, step=1, limit=7
    $region2: #{_lambda_.3} parent=1 // loop_pre_header
      _
    $region3: #{_lambda_.3} parent=1 // loop_header
      %s15 = sphi 0, %s19
      %p16 = scmp.ge.s32.totalorder %s15, 7
      %s23 = sphi 0, %s23
      %s25 = sphi 0, %s23
      %s26 = sphi 0, %s25
      %s40 = sphi 0, %s26
      %s46 = sphi 0, %s48
      %s49 = sphi 0, %s46
      %s50 = sphi 0, %s49
      %s66 = sphi 0, %s50
      %s72 = sphi 0, %s74
      %s75 = sphi 0, %s72
      %s76 = sphi 0, %s75
      %s92 = sphi 0, %s76
      %s98 = sphi 0, %s100
      %s101 = sphi 0, %s98
      %s102 = sphi 0, %s101
      %s118 = sphi 0, %s102
    $region4: #{_lambda_.3} parent=1 // loop_header_branch
      %18 = sbr.rel (%p16) target = $region8
    $region5: #{_lambda_.3} parent=1 // loop_body
      %s20 = ssub.s32 %s15, 1
      %s21 = ssub.s32 %s15, 2
      %s22 = sadd.s32 %s15, 1
      %s24 = sadd.s32 %s23, 1
      %p27 = scmp.eq.s32.totalorder %s15, 4
      %p28 = scmp.ne.s32.totalorder %s23, %s25
      %p29 = scmp.eq.s32.totalorder %s15, 0
      %p30 = por %p28, %p29
      %p31 = scmp.ne.s32.totalorder %s23, %s25
      %p32 = scmp.eq.s32.totalorder %s20, 4
      %p33 = por %p31, %p32
      %p34 = scmp.ne.s32.totalorder %s25, %s26
      %p35 = scmp.eq.s32.totalorder %s20, 0
      %p36 = por %p34, %p35
      %p37 = scmp.ne.s32.totalorder %s25, %s26
      %p38 = scmp.eq.s32.totalorder %s21, 4
      %p39 = por %p37, %p38
      %p41 = scmp.ne.s32.totalorder %s26, %s40
      %p42 = scmp.eq.s32.totalorder %s21, 0
      %p43 = por %p41, %p42
      %s44 = ssub.s32 %s15, %s22
      %p45 = scmp.eq.s32.totalorder %s44, 0
      %s47 = sadd.s32 %s46, 1
      %s48 = scalar_select %p45, %s46, %s47
      %p51 = pneg %p45
      %p52 = scmp.eq.s32.totalorder %s15, 4
      %p53 = por %p51, %p52
      %p54 = scmp.ne.s32.totalorder %s46, %s49
      %p55 = scmp.eq.s32.totalorder %s15, 0
      %p56 = por %p54, %p55
      %p57 = scmp.ne.s32.totalorder %s46, %s49
      %p58 = scmp.eq.s32.totalorder %s20, 4
      %p59 = por %p57, %p58
      %p60 = scmp.ne.s32.totalorder %s49, %s50
      %p61 = scmp.eq.s32.totalorder %s20, 0
      %p62 = por %p60, %p61
      %p63 = scmp.ne.s32.totalorder %s49, %s50
      %p64 = scmp.eq.s32.totalorder %s21, 4
      %p65 = por %p63, %p64
      %p67 = scmp.ne.s32.totalorder %s50, %s66
      %p68 = scmp.eq.s32.totalorder %s21, 0
      %p69 = por %p67, %p68
      %s70 = ssub.s32 %s15, %s22
      %p71 = scmp.eq.s32.totalorder %s70, 0
      %s73 = sadd.s32 %s72, 1
      %s74 = scalar_select %p71, %s72, %s73
      %p77 = pneg %p71
      %p78 = scmp.eq.s32.totalorder %s15, 4
      %p79 = por %p77, %p78
      %p80 = scmp.ne.s32.totalorder %s72, %s75
      %p81 = scmp.eq.s32.totalorder %s15, 0
      %p82 = por %p80, %p81
      %p83 = scmp.ne.s32.totalorder %s72, %s75
      %p84 = scmp.eq.s32.totalorder %s20, 4
      %p85 = por %p83, %p84
      %p86 = scmp.ne.s32.totalorder %s75, %s76
      %p87 = scmp.eq.s32.totalorder %s20, 0
      %p88 = por %p86, %p87
      %p89 = scmp.ne.s32.totalorder %s75, %s76
      %p90 = scmp.eq.s32.totalorder %s21, 4
      %p91 = por %p89, %p90
      %p93 = scmp.ne.s32.totalorder %s76, %s92
      %p94 = scmp.eq.s32.totalorder %s21, 0
      %p95 = por %p93, %p94
      %s96 = ssub.s32 %s15, %s22
      %p97 = scmp.eq.s32.totalorder %s96, 0
      %s99 = sadd.s32 %s98, 1
      %s100 = scalar_select %p97, %s98, %s99
      %p103 = pneg %p97
      %p104 = scmp.eq.s32.totalorder %s15, 4
      %p105 = por %p103, %p104
      %p106 = scmp.ne.s32.totalorder %s98, %s101
      %p107 = scmp.eq.s32.totalorder %s15, 0
      %p108 = por %p106, %p107
      %p109 = scmp.ne.s32.totalorder %s98, %s101
      %p110 = scmp.eq.s32.totalorder %s20, 4
      %p111 = por %p109, %p110
      %p112 = scmp.ne.s32.totalorder %s101, %s102
      %p113 = scmp.eq.s32.totalorder %s20, 0
      %p114 = por %p112, %p113
      %p115 = scmp.ne.s32.totalorder %s101, %s102
      %p116 = scmp.eq.s32.totalorder %s21, 4
      %p117 = por %p115, %p116
      %p119 = scmp.ne.s32.totalorder %s102, %s118
      %p120 = scmp.eq.s32.totalorder %s21, 0
      %p121 = por %p119, %p120
      %p122 = scmp.le.s32.totalorder 1, %s15
      %p123 = scmp.lt.s32.totalorder %s15, 6
      %p124 = pnand %p122, %p123
      %p125 = pneg %p124
      // Predicated region
      $region9: #{_lambda_.3} parent=5 // pred_check
        _
      $region10: #{_lambda_.3} parent=5 // pred_check_branch
        %127 = sbr.rel (%p124) target = $region12
      $region11: #{_lambda_.3} parent=5 // pred_region
        %s128 = ssub.s32 %s15, 1
        // Predicated region
        $region13: #{_lambda_.3} parent=11 // pred_check
          %p129 = pneg %p36
        $region14: #{_lambda_.3} parent=11 // pred_check_branch
          %131 = sbr.rel (%p129) target = $region16
        $region15: #{_lambda_.3} parent=11 // pred_region
          _
        $region16: #{_lambda_.3} parent=11 // pred_fallthru
          _
      $region12: #{_lambda_.3} parent=5 // pred_fallthru
        _
      %p132 = scmp.lt.s32.totalorder %s15, 5
      // Predicated region
      $region17: #{_lambda_.3} parent=5 // pred_check
        %p133 = pneg %p132
      $region18: #{_lambda_.3} parent=5 // pred_check_branch
        %135 = sbr.rel (%p133) target = $region20
      $region19: #{_lambda_.3} parent=5 // pred_region
        // Predicated region
        $region21: #{_lambda_.3} parent=19 // pred_check
          %p136 = pneg %p56
        $region22: #{_lambda_.3} parent=19 // pred_check_branch
          %138 = sbr.rel (%p136) target = $region24
        $region23: #{_lambda_.3} parent=19 // pred_region
          %s139 = sand.u32 %s46, 1
          %s140 = scalar_lea.sflag [#allocation3], %s139
          %s141 = sand.u32 %s46, 1
          %s142 = smul.addr %s141, 2048
          %s143 = scalar_lea.vmem [#allocation2], %s142
          %s144 = smul.u32 16, %s15
          %146 = vsyncadd %s140, 0
          %s147 = smul.addr %s144, 4
          %s148 = scalar_lea.hbm %s1, %s147
          %s149 = sshll.u32 %s148, 4
          %s150 = int_to_ptr.hbm [resolvable:$true] %s149
          %s151 = sshll.u32 %s143, 4
          %s152 = int_to_ptr.vmem [resolvable:$true] %s151
          %157 = dma.hbm_to_vmem [thread:$0]  %s150, 32768, %s152, %s140, 5120, 1024, 64
        $region24: #{_lambda_.3} parent=19 // pred_fallthru
          _
        // Predicated region
        $region25: #{_lambda_.3} parent=19 // pred_check
          %p158 = pneg %p82
        $region26: #{_lambda_.3} parent=19 // pred_check_branch
          %160 = sbr.rel (%p158) target = $region28
        $region27: #{_lambda_.3} parent=19 // pred_region
          %s161 = sand.u32 %s72, 1
          %s162 = scalar_lea.sflag [#allocation5], %s161
          %s163 = sand.u32 %s72, 1
          %s164 = smul.addr %s163, 16
          %s165 = scalar_lea.vmem [#allocation4], %s164
          %s166 = smul.u32 16, %s15
          %168 = vsyncadd %s162, 0
          %s169 = scalar_lea.hbm %s2, %s166
          %s171 = sshll.u32 %s169, 4
          %s172 = int_to_ptr.hbm [resolvable:$true] %s171
          %s173 = sshll.u32 %s165, 4
          %s174 = int_to_ptr.vmem [resolvable:$true] %s173
          %176 = dma.hbm_to_vmem [thread:$0]  %s172, 256, %s174, %s162
        $region28: #{_lambda_.3} parent=19 // pred_fallthru
          _
      $region20: #{_lambda_.3} parent=5 // pred_fallthru
        _
      %p177 = scmp.le.s32.totalorder 1, %s15
      %p178 = scmp.lt.s32.totalorder %s15, 6
      %p179 = pnand %p177, %p178
      %p180 = pneg %p179
      // Predicated region
      $region29: #{_lambda_.3} parent=5 // pred_check
        _
      $region30: #{_lambda_.3} parent=5 // pred_check_branch
        %182 = sbr.rel (%p179) target = $region32
      $region31: #{_lambda_.3} parent=5 // pred_region
        %s183 = ssub.s32 %s15, 1
        %s184 = sand.u32 %s49, 1
        %s185 = scalar_lea.sflag [#allocation3], %s184
        %s186 = sand.u32 %s49, 1
        %s187 = smul.addr %s186, 2048
        %s188 = scalar_lea.vmem [#allocation2], %s187
        // Predicated region
        $region33: #{_lambda_.3} parent=31 // pred_check
          %p189 = pneg %p62
        $region34: #{_lambda_.3} parent=31 // pred_check_branch
          %191 = sbr.rel (%p189) target = $region36
        $region35: #{_lambda_.3} parent=31 // pred_region
          %193 = dma.done %s185, 32768
        $region36: #{_lambda_.3} parent=31 // pred_fallthru
          _
        %s194 = sand.u32 %s75, 1
        %s195 = scalar_lea.sflag [#allocation5], %s194
        %s196 = sand.u32 %s75, 1
        %s197 = smul.addr %s196, 16
        %s198 = scalar_lea.vmem [#allocation4], %s197
        // Predicated region
        $region37: #{_lambda_.3} parent=31 // pred_check
          %p199 = pneg %p88
        $region38: #{_lambda_.3} parent=31 // pred_check_branch
          %201 = sbr.rel (%p199) target = $region40
        $region39: #{_lambda_.3} parent=31 // pred_region
          %203 = dma.done %s195, 256
        $region40: #{_lambda_.3} parent=31 // pred_fallthru
          _
        %p204 = pneg %p36
        %p205 = pneg %p33
        %s206 = sand.u32 %s49, 1
        %s207 = scalar_lea.sflag [#allocation3], %s206
        %s208 = sand.u32 %s49, 1
        %s209 = smul.addr %s208, 2048
        %s210 = scalar_lea.vmem [#allocation2], %s209
        %p211 = pneg %p62
        %p212 = pneg %p59
        %s213 = sand.u32 %s75, 1
        %s214 = scalar_lea.sflag [#allocation5], %s213
        %s215 = sand.u32 %s75, 1
        %s216 = smul.addr %s215, 16
        %s217 = scalar_lea.vmem [#allocation4], %s216
        %p218 = pneg %p88
        %p219 = pneg %p85
        %p220 = pneg %p114
        %p221 = pneg %p111
        %s222 = smul.u32 16, %s20
        %p223 = scmp.lt.s32.totalorder %s222, 79
        %s224 = scalar_select %p223, %s222, 79
        %s225 = smul.addr %s224, 8
        %s226 = scalar_lea.vmem %s3, %s225
        %s227 = smul.u32 16, %s20
        %s228 = smul.u32 16, %s20
        %s229 = smul.u32 16, %s20
        %p230 = scmp.lt.s32.totalorder %s229, 79
        %s231 = scalar_select %p230, %s229, 79
        %s232 = smul.addr %s231, 8
        %s233 = scalar_lea.vmem %s3, %s232
        %s234 = smul.u32 16, %s20
        %v235 = vld [vmem:[%s0] sm:$0xff]
        %v236 = vld [vmem:[%s188] sm:$0xff]
        %v237 = vld [vmem:[%s188 + $0x8] sm:$0xff]
        %v238 = vld [vmem:[%s188 + $0x10] sm:$0xff]
        %v239 = vld [vmem:[%s188 + $0x18] sm:$0xff]
        %v240 = vld [vmem:[%s188 + $0x20] sm:$0xff]
        %v241 = vld [vmem:[%s188 + $0x28] sm:$0xff]
        %v242 = vld [vmem:[%s188 + $0x30] sm:$0xff]
        %v243 = vld [vmem:[%s188 + $0x38] sm:$0xff]
        %v244 = vld [vmem:[%s188 + $0x40] sm:$0xff]
        %v245 = vld [vmem:[%s188 + $0x48] sm:$0xff]
        %v246 = vld [vmem:[%s188 + $0x50] sm:$0xff]
        %v247 = vld [vmem:[%s188 + $0x58] sm:$0xff]
        %v248 = vld [vmem:[%s188 + $0x60] sm:$0xff]
        %v249 = vld [vmem:[%s188 + $0x68] sm:$0xff]
        %v250 = vld [vmem:[%s188 + $0x70] sm:$0xff]
        %v251 = vld [vmem:[%s188 + $0x78] sm:$0xff]
        %v252 = vld [vmem:[%s188 + $0x80] sm:$0xff]
        %v253 = vld [vmem:[%s188 + $0x88] sm:$0xff]
        %v254 = vld [vmem:[%s188 + $0x90] sm:$0xff]
        %v255 = vld [vmem:[%s188 + $0x98] sm:$0xff]
        %v256 = vld [vmem:[%s188 + $0xa0] sm:$0xff]
        %v257 = vld [vmem:[%s188 + $0xa8] sm:$0xff]
        %v258 = vld [vmem:[%s188 + $0xb0] sm:$0xff]
        %v259 = vld [vmem:[%s188 + $0xb8] sm:$0xff]
        %v260 = vld [vmem:[%s188 + $0xc0] sm:$0xff]
        %v261 = vld [vmem:[%s188 + $0xc8] sm:$0xff]
        %v262 = vld [vmem:[%s188 + $0xd0] sm:$0xff]
        %v263 = vld [vmem:[%s188 + $0xd8] sm:$0xff]
        %v264 = vld [vmem:[%s188 + $0xe0] sm:$0xff]
        %v265 = vld [vmem:[%s188 + $0xe8] sm:$0xff]
        %v266 = vld [vmem:[%s188 + $0xf0] sm:$0xff]
        %v267 = vld [vmem:[%s188 + $0xf8] sm:$0xff]
        %v268 = vld [vmem:[%s188 + $0x100] sm:$0xff]
        %v269 = vld [vmem:[%s188 + $0x108] sm:$0xff]
        %v270 = vld [vmem:[%s188 + $0x110] sm:$0xff]
        %v271 = vld [vmem:[%s188 + $0x118] sm:$0xff]
        %v272 = vld [vmem:[%s188 + $0x120] sm:$0xff]
        %v273 = vld [vmem:[%s188 + $0x128] sm:$0xff]
        %v274 = vld [vmem:[%s188 + $0x130] sm:$0xff]
        %v275 = vld [vmem:[%s188 + $0x138] sm:$0xff]
        %v276 = vld [vmem:[%s188 + $0x140] sm:$0xff]
        %v277 = vld [vmem:[%s188 + $0x148] sm:$0xff]
        %v278 = vld [vmem:[%s188 + $0x150] sm:$0xff]
        %v279 = vld [vmem:[%s188 + $0x158] sm:$0xff]
        %v280 = vld [vmem:[%s188 + $0x160] sm:$0xff]
        %v281 = vld [vmem:[%s188 + $0x168] sm:$0xff]
        %v282 = vld [vmem:[%s188 + $0x170] sm:$0xff]
        %v283 = vld [vmem:[%s188 + $0x178] sm:$0xff]
        %v284 = vld [vmem:[%s188 + $0x180] sm:$0xff]
        %v285 = vld [vmem:[%s188 + $0x188] sm:$0xff]
        %v286 = vld [vmem:[%s188 + $0x190] sm:$0xff]
        %v287 = vld [vmem:[%s188 + $0x198] sm:$0xff]
        %v288 = vld [vmem:[%s188 + $0x1a0] sm:$0xff]
        %v289 = vld [vmem:[%s188 + $0x1a8] sm:$0xff]
        %v290 = vld [vmem:[%s188 + $0x1b0] sm:$0xff]
        %v291 = vld [vmem:[%s188 + $0x1b8] sm:$0xff]
        %v292 = vld [vmem:[%s188 + $0x1c0] sm:$0xff]
        %v293 = vld [vmem:[%s188 + $0x1c8] sm:$0xff]
        %v294 = vld [vmem:[%s188 + $0x1d0] sm:$0xff]
        %v295 = vld [vmem:[%s188 + $0x1d8] sm:$0xff]
        %v296 = vld [vmem:[%s188 + $0x1e0] sm:$0xff]
        %v297 = vld [vmem:[%s188 + $0x1e8] sm:$0xff]
        %v298 = vld [vmem:[%s188 + $0x1f0] sm:$0xff]
        %v299 = vld [vmem:[%s188 + $0x1f8] sm:$0xff]
        %v300 = vld [vmem:[%s188 + $0x200] sm:$0xff]
        %v301 = vld [vmem:[%s188 + $0x208] sm:$0xff]
        %v302 = vld [vmem:[%s188 + $0x210] sm:$0xff]
        %v303 = vld [vmem:[%s188 + $0x218] sm:$0xff]
        %v304 = vld [vmem:[%s188 + $0x220] sm:$0xff]
        %v305 = vld [vmem:[%s188 + $0x228] sm:$0xff]
        %v306 = vld [vmem:[%s188 + $0x230] sm:$0xff]
        %v307 = vld [vmem:[%s188 + $0x238] sm:$0xff]
        %v308 = vld [vmem:[%s188 + $0x240] sm:$0xff]
        %v309 = vld [vmem:[%s188 + $0x248] sm:$0xff]
        %v310 = vld [vmem:[%s188 + $0x250] sm:$0xff]
        %v311 = vld [vmem:[%s188 + $0x258] sm:$0xff]
        %v312 = vld [vmem:[%s188 + $0x260] sm:$0xff]
        %v313 = vld [vmem:[%s188 + $0x268] sm:$0xff]
        %v314 = vld [vmem:[%s188 + $0x270] sm:$0xff]
        %v315 = vld [vmem:[%s188 + $0x278] sm:$0xff]
        %v316 = vld [vmem:[%s188 + $0x280] sm:$0xff]
        %v317 = vld [vmem:[%s188 + $0x288] sm:$0xff]
        %v318 = vld [vmem:[%s188 + $0x290] sm:$0xff]
        %v319 = vld [vmem:[%s188 + $0x298] sm:$0xff]
        %v320 = vld [vmem:[%s188 + $0x2a0] sm:$0xff]
        %v321 = vld [vmem:[%s188 + $0x2a8] sm:$0xff]
        %v322 = vld [vmem:[%s188 + $0x2b0] sm:$0xff]
        %v323 = vld [vmem:[%s188 + $0x2b8] sm:$0xff]
        %v324 = vld [vmem:[%s188 + $0x2c0] sm:$0xff]
        %v325 = vld [vmem:[%s188 + $0x2c8] sm:$0xff]
        %v326 = vld [vmem:[%s188 + $0x2d0] sm:$0xff]
        %v327 = vld [vmem:[%s188 + $0x2d8] sm:$0xff]
        %v328 = vld [vmem:[%s188 + $0x2e0] sm:$0xff]
        %v329 = vld [vmem:[%s188 + $0x2e8] sm:$0xff]
        %v330 = vld [vmem:[%s188 + $0x2f0] sm:$0xff]
        %v331 = vld [vmem:[%s188 + $0x2f8] sm:$0xff]
        %v332 = vld [vmem:[%s188 + $0x300] sm:$0xff]
        %v333 = vld [vmem:[%s188 + $0x308] sm:$0xff]
        %v334 = vld [vmem:[%s188 + $0x310] sm:$0xff]
        %v335 = vld [vmem:[%s188 + $0x318] sm:$0xff]
        %v336 = vld [vmem:[%s188 + $0x320] sm:$0xff]
        %v337 = vld [vmem:[%s188 + $0x328] sm:$0xff]
        %v338 = vld [vmem:[%s188 + $0x330] sm:$0xff]
        %v339 = vld [vmem:[%s188 + $0x338] sm:$0xff]
        %v340 = vld [vmem:[%s188 + $0x340] sm:$0xff]
        %v341 = vld [vmem:[%s188 + $0x348] sm:$0xff]
        %v342 = vld [vmem:[%s188 + $0x350] sm:$0xff]
        %v343 = vld [vmem:[%s188 + $0x358] sm:$0xff]
        %v344 = vld [vmem:[%s188 + $0x360] sm:$0xff]
        %v345 = vld [vmem:[%s188 + $0x368] sm:$0xff]
        %v346 = vld [vmem:[%s188 + $0x370] sm:$0xff]
        %v347 = vld [vmem:[%s188 + $0x378] sm:$0xff]
        %v348 = vld [vmem:[%s188 + $0x380] sm:$0xff]
        %v349 = vld [vmem:[%s188 + $0x388] sm:$0xff]
        %v350 = vld [vmem:[%s188 + $0x390] sm:$0xff]
        %v351 = vld [vmem:[%s188 + $0x398] sm:$0xff]
        %v352 = vld [vmem:[%s188 + $0x3a0] sm:$0xff]
        %v353 = vld [vmem:[%s188 + $0x3a8] sm:$0xff]
        %v354 = vld [vmem:[%s188 + $0x3b0] sm:$0xff]
        %v355 = vld [vmem:[%s188 + $0x3b8] sm:$0xff]
        %v356 = vld [vmem:[%s188 + $0x3c0] sm:$0xff]
        %v357 = vld [vmem:[%s188 + $0x3c8] sm:$0xff]
        %v358 = vld [vmem:[%s188 + $0x3d0] sm:$0xff]
        %v359 = vld [vmem:[%s188 + $0x3d8] sm:$0xff]
        %v360 = vld [vmem:[%s188 + $0x3e0] sm:$0xff]
        %v361 = vld [vmem:[%s188 + $0x3e8] sm:$0xff]
        %v362 = vld [vmem:[%s188 + $0x3f0] sm:$0xff]
        %v363 = vld [vmem:[%s188 + $0x3f8] sm:$0xff]
        %v364 = vld [vmem:[%s188 + $0x400] sm:$0xff]
        %v365 = vld [vmem:[%s188 + $0x408] sm:$0xff]
        %v366 = vld [vmem:[%s188 + $0x410] sm:$0xff]
        %v367 = vld [vmem:[%s188 + $0x418] sm:$0xff]
        %v368 = vld [vmem:[%s188 + $0x420] sm:$0xff]
        %v369 = vld [vmem:[%s188 + $0x428] sm:$0xff]
        %v370 = vld [vmem:[%s188 + $0x430] sm:$0xff]
        %v371 = vld [vmem:[%s188 + $0x438] sm:$0xff]
        %v372 = vld [vmem:[%s188 + $0x440] sm:$0xff]
        %v373 = vld [vmem:[%s188 + $0x448] sm:$0xff]
        %v374 = vld [vmem:[%s188 + $0x450] sm:$0xff]
        %v375 = vld [vmem:[%s188 + $0x458] sm:$0xff]
        %v376 = vld [vmem:[%s188 + $0x460] sm:$0xff]
        %v377 = vld [vmem:[%s188 + $0x468] sm:$0xff]
        %v378 = vld [vmem:[%s188 + $0x470] sm:$0xff]
        %v379 = vld [vmem:[%s188 + $0x478] sm:$0xff]
        %v380 = vld [vmem:[%s188 + $0x480] sm:$0xff]
        %v381 = vld [vmem:[%s188 + $0x488] sm:$0xff]
        %v382 = vld [vmem:[%s188 + $0x490] sm:$0xff]
        %v383 = vld [vmem:[%s188 + $0x498] sm:$0xff]
        %v384 = vld [vmem:[%s188 + $0x4a0] sm:$0xff]
        %v385 = vld [vmem:[%s188 + $0x4a8] sm:$0xff]
        %v386 = vld [vmem:[%s188 + $0x4b0] sm:$0xff]
        %v387 = vld [vmem:[%s188 + $0x4b8] sm:$0xff]
        %v388 = vld [vmem:[%s188 + $0x4c0] sm:$0xff]
        %v389 = vld [vmem:[%s188 + $0x4c8] sm:$0xff]
        %v390 = vld [vmem:[%s188 + $0x4d0] sm:$0xff]
        %v391 = vld [vmem:[%s188 + $0x4d8] sm:$0xff]
        %v392 = vld [vmem:[%s188 + $0x4e0] sm:$0xff]
        %v393 = vld [vmem:[%s188 + $0x4e8] sm:$0xff]
        %v394 = vld [vmem:[%s188 + $0x4f0] sm:$0xff]
        %v395 = vld [vmem:[%s188 + $0x4f8] sm:$0xff]
        %v396 = vld [vmem:[%s188 + $0x500] sm:$0xff]
        %v397 = vld [vmem:[%s188 + $0x508] sm:$0xff]
        %v398 = vld [vmem:[%s188 + $0x510] sm:$0xff]
        %v399 = vld [vmem:[%s188 + $0x518] sm:$0xff]
        %v400 = vld [vmem:[%s188 + $0x520] sm:$0xff]
        %v401 = vld [vmem:[%s188 + $0x528] sm:$0xff]
        %v402 = vld [vmem:[%s188 + $0x530] sm:$0xff]
        %v403 = vld [vmem:[%s188 + $0x538] sm:$0xff]
        %v404 = vld [vmem:[%s188 + $0x540] sm:$0xff]
        %v405 = vld [vmem:[%s188 + $0x548] sm:$0xff]
        %v406 = vld [vmem:[%s188 + $0x550] sm:$0xff]
        %v407 = vld [vmem:[%s188 + $0x558] sm:$0xff]
        %v408 = vld [vmem:[%s188 + $0x560] sm:$0xff]
        %v409 = vld [vmem:[%s188 + $0x568] sm:$0xff]
        %v410 = vld [vmem:[%s188 + $0x570] sm:$0xff]
        %v411 = vld [vmem:[%s188 + $0x578] sm:$0xff]
        %v412 = vld [vmem:[%s188 + $0x580] sm:$0xff]
        %v413 = vld [vmem:[%s188 + $0x588] sm:$0xff]
        %v414 = vld [vmem:[%s188 + $0x590] sm:$0xff]
        %v415 = vld [vmem:[%s188 + $0x598] sm:$0xff]
        %v416 = vld [vmem:[%s188 + $0x5a0] sm:$0xff]
        %v417 = vld [vmem:[%s188 + $0x5a8] sm:$0xff]
        %v418 = vld [vmem:[%s188 + $0x5b0] sm:$0xff]
        %v419 = vld [vmem:[%s188 + $0x5b8] sm:$0xff]
        %v420 = vld [vmem:[%s188 + $0x5c0] sm:$0xff]
        %v421 = vld [vmem:[%s188 + $0x5c8] sm:$0xff]
        %v422 = vld [vmem:[%s188 + $0x5d0] sm:$0xff]
        %v423 = vld [vmem:[%s188 + $0x5d8] sm:$0xff]
        %v424 = vld [vmem:[%s188 + $0x5e0] sm:$0xff]
        %v425 = vld [vmem:[%s188 + $0x5e8] sm:$0xff]
        %v426 = vld [vmem:[%s188 + $0x5f0] sm:$0xff]
        %v427 = vld [vmem:[%s188 + $0x5f8] sm:$0xff]
        %v428 = vld [vmem:[%s188 + $0x600] sm:$0xff]
        %v429 = vld [vmem:[%s188 + $0x608] sm:$0xff]
        %v430 = vld [vmem:[%s188 + $0x610] sm:$0xff]
        %v431 = vld [vmem:[%s188 + $0x618] sm:$0xff]
        %v432 = vld [vmem:[%s188 + $0x620] sm:$0xff]
        %v433 = vld [vmem:[%s188 + $0x628] sm:$0xff]
        %v434 = vld [vmem:[%s188 + $0x630] sm:$0xff]
        %v435 = vld [vmem:[%s188 + $0x638] sm:$0xff]
        %v436 = vld [vmem:[%s188 + $0x640] sm:$0xff]
        %v437 = vld [vmem:[%s188 + $0x648] sm:$0xff]
        %v438 = vld [vmem:[%s188 + $0x650] sm:$0xff]
        %v439 = vld [vmem:[%s188 + $0x658] sm:$0xff]
        %v440 = vld [vmem:[%s188 + $0x660] sm:$0xff]
        %v441 = vld [vmem:[%s188 + $0x668] sm:$0xff]
        %v442 = vld [vmem:[%s188 + $0x670] sm:$0xff]
        %v443 = vld [vmem:[%s188 + $0x678] sm:$0xff]
        %v444 = vld [vmem:[%s188 + $0x680] sm:$0xff]
        %v445 = vld [vmem:[%s188 + $0x688] sm:$0xff]
        %v446 = vld [vmem:[%s188 + $0x690] sm:$0xff]
        %v447 = vld [vmem:[%s188 + $0x698] sm:$0xff]
        %v448 = vld [vmem:[%s188 + $0x6a0] sm:$0xff]
        %v449 = vld [vmem:[%s188 + $0x6a8] sm:$0xff]
        %v450 = vld [vmem:[%s188 + $0x6b0] sm:$0xff]
        %v451 = vld [vmem:[%s188 + $0x6b8] sm:$0xff]
        %v452 = vld [vmem:[%s188 + $0x6c0] sm:$0xff]
        %v453 = vld [vmem:[%s188 + $0x6c8] sm:$0xff]
        %v454 = vld [vmem:[%s188 + $0x6d0] sm:$0xff]
        %v455 = vld [vmem:[%s188 + $0x6d8] sm:$0xff]
        %v456 = vld [vmem:[%s188 + $0x6e0] sm:$0xff]
        %v457 = vld [vmem:[%s188 + $0x6e8] sm:$0xff]
        %v458 = vld [vmem:[%s188 + $0x6f0] sm:$0xff]
        %v459 = vld [vmem:[%s188 + $0x6f8] sm:$0xff]
        %v460 = vld [vmem:[%s188 + $0x700] sm:$0xff]
        %v461 = vld [vmem:[%s188 + $0x708] sm:$0xff]
        %v462 = vld [vmem:[%s188 + $0x710] sm:$0xff]
        %v463 = vld [vmem:[%s188 + $0x718] sm:$0xff]
        %v464 = vld [vmem:[%s188 + $0x720] sm:$0xff]
        %v465 = vld [vmem:[%s188 + $0x728] sm:$0xff]
        %v466 = vld [vmem:[%s188 + $0x730] sm:$0xff]
        %v467 = vld [vmem:[%s188 + $0x738] sm:$0xff]
        %v468 = vld [vmem:[%s188 + $0x740] sm:$0xff]
        %v469 = vld [vmem:[%s188 + $0x748] sm:$0xff]
        %v470 = vld [vmem:[%s188 + $0x750] sm:$0xff]
        %v471 = vld [vmem:[%s188 + $0x758] sm:$0xff]
        %v472 = vld [vmem:[%s188 + $0x760] sm:$0xff]
        %v473 = vld [vmem:[%s188 + $0x768] sm:$0xff]
        %v474 = vld [vmem:[%s188 + $0x770] sm:$0xff]
        %v475 = vld [vmem:[%s188 + $0x778] sm:$0xff]
        %v476 = vld [vmem:[%s188 + $0x780] sm:$0xff]
        %v477 = vld [vmem:[%s188 + $0x788] sm:$0xff]
        %v478 = vld [vmem:[%s188 + $0x790] sm:$0xff]
        %v479 = vld [vmem:[%s188 + $0x798] sm:$0xff]
        %v480 = vld [vmem:[%s188 + $0x7a0] sm:$0xff]
        %v481 = vld [vmem:[%s188 + $0x7a8] sm:$0xff]
        %v482 = vld [vmem:[%s188 + $0x7b0] sm:$0xff]
        %v483 = vld [vmem:[%s188 + $0x7b8] sm:$0xff]
        %v484 = vld [vmem:[%s188 + $0x7c0] sm:$0xff]
        %v485 = vld [vmem:[%s188 + $0x7c8] sm:$0xff]
        %v486 = vld [vmem:[%s188 + $0x7d0] sm:$0xff]
        %v487 = vld [vmem:[%s188 + $0x7d8] sm:$0xff]
        %v488 = vld [vmem:[%s188 + $0x7e0] sm:$0xff]
        %v489 = vld [vmem:[%s188 + $0x7e8] sm:$0xff]
        %v490 = vld [vmem:[%s188 + $0x7f0] sm:$0xff]
        %v491 = vld [vmem:[%s188 + $0x7f8] sm:$0xff]
        %v492 = vld [vmem:[%s198] sm:$0xff]
        %v493 = vld [vmem:[%s198 + $0x8] sm:$0xff]
        %v496 = vperm.slane %v492, 0
        %v497 = vperm.slane %v492, 1
        %v498 = vperm.slane %v492, 2
        %v499 = vperm.slane %v492, 3
        %v500 = vperm.slane %v492, 4
        %v501 = vperm.slane %v492, 5
        %v502 = vperm.slane %v492, 6
        %v503 = vperm.slane %v492, 7
        %v504 = vperm.slane %v493, 0
        %v505 = vperm.slane %v493, 1
        %v506 = vperm.slane %v493, 2
        %v507 = vperm.slane %v493, 3
        %v508 = vperm.slane %v493, 4
        %v509 = vperm.slane %v493, 5
        %v510 = vperm.slane %v493, 6
        %v511 = vperm.slane %v493, 7
        %v529 = vunpack.c.l.b16 %v235
        %v530 = vunpack.c.h.b16 %v235
        %v531 = vpack.c.b16 %v529, %v529
        %v532 = vpack.c.b16 %v530, %v530
        %v791 = vunpack.c.l.b16 %v236
        %v792 = vunpack.c.h.b16 %v236
        %v793 = vunpack.c.l.b16 %v237
        %v794 = vunpack.c.h.b16 %v237
        %v795 = vunpack.c.l.b16 %v238
        %v796 = vunpack.c.h.b16 %v238
        %v797 = vunpack.c.l.b16 %v239
        %v798 = vunpack.c.h.b16 %v239
        %v799 = vunpack.c.l.b16 %v240
        %v800 = vunpack.c.h.b16 %v240
        %v801 = vunpack.c.l.b16 %v241
        %v802 = vunpack.c.h.b16 %v241
        %v803 = vunpack.c.l.b16 %v242
        %v804 = vunpack.c.h.b16 %v242
        %v805 = vunpack.c.l.b16 %v243
        %v806 = vunpack.c.h.b16 %v243
        %v807 = vunpack.c.l.b16 %v244
        %v808 = vunpack.c.h.b16 %v244
        %v809 = vunpack.c.l.b16 %v245
        %v810 = vunpack.c.h.b16 %v245
        %v811 = vunpack.c.l.b16 %v246
        %v812 = vunpack.c.h.b16 %v246
        %v813 = vunpack.c.l.b16 %v247
        %v814 = vunpack.c.h.b16 %v247
        %v815 = vunpack.c.l.b16 %v248
        %v816 = vunpack.c.h.b16 %v248
        %v817 = vunpack.c.l.b16 %v249
        %v818 = vunpack.c.h.b16 %v249
        %v819 = vunpack.c.l.b16 %v250
        %v820 = vunpack.c.h.b16 %v250
        %v821 = vunpack.c.l.b16 %v251
        %v822 = vunpack.c.h.b16 %v251
        %v823 = vunpack.c.l.b16 %v252
        %v824 = vunpack.c.h.b16 %v252
        %v825 = vunpack.c.l.b16 %v253
        %v826 = vunpack.c.h.b16 %v253
        %v827 = vunpack.c.l.b16 %v254
        %v828 = vunpack.c.h.b16 %v254
        %v829 = vunpack.c.l.b16 %v255
        %v830 = vunpack.c.h.b16 %v255
        %v831 = vunpack.c.l.b16 %v256
        %v832 = vunpack.c.h.b16 %v256
        %v833 = vunpack.c.l.b16 %v257
        %v834 = vunpack.c.h.b16 %v257
        %v835 = vunpack.c.l.b16 %v258
        %v836 = vunpack.c.h.b16 %v258
        %v837 = vunpack.c.l.b16 %v259
        %v838 = vunpack.c.h.b16 %v259
        %v839 = vunpack.c.l.b16 %v260
        %v840 = vunpack.c.h.b16 %v260
        %v841 = vunpack.c.l.b16 %v261
        %v842 = vunpack.c.h.b16 %v261
        %v843 = vunpack.c.l.b16 %v262
        %v844 = vunpack.c.h.b16 %v262
        %v845 = vunpack.c.l.b16 %v263
        %v846 = vunpack.c.h.b16 %v263
        %v847 = vunpack.c.l.b16 %v264
        %v848 = vunpack.c.h.b16 %v264
        %v849 = vunpack.c.l.b16 %v265
        %v850 = vunpack.c.h.b16 %v265
        %v851 = vunpack.c.l.b16 %v266
        %v852 = vunpack.c.h.b16 %v266
        %v853 = vunpack.c.l.b16 %v267
        %v854 = vunpack.c.h.b16 %v267
        %v855 = vunpack.c.l.b16 %v268
        %v856 = vunpack.c.h.b16 %v268
        %v857 = vunpack.c.l.b16 %v269
        %v858 = vunpack.c.h.b16 %v269
        %v859 = vunpack.c.l.b16 %v270
        %v860 = vunpack.c.h.b16 %v270
        %v861 = vunpack.c.l.b16 %v271
        %v862 = vunpack.c.h.b16 %v271
        %v863 = vunpack.c.l.b16 %v272
        %v864 = vunpack.c.h.b16 %v272
        %v865 = vunpack.c.l.b16 %v273
        %v866 = vunpack.c.h.b16 %v273
        %v867 = vunpack.c.l.b16 %v274
        %v868 = vunpack.c.h.b16 %v274
        %v869 = vunpack.c.l.b16 %v275
        %v870 = vunpack.c.h.b16 %v275
        %v871 = vunpack.c.l.b16 %v276
        %v872 = vunpack.c.h.b16 %v276
        %v873 = vunpack.c.l.b16 %v277
        %v874 = vunpack.c.h.b16 %v277
        %v875 = vunpack.c.l.b16 %v278
        %v876 = vunpack.c.h.b16 %v278
        %v877 = vunpack.c.l.b16 %v279
        %v878 = vunpack.c.h.b16 %v279
        %v879 = vunpack.c.l.b16 %v280
        %v880 = vunpack.c.h.b16 %v280
        %v881 = vunpack.c.l.b16 %v281
        %v882 = vunpack.c.h.b16 %v281
        %v883 = vunpack.c.l.b16 %v282
        %v884 = vunpack.c.h.b16 %v282
        %v885 = vunpack.c.l.b16 %v283
        %v886 = vunpack.c.h.b16 %v283
        %v887 = vunpack.c.l.b16 %v284
        %v888 = vunpack.c.h.b16 %v284
        %v889 = vunpack.c.l.b16 %v285
        %v890 = vunpack.c.h.b16 %v285
        %v891 = vunpack.c.l.b16 %v286
        %v892 = vunpack.c.h.b16 %v286
        %v893 = vunpack.c.l.b16 %v287
        %v894 = vunpack.c.h.b16 %v287
        %v895 = vunpack.c.l.b16 %v288
        %v896 = vunpack.c.h.b16 %v288
        %v897 = vunpack.c.l.b16 %v289
        %v898 = vunpack.c.h.b16 %v289
        %v899 = vunpack.c.l.b16 %v290
        %v900 = vunpack.c.h.b16 %v290
        %v901 = vunpack.c.l.b16 %v291
        %v902 = vunpack.c.h.b16 %v291
        %v903 = vunpack.c.l.b16 %v292
        %v904 = vunpack.c.h.b16 %v292
        %v905 = vunpack.c.l.b16 %v293
        %v906 = vunpack.c.h.b16 %v293
        %v907 = vunpack.c.l.b16 %v294
        %v908 = vunpack.c.h.b16 %v294
        %v909 = vunpack.c.l.b16 %v295
        %v910 = vunpack.c.h.b16 %v295
        %v911 = vunpack.c.l.b16 %v296
        %v912 = vunpack.c.h.b16 %v296
        %v913 = vunpack.c.l.b16 %v297
        %v914 = vunpack.c.h.b16 %v297
        %v915 = vunpack.c.l.b16 %v298
        %v916 = vunpack.c.h.b16 %v298
        %v917 = vunpack.c.l.b16 %v299
        %v918 = vunpack.c.h.b16 %v299
        %v919 = vunpack.c.l.b16 %v300
        %v920 = vunpack.c.h.b16 %v300
        %v921 = vunpack.c.l.b16 %v301
        %v922 = vunpack.c.h.b16 %v301
        %v923 = vunpack.c.l.b16 %v302
        %v924 = vunpack.c.h.b16 %v302
        %v925 = vunpack.c.l.b16 %v303
        %v926 = vunpack.c.h.b16 %v303
        %v927 = vunpack.c.l.b16 %v304
        %v928 = vunpack.c.h.b16 %v304
        %v929 = vunpack.c.l.b16 %v305
        %v930 = vunpack.c.h.b16 %v305
        %v931 = vunpack.c.l.b16 %v306
        %v932 = vunpack.c.h.b16 %v306
        %v933 = vunpack.c.l.b16 %v307
        %v934 = vunpack.c.h.b16 %v307
        %v935 = vunpack.c.l.b16 %v308
        %v936 = vunpack.c.h.b16 %v308
        %v937 = vunpack.c.l.b16 %v309
        %v938 = vunpack.c.h.b16 %v309
        %v939 = vunpack.c.l.b16 %v310
        %v940 = vunpack.c.h.b16 %v310
        %v941 = vunpack.c.l.b16 %v311
        %v942 = vunpack.c.h.b16 %v311
        %v943 = vunpack.c.l.b16 %v312
        %v944 = vunpack.c.h.b16 %v312
        %v945 = vunpack.c.l.b16 %v313
        %v946 = vunpack.c.h.b16 %v313
        %v947 = vunpack.c.l.b16 %v314
        %v948 = vunpack.c.h.b16 %v314
        %v949 = vunpack.c.l.b16 %v315
        %v950 = vunpack.c.h.b16 %v315
        %v951 = vunpack.c.l.b16 %v316
        %v952 = vunpack.c.h.b16 %v316
        %v953 = vunpack.c.l.b16 %v317
        %v954 = vunpack.c.h.b16 %v317
        %v955 = vunpack.c.l.b16 %v318
        %v956 = vunpack.c.h.b16 %v318
        %v957 = vunpack.c.l.b16 %v319
        %v958 = vunpack.c.h.b16 %v319
        %v959 = vunpack.c.l.b16 %v320
        %v960 = vunpack.c.h.b16 %v320
        %v961 = vunpack.c.l.b16 %v321
        %v962 = vunpack.c.h.b16 %v321
        %v963 = vunpack.c.l.b16 %v322
        %v964 = vunpack.c.h.b16 %v322
        %v965 = vunpack.c.l.b16 %v323
        %v966 = vunpack.c.h.b16 %v323
        %v967 = vunpack.c.l.b16 %v324
        %v968 = vunpack.c.h.b16 %v324
        %v969 = vunpack.c.l.b16 %v325
        %v970 = vunpack.c.h.b16 %v325
        %v971 = vunpack.c.l.b16 %v326
        %v972 = vunpack.c.h.b16 %v326
        %v973 = vunpack.c.l.b16 %v327
        %v974 = vunpack.c.h.b16 %v327
        %v975 = vunpack.c.l.b16 %v328
        %v976 = vunpack.c.h.b16 %v328
        %v977 = vunpack.c.l.b16 %v329
        %v978 = vunpack.c.h.b16 %v329
        %v979 = vunpack.c.l.b16 %v330
        %v980 = vunpack.c.h.b16 %v330
        %v981 = vunpack.c.l.b16 %v331
        %v982 = vunpack.c.h.b16 %v331
        %v983 = vunpack.c.l.b16 %v332
        %v984 = vunpack.c.h.b16 %v332
        %v985 = vunpack.c.l.b16 %v333
        %v986 = vunpack.c.h.b16 %v333
        %v987 = vunpack.c.l.b16 %v334
        %v988 = vunpack.c.h.b16 %v334
        %v989 = vunpack.c.l.b16 %v335
        %v990 = vunpack.c.h.b16 %v335
        %v991 = vunpack.c.l.b16 %v336
        %v992 = vunpack.c.h.b16 %v336
        %v993 = vunpack.c.l.b16 %v337
        %v994 = vunpack.c.h.b16 %v337
        %v995 = vunpack.c.l.b16 %v338
        %v996 = vunpack.c.h.b16 %v338
        %v997 = vunpack.c.l.b16 %v339
        %v998 = vunpack.c.h.b16 %v339
        %v999 = vunpack.c.l.b16 %v340
        %v1000 = vunpack.c.h.b16 %v340
        %v1001 = vunpack.c.l.b16 %v341
        %v1002 = vunpack.c.h.b16 %v341
        %v1003 = vunpack.c.l.b16 %v342
        %v1004 = vunpack.c.h.b16 %v342
        %v1005 = vunpack.c.l.b16 %v343
        %v1006 = vunpack.c.h.b16 %v343
        %v1007 = vunpack.c.l.b16 %v344
        %v1008 = vunpack.c.h.b16 %v344
        %v1009 = vunpack.c.l.b16 %v345
        %v1010 = vunpack.c.h.b16 %v345
        %v1011 = vunpack.c.l.b16 %v346
        %v1012 = vunpack.c.h.b16 %v346
        %v1013 = vunpack.c.l.b16 %v347
        %v1014 = vunpack.c.h.b16 %v347
        %v1015 = vunpack.c.l.b16 %v348
        %v1016 = vunpack.c.h.b16 %v348
        %v1017 = vunpack.c.l.b16 %v349
        %v1018 = vunpack.c.h.b16 %v349
        %v1019 = vunpack.c.l.b16 %v350
        %v1020 = vunpack.c.h.b16 %v350
        %v1021 = vunpack.c.l.b16 %v351
        %v1022 = vunpack.c.h.b16 %v351
        %v1023 = vunpack.c.l.b16 %v352
        %v1024 = vunpack.c.h.b16 %v352
        %v1025 = vunpack.c.l.b16 %v353
        %v1026 = vunpack.c.h.b16 %v353
        %v1027 = vunpack.c.l.b16 %v354
        %v1028 = vunpack.c.h.b16 %v354
        %v1029 = vunpack.c.l.b16 %v355
        %v1030 = vunpack.c.h.b16 %v355
        %v1031 = vunpack.c.l.b16 %v356
        %v1032 = vunpack.c.h.b16 %v356
        %v1033 = vunpack.c.l.b16 %v357
        %v1034 = vunpack.c.h.b16 %v357
        %v1035 = vunpack.c.l.b16 %v358
        %v1036 = vunpack.c.h.b16 %v358
        %v1037 = vunpack.c.l.b16 %v359
        %v1038 = vunpack.c.h.b16 %v359
        %v1039 = vunpack.c.l.b16 %v360
        %v1040 = vunpack.c.h.b16 %v360
        %v1041 = vunpack.c.l.b16 %v361
        %v1042 = vunpack.c.h.b16 %v361
        %v1043 = vunpack.c.l.b16 %v362
        %v1044 = vunpack.c.h.b16 %v362
        %v1045 = vunpack.c.l.b16 %v363
        %v1046 = vunpack.c.h.b16 %v363
        %v1047 = vunpack.c.l.b16 %v364
        %v1048 = vunpack.c.h.b16 %v364
        %v1049 = vunpack.c.l.b16 %v365
        %v1050 = vunpack.c.h.b16 %v365
        %v1051 = vunpack.c.l.b16 %v366
        %v1052 = vunpack.c.h.b16 %v366
        %v1053 = vunpack.c.l.b16 %v367
        %v1054 = vunpack.c.h.b16 %v367
        %v1055 = vunpack.c.l.b16 %v368
        %v1056 = vunpack.c.h.b16 %v368
        %v1057 = vunpack.c.l.b16 %v369
        %v1058 = vunpack.c.h.b16 %v369
        %v1059 = vunpack.c.l.b16 %v370
        %v1060 = vunpack.c.h.b16 %v370
        %v1061 = vunpack.c.l.b16 %v371
        %v1062 = vunpack.c.h.b16 %v371
        %v1063 = vunpack.c.l.b16 %v372
        %v1064 = vunpack.c.h.b16 %v372
        %v1065 = vunpack.c.l.b16 %v373
        %v1066 = vunpack.c.h.b16 %v373
        %v1067 = vunpack.c.l.b16 %v374
        %v1068 = vunpack.c.h.b16 %v374
        %v1069 = vunpack.c.l.b16 %v375
        %v1070 = vunpack.c.h.b16 %v375
        %v1071 = vunpack.c.l.b16 %v376
        %v1072 = vunpack.c.h.b16 %v376
        %v1073 = vunpack.c.l.b16 %v377
        %v1074 = vunpack.c.h.b16 %v377
        %v1075 = vunpack.c.l.b16 %v378
        %v1076 = vunpack.c.h.b16 %v378
        %v1077 = vunpack.c.l.b16 %v379
        %v1078 = vunpack.c.h.b16 %v379
        %v1079 = vunpack.c.l.b16 %v380
        %v1080 = vunpack.c.h.b16 %v380
        %v1081 = vunpack.c.l.b16 %v381
        %v1082 = vunpack.c.h.b16 %v381
        %v1083 = vunpack.c.l.b16 %v382
        %v1084 = vunpack.c.h.b16 %v382
        %v1085 = vunpack.c.l.b16 %v383
        %v1086 = vunpack.c.h.b16 %v383
        %v1087 = vunpack.c.l.b16 %v384
        %v1088 = vunpack.c.h.b16 %v384
        %v1089 = vunpack.c.l.b16 %v385
        %v1090 = vunpack.c.h.b16 %v385
        %v1091 = vunpack.c.l.b16 %v386
        %v1092 = vunpack.c.h.b16 %v386
        %v1093 = vunpack.c.l.b16 %v387
        %v1094 = vunpack.c.h.b16 %v387
        %v1095 = vunpack.c.l.b16 %v388
        %v1096 = vunpack.c.h.b16 %v388
        %v1097 = vunpack.c.l.b16 %v389
        %v1098 = vunpack.c.h.b16 %v389
        %v1099 = vunpack.c.l.b16 %v390
        %v1100 = vunpack.c.h.b16 %v390
        %v1101 = vunpack.c.l.b16 %v391
        %v1102 = vunpack.c.h.b16 %v391
        %v1103 = vunpack.c.l.b16 %v392
        %v1104 = vunpack.c.h.b16 %v392
        %v1105 = vunpack.c.l.b16 %v393
        %v1106 = vunpack.c.h.b16 %v393
        %v1107 = vunpack.c.l.b16 %v394
        %v1108 = vunpack.c.h.b16 %v394
        %v1109 = vunpack.c.l.b16 %v395
        %v1110 = vunpack.c.h.b16 %v395
        %v1111 = vunpack.c.l.b16 %v396
        %v1112 = vunpack.c.h.b16 %v396
        %v1113 = vunpack.c.l.b16 %v397
        %v1114 = vunpack.c.h.b16 %v397
        %v1115 = vunpack.c.l.b16 %v398
        %v1116 = vunpack.c.h.b16 %v398
        %v1117 = vunpack.c.l.b16 %v399
        %v1118 = vunpack.c.h.b16 %v399
        %v1119 = vunpack.c.l.b16 %v400
        %v1120 = vunpack.c.h.b16 %v400
        %v1121 = vunpack.c.l.b16 %v401
        %v1122 = vunpack.c.h.b16 %v401
        %v1123 = vunpack.c.l.b16 %v402
        %v1124 = vunpack.c.h.b16 %v402
        %v1125 = vunpack.c.l.b16 %v403
        %v1126 = vunpack.c.h.b16 %v403
        %v1127 = vunpack.c.l.b16 %v404
        %v1128 = vunpack.c.h.b16 %v404
        %v1129 = vunpack.c.l.b16 %v405
        %v1130 = vunpack.c.h.b16 %v405
        %v1131 = vunpack.c.l.b16 %v406
        %v1132 = vunpack.c.h.b16 %v406
        %v1133 = vunpack.c.l.b16 %v407
        %v1134 = vunpack.c.h.b16 %v407
        %v1135 = vunpack.c.l.b16 %v408
        %v1136 = vunpack.c.h.b16 %v408
        %v1137 = vunpack.c.l.b16 %v409
        %v1138 = vunpack.c.h.b16 %v409
        %v1139 = vunpack.c.l.b16 %v410
        %v1140 = vunpack.c.h.b16 %v410
        %v1141 = vunpack.c.l.b16 %v411
        %v1142 = vunpack.c.h.b16 %v411
        %v1143 = vunpack.c.l.b16 %v412
        %v1144 = vunpack.c.h.b16 %v412
        %v1145 = vunpack.c.l.b16 %v413
        %v1146 = vunpack.c.h.b16 %v413
        %v1147 = vunpack.c.l.b16 %v414
        %v1148 = vunpack.c.h.b16 %v414
        %v1149 = vunpack.c.l.b16 %v415
        %v1150 = vunpack.c.h.b16 %v415
        %v1151 = vunpack.c.l.b16 %v416
        %v1152 = vunpack.c.h.b16 %v416
        %v1153 = vunpack.c.l.b16 %v417
        %v1154 = vunpack.c.h.b16 %v417
        %v1155 = vunpack.c.l.b16 %v418
        %v1156 = vunpack.c.h.b16 %v418
        %v1157 = vunpack.c.l.b16 %v419
        %v1158 = vunpack.c.h.b16 %v419
        %v1159 = vunpack.c.l.b16 %v420
        %v1160 = vunpack.c.h.b16 %v420
        %v1161 = vunpack.c.l.b16 %v421
        %v1162 = vunpack.c.h.b16 %v421
        %v1163 = vunpack.c.l.b16 %v422
        %v1164 = vunpack.c.h.b16 %v422
        %v1165 = vunpack.c.l.b16 %v423
        %v1166 = vunpack.c.h.b16 %v423
        %v1167 = vunpack.c.l.b16 %v424
        %v1168 = vunpack.c.h.b16 %v424
        %v1169 = vunpack.c.l.b16 %v425
        %v1170 = vunpack.c.h.b16 %v425
        %v1171 = vunpack.c.l.b16 %v426
        %v1172 = vunpack.c.h.b16 %v426
        %v1173 = vunpack.c.l.b16 %v427
        %v1174 = vunpack.c.h.b16 %v427
        %v1175 = vunpack.c.l.b16 %v428
        %v1176 = vunpack.c.h.b16 %v428
        %v1177 = vunpack.c.l.b16 %v429
        %v1178 = vunpack.c.h.b16 %v429
        %v1179 = vunpack.c.l.b16 %v430
        %v1180 = vunpack.c.h.b16 %v430
        %v1181 = vunpack.c.l.b16 %v431
        %v1182 = vunpack.c.h.b16 %v431
        %v1183 = vunpack.c.l.b16 %v432
        %v1184 = vunpack.c.h.b16 %v432
        %v1185 = vunpack.c.l.b16 %v433
        %v1186 = vunpack.c.h.b16 %v433
        %v1187 = vunpack.c.l.b16 %v434
        %v1188 = vunpack.c.h.b16 %v434
        %v1189 = vunpack.c.l.b16 %v435
        %v1190 = vunpack.c.h.b16 %v435
        %v1191 = vunpack.c.l.b16 %v436
        %v1192 = vunpack.c.h.b16 %v436
        %v1193 = vunpack.c.l.b16 %v437
        %v1194 = vunpack.c.h.b16 %v437
        %v1195 = vunpack.c.l.b16 %v438
        %v1196 = vunpack.c.h.b16 %v438
        %v1197 = vunpack.c.l.b16 %v439
        %v1198 = vunpack.c.h.b16 %v439
        %v1199 = vunpack.c.l.b16 %v440
        %v1200 = vunpack.c.h.b16 %v440
        %v1201 = vunpack.c.l.b16 %v441
        %v1202 = vunpack.c.h.b16 %v441
        %v1203 = vunpack.c.l.b16 %v442
        %v1204 = vunpack.c.h.b16 %v442
        %v1205 = vunpack.c.l.b16 %v443
        %v1206 = vunpack.c.h.b16 %v443
        %v1207 = vunpack.c.l.b16 %v444
        %v1208 = vunpack.c.h.b16 %v444
        %v1209 = vunpack.c.l.b16 %v445
        %v1210 = vunpack.c.h.b16 %v445
        %v1211 = vunpack.c.l.b16 %v446
        %v1212 = vunpack.c.h.b16 %v446
        %v1213 = vunpack.c.l.b16 %v447
        %v1214 = vunpack.c.h.b16 %v447
        %v1215 = vunpack.c.l.b16 %v448
        %v1216 = vunpack.c.h.b16 %v448
        %v1217 = vunpack.c.l.b16 %v449
        %v1218 = vunpack.c.h.b16 %v449
        %v1219 = vunpack.c.l.b16 %v450
        %v1220 = vunpack.c.h.b16 %v450
        %v1221 = vunpack.c.l.b16 %v451
        %v1222 = vunpack.c.h.b16 %v451
        %v1223 = vunpack.c.l.b16 %v452
        %v1224 = vunpack.c.h.b16 %v452
        %v1225 = vunpack.c.l.b16 %v453
        %v1226 = vunpack.c.h.b16 %v453
        %v1227 = vunpack.c.l.b16 %v454
        %v1228 = vunpack.c.h.b16 %v454
        %v1229 = vunpack.c.l.b16 %v455
        %v1230 = vunpack.c.h.b16 %v455
        %v1231 = vunpack.c.l.b16 %v456
        %v1232 = vunpack.c.h.b16 %v456
        %v1233 = vunpack.c.l.b16 %v457
        %v1234 = vunpack.c.h.b16 %v457
        %v1235 = vunpack.c.l.b16 %v458
        %v1236 = vunpack.c.h.b16 %v458
        %v1237 = vunpack.c.l.b16 %v459
        %v1238 = vunpack.c.h.b16 %v459
        %v1239 = vunpack.c.l.b16 %v460
        %v1240 = vunpack.c.h.b16 %v460
        %v1241 = vunpack.c.l.b16 %v461
        %v1242 = vunpack.c.h.b16 %v461
        %v1243 = vunpack.c.l.b16 %v462
        %v1244 = vunpack.c.h.b16 %v462
        %v1245 = vunpack.c.l.b16 %v463
        %v1246 = vunpack.c.h.b16 %v463
        %v1247 = vunpack.c.l.b16 %v464
        %v1248 = vunpack.c.h.b16 %v464
        %v1249 = vunpack.c.l.b16 %v465
        %v1250 = vunpack.c.h.b16 %v465
        %v1251 = vunpack.c.l.b16 %v466
        %v1252 = vunpack.c.h.b16 %v466
        %v1253 = vunpack.c.l.b16 %v467
        %v1254 = vunpack.c.h.b16 %v467
        %v1255 = vunpack.c.l.b16 %v468
        %v1256 = vunpack.c.h.b16 %v468
        %v1257 = vunpack.c.l.b16 %v469
        %v1258 = vunpack.c.h.b16 %v469
        %v1259 = vunpack.c.l.b16 %v470
        %v1260 = vunpack.c.h.b16 %v470
        %v1261 = vunpack.c.l.b16 %v471
        %v1262 = vunpack.c.h.b16 %v471
        %v1263 = vunpack.c.l.b16 %v472
        %v1264 = vunpack.c.h.b16 %v472
        %v1265 = vunpack.c.l.b16 %v473
        %v1266 = vunpack.c.h.b16 %v473
        %v1267 = vunpack.c.l.b16 %v474
        %v1268 = vunpack.c.h.b16 %v474
        %v1269 = vunpack.c.l.b16 %v475
        %v1270 = vunpack.c.h.b16 %v475
        %v1271 = vunpack.c.l.b16 %v476
        %v1272 = vunpack.c.h.b16 %v476
        %v1273 = vunpack.c.l.b16 %v477
        %v1274 = vunpack.c.h.b16 %v477
        %v1275 = vunpack.c.l.b16 %v478
        %v1276 = vunpack.c.h.b16 %v478
        %v1277 = vunpack.c.l.b16 %v479
        %v1278 = vunpack.c.h.b16 %v479
        %v1279 = vunpack.c.l.b16 %v480
        %v1280 = vunpack.c.h.b16 %v480
        %v1281 = vunpack.c.l.b16 %v481
        %v1282 = vunpack.c.h.b16 %v481
        %v1283 = vunpack.c.l.b16 %v482
        %v1284 = vunpack.c.h.b16 %v482
        %v1285 = vunpack.c.l.b16 %v483
        %v1286 = vunpack.c.h.b16 %v483
        %v1287 = vunpack.c.l.b16 %v484
        %v1288 = vunpack.c.h.b16 %v484
        %v1289 = vunpack.c.l.b16 %v485
        %v1290 = vunpack.c.h.b16 %v485
        %v1291 = vunpack.c.l.b16 %v486
        %v1292 = vunpack.c.h.b16 %v486
        %v1293 = vunpack.c.l.b16 %v487
        %v1294 = vunpack.c.h.b16 %v487
        %v1295 = vunpack.c.l.b16 %v488
        %v1296 = vunpack.c.h.b16 %v488
        %v1297 = vunpack.c.l.b16 %v489
        %v1298 = vunpack.c.h.b16 %v489
        %v1299 = vunpack.c.l.b16 %v490
        %v1300 = vunpack.c.h.b16 %v490
        %v1301 = vunpack.c.l.b16 %v491
        %v1302 = vunpack.c.h.b16 %v491
        %v1303 = vpack.c.b16 %v807, %v791
        %v1304 = vpack.c.b16 %v808, %v792
        %v1305 = vpack.c.b16 %v809, %v793
        %v1306 = vpack.c.b16 %v810, %v794
        %v1307 = vpack.c.b16 %v811, %v795
        %v1308 = vpack.c.b16 %v812, %v796
        %v1309 = vpack.c.b16 %v813, %v797
        %v1310 = vpack.c.b16 %v814, %v798
        %v1311 = vpack.c.b16 %v815, %v799
        %v1312 = vpack.c.b16 %v816, %v800
        %v1313 = vpack.c.b16 %v817, %v801
        %v1314 = vpack.c.b16 %v818, %v802
        %v1315 = vpack.c.b16 %v819, %v803
        %v1316 = vpack.c.b16 %v820, %v804
        %v1317 = vpack.c.b16 %v821, %v805
        %v1318 = vpack.c.b16 %v822, %v806
        %v1319 = vpack.c.b16 %v839, %v823
        %v1320 = vpack.c.b16 %v840, %v824
        %v1321 = vpack.c.b16 %v841, %v825
        %v1322 = vpack.c.b16 %v842, %v826
        %v1323 = vpack.c.b16 %v843, %v827
        %v1324 = vpack.c.b16 %v844, %v828
        %v1325 = vpack.c.b16 %v845, %v829
        %v1326 = vpack.c.b16 %v846, %v830
        %v1327 = vpack.c.b16 %v847, %v831
        %v1328 = vpack.c.b16 %v848, %v832
        %v1329 = vpack.c.b16 %v849, %v833
        %v1330 = vpack.c.b16 %v850, %v834
        %v1331 = vpack.c.b16 %v851, %v835
        %v1332 = vpack.c.b16 %v852, %v836
        %v1333 = vpack.c.b16 %v853, %v837
        %v1334 = vpack.c.b16 %v854, %v838
        %v1335 = vpack.c.b16 %v871, %v855
        %v1336 = vpack.c.b16 %v872, %v856
        %v1337 = vpack.c.b16 %v873, %v857
        %v1338 = vpack.c.b16 %v874, %v858
        %v1339 = vpack.c.b16 %v875, %v859
        %v1340 = vpack.c.b16 %v876, %v860
        %v1341 = vpack.c.b16 %v877, %v861
        %v1342 = vpack.c.b16 %v878, %v862
        %v1343 = vpack.c.b16 %v879, %v863
        %v1344 = vpack.c.b16 %v880, %v864
        %v1345 = vpack.c.b16 %v881, %v865
        %v1346 = vpack.c.b16 %v882, %v866
        %v1347 = vpack.c.b16 %v883, %v867
        %v1348 = vpack.c.b16 %v884, %v868
        %v1349 = vpack.c.b16 %v885, %v869
        %v1350 = vpack.c.b16 %v886, %v870
        %v1351 = vpack.c.b16 %v903, %v887
        %v1352 = vpack.c.b16 %v904, %v888
        %v1353 = vpack.c.b16 %v905, %v889
        %v1354 = vpack.c.b16 %v906, %v890
        %v1355 = vpack.c.b16 %v907, %v891
        %v1356 = vpack.c.b16 %v908, %v892
        %v1357 = vpack.c.b16 %v909, %v893
        %v1358 = vpack.c.b16 %v910, %v894
        %v1359 = vpack.c.b16 %v911, %v895
        %v1360 = vpack.c.b16 %v912, %v896
        %v1361 = vpack.c.b16 %v913, %v897
        %v1362 = vpack.c.b16 %v914, %v898
        %v1363 = vpack.c.b16 %v915, %v899
        %v1364 = vpack.c.b16 %v916, %v900
        %v1365 = vpack.c.b16 %v917, %v901
        %v1366 = vpack.c.b16 %v918, %v902
        %v1367 = vpack.c.b16 %v935, %v919
        %v1368 = vpack.c.b16 %v936, %v920
        %v1369 = vpack.c.b16 %v937, %v921
        %v1370 = vpack.c.b16 %v938, %v922
        %v1371 = vpack.c.b16 %v939, %v923
        %v1372 = vpack.c.b16 %v940, %v924
        %v1373 = vpack.c.b16 %v941, %v925
        %v1374 = vpack.c.b16 %v942, %v926
        %v1375 = vpack.c.b16 %v943, %v927
        %v1376 = vpack.c.b16 %v944, %v928
        %v1377 = vpack.c.b16 %v945, %v929
        %v1378 = vpack.c.b16 %v946, %v930
        %v1379 = vpack.c.b16 %v947, %v931
        %v1380 = vpack.c.b16 %v948, %v932
        %v1381 = vpack.c.b16 %v949, %v933
        %v1382 = vpack.c.b16 %v950, %v934
        %v1383 = vpack.c.b16 %v967, %v951
        %v1384 = vpack.c.b16 %v968, %v952
        %v1385 = vpack.c.b16 %v969, %v953
        %v1386 = vpack.c.b16 %v970, %v954
        %v1387 = vpack.c.b16 %v971, %v955
        %v1388 = vpack.c.b16 %v972, %v956
        %v1389 = vpack.c.b16 %v973, %v957
        %v1390 = vpack.c.b16 %v974, %v958
        %v1391 = vpack.c.b16 %v975, %v959
        %v1392 = vpack.c.b16 %v976, %v960
        %v1393 = vpack.c.b16 %v977, %v961
        %v1394 = vpack.c.b16 %v978, %v962
        %v1395 = vpack.c.b16 %v979, %v963
        %v1396 = vpack.c.b16 %v980, %v964
        %v1397 = vpack.c.b16 %v981, %v965
        %v1398 = vpack.c.b16 %v982, %v966
        %v1399 = vpack.c.b16 %v999, %v983
        %v1400 = vpack.c.b16 %v1000, %v984
        %v1401 = vpack.c.b16 %v1001, %v985
        %v1402 = vpack.c.b16 %v1002, %v986
        %v1403 = vpack.c.b16 %v1003, %v987
        %v1404 = vpack.c.b16 %v1004, %v988
        %v1405 = vpack.c.b16 %v1005, %v989
        %v1406 = vpack.c.b16 %v1006, %v990
        %v1407 = vpack.c.b16 %v1007, %v991
        %v1408 = vpack.c.b16 %v1008, %v992
        %v1409 = vpack.c.b16 %v1009, %v993
        %v1410 = vpack.c.b16 %v1010, %v994
        %v1411 = vpack.c.b16 %v1011, %v995
        %v1412 = vpack.c.b16 %v1012, %v996
        %v1413 = vpack.c.b16 %v1013, %v997
        %v1414 = vpack.c.b16 %v1014, %v998
        %v1415 = vpack.c.b16 %v1031, %v1015
        %v1416 = vpack.c.b16 %v1032, %v1016
        %v1417 = vpack.c.b16 %v1033, %v1017
        %v1418 = vpack.c.b16 %v1034, %v1018
        %v1419 = vpack.c.b16 %v1035, %v1019
        %v1420 = vpack.c.b16 %v1036, %v1020
        %v1421 = vpack.c.b16 %v1037, %v1021
        %v1422 = vpack.c.b16 %v1038, %v1022
        %v1423 = vpack.c.b16 %v1039, %v1023
        %v1424 = vpack.c.b16 %v1040, %v1024
        %v1425 = vpack.c.b16 %v1041, %v1025
        %v1426 = vpack.c.b16 %v1042, %v1026
        %v1427 = vpack.c.b16 %v1043, %v1027
        %v1428 = vpack.c.b16 %v1044, %v1028
        %v1429 = vpack.c.b16 %v1045, %v1029
        %v1430 = vpack.c.b16 %v1046, %v1030
        %v1431 = vpack.c.b16 %v1063, %v1047
        %v1432 = vpack.c.b16 %v1064, %v1048
        %v1433 = vpack.c.b16 %v1065, %v1049
        %v1434 = vpack.c.b16 %v1066, %v1050
        %v1435 = vpack.c.b16 %v1067, %v1051
        %v1436 = vpack.c.b16 %v1068, %v1052
        %v1437 = vpack.c.b16 %v1069, %v1053
        %v1438 = vpack.c.b16 %v1070, %v1054
        %v1439 = vpack.c.b16 %v1071, %v1055
        %v1440 = vpack.c.b16 %v1072, %v1056
        %v1441 = vpack.c.b16 %v1073, %v1057
        %v1442 = vpack.c.b16 %v1074, %v1058
        %v1443 = vpack.c.b16 %v1075, %v1059
        %v1444 = vpack.c.b16 %v1076, %v1060
        %v1445 = vpack.c.b16 %v1077, %v1061
        %v1446 = vpack.c.b16 %v1078, %v1062
        %v1447 = vpack.c.b16 %v1095, %v1079
        %v1448 = vpack.c.b16 %v1096, %v1080
        %v1449 = vpack.c.b16 %v1097, %v1081
        %v1450 = vpack.c.b16 %v1098, %v1082
        %v1451 = vpack.c.b16 %v1099, %v1083
        %v1452 = vpack.c.b16 %v1100, %v1084
        %v1453 = vpack.c.b16 %v1101, %v1085
        %v1454 = vpack.c.b16 %v1102, %v1086
        %v1455 = vpack.c.b16 %v1103, %v1087
        %v1456 = vpack.c.b16 %v1104, %v1088
        %v1457 = vpack.c.b16 %v1105, %v1089
        %v1458 = vpack.c.b16 %v1106, %v1090
        %v1459 = vpack.c.b16 %v1107, %v1091
        %v1460 = vpack.c.b16 %v1108, %v1092
        %v1461 = vpack.c.b16 %v1109, %v1093
        %v1462 = vpack.c.b16 %v1110, %v1094
        %v1463 = vpack.c.b16 %v1127, %v1111
        %v1464 = vpack.c.b16 %v1128, %v1112
        %v1465 = vpack.c.b16 %v1129, %v1113
        %v1466 = vpack.c.b16 %v1130, %v1114
        %v1467 = vpack.c.b16 %v1131, %v1115
        %v1468 = vpack.c.b16 %v1132, %v1116
        %v1469 = vpack.c.b16 %v1133, %v1117
        %v1470 = vpack.c.b16 %v1134, %v1118
        %v1471 = vpack.c.b16 %v1135, %v1119
        %v1472 = vpack.c.b16 %v1136, %v1120
        %v1473 = vpack.c.b16 %v1137, %v1121
        %v1474 = vpack.c.b16 %v1138, %v1122
        %v1475 = vpack.c.b16 %v1139, %v1123
        %v1476 = vpack.c.b16 %v1140, %v1124
        %v1477 = vpack.c.b16 %v1141, %v1125
        %v1478 = vpack.c.b16 %v1142, %v1126
        %v1479 = vpack.c.b16 %v1159, %v1143
        %v1480 = vpack.c.b16 %v1160, %v1144
        %v1481 = vpack.c.b16 %v1161, %v1145
        %v1482 = vpack.c.b16 %v1162, %v1146
        %v1483 = vpack.c.b16 %v1163, %v1147
        %v1484 = vpack.c.b16 %v1164, %v1148
        %v1485 = vpack.c.b16 %v1165, %v1149
        %v1486 = vpack.c.b16 %v1166, %v1150
        %v1487 = vpack.c.b16 %v1167, %v1151
        %v1488 = vpack.c.b16 %v1168, %v1152
        %v1489 = vpack.c.b16 %v1169, %v1153
        %v1490 = vpack.c.b16 %v1170, %v1154
        %v1491 = vpack.c.b16 %v1171, %v1155
        %v1492 = vpack.c.b16 %v1172, %v1156
        %v1493 = vpack.c.b16 %v1173, %v1157
        %v1494 = vpack.c.b16 %v1174, %v1158
        %v1495 = vpack.c.b16 %v1191, %v1175
        %v1496 = vpack.c.b16 %v1192, %v1176
        %v1497 = vpack.c.b16 %v1193, %v1177
        %v1498 = vpack.c.b16 %v1194, %v1178
        %v1499 = vpack.c.b16 %v1195, %v1179
        %v1500 = vpack.c.b16 %v1196, %v1180
        %v1501 = vpack.c.b16 %v1197, %v1181
        %v1502 = vpack.c.b16 %v1198, %v1182
        %v1503 = vpack.c.b16 %v1199, %v1183
        %v1504 = vpack.c.b16 %v1200, %v1184
        %v1505 = vpack.c.b16 %v1201, %v1185
        %v1506 = vpack.c.b16 %v1202, %v1186
        %v1507 = vpack.c.b16 %v1203, %v1187
        %v1508 = vpack.c.b16 %v1204, %v1188
        %v1509 = vpack.c.b16 %v1205, %v1189
        %v1510 = vpack.c.b16 %v1206, %v1190
        %v1511 = vpack.c.b16 %v1223, %v1207
        %v1512 = vpack.c.b16 %v1224, %v1208
        %v1513 = vpack.c.b16 %v1225, %v1209
        %v1514 = vpack.c.b16 %v1226, %v1210
        %v1515 = vpack.c.b16 %v1227, %v1211
        %v1516 = vpack.c.b16 %v1228, %v1212
        %v1517 = vpack.c.b16 %v1229, %v1213
        %v1518 = vpack.c.b16 %v1230, %v1214
        %v1519 = vpack.c.b16 %v1231, %v1215
        %v1520 = vpack.c.b16 %v1232, %v1216
        %v1521 = vpack.c.b16 %v1233, %v1217
        %v1522 = vpack.c.b16 %v1234, %v1218
        %v1523 = vpack.c.b16 %v1235, %v1219
        %v1524 = vpack.c.b16 %v1236, %v1220
        %v1525 = vpack.c.b16 %v1237, %v1221
        %v1526 = vpack.c.b16 %v1238, %v1222
        %v1527 = vpack.c.b16 %v1255, %v1239
        %v1528 = vpack.c.b16 %v1256, %v1240
        %v1529 = vpack.c.b16 %v1257, %v1241
        %v1530 = vpack.c.b16 %v1258, %v1242
        %v1531 = vpack.c.b16 %v1259, %v1243
        %v1532 = vpack.c.b16 %v1260, %v1244
        %v1533 = vpack.c.b16 %v1261, %v1245
        %v1534 = vpack.c.b16 %v1262, %v1246
        %v1535 = vpack.c.b16 %v1263, %v1247
        %v1536 = vpack.c.b16 %v1264, %v1248
        %v1537 = vpack.c.b16 %v1265, %v1249
        %v1538 = vpack.c.b16 %v1266, %v1250
        %v1539 = vpack.c.b16 %v1267, %v1251
        %v1540 = vpack.c.b16 %v1268, %v1252
        %v1541 = vpack.c.b16 %v1269, %v1253
        %v1542 = vpack.c.b16 %v1270, %v1254
        %v1543 = vpack.c.b16 %v1287, %v1271
        %v1544 = vpack.c.b16 %v1288, %v1272
        %v1545 = vpack.c.b16 %v1289, %v1273
        %v1546 = vpack.c.b16 %v1290, %v1274
        %v1547 = vpack.c.b16 %v1291, %v1275
        %v1548 = vpack.c.b16 %v1292, %v1276
        %v1549 = vpack.c.b16 %v1293, %v1277
        %v1550 = vpack.c.b16 %v1294, %v1278
        %v1551 = vpack.c.b16 %v1295, %v1279
        %v1552 = vpack.c.b16 %v1296, %v1280
        %v1553 = vpack.c.b16 %v1297, %v1281
        %v1554 = vpack.c.b16 %v1298, %v1282
        %v1555 = vpack.c.b16 %v1299, %v1283
        %v1556 = vpack.c.b16 %v1300, %v1284
        %v1557 = vpack.c.b16 %v1301, %v1285
        %v1558 = vpack.c.b16 %v1302, %v1286
        %1815 = vmatpush.bf16.msra.mxu0 %v1415
        %1816 = vmatpush.bf16.msra.mxu0 %v1399
        %1817 = vmatpush.bf16.msra.mxu0 %v1383
        %1818 = vmatpush.bf16.msra.mxu0 %v1367
        %1819 = vmatpush.bf16.msra.mxu0 %v1351
        %1820 = vmatpush.bf16.msra.mxu0 %v1335
        %1821 = vmatpush.bf16.msra.mxu0 %v1319
        %1822 = vmatpush.bf16.msra.mxu0 %v1303
        %1823 = vmatmul.bf16.gmra.mxu0 %v531
        %v1824 = vpop.f32.mrf.mxu0
        %v1825 = vadd.f32 %v496, %v1824
        %v1826 = vpop.f32.mrf.mxu0
        %1827 = vdwg.mxu0
        %1828 = vmatpush.bf16.msra.mxu0 %v1543
        %1829 = vmatpush.bf16.msra.mxu0 %v1527
        %1830 = vmatpush.bf16.msra.mxu0 %v1511
        %1831 = vmatpush.bf16.msra.mxu0 %v1495
        %1832 = vmatpush.bf16.msra.mxu0 %v1479
        %1833 = vmatpush.bf16.msra.mxu0 %v1463
        %1834 = vmatpush.bf16.msra.mxu0 %v1447
        %1835 = vmatpush.bf16.msra.mxu0 %v1431
        %1836 = vmatmul.bf16.gmra.mxu0 %v532
        %v1837 = vpop.f32.mrf.mxu0
        %v1838 = vadd.f32 %v1825, %v1837
        %v1839 = vpop.f32.mrf.mxu0
        %1840 = vdwg.mxu0
        %1841 = vmatpush.bf16.msra.mxu0 %v1416
        %1842 = vmatpush.bf16.msra.mxu0 %v1400
        %1843 = vmatpush.bf16.msra.mxu0 %v1384
        %1844 = vmatpush.bf16.msra.mxu0 %v1368
        %1845 = vmatpush.bf16.msra.mxu0 %v1352
        %1846 = vmatpush.bf16.msra.mxu0 %v1336
        %1847 = vmatpush.bf16.msra.mxu0 %v1320
        %1848 = vmatpush.bf16.msra.mxu0 %v1304
        %1849 = vmatmul.bf16.gmra.mxu0 %v531
        %v1850 = vpop.f32.mrf.mxu0
        %v1851 = vadd.f32 %v497, %v1850
        %v1852 = vpop.f32.mrf.mxu0
        %1853 = vdwg.mxu0
        %1854 = vmatpush.bf16.msra.mxu0 %v1544
        %1855 = vmatpush.bf16.msra.mxu0 %v1528
        %1856 = vmatpush.bf16.msra.mxu0 %v1512
        %1857 = vmatpush.bf16.msra.mxu0 %v1496
        %1858 = vmatpush.bf16.msra.mxu0 %v1480
        %1859 = vmatpush.bf16.msra.mxu0 %v1464
        %1860 = vmatpush.bf16.msra.mxu0 %v1448
        %1861 = vmatpush.bf16.msra.mxu0 %v1432
        %1862 = vmatmul.bf16.gmra.mxu0 %v532
        %v1863 = vpop.f32.mrf.mxu0
        %v1864 = vadd.f32 %v1851, %v1863
        %v1865 = vpop.f32.mrf.mxu0
        %1866 = vdwg.mxu0
        %1867 = vmatpush.bf16.msra.mxu0 %v1417
        %1868 = vmatpush.bf16.msra.mxu0 %v1401
        %1869 = vmatpush.bf16.msra.mxu0 %v1385
        %1870 = vmatpush.bf16.msra.mxu0 %v1369
        %1871 = vmatpush.bf16.msra.mxu0 %v1353
        %1872 = vmatpush.bf16.msra.mxu0 %v1337
        %1873 = vmatpush.bf16.msra.mxu0 %v1321
        %1874 = vmatpush.bf16.msra.mxu0 %v1305
        %1875 = vmatmul.bf16.gmra.mxu0 %v531
        %v1876 = vpop.f32.mrf.mxu0
        %v1877 = vadd.f32 %v498, %v1876
        %v1878 = vpop.f32.mrf.mxu0
        %1879 = vdwg.mxu0
        %1880 = vmatpush.bf16.msra.mxu0 %v1545
        %1881 = vmatpush.bf16.msra.mxu0 %v1529
        %1882 = vmatpush.bf16.msra.mxu0 %v1513
        %1883 = vmatpush.bf16.msra.mxu0 %v1497
        %1884 = vmatpush.bf16.msra.mxu0 %v1481
        %1885 = vmatpush.bf16.msra.mxu0 %v1465
        %1886 = vmatpush.bf16.msra.mxu0 %v1449
        %1887 = vmatpush.bf16.msra.mxu0 %v1433
        %1888 = vmatmul.bf16.gmra.mxu0 %v532
        %v1889 = vpop.f32.mrf.mxu0
        %v1890 = vadd.f32 %v1877, %v1889
        %v1891 = vpop.f32.mrf.mxu0
        %1892 = vdwg.mxu0
        %1893 = vmatpush.bf16.msra.mxu0 %v1418
        %1894 = vmatpush.bf16.msra.mxu0 %v1402
        %1895 = vmatpush.bf16.msra.mxu0 %v1386
        %1896 = vmatpush.bf16.msra.mxu0 %v1370
        %1897 = vmatpush.bf16.msra.mxu0 %v1354
        %1898 = vmatpush.bf16.msra.mxu0 %v1338
        %1899 = vmatpush.bf16.msra.mxu0 %v1322
        %1900 = vmatpush.bf16.msra.mxu0 %v1306
        %1901 = vmatmul.bf16.gmra.mxu0 %v531
        %v1902 = vpop.f32.mrf.mxu0
        %v1903 = vadd.f32 %v499, %v1902
        %v1904 = vpop.f32.mrf.mxu0
        %1905 = vdwg.mxu0
        %1906 = vmatpush.bf16.msra.mxu0 %v1546
        %1907 = vmatpush.bf16.msra.mxu0 %v1530
        %1908 = vmatpush.bf16.msra.mxu0 %v1514
        %1909 = vmatpush.bf16.msra.mxu0 %v1498
        %1910 = vmatpush.bf16.msra.mxu0 %v1482
        %1911 = vmatpush.bf16.msra.mxu0 %v1466
        %1912 = vmatpush.bf16.msra.mxu0 %v1450
        %1913 = vmatpush.bf16.msra.mxu0 %v1434
        %1914 = vmatmul.bf16.gmra.mxu0 %v532
        %v1915 = vpop.f32.mrf.mxu0
        %v1916 = vadd.f32 %v1903, %v1915
        %v1917 = vpop.f32.mrf.mxu0
        %1918 = vdwg.mxu0
        %1919 = vmatpush.bf16.msra.mxu0 %v1419
        %1920 = vmatpush.bf16.msra.mxu0 %v1403
        %1921 = vmatpush.bf16.msra.mxu0 %v1387
        %1922 = vmatpush.bf16.msra.mxu0 %v1371
        %1923 = vmatpush.bf16.msra.mxu0 %v1355
        %1924 = vmatpush.bf16.msra.mxu0 %v1339
        %1925 = vmatpush.bf16.msra.mxu0 %v1323
        %1926 = vmatpush.bf16.msra.mxu0 %v1307
        %1927 = vmatmul.bf16.gmra.mxu0 %v531
        %v1928 = vpop.f32.mrf.mxu0
        %v1929 = vadd.f32 %v500, %v1928
        %v1930 = vpop.f32.mrf.mxu0
        %1931 = vdwg.mxu0
        %1932 = vmatpush.bf16.msra.mxu0 %v1547
        %1933 = vmatpush.bf16.msra.mxu0 %v1531
        %1934 = vmatpush.bf16.msra.mxu0 %v1515
        %1935 = vmatpush.bf16.msra.mxu0 %v1499
        %1936 = vmatpush.bf16.msra.mxu0 %v1483
        %1937 = vmatpush.bf16.msra.mxu0 %v1467
        %1938 = vmatpush.bf16.msra.mxu0 %v1451
        %1939 = vmatpush.bf16.msra.mxu0 %v1435
        %1940 = vmatmul.bf16.gmra.mxu0 %v532
        %v1941 = vpop.f32.mrf.mxu0
        %v1942 = vadd.f32 %v1929, %v1941
        %v1943 = vpop.f32.mrf.mxu0
        %1944 = vdwg.mxu0
        %1945 = vmatpush.bf16.msra.mxu0 %v1420
        %1946 = vmatpush.bf16.msra.mxu0 %v1404
        %1947 = vmatpush.bf16.msra.mxu0 %v1388
        %1948 = vmatpush.bf16.msra.mxu0 %v1372
        %1949 = vmatpush.bf16.msra.mxu0 %v1356
        %1950 = vmatpush.bf16.msra.mxu0 %v1340
        %1951 = vmatpush.bf16.msra.mxu0 %v1324
        %1952 = vmatpush.bf16.msra.mxu0 %v1308
        %1953 = vmatmul.bf16.gmra.mxu0 %v531
        %v1954 = vpop.f32.mrf.mxu0
        %v1955 = vadd.f32 %v501, %v1954
        %v1956 = vpop.f32.mrf.mxu0
        %1957 = vdwg.mxu0
        %1958 = vmatpush.bf16.msra.mxu0 %v1548
        %1959 = vmatpush.bf16.msra.mxu0 %v1532
        %1960 = vmatpush.bf16.msra.mxu0 %v1516
        %1961 = vmatpush.bf16.msra.mxu0 %v1500
        %1962 = vmatpush.bf16.msra.mxu0 %v1484
        %1963 = vmatpush.bf16.msra.mxu0 %v1468
        %1964 = vmatpush.bf16.msra.mxu0 %v1452
        %1965 = vmatpush.bf16.msra.mxu0 %v1436
        %1966 = vmatmul.bf16.gmra.mxu0 %v532
        %v1967 = vpop.f32.mrf.mxu0
        %v1968 = vadd.f32 %v1955, %v1967
        %v1969 = vpop.f32.mrf.mxu0
        %1970 = vdwg.mxu0
        %1971 = vmatpush.bf16.msra.mxu0 %v1421
        %1972 = vmatpush.bf16.msra.mxu0 %v1405
        %1973 = vmatpush.bf16.msra.mxu0 %v1389
        %1974 = vmatpush.bf16.msra.mxu0 %v1373
        %1975 = vmatpush.bf16.msra.mxu0 %v1357
        %1976 = vmatpush.bf16.msra.mxu0 %v1341
        %1977 = vmatpush.bf16.msra.mxu0 %v1325
        %1978 = vmatpush.bf16.msra.mxu0 %v1309
        %1979 = vmatmul.bf16.gmra.mxu0 %v531
        %v1980 = vpop.f32.mrf.mxu0
        %v1981 = vadd.f32 %v502, %v1980
        %v1982 = vpop.f32.mrf.mxu0
        %1983 = vdwg.mxu0
        %1984 = vmatpush.bf16.msra.mxu0 %v1549
        %1985 = vmatpush.bf16.msra.mxu0 %v1533
        %1986 = vmatpush.bf16.msra.mxu0 %v1517
        %1987 = vmatpush.bf16.msra.mxu0 %v1501
        %1988 = vmatpush.bf16.msra.mxu0 %v1485
        %1989 = vmatpush.bf16.msra.mxu0 %v1469
        %1990 = vmatpush.bf16.msra.mxu0 %v1453
        %1991 = vmatpush.bf16.msra.mxu0 %v1437
        %1992 = vmatmul.bf16.gmra.mxu0 %v532
        %v1993 = vpop.f32.mrf.mxu0
        %v1994 = vadd.f32 %v1981, %v1993
        %v1995 = vpop.f32.mrf.mxu0
        %1996 = vdwg.mxu0
        %1997 = vmatpush.bf16.msra.mxu0 %v1422
        %1998 = vmatpush.bf16.msra.mxu0 %v1406
        %1999 = vmatpush.bf16.msra.mxu0 %v1390
        %2000 = vmatpush.bf16.msra.mxu0 %v1374
        %2001 = vmatpush.bf16.msra.mxu0 %v1358
        %2002 = vmatpush.bf16.msra.mxu0 %v1342
        %2003 = vmatpush.bf16.msra.mxu0 %v1326
        %2004 = vmatpush.bf16.msra.mxu0 %v1310
        %2005 = vmatmul.bf16.gmra.mxu0 %v531
        %v2006 = vpop.f32.mrf.mxu0
        %v2007 = vadd.f32 %v503, %v2006
        %v2008 = vpop.f32.mrf.mxu0
        %2009 = vdwg.mxu0
        %2010 = vmatpush.bf16.msra.mxu0 %v1550
        %2011 = vmatpush.bf16.msra.mxu0 %v1534
        %2012 = vmatpush.bf16.msra.mxu0 %v1518
        %2013 = vmatpush.bf16.msra.mxu0 %v1502
        %2014 = vmatpush.bf16.msra.mxu0 %v1486
        %2015 = vmatpush.bf16.msra.mxu0 %v1470
        %2016 = vmatpush.bf16.msra.mxu0 %v1454
        %2017 = vmatpush.bf16.msra.mxu0 %v1438
        %2018 = vmatmul.bf16.gmra.mxu0 %v532
        %v2019 = vpop.f32.mrf.mxu0
        %v2020 = vadd.f32 %v2007, %v2019
        %v2021 = vpop.f32.mrf.mxu0
        %2022 = vdwg.mxu0
        %2023 = vmatpush.bf16.msra.mxu0 %v1423
        %2024 = vmatpush.bf16.msra.mxu0 %v1407
        %2025 = vmatpush.bf16.msra.mxu0 %v1391
        %2026 = vmatpush.bf16.msra.mxu0 %v1375
        %2027 = vmatpush.bf16.msra.mxu0 %v1359
        %2028 = vmatpush.bf16.msra.mxu0 %v1343
        %2029 = vmatpush.bf16.msra.mxu0 %v1327
        %2030 = vmatpush.bf16.msra.mxu0 %v1311
        %2031 = vmatmul.bf16.gmra.mxu0 %v531
        %v2032 = vpop.f32.mrf.mxu0
        %v2033 = vadd.f32 %v504, %v2032
        %v2034 = vpop.f32.mrf.mxu0
        %2035 = vdwg.mxu0
        %2036 = vmatpush.bf16.msra.mxu0 %v1551
        %2037 = vmatpush.bf16.msra.mxu0 %v1535
        %2038 = vmatpush.bf16.msra.mxu0 %v1519
        %2039 = vmatpush.bf16.msra.mxu0 %v1503
        %2040 = vmatpush.bf16.msra.mxu0 %v1487
        %2041 = vmatpush.bf16.msra.mxu0 %v1471
        %2042 = vmatpush.bf16.msra.mxu0 %v1455
        %2043 = vmatpush.bf16.msra.mxu0 %v1439
        %2044 = vmatmul.bf16.gmra.mxu0 %v532
        %v2045 = vpop.f32.mrf.mxu0
        %v2046 = vadd.f32 %v2033, %v2045
        %v2047 = vpop.f32.mrf.mxu0
        %2048 = vdwg.mxu0
        %2049 = vmatpush.bf16.msra.mxu0 %v1424
        %2050 = vmatpush.bf16.msra.mxu0 %v1408
        %2051 = vmatpush.bf16.msra.mxu0 %v1392
        %2052 = vmatpush.bf16.msra.mxu0 %v1376
        %2053 = vmatpush.bf16.msra.mxu0 %v1360
        %2054 = vmatpush.bf16.msra.mxu0 %v1344
        %2055 = vmatpush.bf16.msra.mxu0 %v1328
        %2056 = vmatpush.bf16.msra.mxu0 %v1312
        %2057 = vmatmul.bf16.gmra.mxu0 %v531
        %v2058 = vpop.f32.mrf.mxu0
        %v2059 = vadd.f32 %v505, %v2058
        %v2060 = vpop.f32.mrf.mxu0
        %2061 = vdwg.mxu0
        %2062 = vmatpush.bf16.msra.mxu0 %v1552
        %2063 = vmatpush.bf16.msra.mxu0 %v1536
        %2064 = vmatpush.bf16.msra.mxu0 %v1520
        %2065 = vmatpush.bf16.msra.mxu0 %v1504
        %2066 = vmatpush.bf16.msra.mxu0 %v1488
        %2067 = vmatpush.bf16.msra.mxu0 %v1472
        %2068 = vmatpush.bf16.msra.mxu0 %v1456
        %2069 = vmatpush.bf16.msra.mxu0 %v1440
        %2070 = vmatmul.bf16.gmra.mxu0 %v532
        %v2071 = vpop.f32.mrf.mxu0
        %v2072 = vadd.f32 %v2059, %v2071
        %v2073 = vpop.f32.mrf.mxu0
        %2074 = vdwg.mxu0
        %2075 = vmatpush.bf16.msra.mxu0 %v1425
        %2076 = vmatpush.bf16.msra.mxu0 %v1409
        %2077 = vmatpush.bf16.msra.mxu0 %v1393
        %2078 = vmatpush.bf16.msra.mxu0 %v1377
        %2079 = vmatpush.bf16.msra.mxu0 %v1361
        %2080 = vmatpush.bf16.msra.mxu0 %v1345
        %2081 = vmatpush.bf16.msra.mxu0 %v1329
        %2082 = vmatpush.bf16.msra.mxu0 %v1313
        %2083 = vmatmul.bf16.gmra.mxu0 %v531
        %v2084 = vpop.f32.mrf.mxu0
        %v2085 = vadd.f32 %v506, %v2084
        %v2086 = vpop.f32.mrf.mxu0
        %2087 = vdwg.mxu0
        %2088 = vmatpush.bf16.msra.mxu0 %v1553
        %2089 = vmatpush.bf16.msra.mxu0 %v1537
        %2090 = vmatpush.bf16.msra.mxu0 %v1521
        %2091 = vmatpush.bf16.msra.mxu0 %v1505
        %2092 = vmatpush.bf16.msra.mxu0 %v1489
        %2093 = vmatpush.bf16.msra.mxu0 %v1473
        %2094 = vmatpush.bf16.msra.mxu0 %v1457
        %2095 = vmatpush.bf16.msra.mxu0 %v1441
        %2096 = vmatmul.bf16.gmra.mxu0 %v532
        %v2097 = vpop.f32.mrf.mxu0
        %v2098 = vadd.f32 %v2085, %v2097
        %v2099 = vpop.f32.mrf.mxu0
        %2100 = vdwg.mxu0
        %2101 = vmatpush.bf16.msra.mxu0 %v1426
        %2102 = vmatpush.bf16.msra.mxu0 %v1410
        %2103 = vmatpush.bf16.msra.mxu0 %v1394
        %2104 = vmatpush.bf16.msra.mxu0 %v1378
        %2105 = vmatpush.bf16.msra.mxu0 %v1362
        %2106 = vmatpush.bf16.msra.mxu0 %v1346
        %2107 = vmatpush.bf16.msra.mxu0 %v1330
        %2108 = vmatpush.bf16.msra.mxu0 %v1314
        %2109 = vmatmul.bf16.gmra.mxu0 %v531
        %v2110 = vpop.f32.mrf.mxu0
        %v2111 = vadd.f32 %v507, %v2110
        %v2112 = vpop.f32.mrf.mxu0
        %2113 = vdwg.mxu0
        %2114 = vmatpush.bf16.msra.mxu0 %v1554
        %2115 = vmatpush.bf16.msra.mxu0 %v1538
        %2116 = vmatpush.bf16.msra.mxu0 %v1522
        %2117 = vmatpush.bf16.msra.mxu0 %v1506
        %2118 = vmatpush.bf16.msra.mxu0 %v1490
        %2119 = vmatpush.bf16.msra.mxu0 %v1474
        %2120 = vmatpush.bf16.msra.mxu0 %v1458
        %2121 = vmatpush.bf16.msra.mxu0 %v1442
        %2122 = vmatmul.bf16.gmra.mxu0 %v532
        %v2123 = vpop.f32.mrf.mxu0
        %v2124 = vadd.f32 %v2111, %v2123
        %v2125 = vpop.f32.mrf.mxu0
        %2126 = vdwg.mxu0
        %2127 = vmatpush.bf16.msra.mxu0 %v1427
        %2128 = vmatpush.bf16.msra.mxu0 %v1411
        %2129 = vmatpush.bf16.msra.mxu0 %v1395
        %2130 = vmatpush.bf16.msra.mxu0 %v1379
        %2131 = vmatpush.bf16.msra.mxu0 %v1363
        %2132 = vmatpush.bf16.msra.mxu0 %v1347
        %2133 = vmatpush.bf16.msra.mxu0 %v1331
        %2134 = vmatpush.bf16.msra.mxu0 %v1315
        %2135 = vmatmul.bf16.gmra.mxu0 %v531
        %v2136 = vpop.f32.mrf.mxu0
        %v2137 = vadd.f32 %v508, %v2136
        %v2138 = vpop.f32.mrf.mxu0
        %2139 = vdwg.mxu0
        %2140 = vmatpush.bf16.msra.mxu0 %v1555
        %2141 = vmatpush.bf16.msra.mxu0 %v1539
        %2142 = vmatpush.bf16.msra.mxu0 %v1523
        %2143 = vmatpush.bf16.msra.mxu0 %v1507
        %2144 = vmatpush.bf16.msra.mxu0 %v1491
        %2145 = vmatpush.bf16.msra.mxu0 %v1475
        %2146 = vmatpush.bf16.msra.mxu0 %v1459
        %2147 = vmatpush.bf16.msra.mxu0 %v1443
        %2148 = vmatmul.bf16.gmra.mxu0 %v532
        %v2149 = vpop.f32.mrf.mxu0
        %v2150 = vadd.f32 %v2137, %v2149
        %v2151 = vpop.f32.mrf.mxu0
        %2152 = vdwg.mxu0
        %2153 = vmatpush.bf16.msra.mxu0 %v1428
        %2154 = vmatpush.bf16.msra.mxu0 %v1412
        %2155 = vmatpush.bf16.msra.mxu0 %v1396
        %2156 = vmatpush.bf16.msra.mxu0 %v1380
        %2157 = vmatpush.bf16.msra.mxu0 %v1364
        %2158 = vmatpush.bf16.msra.mxu0 %v1348
        %2159 = vmatpush.bf16.msra.mxu0 %v1332
        %2160 = vmatpush.bf16.msra.mxu0 %v1316
        %2161 = vmatmul.bf16.gmra.mxu0 %v531
        %v2162 = vpop.f32.mrf.mxu0
        %v2163 = vadd.f32 %v509, %v2162
        %v2164 = vpop.f32.mrf.mxu0
        %2165 = vdwg.mxu0
        %2166 = vmatpush.bf16.msra.mxu0 %v1556
        %2167 = vmatpush.bf16.msra.mxu0 %v1540
        %2168 = vmatpush.bf16.msra.mxu0 %v1524
        %2169 = vmatpush.bf16.msra.mxu0 %v1508
        %2170 = vmatpush.bf16.msra.mxu0 %v1492
        %2171 = vmatpush.bf16.msra.mxu0 %v1476
        %2172 = vmatpush.bf16.msra.mxu0 %v1460
        %2173 = vmatpush.bf16.msra.mxu0 %v1444
        %2174 = vmatmul.bf16.gmra.mxu0 %v532
        %v2175 = vpop.f32.mrf.mxu0
        %v2176 = vadd.f32 %v2163, %v2175
        %v2177 = vpop.f32.mrf.mxu0
        %2178 = vdwg.mxu0
        %2179 = vmatpush.bf16.msra.mxu0 %v1429
        %2180 = vmatpush.bf16.msra.mxu0 %v1413
        %2181 = vmatpush.bf16.msra.mxu0 %v1397
        %2182 = vmatpush.bf16.msra.mxu0 %v1381
        %2183 = vmatpush.bf16.msra.mxu0 %v1365
        %2184 = vmatpush.bf16.msra.mxu0 %v1349
        %2185 = vmatpush.bf16.msra.mxu0 %v1333
        %2186 = vmatpush.bf16.msra.mxu0 %v1317
        %2187 = vmatmul.bf16.gmra.mxu0 %v531
        %v2188 = vpop.f32.mrf.mxu0
        %v2189 = vadd.f32 %v510, %v2188
        %v2190 = vpop.f32.mrf.mxu0
        %2191 = vdwg.mxu0
        %2192 = vmatpush.bf16.msra.mxu0 %v1557
        %2193 = vmatpush.bf16.msra.mxu0 %v1541
        %2194 = vmatpush.bf16.msra.mxu0 %v1525
        %2195 = vmatpush.bf16.msra.mxu0 %v1509
        %2196 = vmatpush.bf16.msra.mxu0 %v1493
        %2197 = vmatpush.bf16.msra.mxu0 %v1477
        %2198 = vmatpush.bf16.msra.mxu0 %v1461
        %2199 = vmatpush.bf16.msra.mxu0 %v1445
        %2200 = vmatmul.bf16.gmra.mxu0 %v532
        %v2201 = vpop.f32.mrf.mxu0
        %v2202 = vadd.f32 %v2189, %v2201
        %v2203 = vpop.f32.mrf.mxu0
        %2204 = vdwg.mxu0
        %2205 = vmatpush.bf16.msra.mxu0 %v1430
        %2206 = vmatpush.bf16.msra.mxu0 %v1414
        %2207 = vmatpush.bf16.msra.mxu0 %v1398
        %2208 = vmatpush.bf16.msra.mxu0 %v1382
        %2209 = vmatpush.bf16.msra.mxu0 %v1366
        %2210 = vmatpush.bf16.msra.mxu0 %v1350
        %2211 = vmatpush.bf16.msra.mxu0 %v1334
        %2212 = vmatpush.bf16.msra.mxu0 %v1318
        %2213 = vmatmul.bf16.gmra.mxu0 %v531
        %v2214 = vpop.f32.mrf.mxu0
        %v2215 = vadd.f32 %v511, %v2214
        %v2216 = vpop.f32.mrf.mxu0
        %2217 = vdwg.mxu0
        %2218 = vmatpush.bf16.msra.mxu0 %v1558
        %2219 = vmatpush.bf16.msra.mxu0 %v1542
        %2220 = vmatpush.bf16.msra.mxu0 %v1526
        %2221 = vmatpush.bf16.msra.mxu0 %v1510
        %2222 = vmatpush.bf16.msra.mxu0 %v1494
        %2223 = vmatpush.bf16.msra.mxu0 %v1478
        %2224 = vmatpush.bf16.msra.mxu0 %v1462
        %2225 = vmatpush.bf16.msra.mxu0 %v1446
        %2226 = vmatmul.bf16.gmra.mxu0 %v532
        %v2227 = vpop.f32.mrf.mxu0
        %v2228 = vadd.f32 %v2215, %v2227
        %v2229 = vpop.f32.mrf.mxu0
        %2230 = vdwg.mxu0
        %2231 = vst [vmem:[%s233] sm:$0xff] %v1838
        %2232 = vst [vmem:[%s233 + $0x8] sm:$0xff] %v1864
        %2233 = vst [vmem:[%s233 + $0x10] sm:$0xff] %v1890
        %2234 = vst [vmem:[%s233 + $0x18] sm:$0xff] %v1916
        %2235 = vst [vmem:[%s233 + $0x20] sm:$0xff] %v1942
        %2236 = vst [vmem:[%s233 + $0x28] sm:$0xff] %v1968
        %2237 = vst [vmem:[%s233 + $0x30] sm:$0xff] %v1994
        %2238 = vst [vmem:[%s233 + $0x38] sm:$0xff] %v2020
        %2239 = vst [vmem:[%s233 + $0x40] sm:$0xff] %v2046
        %2240 = vst [vmem:[%s233 + $0x48] sm:$0xff] %v2072
        %2241 = vst [vmem:[%s233 + $0x50] sm:$0xff] %v2098
        %2242 = vst [vmem:[%s233 + $0x58] sm:$0xff] %v2124
        %2243 = vst [vmem:[%s233 + $0x60] sm:$0xff] %v2150
        %2244 = vst [vmem:[%s233 + $0x68] sm:$0xff] %v2176
        %2245 = vst [vmem:[%s233 + $0x70] sm:$0xff] %v2202
        %2246 = vst [vmem:[%s233 + $0x78] sm:$0xff] %v2228
        %s2247 = smul.u32 16, %s20
        %p2248 = scmp.lt.s32.totalorder %s2247, 79
        %s2249 = scalar_select %p2248, %s2247, 79
        %s2250 = smul.addr %s2249, 8
        %s2251 = scalar_lea.vmem %s3, %s2250
        // Predicated region
        $region41: #{_lambda_.3} parent=31 // pred_check
          %p2252 = pneg %p111
        $region42: #{_lambda_.3} parent=31 // pred_check_branch
          %2254 = sbr.rel (%p2252) target = $region44
        $region43: #{_lambda_.3} parent=31 // pred_region
          %s2255 = smul.u32 16, %s20
        $region44: #{_lambda_.3} parent=31 // pred_fallthru
          _
      $region32: #{_lambda_.3} parent=5 // pred_fallthru
        _
      %p2256 = scmp.le.s32.totalorder 2, %s15
      // Predicated region
      $region45: #{_lambda_.3} parent=5 // pred_check
        %p2257 = pneg %p2256
      $region46: #{_lambda_.3} parent=5 // pred_check_branch
        %2259 = sbr.rel (%p2257) target = $region48
      $region47: #{_lambda_.3} parent=5 // pred_region
        %s2260 = ssub.s32 %s15, 2
        // Predicated region
        $region49: #{_lambda_.3} parent=47 // pred_check
          %p2261 = pneg %p117
        $region50: #{_lambda_.3} parent=47 // pred_check_branch
          %2263 = sbr.rel (%p2261) target = $region52
        $region51: #{_lambda_.3} parent=47 // pred_region
          %s2264 = smul.u32 16, %s21
          %p2265 = scmp.lt.s32.totalorder %s2264, 79
          %s2266 = scalar_select %p2265, %s2264, 79
          %s2267 = smul.addr %s2266, 8
          %s2268 = scalar_lea.vmem %s3, %s2267
        $region52: #{_lambda_.3} parent=47 // pred_fallthru
          _
      $region48: #{_lambda_.3} parent=5 // pred_fallthru
        _
    $region6: #{_lambda_.3} parent=1 // loop_footer
      %s19 = sadd.s32 1, %s15
    $region7: #{_lambda_.3} parent=1 // loop_footer_branch
      %14 = sbr.rel target = $region3
    $region8: #{_lambda_.3} parent=1 // loop_exit
      _
    %2269 = vsyncpa [#allocation3], 1
    %s2270 = scalar_lea.sflag [#allocation3], 1
    %2271 = vsyncpa %s2270, 1
    %2272 = vsyncpa [#allocation5], 1
    %s2273 = scalar_lea.sflag [#allocation5], 1
    %2274 = vsyncpa %s2273, 1

// kernel: _lambda_.2
$region0: #{_lambda_.2}
  #allocation0 [shape = 'u32[]', space=smem, size = 0x4, offset = 0x4, fixed_abs, tag = 'smem constant byte address 0x4 - core index']
  #allocation1 [shape = 'u32[72,128]{1,0:T(1,128)}', space=vmem, size = 0x9000, scoped, tag = 'internal scratch']
  %s0 = inlined_call_operand.vmem [shape: f32[25,8,192], index: 0, kind: input, shape index: {}]
  %s1 = inlined_call_operand.hbm [shape: f32[192,12], index: 1, kind: input, shape index: {}]
  %s2 = inlined_call_operand.hbm [shape: f32[12,192], index: 2, kind: input, shape index: {}]
  %s3 = inlined_call_operand.hbm [shape: bf16[25,192,512], index: 3, kind: input, shape index: {}]
  %s4 = inlined_call_operand.hbm [shape: f32[1,512], index: 4, kind: input, shape index: {}]
  %s5 = inlined_call_operand.vmem [shape: bf16[8,256], index: 5, kind: output, shape index: {}]
  %s6 = sld [smem:[#allocation0]]
  $region46: #{_lambda_.2} parent=0
    _
  %s8 = ssub.s32 1, %s6
  %s9 = scalar_select 0, %s8, %s6
  $region1: #{_lambda_.2} parent=0
    #allocation2 [shape = 'u8[98304]{0}', space=vmem, size = 0x18000, scoped, tag = 'input window, operand 1, single buffered']
    #allocation3 [shape = 's32[1]{0}', space=sflag, size = 0x4, scoped, tag = 'scoped memory for _lambda_.2']
    #allocation4 [shape = 'u8[16384]{0}', space=vmem, size = 0x4000, scoped, tag = 'input window, operand 2, single buffered']
    #allocation5 [shape = 's32[1]{0}', space=sflag, size = 0x4, scoped, tag = 'scoped memory for _lambda_.2']
    #allocation6 [shape = 'u8[4915200]{0}', space=vmem, size = 0x4b0000, scoped, tag = 'input window, operand 3, single buffered']
    #allocation7 [shape = 'u8[2048]{0}', space=vmem, size = 0x800, scoped, tag = 'input window, operand 4, single buffered']
    #allocation8 [shape = 's32[1]{0}', space=sflag, size = 0x4, scoped, tag = 'scoped memory for _lambda_.2']
    %10 = vsyncpa [#allocation3], 0
    %11 = vsyncpa [#allocation5], 0
    %12 = vsyncpa [#allocation8], 0
    // Predicated region
    $region2: #{_lambda_.2} parent=1 // pred_check
      _
    $region3: #{_lambda_.2} parent=1 // pred_check_branch
      %14 = sbr.rel (0) target = $region5
    $region4: #{_lambda_.2} parent=1 // pred_region
      _
    $region5: #{_lambda_.2} parent=1 // pred_fallthru
      _
    // Predicated region
    $region6: #{_lambda_.2} parent=1 // pred_check
      _
    $region7: #{_lambda_.2} parent=1 // pred_check_branch
      %16 = sbr.rel (0) target = $region9
    $region8: #{_lambda_.2} parent=1 // pred_region
      %18 = vsyncadd [#allocation3], 0
      %s19 = sshll.u32 %s1, 4
      %s20 = int_to_ptr.hbm [resolvable:$true] %s19
      %s21 = sshll.u32 [#allocation2], 4
      %s22 = int_to_ptr.vmem [resolvable:$true] %s21
      %27 = dma.hbm_to_vmem [thread:$0]  %s20, 3072, %s22, [#allocation3], 128, 128, 8
    $region9: #{_lambda_.2} parent=1 // pred_fallthru
      _
    // Predicated region
    $region10: #{_lambda_.2} parent=1 // pred_check
      _
    $region11: #{_lambda_.2} parent=1 // pred_check_branch
      %29 = sbr.rel (0) target = $region13
    $region12: #{_lambda_.2} parent=1 // pred_region
      %31 = vsyncadd [#allocation5], 0
      %s32 = sshll.u32 %s2, 4
      %s33 = int_to_ptr.hbm [resolvable:$true] %s32
      %s34 = sshll.u32 [#allocation4], 4
      %s35 = int_to_ptr.vmem [resolvable:$true] %s34
      %40 = dma.hbm_to_vmem [thread:$0]  %s33, 512, %s35, [#allocation5], 256, 256, 16
    $region13: #{_lambda_.2} parent=1 // pred_fallthru
      _
    // Predicated region
    $region14: #{_lambda_.2} parent=1 // pred_check
      _
    $region15: #{_lambda_.2} parent=1 // pred_check_branch
      %42 = sbr.rel (0) target = $region17
    $region16: #{_lambda_.2} parent=1 // pred_region
      %44 = vsyncadd [#allocation5], 0
      %s45 = sshll.u32 %s3, 4
      %s46 = int_to_ptr.hbm [resolvable:$true] %s45
      %s47 = sshll.u32 [#allocation6], 4
      %s48 = int_to_ptr.vmem [resolvable:$true] %s47
      %53 = dma.hbm_to_vmem [thread:$0]  %s46, 153600, %s48, [#allocation5], 256, 256, 16
    $region17: #{_lambda_.2} parent=1 // pred_fallthru
      _
    // Predicated region
    $region18: #{_lambda_.2} parent=1 // pred_check
      _
    $region19: #{_lambda_.2} parent=1 // pred_check_branch
      %55 = sbr.rel (0) target = $region21
    $region20: #{_lambda_.2} parent=1 // pred_region
      %57 = vsyncadd [#allocation8], 0
      %s59 = sshll.u32 %s4, 4
      %s60 = int_to_ptr.hbm [resolvable:$true] %s59
      %s61 = sshll.u32 [#allocation7], 4
      %s62 = int_to_ptr.vmem [resolvable:$true] %s61
      %64 = dma.hbm_to_vmem [thread:$0]  %s60, 64, %s62, [#allocation8]
    $region21: #{_lambda_.2} parent=1 // pred_fallthru
      _
    // Predicated region
    $region22: #{_lambda_.2} parent=1 // pred_check
      _
    $region23: #{_lambda_.2} parent=1 // pred_check_branch
      %66 = sbr.rel (0) target = $region25
    $region24: #{_lambda_.2} parent=1 // pred_region
      %68 = dma.done [#allocation3], 3072
    $region25: #{_lambda_.2} parent=1 // pred_fallthru
      _
    // Predicated region
    $region26: #{_lambda_.2} parent=1 // pred_check
      _
    $region27: #{_lambda_.2} parent=1 // pred_check_branch
      %70 = sbr.rel (0) target = $region29
    $region28: #{_lambda_.2} parent=1 // pred_region
      %72 = dma.done [#allocation5], 512
    $region29: #{_lambda_.2} parent=1 // pred_fallthru
      _
    // Predicated region
    $region30: #{_lambda_.2} parent=1 // pred_check
      _
    $region31: #{_lambda_.2} parent=1 // pred_check_branch
      %74 = sbr.rel (0) target = $region33
    $region32: #{_lambda_.2} parent=1 // pred_region
      %76 = dma.done [#allocation5], 153600
    $region33: #{_lambda_.2} parent=1 // pred_fallthru
      _
    // Predicated region
    $region34: #{_lambda_.2} parent=1 // pred_check
      _
    $region35: #{_lambda_.2} parent=1 // pred_check_branch
      %78 = sbr.rel (0) target = $region37
    $region36: #{_lambda_.2} parent=1 // pred_region
      %80 = dma.done [#allocation8], 64
    $region37: #{_lambda_.2} parent=1 // pred_fallthru
      _
    %v82 = vld [vmem:[%s0] sm:$0xff]
    %v83 = vld [vmem:[%s0 + $0x8] sm:$0xff]
    %v84 = vld [vmem:[%s0 + $0x10] sm:$0xff]
    %v85 = vld [vmem:[%s0 + $0x18] sm:$0xff]
    %v86 = vld [vmem:[%s0 + $0x20] sm:$0xff]
    %v87 = vld [vmem:[%s0 + $0x28] sm:$0xff]
    %v88 = vld [vmem:[%s0 + $0x30] sm:$0xff]
    %v89 = vld [vmem:[%s0 + $0x38] sm:$0xff]
    %v90 = vld [vmem:[%s0 + $0x40] sm:$0xff]
    %v91 = vld [vmem:[%s0 + $0x48] sm:$0xff]
    %v92 = vld [vmem:[%s0 + $0x50] sm:$0xff]
    %v93 = vld [vmem:[%s0 + $0x58] sm:$0xff]
    %v94 = vld [vmem:[%s0 + $0x60] sm:$0xff]
    %v95 = vld [vmem:[%s0 + $0x68] sm:$0xff]
    %v96 = vld [vmem:[%s0 + $0x70] sm:$0xff]
    %v97 = vld [vmem:[%s0 + $0x78] sm:$0xff]
    %v98 = vld [vmem:[%s0 + $0x80] sm:$0xff]
    %v99 = vld [vmem:[%s0 + $0x88] sm:$0xff]
    %v100 = vld [vmem:[%s0 + $0x90] sm:$0xff]
    %v101 = vld [vmem:[%s0 + $0x98] sm:$0xff]
    %v102 = vld [vmem:[%s0 + $0xa0] sm:$0xff]
    %v103 = vld [vmem:[%s0 + $0xa8] sm:$0xff]
    %v104 = vld [vmem:[%s0 + $0xb0] sm:$0xff]
    %v105 = vld [vmem:[%s0 + $0xb8] sm:$0xff]
    %v106 = vld [vmem:[%s0 + $0xc0] sm:$0xff]
    %v107 = vld [vmem:[%s0 + $0xc8] sm:$0xff]
    %v108 = vld [vmem:[%s0 + $0xd0] sm:$0xff]
    %v109 = vld [vmem:[%s0 + $0xd8] sm:$0xff]
    %v110 = vld [vmem:[%s0 + $0xe0] sm:$0xff]
    %v111 = vld [vmem:[%s0 + $0xe8] sm:$0xff]
    %v112 = vld [vmem:[%s0 + $0xf0] sm:$0xff]
    %v113 = vld [vmem:[%s0 + $0xf8] sm:$0xff]
    %v114 = vld [vmem:[%s0 + $0x100] sm:$0xff]
    %v115 = vld [vmem:[%s0 + $0x108] sm:$0xff]
    %v116 = vld [vmem:[%s0 + $0x110] sm:$0xff]
    %v117 = vld [vmem:[%s0 + $0x118] sm:$0xff]
    %v118 = vld [vmem:[%s0 + $0x120] sm:$0xff]
    %v119 = vld [vmem:[%s0 + $0x128] sm:$0xff]
    %v120 = vld [vmem:[%s0 + $0x130] sm:$0xff]
    %v121 = vld [vmem:[%s0 + $0x138] sm:$0xff]
    %v122 = vld [vmem:[%s0 + $0x140] sm:$0xff]
    %v123 = vld [vmem:[%s0 + $0x148] sm:$0xff]
    %v124 = vld [vmem:[%s0 + $0x150] sm:$0xff]
    %v125 = vld [vmem:[%s0 + $0x158] sm:$0xff]
    %v126 = vld [vmem:[%s0 + $0x160] sm:$0xff]
    %v127 = vld [vmem:[%s0 + $0x168] sm:$0xff]
    %v128 = vld [vmem:[%s0 + $0x170] sm:$0xff]
    %v129 = vld [vmem:[%s0 + $0x178] sm:$0xff]
    %v130 = vld [vmem:[%s0 + $0x180] sm:$0xff]
    %v131 = vld [vmem:[%s0 + $0x188] sm:$0xff]
    %v132 = vld [vmem:[#allocation2] sm:$0xff]
    %v133 = vld [vmem:[#allocation2 + $0x8] sm:$0xff]
    %v134 = vld [vmem:[#allocation2 + $0x10] sm:$0xff]
    %v135 = vld [vmem:[#allocation2 + $0x18] sm:$0xff]
    %v136 = vld [vmem:[#allocation2 + $0x20] sm:$0xff]
    %v137 = vld [vmem:[#allocation2 + $0x28] sm:$0xff]
    %v138 = vld [vmem:[#allocation2 + $0x30] sm:$0xff]
    %v139 = vld [vmem:[#allocation2 + $0x38] sm:$0xff]
    %v140 = vld [vmem:[#allocation2 + $0x40] sm:$0xff]
    %v141 = vld [vmem:[#allocation2 + $0x48] sm:$0xff]
    %v142 = vld [vmem:[#allocation2 + $0x50] sm:$0xff]
    %v143 = vld [vmem:[#allocation2 + $0x58] sm:$0xff]
    %v144 = vld [vmem:[#allocation2 + $0x60] sm:$0xff]
    %v145 = vld [vmem:[#allocation2 + $0x68] sm:$0xff]
    %v146 = vld [vmem:[#allocation2 + $0x70] sm:$0xff]
    %v147 = vld [vmem:[#allocation2 + $0x78] sm:$0xff]
    %v148 = vld [vmem:[#allocation2 + $0x80] sm:$0xff]
    %v149 = vld [vmem:[#allocation2 + $0x88] sm:$0xff]
    %v150 = vld [vmem:[#allocation2 + $0x90] sm:$0xff]
    %v151 = vld [vmem:[#allocation2 + $0x98] sm:$0xff]
    %v152 = vld [vmem:[#allocation2 + $0xa0] sm:$0xff]
    %v153 = vld [vmem:[#allocation2 + $0xa8] sm:$0xff]
    %v154 = vld [vmem:[#allocation2 + $0xb0] sm:$0xff]
    %v155 = vld [vmem:[#allocation2 + $0xb8] sm:$0xff]
    %v156 = vld [vmem:[#allocation4] sm:$0xff]
    %v157 = vld [vmem:[#allocation4 + $0x8] sm:$0xff]
    %v158 = vld [vmem:[#allocation4 + $0x10] sm:$0xf]
    %v159 = vld [vmem:[#allocation4 + $0x18] sm:$0xf]
    %v160 = vadd.f32 %v82, %v84
    %v161 = vadd.f32 %v160, %v86
    %v162 = vadd.f32 %v161, %v88
    %v163 = vadd.f32 %v162, %v90
    %v164 = vadd.f32 %v163, %v92
    %v165 = vadd.f32 %v164, %v94
    %v166 = vadd.f32 %v165, %v96
    %v167 = vadd.f32 %v166, %v98
    %v168 = vadd.f32 %v167, %v100
    %v169 = vadd.f32 %v168, %v102
    %v170 = vadd.f32 %v169, %v104
    %v171 = vadd.f32 %v170, %v106
    %v172 = vadd.f32 %v171, %v108
    %v173 = vadd.f32 %v172, %v110
    %v174 = vadd.f32 %v173, %v112
    %v175 = vadd.f32 %v174, %v114
    %v176 = vadd.f32 %v175, %v116
    %v177 = vadd.f32 %v176, %v118
    %v178 = vadd.f32 %v177, %v120
    %v179 = vadd.f32 %v178, %v122
    %v180 = vadd.f32 %v179, %v124
    %v181 = vadd.f32 %v180, %v126
    %v182 = vadd.f32 %v181, %v128
    %v183 = vadd.f32 %v182, %v130
    %vm184 = vcmask 523264
    %v185 = vsel %vm184, %v83, 0.0
    %v186 = vsel %vm184, %v85, 0.0
    %v187 = vadd.f32 %v185, %v186
    %v188 = vsel %vm184, %v87, 0.0
    %v189 = vadd.f32 %v187, %v188
    %v190 = vsel %vm184, %v89, 0.0
    %v191 = vadd.f32 %v189, %v190
    %v192 = vsel %vm184, %v91, 0.0
    %v193 = vadd.f32 %v191, %v192
    %v194 = vsel %vm184, %v93, 0.0
    %v195 = vadd.f32 %v193, %v194
    %v196 = vsel %vm184, %v95, 0.0
    %v197 = vadd.f32 %v195, %v196
    %v198 = vsel %vm184, %v97, 0.0
    %v199 = vadd.f32 %v197, %v198
    %v200 = vsel %vm184, %v99, 0.0
    %v201 = vadd.f32 %v199, %v200
    %v202 = vsel %vm184, %v101, 0.0
    %v203 = vadd.f32 %v201, %v202
    %v204 = vsel %vm184, %v103, 0.0
    %v205 = vadd.f32 %v203, %v204
    %v206 = vsel %vm184, %v105, 0.0
    %v207 = vadd.f32 %v205, %v206
    %v208 = vsel %vm184, %v107, 0.0
    %v209 = vadd.f32 %v207, %v208
    %v210 = vsel %vm184, %v109, 0.0
    %v211 = vadd.f32 %v209, %v210
    %v212 = vsel %vm184, %v111, 0.0
    %v213 = vadd.f32 %v211, %v212
    %v214 = vsel %vm184, %v113, 0.0
    %v215 = vadd.f32 %v213, %v214
    %v216 = vsel %vm184, %v115, 0.0
    %v217 = vadd.f32 %v215, %v216
    %v218 = vsel %vm184, %v117, 0.0
    %v219 = vadd.f32 %v217, %v218
    %v220 = vsel %vm184, %v119, 0.0
    %v221 = vadd.f32 %v219, %v220
    %v222 = vsel %vm184, %v121, 0.0
    %v223 = vadd.f32 %v221, %v222
    %v224 = vsel %vm184, %v123, 0.0
    %v225 = vadd.f32 %v223, %v224
    %v226 = vsel %vm184, %v125, 0.0
    %v227 = vadd.f32 %v225, %v226
    %v228 = vsel %vm184, %v127, 0.0
    %v229 = vadd.f32 %v227, %v228
    %v230 = vsel %vm184, %v129, 0.0
    %v231 = vadd.f32 %v229, %v230
    %v232 = vsel %vm184, %v131, 0.0
    %v233 = vadd.f32 %v231, %v232
    %v234 = vrcp.pop 25.0
    %v235 = vmul.f32 25.0, %v234
    %v236 = vsub.f32 1.0, %v235
    %v237 = vmul.f32 %v234, %v236
    %v238 = vadd.f32 %v234, %v237
    %vm239 = vweird.f32 %v234
    %v240 = vsel %vm239, %v234, %v238
    %v241 = vmul.f32 %v183, %v240
    %v242 = vmul.f32 %v233, %v240
    %v244 = vsel %vm184, %v242, 0
    %246 = vmatpush.msra.mxu0 %v147
    %247 = vmatpush.msra.mxu0 %v146
    %248 = vmatpush.msra.mxu0 %v145
    %249 = vmatpush.msra.mxu0 %v144
    %250 = vmatpush.msra.mxu0 %v143
    %251 = vmatpush.msra.mxu0 %v142
    %252 = vmatpush.msra.mxu0 %v141
    %253 = vmatpush.msra.mxu0 %v140
    %254 = vmatpush.msra.mxu0 %v139
    %255 = vmatpush.msra.mxu0 %v138
    %256 = vmatpush.msra.mxu0 %v137
    %257 = vmatpush.msra.mxu0 %v136
    %258 = vmatpush.msra.mxu0 %v135
    %259 = vmatpush.msra.mxu0 %v134
    %260 = vmatpush.msra.mxu0 %v133
    %261 = vmatpush.msra.mxu0 %v132
    %262 = vmatmul.f32.gmra.mxu0 %v241
    %v263 = vpop.f32.mrf.mxu0
    %v264 = vadd.f32 0.0, %v263
    %265 = vdwg.mxu0
    %266 = vmatpush.msra.mxu0 0.0
    %267 = vmatpush.msra.mxu0 0.0
    %268 = vmatpush.msra.mxu0 0.0
    %269 = vmatpush.msra.mxu0 0.0
    %270 = vmatpush.msra.mxu0 0.0
    %271 = vmatpush.msra.mxu0 0.0
    %272 = vmatpush.msra.mxu0 0.0
    %273 = vmatpush.msra.mxu0 0.0
    %274 = vmatpush.msra.mxu0 %v155
    %275 = vmatpush.msra.mxu0 %v154
    %276 = vmatpush.msra.mxu0 %v153
    %277 = vmatpush.msra.mxu0 %v152
    %278 = vmatpush.msra.mxu0 %v151
    %279 = vmatpush.msra.mxu0 %v150
    %280 = vmatpush.msra.mxu0 %v149
    %281 = vmatpush.msra.mxu0 %v148
    %282 = vmatmul.f32.gmra.mxu0 %v244
    %v283 = vpop.f32.mrf.mxu0
    %v284 = vadd.f32 %v264, %v283
    %285 = vdwg.mxu0
    %v286 = vmax.f32 %v284, 0.0
    %vm287 = vcmask 97280
    %v289 = vsel %vm287, %v286, 0
    %vm291 = vcmask 1043456
    %v293 = vsel %vm291, %v158, 0
    %v296 = vsel %vm291, %v159, 0
    %298 = vmatpush.msra.mxu0 0.0
    %299 = vmatpush.msra.mxu0 0.0
    %300 = vmatpush.msra.mxu0 0.0
    %301 = vmatpush.msra.mxu0 0.0
    %302 = vmatpush.msra.mxu0 0.0
    %303 = vmatpush.msra.mxu0 0.0
    %304 = vmatpush.msra.mxu0 0.0
    %305 = vmatpush.msra.mxu0 0.0
    %306 = vmatpush.msra.mxu0 0.0
    %307 = vmatpush.msra.mxu0 0.0
    %308 = vmatpush.msra.mxu0 0.0
    %309 = vmatpush.msra.mxu0 0.0
    %310 = vmatpush.msra.mxu0 0.0
    %311 = vmatpush.msra.mxu0 0.0
    %312 = vmatpush.msra.mxu0 %v293
    %313 = vmatpush.msra.mxu0 %v156
    %314 = vmatmul.f32.gmra.mxu0 %v289
    %v315 = vpop.f32.mrf.mxu0
    %v316 = vadd.f32 0.0, %v315
    %317 = vdwg.mxu0
    %318 = vmatpush.msra.mxu0 0.0
    %319 = vmatpush.msra.mxu0 0.0
    %320 = vmatpush.msra.mxu0 0.0
    %321 = vmatpush.msra.mxu0 0.0
    %322 = vmatpush.msra.mxu0 0.0
    %323 = vmatpush.msra.mxu0 0.0
    %324 = vmatpush.msra.mxu0 0.0
    %325 = vmatpush.msra.mxu0 0.0
    %326 = vmatpush.msra.mxu0 0.0
    %327 = vmatpush.msra.mxu0 0.0
    %328 = vmatpush.msra.mxu0 0.0
    %329 = vmatpush.msra.mxu0 0.0
    %330 = vmatpush.msra.mxu0 0.0
    %331 = vmatpush.msra.mxu0 0.0
    %332 = vmatpush.msra.mxu0 %v296
    %333 = vmatpush.msra.mxu0 %v157
    %334 = vmatmul.f32.gmra.mxu0 %v289
    %v335 = vpop.f32.mrf.mxu0
    %v336 = vadd.f32 0.0, %v335
    %337 = vdwg.mxu0
    %v338 = vsub.f32 0.0, %v316
    %v339 = vsub.f32 0.0, %v336
    %v340 = vmul.f32 %v338, 1.442695
    %v341 = vpow.pop %v340
    %v342 = vmul.f32 %v339, 1.442695
    %v343 = vpow.pop %v342
    %v344 = vadd.f32 %v341, 1.0
    %v345 = vadd.f32 %v343, 1.0
    %v346 = vrcp.pop %v344
    %v347 = vmul.f32 %v344, %v346
    %v348 = vsub.f32 1.0, %v347
    %v349 = vmul.f32 %v346, %v348
    %v350 = vadd.f32 %v346, %v349
    %vm351 = vweird.f32 %v344
    %vm352 = vweird.f32 %v346
    %vm353 = vmor %vm351, %vm352
    %v354 = vsel %vm353, %v346, %v350
    %v355 = vand.u32 2147483647, %v344
    %vm356 = vcmp.eq.f32.partialorder %v355, 8.507059e+37
    %v357 = vand.u32 %v344, 2147483648
    %v358 = vor.u32 1.1754944e-38, %v357
    %v359 = vsel %vm356, %v358, %v354
    %v360 = vmul.f32 1.0, %v359
    %v361 = vrcp.pop %v345
    %v362 = vmul.f32 %v345, %v361
    %v363 = vsub.f32 1.0, %v362
    %v364 = vmul.f32 %v361, %v363
    %v365 = vadd.f32 %v361, %v364
    %vm366 = vweird.f32 %v345
    %vm367 = vweird.f32 %v361
    %vm368 = vmor %vm366, %vm367
    %v369 = vsel %vm368, %v361, %v365
    %v370 = vand.u32 2147483647, %v345
    %vm371 = vcmp.eq.f32.partialorder %v370, 8.507059e+37
    %v372 = vand.u32 %v345, 2147483648
    %v373 = vor.u32 1.1754944e-38, %v372
    %v374 = vsel %vm371, %v373, %v369
    %v375 = vmul.f32 1.0, %v374
    %v376 = vadd.f32 %v360, 1.0
    %v377 = vadd.f32 %v375, 1.0
    %v378 = vmul.f32 %v241, %v376
    %v379 = vmul.f32 %v242, %v377
    %v381 = vsel %vm184, %v379, 0
    %383 = vmatpush.msra.mxu0 %v147
    %384 = vmatpush.msra.mxu0 %v146
    %385 = vmatpush.msra.mxu0 %v145
    %386 = vmatpush.msra.mxu0 %v144
    %387 = vmatpush.msra.mxu0 %v143
    %388 = vmatpush.msra.mxu0 %v142
    %389 = vmatpush.msra.mxu0 %v141
    %390 = vmatpush.msra.mxu0 %v140
    %391 = vmatpush.msra.mxu0 %v139
    %392 = vmatpush.msra.mxu0 %v138
    %393 = vmatpush.msra.mxu0 %v137
    %394 = vmatpush.msra.mxu0 %v136
    %395 = vmatpush.msra.mxu0 %v135
    %396 = vmatpush.msra.mxu0 %v134
    %397 = vmatpush.msra.mxu0 %v133
    %398 = vmatpush.msra.mxu0 %v132
    %399 = vmatmul.f32.gmra.mxu0 %v378
    %v400 = vpop.f32.mrf.mxu0
    %v401 = vadd.f32 0.0, %v400
    %402 = vdwg.mxu0
    %403 = vmatpush.msra.mxu0 0.0
    %404 = vmatpush.msra.mxu0 0.0
    %405 = vmatpush.msra.mxu0 0.0
    %406 = vmatpush.msra.mxu0 0.0
    %407 = vmatpush.msra.mxu0 0.0
    %408 = vmatpush.msra.mxu0 0.0
    %409 = vmatpush.msra.mxu0 0.0
    %410 = vmatpush.msra.mxu0 0.0
    %411 = vmatpush.msra.mxu0 %v155
    %412 = vmatpush.msra.mxu0 %v154
    %413 = vmatpush.msra.mxu0 %v153
    %414 = vmatpush.msra.mxu0 %v152
    %415 = vmatpush.msra.mxu0 %v151
    %416 = vmatpush.msra.mxu0 %v150
    %417 = vmatpush.msra.mxu0 %v149
    %418 = vmatpush.msra.mxu0 %v148
    %419 = vmatmul.f32.gmra.mxu0 %v381
    %v420 = vpop.f32.mrf.mxu0
    %v421 = vadd.f32 %v401, %v420
    %422 = vdwg.mxu0
    %v423 = vmax.f32 %v421, 0.0
    %v425 = vsel %vm287, %v423, 0
    %427 = vmatpush.msra.mxu0 0.0
    %428 = vmatpush.msra.mxu0 0.0
    %429 = vmatpush.msra.mxu0 0.0
    %430 = vmatpush.msra.mxu0 0.0
    %431 = vmatpush.msra.mxu0 0.0
    %432 = vmatpush.msra.mxu0 0.0
    %433 = vmatpush.msra.mxu0 0.0
    %434 = vmatpush.msra.mxu0 0.0
    %435 = vmatpush.msra.mxu0 0.0
    %436 = vmatpush.msra.mxu0 0.0
    %437 = vmatpush.msra.mxu0 0.0
    %438 = vmatpush.msra.mxu0 0.0
    %439 = vmatpush.msra.mxu0 0.0
    %440 = vmatpush.msra.mxu0 0.0
    %441 = vmatpush.msra.mxu0 %v293
    %442 = vmatpush.msra.mxu0 %v156
    %443 = vmatmul.f32.gmra.mxu0 %v425
    %v444 = vpop.f32.mrf.mxu0
    %v445 = vadd.f32 0.0, %v444
    %446 = vdwg.mxu0
    %447 = vmatpush.msra.mxu0 0.0
    %448 = vmatpush.msra.mxu0 0.0
    %449 = vmatpush.msra.mxu0 0.0
    %450 = vmatpush.msra.mxu0 0.0
    %451 = vmatpush.msra.mxu0 0.0
    %452 = vmatpush.msra.mxu0 0.0
    %453 = vmatpush.msra.mxu0 0.0
    %454 = vmatpush.msra.mxu0 0.0
    %455 = vmatpush.msra.mxu0 0.0
    %456 = vmatpush.msra.mxu0 0.0
    %457 = vmatpush.msra.mxu0 0.0
    %458 = vmatpush.msra.mxu0 0.0
    %459 = vmatpush.msra.mxu0 0.0
    %460 = vmatpush.msra.mxu0 0.0
    %461 = vmatpush.msra.mxu0 %v296
    %462 = vmatpush.msra.mxu0 %v157
    %463 = vmatmul.f32.gmra.mxu0 %v425
    %v464 = vpop.f32.mrf.mxu0
    %v465 = vadd.f32 0.0, %v464
    %466 = vdwg.mxu0
    %v467 = vsub.f32 0.0, %v445
    %v468 = vsub.f32 0.0, %v465
    %v469 = vmul.f32 %v467, 1.442695
    %v470 = vpow.pop %v469
    %v471 = vmul.f32 %v468, 1.442695
    %v472 = vpow.pop %v471
    %v473 = vadd.f32 %v470, 1.0
    %v474 = vadd.f32 %v472, 1.0
    %v475 = vrcp.pop %v473
    %v476 = vmul.f32 %v473, %v475
    %v477 = vsub.f32 1.0, %v476
    %v478 = vmul.f32 %v475, %v477
    %v479 = vadd.f32 %v475, %v478
    %vm480 = vweird.f32 %v473
    %vm481 = vweird.f32 %v475
    %vm482 = vmor %vm480, %vm481
    %v483 = vsel %vm482, %v475, %v479
    %v484 = vand.u32 2147483647, %v473
    %vm485 = vcmp.eq.f32.partialorder %v484, 8.507059e+37
    %v486 = vand.u32 %v473, 2147483648
    %v487 = vor.u32 1.1754944e-38, %v486
    %v488 = vsel %vm485, %v487, %v483
    %v489 = vmul.f32 1.0, %v488
    %v490 = vrcp.pop %v474
    %v491 = vmul.f32 %v474, %v490
    %v492 = vsub.f32 1.0, %v491
    %v493 = vmul.f32 %v490, %v492
    %v494 = vadd.f32 %v490, %v493
    %vm495 = vweird.f32 %v474
    %vm496 = vweird.f32 %v490
    %vm497 = vmor %vm495, %vm496
    %v498 = vsel %vm497, %v490, %v494
    %v499 = vand.u32 2147483647, %v474
    %vm500 = vcmp.eq.f32.partialorder %v499, 8.507059e+37
    %v501 = vand.u32 %v474, 2147483648
    %v502 = vor.u32 1.1754944e-38, %v501
    %v503 = vsel %vm500, %v502, %v498
    %v504 = vmul.f32 1.0, %v503
    %v505 = vadd.f32 %v489, 1.0
    %v506 = vadd.f32 %v504, 1.0
    %v507 = vmul.f32 %v378, %v505
    %v508 = vmul.f32 %v379, %v506
    %v510 = vsel %vm184, %v508, 0
    %512 = vmatpush.msra.mxu0 %v147
    %513 = vmatpush.msra.mxu0 %v146
    %514 = vmatpush.msra.mxu0 %v145
    %515 = vmatpush.msra.mxu0 %v144
    %516 = vmatpush.msra.mxu0 %v143
    %517 = vmatpush.msra.mxu0 %v142
    %518 = vmatpush.msra.mxu0 %v141
    %519 = vmatpush.msra.mxu0 %v140
    %520 = vmatpush.msra.mxu0 %v139
    %521 = vmatpush.msra.mxu0 %v138
    %522 = vmatpush.msra.mxu0 %v137
    %523 = vmatpush.msra.mxu0 %v136
    %524 = vmatpush.msra.mxu0 %v135
    %525 = vmatpush.msra.mxu0 %v134
    %526 = vmatpush.msra.mxu0 %v133
    %527 = vmatpush.msra.mxu0 %v132
    %528 = vmatmul.f32.gmra.mxu0 %v507
    %v529 = vpop.f32.mrf.mxu0
    %v530 = vadd.f32 0.0, %v529
    %531 = vdwg.mxu0
    %532 = vmatpush.msra.mxu0 0.0
    %533 = vmatpush.msra.mxu0 0.0
    %534 = vmatpush.msra.mxu0 0.0
    %535 = vmatpush.msra.mxu0 0.0
    %536 = vmatpush.msra.mxu0 0.0
    %537 = vmatpush.msra.mxu0 0.0
    %538 = vmatpush.msra.mxu0 0.0
    %539 = vmatpush.msra.mxu0 0.0
    %540 = vmatpush.msra.mxu0 %v155
    %541 = vmatpush.msra.mxu0 %v154
    %542 = vmatpush.msra.mxu0 %v153
    %543 = vmatpush.msra.mxu0 %v152
    %544 = vmatpush.msra.mxu0 %v151
    %545 = vmatpush.msra.mxu0 %v150
    %546 = vmatpush.msra.mxu0 %v149
    %547 = vmatpush.msra.mxu0 %v148
    %548 = vmatmul.f32.gmra.mxu0 %v510
    %v549 = vpop.f32.mrf.mxu0
    %v550 = vadd.f32 %v530, %v549
    %551 = vdwg.mxu0
    %v552 = vmax.f32 %v550, 0.0
    %v554 = vsel %vm287, %v552, 0
    %556 = vmatpush.msra.mxu0 0.0
    %557 = vmatpush.msra.mxu0 0.0
    %558 = vmatpush.msra.mxu0 0.0
    %559 = vmatpush.msra.mxu0 0.0
    %560 = vmatpush.msra.mxu0 0.0
    %561 = vmatpush.msra.mxu0 0.0
    %562 = vmatpush.msra.mxu0 0.0
    %563 = vmatpush.msra.mxu0 0.0
    %564 = vmatpush.msra.mxu0 0.0
    %565 = vmatpush.msra.mxu0 0.0
    %566 = vmatpush.msra.mxu0 0.0
    %567 = vmatpush.msra.mxu0 0.0
    %568 = vmatpush.msra.mxu0 0.0
    %569 = vmatpush.msra.mxu0 0.0
    %570 = vmatpush.msra.mxu0 %v293
    %571 = vmatpush.msra.mxu0 %v156
    %572 = vmatmul.f32.gmra.mxu0 %v554
    %v573 = vpop.f32.mrf.mxu0
    %v574 = vadd.f32 0.0, %v573
    %575 = vdwg.mxu0
    %576 = vmatpush.msra.mxu0 0.0
    %577 = vmatpush.msra.mxu0 0.0
    %578 = vmatpush.msra.mxu0 0.0
    %579 = vmatpush.msra.mxu0 0.0
    %580 = vmatpush.msra.mxu0 0.0
    %581 = vmatpush.msra.mxu0 0.0
    %582 = vmatpush.msra.mxu0 0.0
    %583 = vmatpush.msra.mxu0 0.0
    %584 = vmatpush.msra.mxu0 0.0
    %585 = vmatpush.msra.mxu0 0.0
    %586 = vmatpush.msra.mxu0 0.0
    %587 = vmatpush.msra.mxu0 0.0
    %588 = vmatpush.msra.mxu0 0.0
    %589 = vmatpush.msra.mxu0 0.0
    %590 = vmatpush.msra.mxu0 %v296
    %591 = vmatpush.msra.mxu0 %v157
    %592 = vmatmul.f32.gmra.mxu0 %v554
    %v593 = vpop.f32.mrf.mxu0
    %v594 = vadd.f32 0.0, %v593
    %595 = vdwg.mxu0
    %v596 = vsub.f32 0.0, %v574
    %v597 = vsub.f32 0.0, %v594
    %v598 = vmul.f32 %v596, 1.442695
    %v599 = vpow.pop %v598
    %v600 = vmul.f32 %v597, 1.442695
    %v601 = vpow.pop %v600
    %v602 = vadd.f32 %v599, 1.0
    %v603 = vadd.f32 %v601, 1.0
    %v604 = vrcp.pop %v602
    %v605 = vmul.f32 %v602, %v604
    %v606 = vsub.f32 1.0, %v605
    %v607 = vmul.f32 %v604, %v606
    %v608 = vadd.f32 %v604, %v607
    %vm609 = vweird.f32 %v602
    %vm610 = vweird.f32 %v604
    %vm611 = vmor %vm609, %vm610
    %v612 = vsel %vm611, %v604, %v608
    %v613 = vand.u32 2147483647, %v602
    %vm614 = vcmp.eq.f32.partialorder %v613, 8.507059e+37
    %v615 = vand.u32 %v602, 2147483648
    %v616 = vor.u32 1.1754944e-38, %v615
    %v617 = vsel %vm614, %v616, %v612
    %v618 = vmul.f32 1.0, %v617
    %v619 = vrcp.pop %v603
    %v620 = vmul.f32 %v603, %v619
    %v621 = vsub.f32 1.0, %v620
    %v622 = vmul.f32 %v619, %v621
    %v623 = vadd.f32 %v619, %v622
    %vm624 = vweird.f32 %v603
    %vm625 = vweird.f32 %v619
    %vm626 = vmor %vm624, %vm625
    %v627 = vsel %vm626, %v619, %v623
    %v628 = vand.u32 2147483647, %v603
    %vm629 = vcmp.eq.f32.partialorder %v628, 8.507059e+37
    %v630 = vand.u32 %v603, 2147483648
    %v631 = vor.u32 1.1754944e-38, %v630
    %v632 = vsel %vm629, %v631, %v627
    %v633 = vmul.f32 1.0, %v632
    %v634 = vadd.f32 %v618, 1.0
    %v635 = vadd.f32 %v633, 1.0
    %v636 = vmul.f32 %v376, %v505
    %v637 = vmul.f32 %v377, %v506
    %v638 = vmul.f32 %v636, %v634
    %v639 = vmul.f32 %v637, %v635
    %v640 = vadd.f32 %v638, 1.0
    %v641 = vadd.f32 %v639, 1.0
    %v642 = vmul.f32 %v82, %v640
    %v643 = vmul.f32 %v83, %v641
    %v644 = vpack.c.bf16 %v642, %v642
    %v645 = vpack.c.bf16 %v643, %v643
    %v646 = vld [vmem:[#allocation6] sm:$0xff]
    %v647 = vld [vmem:[#allocation6 + $0x8] sm:$0xff]
    %v648 = vld [vmem:[#allocation6 + $0x10] sm:$0xff]
    %v649 = vld [vmem:[#allocation6 + $0x18] sm:$0xff]
    %v650 = vld [vmem:[#allocation6 + $0x20] sm:$0xff]
    %v651 = vld [vmem:[#allocation6 + $0x28] sm:$0xff]
    %v652 = vld [vmem:[#allocation6 + $0x30] sm:$0xff]
    %v653 = vld [vmem:[#allocation6 + $0x38] sm:$0xff]
    %v654 = vld [vmem:[#allocation6 + $0x40] sm:$0xff]
    %v655 = vld [vmem:[#allocation6 + $0x48] sm:$0xff]
    %v656 = vld [vmem:[#allocation6 + $0x50] sm:$0xff]
    %v657 = vld [vmem:[#allocation6 + $0x58] sm:$0xff]
    %v658 = vld [vmem:[#allocation6 + $0x60] sm:$0xff]
    %v659 = vld [vmem:[#allocation6 + $0x68] sm:$0xff]
    %v660 = vld [vmem:[#allocation6 + $0x70] sm:$0xff]
    %v661 = vld [vmem:[#allocation6 + $0x78] sm:$0xff]
    %v662 = vld [vmem:[#allocation6 + $0x80] sm:$0xff]
    %v663 = vld [vmem:[#allocation6 + $0x88] sm:$0xff]
    %v664 = vld [vmem:[#allocation6 + $0x90] sm:$0xff]
    %v665 = vld [vmem:[#allocation6 + $0x98] sm:$0xff]
    %v666 = vld [vmem:[#allocation6 + $0xa0] sm:$0xff]
    %v667 = vld [vmem:[#allocation6 + $0xa8] sm:$0xff]
    %v668 = vld [vmem:[#allocation6 + $0xb0] sm:$0xff]
    %v669 = vld [vmem:[#allocation6 + $0xb8] sm:$0xff]
    %v670 = vld [vmem:[#allocation6 + $0xc0] sm:$0xff]
    %v671 = vld [vmem:[#allocation6 + $0xc8] sm:$0xff]
    %v672 = vld [vmem:[#allocation6 + $0xd0] sm:$0xff]
    %v673 = vld [vmem:[#allocation6 + $0xd8] sm:$0xff]
    %v674 = vld [vmem:[#allocation6 + $0xe0] sm:$0xff]
    %v675 = vld [vmem:[#allocation6 + $0xe8] sm:$0xff]
    %v676 = vld [vmem:[#allocation6 + $0xf0] sm:$0xff]
    %v677 = vld [vmem:[#allocation6 + $0xf8] sm:$0xff]
    %v678 = vld [vmem:[#allocation6 + $0x100] sm:$0xff]
    %v679 = vld [vmem:[#allocation6 + $0x108] sm:$0xff]
    %v680 = vld [vmem:[#allocation6 + $0x110] sm:$0xff]
    %v681 = vld [vmem:[#allocation6 + $0x118] sm:$0xff]
    %v682 = vld [vmem:[#allocation6 + $0x120] sm:$0xff]
    %v683 = vld [vmem:[#allocation6 + $0x128] sm:$0xff]
    %v684 = vld [vmem:[#allocation6 + $0x130] sm:$0xff]
    %v685 = vld [vmem:[#allocation6 + $0x138] sm:$0xff]
    %v686 = vld [vmem:[#allocation6 + $0x140] sm:$0xff]
    %v687 = vld [vmem:[#allocation6 + $0x148] sm:$0xff]
    %v688 = vld [vmem:[#allocation6 + $0x150] sm:$0xff]
    %v689 = vld [vmem:[#allocation6 + $0x158] sm:$0xff]
    %v690 = vld [vmem:[#allocation6 + $0x160] sm:$0xff]
    %v691 = vld [vmem:[#allocation6 + $0x168] sm:$0xff]
    %v692 = vld [vmem:[#allocation6 + $0x170] sm:$0xff]
    %v693 = vld [vmem:[#allocation6 + $0x178] sm:$0xff]
    %v694 = vmul.f32 %v84, %v640
    %v695 = vmul.f32 %v85, %v641
    %v696 = vpack.c.bf16 %v694, %v694
    %v697 = vpack.c.bf16 %v695, %v695
    %s698 = scalar_lea.vmem [#allocation6], 384
    %v699 = vld [vmem:[%s698] sm:$0xff]
    %v700 = vld [vmem:[%s698 + $0x8] sm:$0xff]
    %v701 = vld [vmem:[%s698 + $0x10] sm:$0xff]
    %v702 = vld [vmem:[%s698 + $0x18] sm:$0xff]
    %v703 = vld [vmem:[%s698 + $0x20] sm:$0xff]
    %v704 = vld [vmem:[%s698 + $0x28] sm:$0xff]
    %v705 = vld [vmem:[%s698 + $0x30] sm:$0xff]
    %v706 = vld [vmem:[%s698 + $0x38] sm:$0xff]
    %v707 = vld [vmem:[%s698 + $0x40] sm:$0xff]
    %v708 = vld [vmem:[%s698 + $0x48] sm:$0xff]
    %v709 = vld [vmem:[%s698 + $0x50] sm:$0xff]
    %v710 = vld [vmem:[%s698 + $0x58] sm:$0xff]
    %v711 = vld [vmem:[%s698 + $0x60] sm:$0xff]
    %v712 = vld [vmem:[%s698 + $0x68] sm:$0xff]
    %v713 = vld [vmem:[%s698 + $0x70] sm:$0xff]
    %v714 = vld [vmem:[%s698 + $0x78] sm:$0xff]
    %v715 = vld [vmem:[%s698 + $0x80] sm:$0xff]
    %v716 = vld [vmem:[%s698 + $0x88] sm:$0xff]
    %v717 = vld [vmem:[%s698 + $0x90] sm:$0xff]
    %v718 = vld [vmem:[%s698 + $0x98] sm:$0xff]
    %v719 = vld [vmem:[%s698 + $0xa0] sm:$0xff]
    %v720 = vld [vmem:[%s698 + $0xa8] sm:$0xff]
    %v721 = vld [vmem:[%s698 + $0xb0] sm:$0xff]
    %v722 = vld [vmem:[%s698 + $0xb8] sm:$0xff]
    %v723 = vld [vmem:[%s698 + $0xc0] sm:$0xff]
    %v724 = vld [vmem:[%s698 + $0xc8] sm:$0xff]
    %v725 = vld [vmem:[%s698 + $0xd0] sm:$0xff]
    %v726 = vld [vmem:[%s698 + $0xd8] sm:$0xff]
    %v727 = vld [vmem:[%s698 + $0xe0] sm:$0xff]
    %v728 = vld [vmem:[%s698 + $0xe8] sm:$0xff]
    %v729 = vld [vmem:[%s698 + $0xf0] sm:$0xff]
    %v730 = vld [vmem:[%s698 + $0xf8] sm:$0xff]
    %v731 = vld [vmem:[%s698 + $0x100] sm:$0xff]
    %v732 = vld [vmem:[%s698 + $0x108] sm:$0xff]
    %v733 = vld [vmem:[%s698 + $0x110] sm:$0xff]
    %v734 = vld [vmem:[%s698 + $0x118] sm:$0xff]
    %v735 = vld [vmem:[%s698 + $0x120] sm:$0xff]
    %v736 = vld [vmem:[%s698 + $0x128] sm:$0xff]
    %v737 = vld [vmem:[%s698 + $0x130] sm:$0xff]
    %v738 = vld [vmem:[%s698 + $0x138] sm:$0xff]
    %v739 = vld [vmem:[%s698 + $0x140] sm:$0xff]
    %v740 = vld [vmem:[%s698 + $0x148] sm:$0xff]
    %v741 = vld [vmem:[%s698 + $0x150] sm:$0xff]
    %v742 = vld [vmem:[%s698 + $0x158] sm:$0xff]
    %v743 = vld [vmem:[%s698 + $0x160] sm:$0xff]
    %v744 = vld [vmem:[%s698 + $0x168] sm:$0xff]
    %v745 = vld [vmem:[%s698 + $0x170] sm:$0xff]
    %v746 = vld [vmem:[%s698 + $0x178] sm:$0xff]
    %v795 = vunpack.c.l.b16 %v699
    %v796 = vunpack.c.h.b16 %v699
    %v797 = vunpack.c.l.b16 %v700
    %v798 = vunpack.c.h.b16 %v700
    %v799 = vunpack.c.l.b16 %v701
    %v800 = vunpack.c.h.b16 %v701
    %v801 = vunpack.c.l.b16 %v702
    %v802 = vunpack.c.h.b16 %v702
    %v803 = vunpack.c.l.b16 %v703
    %v804 = vunpack.c.h.b16 %v703
    %v805 = vunpack.c.l.b16 %v704
    %v806 = vunpack.c.h.b16 %v704
    %v807 = vunpack.c.l.b16 %v705
    %v808 = vunpack.c.h.b16 %v705
    %v809 = vunpack.c.l.b16 %v706
    %v810 = vunpack.c.h.b16 %v706
    %v811 = vunpack.c.l.b16 %v707
    %v812 = vunpack.c.h.b16 %v707
    %v813 = vunpack.c.l.b16 %v708
    %v814 = vunpack.c.h.b16 %v708
    %v815 = vunpack.c.l.b16 %v709
    %v816 = vunpack.c.h.b16 %v709
    %v817 = vunpack.c.l.b16 %v710
    %v818 = vunpack.c.h.b16 %v710
    %v819 = vunpack.c.l.b16 %v711
    %v820 = vunpack.c.h.b16 %v711
    %v821 = vunpack.c.l.b16 %v712
    %v822 = vunpack.c.h.b16 %v712
    %v823 = vunpack.c.l.b16 %v713
    %v824 = vunpack.c.h.b16 %v713
    %v825 = vunpack.c.l.b16 %v714
    %v826 = vunpack.c.h.b16 %v714
    %v827 = vunpack.c.l.b16 %v715
    %v828 = vunpack.c.h.b16 %v715
    %v829 = vunpack.c.l.b16 %v716
    %v830 = vunpack.c.h.b16 %v716
    %v831 = vunpack.c.l.b16 %v717
    %v832 = vunpack.c.h.b16 %v717
    %v833 = vunpack.c.l.b16 %v718
    %v834 = vunpack.c.h.b16 %v718
    %v835 = vunpack.c.l.b16 %v719
    %v836 = vunpack.c.h.b16 %v719
    %v837 = vunpack.c.l.b16 %v720
    %v838 = vunpack.c.h.b16 %v720
    %v839 = vunpack.c.l.b16 %v721
    %v840 = vunpack.c.h.b16 %v721
    %v841 = vunpack.c.l.b16 %v722
    %v842 = vunpack.c.h.b16 %v722
    %v843 = vunpack.c.l.b16 %v723
    %v844 = vunpack.c.h.b16 %v723
    %v845 = vunpack.c.l.b16 %v724
    %v846 = vunpack.c.h.b16 %v724
    %v847 = vunpack.c.l.b16 %v725
    %v848 = vunpack.c.h.b16 %v725
    %v849 = vunpack.c.l.b16 %v726
    %v850 = vunpack.c.h.b16 %v726
    %v851 = vunpack.c.l.b16 %v727
    %v852 = vunpack.c.h.b16 %v727
    %v853 = vunpack.c.l.b16 %v728
    %v854 = vunpack.c.h.b16 %v728
    %v855 = vunpack.c.l.b16 %v729
    %v856 = vunpack.c.h.b16 %v729
    %v857 = vunpack.c.l.b16 %v730
    %v858 = vunpack.c.h.b16 %v730
    %v859 = vunpack.c.l.b16 %v731
    %v860 = vunpack.c.h.b16 %v731
    %v861 = vunpack.c.l.b16 %v732
    %v862 = vunpack.c.h.b16 %v732
    %v863 = vunpack.c.l.b16 %v733
    %v864 = vunpack.c.h.b16 %v733
    %v865 = vunpack.c.l.b16 %v734
    %v866 = vunpack.c.h.b16 %v734
    %v867 = vunpack.c.l.b16 %v735
    %v868 = vunpack.c.h.b16 %v735
    %v869 = vunpack.c.l.b16 %v736
    %v870 = vunpack.c.h.b16 %v736
    %v871 = vunpack.c.l.b16 %v737
    %v872 = vunpack.c.h.b16 %v737
    %v873 = vunpack.c.l.b16 %v738
    %v874 = vunpack.c.h.b16 %v738
    %v875 = vunpack.c.l.b16 %v739
    %v876 = vunpack.c.h.b16 %v739
    %v877 = vunpack.c.l.b16 %v740
    %v878 = vunpack.c.h.b16 %v740
    %v879 = vunpack.c.l.b16 %v741
    %v880 = vunpack.c.h.b16 %v741
    %v881 = vunpack.c.l.b16 %v742
    %v882 = vunpack.c.h.b16 %v742
    %v883 = vunpack.c.l.b16 %v743
    %v884 = vunpack.c.h.b16 %v743
    %v885 = vunpack.c.l.b16 %v744
    %v886 = vunpack.c.h.b16 %v744
    %v887 = vunpack.c.l.b16 %v745
    %v888 = vunpack.c.h.b16 %v745
    %v889 = vunpack.c.l.b16 %v746
    %v890 = vunpack.c.h.b16 %v746
    %v891 = vpack.c.b16 %v799, %v795
    %v892 = vpack.c.b16 %v800, %v796
    %v893 = vpack.c.b16 %v801, %v797
    %v894 = vpack.c.b16 %v802, %v798
    %v895 = vpack.c.b16 %v807, %v803
    %v896 = vpack.c.b16 %v808, %v804
    %v897 = vpack.c.b16 %v809, %v805
    %v898 = vpack.c.b16 %v810, %v806
    %v899 = vpack.c.b16 %v815, %v811
    %v900 = vpack.c.b16 %v816, %v812
    %v901 = vpack.c.b16 %v817, %v813
    %v902 = vpack.c.b16 %v818, %v814
    %v903 = vpack.c.b16 %v823, %v819
    %v904 = vpack.c.b16 %v824, %v820
    %v905 = vpack.c.b16 %v825, %v821
    %v906 = vpack.c.b16 %v826, %v822
    %v907 = vpack.c.b16 %v831, %v827
    %v908 = vpack.c.b16 %v832, %v828
    %v909 = vpack.c.b16 %v833, %v829
    %v910 = vpack.c.b16 %v834, %v830
    %v911 = vpack.c.b16 %v839, %v835
    %v912 = vpack.c.b16 %v840, %v836
    %v913 = vpack.c.b16 %v841, %v837
    %v914 = vpack.c.b16 %v842, %v838
    %v915 = vpack.c.b16 %v847, %v843
    %v916 = vpack.c.b16 %v848, %v844
    %v917 = vpack.c.b16 %v849, %v845
    %v918 = vpack.c.b16 %v850, %v846
    %v919 = vpack.c.b16 %v855, %v851
    %v920 = vpack.c.b16 %v856, %v852
    %v921 = vpack.c.b16 %v857, %v853
    %v922 = vpack.c.b16 %v858, %v854
    %v923 = vpack.c.b16 %v863, %v859
    %v924 = vpack.c.b16 %v864, %v860
    %v925 = vpack.c.b16 %v865, %v861
    %v926 = vpack.c.b16 %v866, %v862
    %v927 = vpack.c.b16 %v871, %v867
    %v928 = vpack.c.b16 %v872, %v868
    %v929 = vpack.c.b16 %v873, %v869
    %v930 = vpack.c.b16 %v874, %v870
    %v931 = vpack.c.b16 %v879, %v875
    %v932 = vpack.c.b16 %v880, %v876
    %v933 = vpack.c.b16 %v881, %v877
    %v934 = vpack.c.b16 %v882, %v878
    %v935 = vpack.c.b16 %v887, %v883
    %v936 = vpack.c.b16 %v888, %v884
    %v937 = vpack.c.b16 %v889, %v885
    %v938 = vpack.c.b16 %v890, %v886
    %v988 = vsel %vm184, %v697, 0
    %990 = vmatpush.bf16.msra.mxu0 %v919
    %991 = vmatpush.bf16.msra.mxu0 %v915
    %992 = vmatpush.bf16.msra.mxu0 %v911
    %993 = vmatpush.bf16.msra.mxu0 %v907
    %994 = vmatpush.bf16.msra.mxu0 %v903
    %995 = vmatpush.bf16.msra.mxu0 %v899
    %996 = vmatpush.bf16.msra.mxu0 %v895
    %997 = vmatpush.bf16.msra.mxu0 %v891
    %998 = vmatmul.bf16.gmra.mxu0 %v696
    %v999 = vpop.f32.mrf.mxu0
    %v1000 = vadd.f32 0.0, %v999
    %v1001 = vpop.f32.mrf.mxu0
    %1002 = vdwg.mxu0
    %1003 = vmatpush.bf16.msra.mxu0 0
    %1004 = vmatpush.bf16.msra.mxu0 0
    %1005 = vmatpush.bf16.msra.mxu0 0
    %1006 = vmatpush.bf16.msra.mxu0 0
    %1007 = vmatpush.bf16.msra.mxu0 %v935
    %1008 = vmatpush.bf16.msra.mxu0 %v931
    %1009 = vmatpush.bf16.msra.mxu0 %v927
    %1010 = vmatpush.bf16.msra.mxu0 %v923
    %1011 = vmatmul.bf16.gmra.mxu0 %v988
    %v1012 = vpop.f32.mrf.mxu0
    %v1013 = vadd.f32 %v1000, %v1012
    %v1014 = vpop.f32.mrf.mxu0
    %1015 = vdwg.mxu0
    %1016 = vmatpush.bf16.msra.mxu0 %v920
    %1017 = vmatpush.bf16.msra.mxu0 %v916
    %1018 = vmatpush.bf16.msra.mxu0 %v912
    %1019 = vmatpush.bf16.msra.mxu0 %v908
    %1020 = vmatpush.bf16.msra.mxu0 %v904
    %1021 = vmatpush.bf16.msra.mxu0 %v900
    %1022 = vmatpush.bf16.msra.mxu0 %v896
    %1023 = vmatpush.bf16.msra.mxu0 %v892
    %1024 = vmatmul.bf16.gmra.mxu0 %v696
    %v1025 = vpop.f32.mrf.mxu0
    %v1026 = vadd.f32 0.0, %v1025
    %v1027 = vpop.f32.mrf.mxu0
    %1028 = vdwg.mxu0
    %1029 = vmatpush.bf16.msra.mxu0 0
    %1030 = vmatpush.bf16.msra.mxu0 0
    %1031 = vmatpush.bf16.msra.mxu0 0
    %1032 = vmatpush.bf16.msra.mxu0 0
    %1033 = vmatpush.bf16.msra.mxu0 %v936
    %1034 = vmatpush.bf16.msra.mxu0 %v932
    %1035 = vmatpush.bf16.msra.mxu0 %v928
    %1036 = vmatpush.bf16.msra.mxu0 %v924
    %1037 = vmatmul.bf16.gmra.mxu0 %v988
    %v1038 = vpop.f32.mrf.mxu0
    %v1039 = vadd.f32 %v1026, %v1038
    %v1040 = vpop.f32.mrf.mxu0
    %1041 = vdwg.mxu0
    %1042 = vmatpush.bf16.msra.mxu0 %v921
    %1043 = vmatpush.bf16.msra.mxu0 %v917
    %1044 = vmatpush.bf16.msra.mxu0 %v913
    %1045 = vmatpush.bf16.msra.mxu0 %v909
    %1046 = vmatpush.bf16.msra.mxu0 %v905
    %1047 = vmatpush.bf16.msra.mxu0 %v901
    %1048 = vmatpush.bf16.msra.mxu0 %v897
    %1049 = vmatpush.bf16.msra.mxu0 %v893
    %1050 = vmatmul.bf16.gmra.mxu0 %v696
    %v1051 = vpop.f32.mrf.mxu0
    %v1052 = vadd.f32 0.0, %v1051
    %v1053 = vpop.f32.mrf.mxu0
    %1054 = vdwg.mxu0
    %1055 = vmatpush.bf16.msra.mxu0 0
    %1056 = vmatpush.bf16.msra.mxu0 0
    %1057 = vmatpush.bf16.msra.mxu0 0
    %1058 = vmatpush.bf16.msra.mxu0 0
    %1059 = vmatpush.bf16.msra.mxu0 %v937
    %1060 = vmatpush.bf16.msra.mxu0 %v933
    %1061 = vmatpush.bf16.msra.mxu0 %v929
    %1062 = vmatpush.bf16.msra.mxu0 %v925
    %1063 = vmatmul.bf16.gmra.mxu0 %v988
    %v1064 = vpop.f32.mrf.mxu0
    %v1065 = vadd.f32 %v1052, %v1064
    %v1066 = vpop.f32.mrf.mxu0
    %1067 = vdwg.mxu0
    %1068 = vmatpush.bf16.msra.mxu0 %v922
    %1069 = vmatpush.bf16.msra.mxu0 %v918
    %1070 = vmatpush.bf16.msra.mxu0 %v914
    %1071 = vmatpush.bf16.msra.mxu0 %v910
    %1072 = vmatpush.bf16.msra.mxu0 %v906
    %1073 = vmatpush.bf16.msra.mxu0 %v902
    %1074 = vmatpush.bf16.msra.mxu0 %v898
    %1075 = vmatpush.bf16.msra.mxu0 %v894
    %1076 = vmatmul.bf16.gmra.mxu0 %v696
    %v1077 = vpop.f32.mrf.mxu0
    %v1078 = vadd.f32 0.0, %v1077
    %v1079 = vpop.f32.mrf.mxu0
    %1080 = vdwg.mxu0
    %1081 = vmatpush.bf16.msra.mxu0 0
    %1082 = vmatpush.bf16.msra.mxu0 0
    %1083 = vmatpush.bf16.msra.mxu0 0
    %1084 = vmatpush.bf16.msra.mxu0 0
    %1085 = vmatpush.bf16.msra.mxu0 %v938
    %1086 = vmatpush.bf16.msra.mxu0 %v934
    %1087 = vmatpush.bf16.msra.mxu0 %v930
    %1088 = vmatpush.bf16.msra.mxu0 %v926
    %1089 = vmatmul.bf16.gmra.mxu0 %v988
    %v1090 = vpop.f32.mrf.mxu0
    %v1091 = vadd.f32 %v1078, %v1090
    %v1092 = vpop.f32.mrf.mxu0
    %1093 = vdwg.mxu0
    %v1142 = vunpack.c.l.b16 %v646
    %v1143 = vunpack.c.h.b16 %v646
    %v1144 = vunpack.c.l.b16 %v647
    %v1145 = vunpack.c.h.b16 %v647
    %v1146 = vunpack.c.l.b16 %v648
    %v1147 = vunpack.c.h.b16 %v648
    %v1148 = vunpack.c.l.b16 %v649
    %v1149 = vunpack.c.h.b16 %v649
    %v1150 = vunpack.c.l.b16 %v650
    %v1151 = vunpack.c.h.b16 %v650
    %v1152 = vunpack.c.l.b16 %v651
    %v1153 = vunpack.c.h.b16 %v651
    %v1154 = vunpack.c.l.b16 %v652
    %v1155 = vunpack.c.h.b16 %v652
    %v1156 = vunpack.c.l.b16 %v653
    %v1157 = vunpack.c.h.b16 %v653
    %v1158 = vunpack.c.l.b16 %v654
    %v1159 = vunpack.c.h.b16 %v654
    %v1160 = vunpack.c.l.b16 %v655
    %v1161 = vunpack.c.h.b16 %v655
    %v1162 = vunpack.c.l.b16 %v656
    %v1163 = vunpack.c.h.b16 %v656
    %v1164 = vunpack.c.l.b16 %v657
    %v1165 = vunpack.c.h.b16 %v657
    %v1166 = vunpack.c.l.b16 %v658
    %v1167 = vunpack.c.h.b16 %v658
    %v1168 = vunpack.c.l.b16 %v659
    %v1169 = vunpack.c.h.b16 %v659
    %v1170 = vunpack.c.l.b16 %v660
    %v1171 = vunpack.c.h.b16 %v660
    %v1172 = vunpack.c.l.b16 %v661
    %v1173 = vunpack.c.h.b16 %v661
    %v1174 = vunpack.c.l.b16 %v662
    %v1175 = vunpack.c.h.b16 %v662
    %v1176 = vunpack.c.l.b16 %v663
    %v1177 = vunpack.c.h.b16 %v663
    %v1178 = vunpack.c.l.b16 %v664
    %v1179 = vunpack.c.h.b16 %v664
    %v1180 = vunpack.c.l.b16 %v665
    %v1181 = vunpack.c.h.b16 %v665
    %v1182 = vunpack.c.l.b16 %v666
    %v1183 = vunpack.c.h.b16 %v666
    %v1184 = vunpack.c.l.b16 %v667
    %v1185 = vunpack.c.h.b16 %v667
    %v1186 = vunpack.c.l.b16 %v668
    %v1187 = vunpack.c.h.b16 %v668
    %v1188 = vunpack.c.l.b16 %v669
    %v1189 = vunpack.c.h.b16 %v669
    %v1190 = vunpack.c.l.b16 %v670
    %v1191 = vunpack.c.h.b16 %v670
    %v1192 = vunpack.c.l.b16 %v671
    %v1193 = vunpack.c.h.b16 %v671
    %v1194 = vunpack.c.l.b16 %v672
    %v1195 = vunpack.c.h.b16 %v672
    %v1196 = vunpack.c.l.b16 %v673
    %v1197 = vunpack.c.h.b16 %v673
    %v1198 = vunpack.c.l.b16 %v674
    %v1199 = vunpack.c.h.b16 %v674
    %v1200 = vunpack.c.l.b16 %v675
    %v1201 = vunpack.c.h.b16 %v675
    %v1202 = vunpack.c.l.b16 %v676
    %v1203 = vunpack.c.h.b16 %v676
    %v1204 = vunpack.c.l.b16 %v677
    %v1205 = vunpack.c.h.b16 %v677
    %v1206 = vunpack.c.l.b16 %v678
    %v1207 = vunpack.c.h.b16 %v678
    %v1208 = vunpack.c.l.b16 %v679
    %v1209 = vunpack.c.h.b16 %v679
    %v1210 = vunpack.c.l.b16 %v680
    %v1211 = vunpack.c.h.b16 %v680
    %v1212 = vunpack.c.l.b16 %v681
    %v1213 = vunpack.c.h.b16 %v681
    %v1214 = vunpack.c.l.b16 %v682
    %v1215 = vunpack.c.h.b16 %v682
    %v1216 = vunpack.c.l.b16 %v683
    %v1217 = vunpack.c.h.b16 %v683
    %v1218 = vunpack.c.l.b16 %v684
    %v1219 = vunpack.c.h.b16 %v684
    %v1220 = vunpack.c.l.b16 %v685
    %v1221 = vunpack.c.h.b16 %v685
    %v1222 = vunpack.c.l.b16 %v686
    %v1223 = vunpack.c.h.b16 %v686
    %v1224 = vunpack.c.l.b16 %v687
    %v1225 = vunpack.c.h.b16 %v687
    %v1226 = vunpack.c.l.b16 %v688
    %v1227 = vunpack.c.h.b16 %v688
    %v1228 = vunpack.c.l.b16 %v689
    %v1229 = vunpack.c.h.b16 %v689
    %v1230 = vunpack.c.l.b16 %v690
    %v1231 = vunpack.c.h.b16 %v690
    %v1232 = vunpack.c.l.b16 %v691
    %v1233 = vunpack.c.h.b16 %v691
    %v1234 = vunpack.c.l.b16 %v692
    %v1235 = vunpack.c.h.b16 %v692
    %v1236 = vunpack.c.l.b16 %v693
    %v1237 = vunpack.c.h.b16 %v693
    %v1238 = vpack.c.b16 %v1146, %v1142
    %v1239 = vpack.c.b16 %v1147, %v1143
    %v1240 = vpack.c.b16 %v1148, %v1144
    %v1241 = vpack.c.b16 %v1149, %v1145
    %v1242 = vpack.c.b16 %v1154, %v1150
    %v1243 = vpack.c.b16 %v1155, %v1151
    %v1244 = vpack.c.b16 %v1156, %v1152
    %v1245 = vpack.c.b16 %v1157, %v1153
    %v1246 = vpack.c.b16 %v1162, %v1158
    %v1247 = vpack.c.b16 %v1163, %v1159
    %v1248 = vpack.c.b16 %v1164, %v1160
    %v1249 = vpack.c.b16 %v1165, %v1161
    %v1250 = vpack.c.b16 %v1170, %v1166
    %v1251 = vpack.c.b16 %v1171, %v1167
    %v1252 = vpack.c.b16 %v1172, %v1168
    %v1253 = vpack.c.b16 %v1173, %v1169
    %v1254 = vpack.c.b16 %v1178, %v1174
    %v1255 = vpack.c.b16 %v1179, %v1175
    %v1256 = vpack.c.b16 %v1180, %v1176
    %v1257 = vpack.c.b16 %v1181, %v1177
    %v1258 = vpack.c.b16 %v1186, %v1182
    %v1259 = vpack.c.b16 %v1187, %v1183
    %v1260 = vpack.c.b16 %v1188, %v1184
    %v1261 = vpack.c.b16 %v1189, %v1185
    %v1262 = vpack.c.b16 %v1194, %v1190
    %v1263 = vpack.c.b16 %v1195, %v1191
    %v1264 = vpack.c.b16 %v1196, %v1192
    %v1265 = vpack.c.b16 %v1197, %v1193
    %v1266 = vpack.c.b16 %v1202, %v1198
    %v1267 = vpack.c.b16 %v1203, %v1199
    %v1268 = vpack.c.b16 %v1204, %v1200
    %v1269 = vpack.c.b16 %v1205, %v1201
    %v1270 = vpack.c.b16 %v1210, %v1206
    %v1271 = vpack.c.b16 %v1211, %v1207
    %v1272 = vpack.c.b16 %v1212, %v1208
    %v1273 = vpack.c.b16 %v1213, %v1209
    %v1274 = vpack.c.b16 %v1218, %v1214
    %v1275 = vpack.c.b16 %v1219, %v1215
    %v1276 = vpack.c.b16 %v1220, %v1216
    %v1277 = vpack.c.b16 %v1221, %v1217
    %v1278 = vpack.c.b16 %v1226, %v1222
    %v1279 = vpack.c.b16 %v1227, %v1223
    %v1280 = vpack.c.b16 %v1228, %v1224
    %v1281 = vpack.c.b16 %v1229, %v1225
    %v1282 = vpack.c.b16 %v1234, %v1230
    %v1283 = vpack.c.b16 %v1235, %v1231
    %v1284 = vpack.c.b16 %v1236, %v1232
    %v1285 = vpack.c.b16 %v1237, %v1233
    %v1335 = vsel %vm184, %v645, 0
    %1337 = vmatpush.bf16.msra.mxu0 %v1266
    %1338 = vmatpush.bf16.msra.mxu0 %v1262
    %1339 = vmatpush.bf16.msra.mxu0 %v1258
    %1340 = vmatpush.bf16.msra.mxu0 %v1254
    %1341 = vmatpush.bf16.msra.mxu0 %v1250
    %1342 = vmatpush.bf16.msra.mxu0 %v1246
    %1343 = vmatpush.bf16.msra.mxu0 %v1242
    %1344 = vmatpush.bf16.msra.mxu0 %v1238
    %1345 = vmatmul.bf16.gmra.mxu0 %v644
    %v1346 = vpop.f32.mrf.mxu0
    %v1347 = vadd.f32 %v1013, %v1346
    %v1348 = vpop.f32.mrf.mxu0
    %1349 = vdwg.mxu0
    %1350 = vmatpush.bf16.msra.mxu0 0
    %1351 = vmatpush.bf16.msra.mxu0 0
    %1352 = vmatpush.bf16.msra.mxu0 0
    %1353 = vmatpush.bf16.msra.mxu0 0
    %1354 = vmatpush.bf16.msra.mxu0 %v1282
    %1355 = vmatpush.bf16.msra.mxu0 %v1278
    %1356 = vmatpush.bf16.msra.mxu0 %v1274
    %1357 = vmatpush.bf16.msra.mxu0 %v1270
    %1358 = vmatmul.bf16.gmra.mxu0 %v1335
    %v1359 = vpop.f32.mrf.mxu0
    %v1360 = vadd.f32 %v1347, %v1359
    %v1361 = vpop.f32.mrf.mxu0
    %1362 = vdwg.mxu0
    %1363 = vmatpush.bf16.msra.mxu0 %v1267
    %1364 = vmatpush.bf16.msra.mxu0 %v1263
    %1365 = vmatpush.bf16.msra.mxu0 %v1259
    %1366 = vmatpush.bf16.msra.mxu0 %v1255
    %1367 = vmatpush.bf16.msra.mxu0 %v1251
    %1368 = vmatpush.bf16.msra.mxu0 %v1247
    %1369 = vmatpush.bf16.msra.mxu0 %v1243
    %1370 = vmatpush.bf16.msra.mxu0 %v1239
    %1371 = vmatmul.bf16.gmra.mxu0 %v644
    %v1372 = vpop.f32.mrf.mxu0
    %v1373 = vadd.f32 %v1039, %v1372
    %v1374 = vpop.f32.mrf.mxu0
    %1375 = vdwg.mxu0
    %1376 = vmatpush.bf16.msra.mxu0 0
    %1377 = vmatpush.bf16.msra.mxu0 0
    %1378 = vmatpush.bf16.msra.mxu0 0
    %1379 = vmatpush.bf16.msra.mxu0 0
    %1380 = vmatpush.bf16.msra.mxu0 %v1283
    %1381 = vmatpush.bf16.msra.mxu0 %v1279
    %1382 = vmatpush.bf16.msra.mxu0 %v1275
    %1383 = vmatpush.bf16.msra.mxu0 %v1271
    %1384 = vmatmul.bf16.gmra.mxu0 %v1335
    %v1385 = vpop.f32.mrf.mxu0
    %v1386 = vadd.f32 %v1373, %v1385
    %v1387 = vpop.f32.mrf.mxu0
    %1388 = vdwg.mxu0
    %1389 = vmatpush.bf16.msra.mxu0 %v1268
    %1390 = vmatpush.bf16.msra.mxu0 %v1264
    %1391 = vmatpush.bf16.msra.mxu0 %v1260
    %1392 = vmatpush.bf16.msra.mxu0 %v1256
    %1393 = vmatpush.bf16.msra.mxu0 %v1252
    %1394 = vmatpush.bf16.msra.mxu0 %v1248
    %1395 = vmatpush.bf16.msra.mxu0 %v1244
    %1396 = vmatpush.bf16.msra.mxu0 %v1240
    %1397 = vmatmul.bf16.gmra.mxu0 %v644
    %v1398 = vpop.f32.mrf.mxu0
    %v1399 = vadd.f32 %v1065, %v1398
    %v1400 = vpop.f32.mrf.mxu0
    %1401 = vdwg.mxu0
    %1402 = vmatpush.bf16.msra.mxu0 0
    %1403 = vmatpush.bf16.msra.mxu0 0
    %1404 = vmatpush.bf16.msra.mxu0 0
    %1405 = vmatpush.bf16.msra.mxu0 0
    %1406 = vmatpush.bf16.msra.mxu0 %v1284
    %1407 = vmatpush.bf16.msra.mxu0 %v1280
    %1408 = vmatpush.bf16.msra.mxu0 %v1276
    %1409 = vmatpush.bf16.msra.mxu0 %v1272
    %1410 = vmatmul.bf16.gmra.mxu0 %v1335
    %v1411 = vpop.f32.mrf.mxu0
    %v1412 = vadd.f32 %v1399, %v1411
    %v1413 = vpop.f32.mrf.mxu0
    %1414 = vdwg.mxu0
    %1415 = vmatpush.bf16.msra.mxu0 %v1269
    %1416 = vmatpush.bf16.msra.mxu0 %v1265
    %1417 = vmatpush.bf16.msra.mxu0 %v1261
    %1418 = vmatpush.bf16.msra.mxu0 %v1257
    %1419 = vmatpush.bf16.msra.mxu0 %v1253
    %1420 = vmatpush.bf16.msra.mxu0 %v1249
    %1421 = vmatpush.bf16.msra.mxu0 %v1245
    %1422 = vmatpush.bf16.msra.mxu0 %v1241
    %1423 = vmatmul.bf16.gmra.mxu0 %v644
    %v1424 = vpop.f32.mrf.mxu0
    %v1425 = vadd.f32 %v1091, %v1424
    %v1426 = vpop.f32.mrf.mxu0
    %1427 = vdwg.mxu0
    %1428 = vmatpush.bf16.msra.mxu0 0
    %1429 = vmatpush.bf16.msra.mxu0 0
    %1430 = vmatpush.bf16.msra.mxu0 0
    %1431 = vmatpush.bf16.msra.mxu0 0
    %1432 = vmatpush.bf16.msra.mxu0 %v1285
    %1433 = vmatpush.bf16.msra.mxu0 %v1281
    %1434 = vmatpush.bf16.msra.mxu0 %v1277
    %1435 = vmatpush.bf16.msra.mxu0 %v1273
    %1436 = vmatmul.bf16.gmra.mxu0 %v1335
    %v1437 = vpop.f32.mrf.mxu0
    %v1438 = vadd.f32 %v1425, %v1437
    %v1439 = vpop.f32.mrf.mxu0
    %1440 = vdwg.mxu0
    %v1441 = vmul.f32 %v86, %v640
    %v1442 = vmul.f32 %v87, %v641
    %v1443 = vpack.c.bf16 %v1441, %v1441
    %v1444 = vpack.c.bf16 %v1442, %v1442
    %s1445 = scalar_lea.vmem [#allocation6], 768
    %v1446 = vld [vmem:[%s1445] sm:$0xff]
    %v1447 = vld [vmem:[%s1445 + $0x8] sm:$0xff]
    %v1448 = vld [vmem:[%s1445 + $0x10] sm:$0xff]
    %v1449 = vld [vmem:[%s1445 + $0x18] sm:$0xff]
    %v1450 = vld [vmem:[%s1445 + $0x20] sm:$0xff]
    %v1451 = vld [vmem:[%s1445 + $0x28] sm:$0xff]
    %v1452 = vld [vmem:[%s1445 + $0x30] sm:$0xff]
    %v1453 = vld [vmem:[%s1445 + $0x38] sm:$0xff]
    %v1454 = vld [vmem:[%s1445 + $0x40] sm:$0xff]
    %v1455 = vld [vmem:[%s1445 + $0x48] sm:$0xff]
    %v1456 = vld [vmem:[%s1445 + $0x50] sm:$0xff]
    %v1457 = vld [vmem:[%s1445 + $0x58] sm:$0xff]
    %v1458 = vld [vmem:[%s1445 + $0x60] sm:$0xff]
    %v1459 = vld [vmem:[%s1445 + $0x68] sm:$0xff]
    %v1460 = vld [vmem:[%s1445 + $0x70] sm:$0xff]
    %v1461 = vld [vmem:[%s1445 + $0x78] sm:$0xff]
    %v1462 = vld [vmem:[%s1445 + $0x80] sm:$0xff]
    %v1463 = vld [vmem:[%s1445 + $0x88] sm:$0xff]
    %v1464 = vld [vmem:[%s1445 + $0x90] sm:$0xff]
    %v1465 = vld [vmem:[%s1445 + $0x98] sm:$0xff]
    %v1466 = vld [vmem:[%s1445 + $0xa0] sm:$0xff]
    %v1467 = vld [vmem:[%s1445 + $0xa8] sm:$0xff]
    %v1468 = vld [vmem:[%s1445 + $0xb0] sm:$0xff]
    %v1469 = vld [vmem:[%s1445 + $0xb8] sm:$0xff]
    %v1470 = vld [vmem:[%s1445 + $0xc0] sm:$0xff]
    %v1471 = vld [vmem:[%s1445 + $0xc8] sm:$0xff]
    %v1472 = vld [vmem:[%s1445 + $0xd0] sm:$0xff]
    %v1473 = vld [vmem:[%s1445 + $0xd8] sm:$0xff]
    %v1474 = vld [vmem:[%s1445 + $0xe0] sm:$0xff]
    %v1475 = vld [vmem:[%s1445 + $0xe8] sm:$0xff]
    %v1476 = vld [vmem:[%s1445 + $0xf0] sm:$0xff]
    %v1477 = vld [vmem:[%s1445 + $0xf8] sm:$0xff]
    %v1478 = vld [vmem:[%s1445 + $0x100] sm:$0xff]
    %v1479 = vld [vmem:[%s1445 + $0x108] sm:$0xff]
    %v1480 = vld [vmem:[%s1445 + $0x110] sm:$0xff]
    %v1481 = vld [vmem:[%s1445 + $0x118] sm:$0xff]
    %v1482 = vld [vmem:[%s1445 + $0x120] sm:$0xff]
    %v1483 = vld [vmem:[%s1445 + $0x128] sm:$0xff]
    %v1484 = vld [vmem:[%s1445 + $0x130] sm:$0xff]
    %v1485 = vld [vmem:[%s1445 + $0x138] sm:$0xff]
    %v1486 = vld [vmem:[%s1445 + $0x140] sm:$0xff]
    %v1487 = vld [vmem:[%s1445 + $0x148] sm:$0xff]
    %v1488 = vld [vmem:[%s1445 + $0x150] sm:$0xff]
    %v1489 = vld [vmem:[%s1445 + $0x158] sm:$0xff]
    %v1490 = vld [vmem:[%s1445 + $0x160] sm:$0xff]
    %v1491 = vld [vmem:[%s1445 + $0x168] sm:$0xff]
    %v1492 = vld [vmem:[%s1445 + $0x170] sm:$0xff]
    %v1493 = vld [vmem:[%s1445 + $0x178] sm:$0xff]
    %v1542 = vunpack.c.l.b16 %v1446
    %v1543 = vunpack.c.h.b16 %v1446
    %v1544 = vunpack.c.l.b16 %v1447
    %v1545 = vunpack.c.h.b16 %v1447
    %v1546 = vunpack.c.l.b16 %v1448
    %v1547 = vunpack.c.h.b16 %v1448
    %v1548 = vunpack.c.l.b16 %v1449
    %v1549 = vunpack.c.h.b16 %v1449
    %v1550 = vunpack.c.l.b16 %v1450
    %v1551 = vunpack.c.h.b16 %v1450
    %v1552 = vunpack.c.l.b16 %v1451
    %v1553 = vunpack.c.h.b16 %v1451
    %v1554 = vunpack.c.l.b16 %v1452
    %v1555 = vunpack.c.h.b16 %v1452
    %v1556 = vunpack.c.l.b16 %v1453
    %v1557 = vunpack.c.h.b16 %v1453
    %v1558 = vunpack.c.l.b16 %v1454
    %v1559 = vunpack.c.h.b16 %v1454
    %v1560 = vunpack.c.l.b16 %v1455
    %v1561 = vunpack.c.h.b16 %v1455
    %v1562 = vunpack.c.l.b16 %v1456
    %v1563 = vunpack.c.h.b16 %v1456
    %v1564 = vunpack.c.l.b16 %v1457
    %v1565 = vunpack.c.h.b16 %v1457
    %v1566 = vunpack.c.l.b16 %v1458
    %v1567 = vunpack.c.h.b16 %v1458
    %v1568 = vunpack.c.l.b16 %v1459
    %v1569 = vunpack.c.h.b16 %v1459
    %v1570 = vunpack.c.l.b16 %v1460
    %v1571 = vunpack.c.h.b16 %v1460
    %v1572 = vunpack.c.l.b16 %v1461
    %v1573 = vunpack.c.h.b16 %v1461
    %v1574 = vunpack.c.l.b16 %v1462
    %v1575 = vunpack.c.h.b16 %v1462
    %v1576 = vunpack.c.l.b16 %v1463
    %v1577 = vunpack.c.h.b16 %v1463
    %v1578 = vunpack.c.l.b16 %v1464
    %v1579 = vunpack.c.h.b16 %v1464
    %v1580 = vunpack.c.l.b16 %v1465
    %v1581 = vunpack.c.h.b16 %v1465
    %v1582 = vunpack.c.l.b16 %v1466
    %v1583 = vunpack.c.h.b16 %v1466
    %v1584 = vunpack.c.l.b16 %v1467
    %v1585 = vunpack.c.h.b16 %v1467
    %v1586 = vunpack.c.l.b16 %v1468
    %v1587 = vunpack.c.h.b16 %v1468
    %v1588 = vunpack.c.l.b16 %v1469
    %v1589 = vunpack.c.h.b16 %v1469
    %v1590 = vunpack.c.l.b16 %v1470
    %v1591 = vunpack.c.h.b16 %v1470
    %v1592 = vunpack.c.l.b16 %v1471
    %v1593 = vunpack.c.h.b16 %v1471
    %v1594 = vunpack.c.l.b16 %v1472
    %v1595 = vunpack.c.h.b16 %v1472
    %v1596 = vunpack.c.l.b16 %v1473
    %v1597 = vunpack.c.h.b16 %v1473
    %v1598 = vunpack.c.l.b16 %v1474
    %v1599 = vunpack.c.h.b16 %v1474
    %v1600 = vunpack.c.l.b16 %v1475
    %v1601 = vunpack.c.h.b16 %v1475
    %v1602 = vunpack.c.l.b16 %v1476
    %v1603 = vunpack.c.h.b16 %v1476
    %v1604 = vunpack.c.l.b16 %v1477
    %v1605 = vunpack.c.h.b16 %v1477
    %v1606 = vunpack.c.l.b16 %v1478
    %v1607 = vunpack.c.h.b16 %v1478
    %v1608 = vunpack.c.l.b16 %v1479
    %v1609 = vunpack.c.h.b16 %v1479
    %v1610 = vunpack.c.l.b16 %v1480
    %v1611 = vunpack.c.h.b16 %v1480
    %v1612 = vunpack.c.l.b16 %v1481
    %v1613 = vunpack.c.h.b16 %v1481
    %v1614 = vunpack.c.l.b16 %v1482
    %v1615 = vunpack.c.h.b16 %v1482
    %v1616 = vunpack.c.l.b16 %v1483
    %v1617 = vunpack.c.h.b16 %v1483
    %v1618 = vunpack.c.l.b16 %v1484
    %v1619 = vunpack.c.h.b16 %v1484
    %v1620 = vunpack.c.l.b16 %v1485
    %v1621 = vunpack.c.h.b16 %v1485
    %v1622 = vunpack.c.l.b16 %v1486
    %v1623 = vunpack.c.h.b16 %v1486
    %v1624 = vunpack.c.l.b16 %v1487
    %v1625 = vunpack.c.h.b16 %v1487
    %v1626 = vunpack.c.l.b16 %v1488
    %v1627 = vunpack.c.h.b16 %v1488
    %v1628 = vunpack.c.l.b16 %v1489
    %v1629 = vunpack.c.h.b16 %v1489
    %v1630 = vunpack.c.l.b16 %v1490
    %v1631 = vunpack.c.h.b16 %v1490
    %v1632 = vunpack.c.l.b16 %v1491
    %v1633 = vunpack.c.h.b16 %v1491
    %v1634 = vunpack.c.l.b16 %v1492
    %v1635 = vunpack.c.h.b16 %v1492
    %v1636 = vunpack.c.l.b16 %v1493
    %v1637 = vunpack.c.h.b16 %v1493
    %v1638 = vpack.c.b16 %v1546, %v1542
    %v1639 = vpack.c.b16 %v1547, %v1543
    %v1640 = vpack.c.b16 %v1548, %v1544
    %v1641 = vpack.c.b16 %v1549, %v1545
    %v1642 = vpack.c.b16 %v1554, %v1550
    %v1643 = vpack.c.b16 %v1555, %v1551
    %v1644 = vpack.c.b16 %v1556, %v1552
    %v1645 = vpack.c.b16 %v1557, %v1553
    %v1646 = vpack.c.b16 %v1562, %v1558
    %v1647 = vpack.c.b16 %v1563, %v1559
    %v1648 = vpack.c.b16 %v1564, %v1560
    %v1649 = vpack.c.b16 %v1565, %v1561
    %v1650 = vpack.c.b16 %v1570, %v1566
    %v1651 = vpack.c.b16 %v1571, %v1567
    %v1652 = vpack.c.b16 %v1572, %v1568
    %v1653 = vpack.c.b16 %v1573, %v1569
    %v1654 = vpack.c.b16 %v1578, %v1574
    %v1655 = vpack.c.b16 %v1579, %v1575
    %v1656 = vpack.c.b16 %v1580, %v1576
    %v1657 = vpack.c.b16 %v1581, %v1577
    %v1658 = vpack.c.b16 %v1586, %v1582
    %v1659 = vpack.c.b16 %v1587, %v1583
    %v1660 = vpack.c.b16 %v1588, %v1584
    %v1661 = vpack.c.b16 %v1589, %v1585
    %v1662 = vpack.c.b16 %v1594, %v1590
    %v1663 = vpack.c.b16 %v1595, %v1591
    %v1664 = vpack.c.b16 %v1596, %v1592
    %v1665 = vpack.c.b16 %v1597, %v1593
    %v1666 = vpack.c.b16 %v1602, %v1598
    %v1667 = vpack.c.b16 %v1603, %v1599
    %v1668 = vpack.c.b16 %v1604, %v1600
    %v1669 = vpack.c.b16 %v1605, %v1601
    %v1670 = vpack.c.b16 %v1610, %v1606
    %v1671 = vpack.c.b16 %v1611, %v1607
    %v1672 = vpack.c.b16 %v1612, %v1608
    %v1673 = vpack.c.b16 %v1613, %v1609
    %v1674 = vpack.c.b16 %v1618, %v1614
    %v1675 = vpack.c.b16 %v1619, %v1615
    %v1676 = vpack.c.b16 %v1620, %v1616
    %v1677 = vpack.c.b16 %v1621, %v1617
    %v1678 = vpack.c.b16 %v1626, %v1622
    %v1679 = vpack.c.b16 %v1627, %v1623
    %v1680 = vpack.c.b16 %v1628, %v1624
    %v1681 = vpack.c.b16 %v1629, %v1625
    %v1682 = vpack.c.b16 %v1634, %v1630
    %v1683 = vpack.c.b16 %v1635, %v1631
    %v1684 = vpack.c.b16 %v1636, %v1632
    %v1685 = vpack.c.b16 %v1637, %v1633
    %v1735 = vsel %vm184, %v1444, 0
    %1737 = vmatpush.bf16.msra.mxu0 %v1666
    %1738 = vmatpush.bf16.msra.mxu0 %v1662
    %1739 = vmatpush.bf16.msra.mxu0 %v1658
    %1740 = vmatpush.bf16.msra.mxu0 %v1654
    %1741 = vmatpush.bf16.msra.mxu0 %v1650
    %1742 = vmatpush.bf16.msra.mxu0 %v1646
    %1743 = vmatpush.bf16.msra.mxu0 %v1642
    %1744 = vmatpush.bf16.msra.mxu0 %v1638
    %1745 = vmatmul.bf16.gmra.mxu0 %v1443
    %v1746 = vpop.f32.mrf.mxu0
    %v1747 = vadd.f32 0.0, %v1746
    %v1748 = vpop.f32.mrf.mxu0
    %1749 = vdwg.mxu0
    %1750 = vmatpush.bf16.msra.mxu0 0
    %1751 = vmatpush.bf16.msra.mxu0 0
    %1752 = vmatpush.bf16.msra.mxu0 0
    %1753 = vmatpush.bf16.msra.mxu0 0
    %1754 = vmatpush.bf16.msra.mxu0 %v1682
    %1755 = vmatpush.bf16.msra.mxu0 %v1678
    %1756 = vmatpush.bf16.msra.mxu0 %v1674
    %1757 = vmatpush.bf16.msra.mxu0 %v1670
    %1758 = vmatmul.bf16.gmra.mxu0 %v1735
    %v1759 = vpop.f32.mrf.mxu0
    %v1760 = vadd.f32 %v1747, %v1759
    %v1761 = vpop.f32.mrf.mxu0
    %1762 = vdwg.mxu0
    %1763 = vmatpush.bf16.msra.mxu0 %v1667
    %1764 = vmatpush.bf16.msra.mxu0 %v1663
    %1765 = vmatpush.bf16.msra.mxu0 %v1659
    %1766 = vmatpush.bf16.msra.mxu0 %v1655
    %1767 = vmatpush.bf16.msra.mxu0 %v1651
    %1768 = vmatpush.bf16.msra.mxu0 %v1647
    %1769 = vmatpush.bf16.msra.mxu0 %v1643
    %1770 = vmatpush.bf16.msra.mxu0 %v1639
    %1771 = vmatmul.bf16.gmra.mxu0 %v1443
    %v1772 = vpop.f32.mrf.mxu0
    %v1773 = vadd.f32 0.0, %v1772
    %v1774 = vpop.f32.mrf.mxu0
    %1775 = vdwg.mxu0
    %1776 = vmatpush.bf16.msra.mxu0 0
    %1777 = vmatpush.bf16.msra.mxu0 0
    %1778 = vmatpush.bf16.msra.mxu0 0
    %1779 = vmatpush.bf16.msra.mxu0 0
    %1780 = vmatpush.bf16.msra.mxu0 %v1683
    %1781 = vmatpush.bf16.msra.mxu0 %v1679
    %1782 = vmatpush.bf16.msra.mxu0 %v1675
    %1783 = vmatpush.bf16.msra.mxu0 %v1671
    %1784 = vmatmul.bf16.gmra.mxu0 %v1735
    %v1785 = vpop.f32.mrf.mxu0
    %v1786 = vadd.f32 %v1773, %v1785
    %v1787 = vpop.f32.mrf.mxu0
    %1788 = vdwg.mxu0
    %1789 = vmatpush.bf16.msra.mxu0 %v1668
    %1790 = vmatpush.bf16.msra.mxu0 %v1664
    %1791 = vmatpush.bf16.msra.mxu0 %v1660
    %1792 = vmatpush.bf16.msra.mxu0 %v1656
    %1793 = vmatpush.bf16.msra.mxu0 %v1652
    %1794 = vmatpush.bf16.msra.mxu0 %v1648
    %1795 = vmatpush.bf16.msra.mxu0 %v1644
    %1796 = vmatpush.bf16.msra.mxu0 %v1640
    %1797 = vmatmul.bf16.gmra.mxu0 %v1443
    %v1798 = vpop.f32.mrf.mxu0
    %v1799 = vadd.f32 0.0, %v1798
    %v1800 = vpop.f32.mrf.mxu0
    %1801 = vdwg.mxu0
    %1802 = vmatpush.bf16.msra.mxu0 0
    %1803 = vmatpush.bf16.msra.mxu0 0
    %1804 = vmatpush.bf16.msra.mxu0 0
    %1805 = vmatpush.bf16.msra.mxu0 0
    %1806 = vmatpush.bf16.msra.mxu0 %v1684
    %1807 = vmatpush.bf16.msra.mxu0 %v1680
    %1808 = vmatpush.bf16.msra.mxu0 %v1676
    %1809 = vmatpush.bf16.msra.mxu0 %v1672
    %1810 = vmatmul.bf16.gmra.mxu0 %v1735
    %v1811 = vpop.f32.mrf.mxu0
    %v1812 = vadd.f32 %v1799, %v1811
    %v1813 = vpop.f32.mrf.mxu0
    %1814 = vdwg.mxu0
    %1815 = vmatpush.bf16.msra.mxu0 %v1669
    %1816 = vmatpush.bf16.msra.mxu0 %v1665
    %1817 = vmatpush.bf16.msra.mxu0 %v1661
    %1818 = vmatpush.bf16.msra.mxu0 %v1657
    %1819 = vmatpush.bf16.msra.mxu0 %v1653
    %1820 = vmatpush.bf16.msra.mxu0 %v1649
    %1821 = vmatpush.bf16.msra.mxu0 %v1645
    %1822 = vmatpush.bf16.msra.mxu0 %v1641
    %1823 = vmatmul.bf16.gmra.mxu0 %v1443
    %v1824 = vpop.f32.mrf.mxu0
    %v1825 = vadd.f32 0.0, %v1824
    %v1826 = vpop.f32.mrf.mxu0
    %1827 = vdwg.mxu0
    %1828 = vmatpush.bf16.msra.mxu0 0
    %1829 = vmatpush.bf16.msra.mxu0 0
    %1830 = vmatpush.bf16.msra.mxu0 0
    %1831 = vmatpush.bf16.msra.mxu0 0
    %1832 = vmatpush.bf16.msra.mxu0 %v1685
    %1833 = vmatpush.bf16.msra.mxu0 %v1681
    %1834 = vmatpush.bf16.msra.mxu0 %v1677
    %1835 = vmatpush.bf16.msra.mxu0 %v1673
    %1836 = vmatmul.bf16.gmra.mxu0 %v1735
    %v1837 = vpop.f32.mrf.mxu0
    %v1838 = vadd.f32 %v1825, %v1837
    %v1839 = vpop.f32.mrf.mxu0
    %1840 = vdwg.mxu0
    %v1841 = vadd.f32 %v1360, %v1760
    %v1842 = vadd.f32 %v1386, %v1786
    %v1843 = vadd.f32 %v1412, %v1812
    %v1844 = vadd.f32 %v1438, %v1838
    %v1845 = vmul.f32 %v88, %v640
    %v1846 = vmul.f32 %v89, %v641
    %v1847 = vpack.c.bf16 %v1845, %v1845
    %v1848 = vpack.c.bf16 %v1846, %v1846
    %s1849 = scalar_lea.vmem [#allocation6], 1152
    %v1850 = vld [vmem:[%s1849] sm:$0xff]
    %v1851 = vld [vmem:[%s1849 + $0x8] sm:$0xff]
    %v1852 = vld [vmem:[%s1849 + $0x10] sm:$0xff]
    %v1853 = vld [vmem:[%s1849 + $0x18] sm:$0xff]
    %v1854 = vld [vmem:[%s1849 + $0x20] sm:$0xff]
    %v1855 = vld [vmem:[%s1849 + $0x28] sm:$0xff]
    %v1856 = vld [vmem:[%s1849 + $0x30] sm:$0xff]
    %v1857 = vld [vmem:[%s1849 + $0x38] sm:$0xff]
    %v1858 = vld [vmem:[%s1849 + $0x40] sm:$0xff]
    %v1859 = vld [vmem:[%s1849 + $0x48] sm:$0xff]
    %v1860 = vld [vmem:[%s1849 + $0x50] sm:$0xff]
    %v1861 = vld [vmem:[%s1849 + $0x58] sm:$0xff]
    %v1862 = vld [vmem:[%s1849 + $0x60] sm:$0xff]
    %v1863 = vld [vmem:[%s1849 + $0x68] sm:$0xff]
    %v1864 = vld [vmem:[%s1849 + $0x70] sm:$0xff]
    %v1865 = vld [vmem:[%s1849 + $0x78] sm:$0xff]
    %v1866 = vld [vmem:[%s1849 + $0x80] sm:$0xff]
    %v1867 = vld [vmem:[%s1849 + $0x88] sm:$0xff]
    %v1868 = vld [vmem:[%s1849 + $0x90] sm:$0xff]
    %v1869 = vld [vmem:[%s1849 + $0x98] sm:$0xff]
    %v1870 = vld [vmem:[%s1849 + $0xa0] sm:$0xff]
    %v1871 = vld [vmem:[%s1849 + $0xa8] sm:$0xff]
    %v1872 = vld [vmem:[%s1849 + $0xb0] sm:$0xff]
    %v1873 = vld [vmem:[%s1849 + $0xb8] sm:$0xff]
    %v1874 = vld [vmem:[%s1849 + $0xc0] sm:$0xff]
    %v1875 = vld [vmem:[%s1849 + $0xc8] sm:$0xff]
    %v1876 = vld [vmem:[%s1849 + $0xd0] sm:$0xff]
    %v1877 = vld [vmem:[%s1849 + $0xd8] sm:$0xff]
    %v1878 = vld [vmem:[%s1849 + $0xe0] sm:$0xff]
    %v1879 = vld [vmem:[%s1849 + $0xe8] sm:$0xff]
    %v1880 = vld [vmem:[%s1849 + $0xf0] sm:$0xff]
    %v1881 = vld [vmem:[%s1849 + $0xf8] sm:$0xff]
    %v1882 = vld [vmem:[%s1849 + $0x100] sm:$0xff]
    %v1883 = vld [vmem:[%s1849 + $0x108] sm:$0xff]
    %v1884 = vld [vmem:[%s1849 + $0x110] sm:$0xff]
    %v1885 = vld [vmem:[%s1849 + $0x118] sm:$0xff]
    %v1886 = vld [vmem:[%s1849 + $0x120] sm:$0xff]
    %v1887 = vld [vmem:[%s1849 + $0x128] sm:$0xff]
    %v1888 = vld [vmem:[%s1849 + $0x130] sm:$0xff]
    %v1889 = vld [vmem:[%s1849 + $0x138] sm:$0xff]
    %v1890 = vld [vmem:[%s1849 + $0x140] sm:$0xff]
    %v1891 = vld [vmem:[%s1849 + $0x148] sm:$0xff]
    %v1892 = vld [vmem:[%s1849 + $0x150] sm:$0xff]
    %v1893 = vld [vmem:[%s1849 + $0x158] sm:$0xff]
    %v1894 = vld [vmem:[%s1849 + $0x160] sm:$0xff]
    %v1895 = vld [vmem:[%s1849 + $0x168] sm:$0xff]
    %v1896 = vld [vmem:[%s1849 + $0x170] sm:$0xff]
    %v1897 = vld [vmem:[%s1849 + $0x178] sm:$0xff]
    %v1946 = vunpack.c.l.b16 %v1850
    %v1947 = vunpack.c.h.b16 %v1850
    %v1948 = vunpack.c.l.b16 %v1851
    %v1949 = vunpack.c.h.b16 %v1851
    %v1950 = vunpack.c.l.b16 %v1852
    %v1951 = vunpack.c.h.b16 %v1852
    %v1952 = vunpack.c.l.b16 %v1853
    %v1953 = vunpack.c.h.b16 %v1853
    %v1954 = vunpack.c.l.b16 %v1854
    %v1955 = vunpack.c.h.b16 %v1854
    %v1956 = vunpack.c.l.b16 %v1855
    %v1957 = vunpack.c.h.b16 %v1855
    %v1958 = vunpack.c.l.b16 %v1856
    %v1959 = vunpack.c.h.b16 %v1856
    %v1960 = vunpack.c.l.b16 %v1857
    %v1961 = vunpack.c.h.b16 %v1857
    %v1962 = vunpack.c.l.b16 %v1858
    %v1963 = vunpack.c.h.b16 %v1858
    %v1964 = vunpack.c.l.b16 %v1859
    %v1965 = vunpack.c.h.b16 %v1859
    %v1966 = vunpack.c.l.b16 %v1860
    %v1967 = vunpack.c.h.b16 %v1860
    %v1968 = vunpack.c.l.b16 %v1861
    %v1969 = vunpack.c.h.b16 %v1861
    %v1970 = vunpack.c.l.b16 %v1862
    %v1971 = vunpack.c.h.b16 %v1862
    %v1972 = vunpack.c.l.b16 %v1863
    %v1973 = vunpack.c.h.b16 %v1863
    %v1974 = vunpack.c.l.b16 %v1864
    %v1975 = vunpack.c.h.b16 %v1864
    %v1976 = vunpack.c.l.b16 %v1865
    %v1977 = vunpack.c.h.b16 %v1865
    %v1978 = vunpack.c.l.b16 %v1866
    %v1979 = vunpack.c.h.b16 %v1866
    %v1980 = vunpack.c.l.b16 %v1867
    %v1981 = vunpack.c.h.b16 %v1867
    %v1982 = vunpack.c.l.b16 %v1868
    %v1983 = vunpack.c.h.b16 %v1868
    %v1984 = vunpack.c.l.b16 %v1869
    %v1985 = vunpack.c.h.b16 %v1869
    %v1986 = vunpack.c.l.b16 %v1870
    %v1987 = vunpack.c.h.b16 %v1870
    %v1988 = vunpack.c.l.b16 %v1871
    %v1989 = vunpack.c.h.b16 %v1871
    %v1990 = vunpack.c.l.b16 %v1872
    %v1991 = vunpack.c.h.b16 %v1872
    %v1992 = vunpack.c.l.b16 %v1873
    %v1993 = vunpack.c.h.b16 %v1873
    %v1994 = vunpack.c.l.b16 %v1874
    %v1995 = vunpack.c.h.b16 %v1874
    %v1996 = vunpack.c.l.b16 %v1875
    %v1997 = vunpack.c.h.b16 %v1875
    %v1998 = vunpack.c.l.b16 %v1876
    %v1999 = vunpack.c.h.b16 %v1876
    %v2000 = vunpack.c.l.b16 %v1877
    %v2001 = vunpack.c.h.b16 %v1877
    %v2002 = vunpack.c.l.b16 %v1878
    %v2003 = vunpack.c.h.b16 %v1878
    %v2004 = vunpack.c.l.b16 %v1879
    %v2005 = vunpack.c.h.b16 %v1879
    %v2006 = vunpack.c.l.b16 %v1880
    %v2007 = vunpack.c.h.b16 %v1880
    %v2008 = vunpack.c.l.b16 %v1881
    %v2009 = vunpack.c.h.b16 %v1881
    %v2010 = vunpack.c.l.b16 %v1882
    %v2011 = vunpack.c.h.b16 %v1882
    %v2012 = vunpack.c.l.b16 %v1883
    %v2013 = vunpack.c.h.b16 %v1883
    %v2014 = vunpack.c.l.b16 %v1884
    %v2015 = vunpack.c.h.b16 %v1884
    %v2016 = vunpack.c.l.b16 %v1885
    %v2017 = vunpack.c.h.b16 %v1885
    %v2018 = vunpack.c.l.b16 %v1886
    %v2019 = vunpack.c.h.b16 %v1886
    %v2020 = vunpack.c.l.b16 %v1887
    %v2021 = vunpack.c.h.b16 %v1887
    %v2022 = vunpack.c.l.b16 %v1888
    %v2023 = vunpack.c.h.b16 %v1888
    %v2024 = vunpack.c.l.b16 %v1889
    %v2025 = vunpack.c.h.b16 %v1889
    %v2026 = vunpack.c.l.b16 %v1890
    %v2027 = vunpack.c.h.b16 %v1890
    %v2028 = vunpack.c.l.b16 %v1891
    %v2029 = vunpack.c.h.b16 %v1891
    %v2030 = vunpack.c.l.b16 %v1892
    %v2031 = vunpack.c.h.b16 %v1892
    %v2032 = vunpack.c.l.b16 %v1893
    %v2033 = vunpack.c.h.b16 %v1893
    %v2034 = vunpack.c.l.b16 %v1894
    %v2035 = vunpack.c.h.b16 %v1894
    %v2036 = vunpack.c.l.b16 %v1895
    %v2037 = vunpack.c.h.b16 %v1895
    %v2038 = vunpack.c.l.b16 %v1896
    %v2039 = vunpack.c.h.b16 %v1896
    %v2040 = vunpack.c.l.b16 %v1897
    %v2041 = vunpack.c.h.b16 %v1897
    %v2042 = vpack.c.b16 %v1950, %v1946
    %v2043 = vpack.c.b16 %v1951, %v1947
    %v2044 = vpack.c.b16 %v1952, %v1948
    %v2045 = vpack.c.b16 %v1953, %v1949
    %v2046 = vpack.c.b16 %v1958, %v1954
    %v2047 = vpack.c.b16 %v1959, %v1955
    %v2048 = vpack.c.b16 %v1960, %v1956
    %v2049 = vpack.c.b16 %v1961, %v1957
    %v2050 = vpack.c.b16 %v1966, %v1962
    %v2051 = vpack.c.b16 %v1967, %v1963
    %v2052 = vpack.c.b16 %v1968, %v1964
    %v2053 = vpack.c.b16 %v1969, %v1965
    %v2054 = vpack.c.b16 %v1974, %v1970
    %v2055 = vpack.c.b16 %v1975, %v1971
    %v2056 = vpack.c.b16 %v1976, %v1972
    %v2057 = vpack.c.b16 %v1977, %v1973
    %v2058 = vpack.c.b16 %v1982, %v1978
    %v2059 = vpack.c.b16 %v1983, %v1979
    %v2060 = vpack.c.b16 %v1984, %v1980
    %v2061 = vpack.c.b16 %v1985, %v1981
    %v2062 = vpack.c.b16 %v1990, %v1986
    %v2063 = vpack.c.b16 %v1991, %v1987
    %v2064 = vpack.c.b16 %v1992, %v1988
    %v2065 = vpack.c.b16 %v1993, %v1989
    %v2066 = vpack.c.b16 %v1998, %v1994
    %v2067 = vpack.c.b16 %v1999, %v1995
    %v2068 = vpack.c.b16 %v2000, %v1996
    %v2069 = vpack.c.b16 %v2001, %v1997
    %v2070 = vpack.c.b16 %v2006, %v2002
    %v2071 = vpack.c.b16 %v2007, %v2003
    %v2072 = vpack.c.b16 %v2008, %v2004
    %v2073 = vpack.c.b16 %v2009, %v2005
    %v2074 = vpack.c.b16 %v2014, %v2010
    %v2075 = vpack.c.b16 %v2015, %v2011
    %v2076 = vpack.c.b16 %v2016, %v2012
    %v2077 = vpack.c.b16 %v2017, %v2013
    %v2078 = vpack.c.b16 %v2022, %v2018
    %v2079 = vpack.c.b16 %v2023, %v2019
    %v2080 = vpack.c.b16 %v2024, %v2020
    %v2081 = vpack.c.b16 %v2025, %v2021
    %v2082 = vpack.c.b16 %v2030, %v2026
    %v2083 = vpack.c.b16 %v2031, %v2027
    %v2084 = vpack.c.b16 %v2032, %v2028
    %v2085 = vpack.c.b16 %v2033, %v2029
    %v2086 = vpack.c.b16 %v2038, %v2034
    %v2087 = vpack.c.b16 %v2039, %v2035
    %v2088 = vpack.c.b16 %v2040, %v2036
    %v2089 = vpack.c.b16 %v2041, %v2037
    %v2139 = vsel %vm184, %v1848, 0
    %2141 = vmatpush.bf16.msra.mxu0 %v2070
    %2142 = vmatpush.bf16.msra.mxu0 %v2066
    %2143 = vmatpush.bf16.msra.mxu0 %v2062
    %2144 = vmatpush.bf16.msra.mxu0 %v2058
    %2145 = vmatpush.bf16.msra.mxu0 %v2054
    %2146 = vmatpush.bf16.msra.mxu0 %v2050
    %2147 = vmatpush.bf16.msra.mxu0 %v2046
    %2148 = vmatpush.bf16.msra.mxu0 %v2042
    %2149 = vmatmul.bf16.gmra.mxu0 %v1847
    %v2150 = vpop.f32.mrf.mxu0
    %v2151 = vadd.f32 0.0, %v2150
    %v2152 = vpop.f32.mrf.mxu0
    %2153 = vdwg.mxu0
    %2154 = vmatpush.bf16.msra.mxu0 0
    %2155 = vmatpush.bf16.msra.mxu0 0
    %2156 = vmatpush.bf16.msra.mxu0 0
    %2157 = vmatpush.bf16.msra.mxu0 0
    %2158 = vmatpush.bf16.msra.mxu0 %v2086
    %2159 = vmatpush.bf16.msra.mxu0 %v2082
    %2160 = vmatpush.bf16.msra.mxu0 %v2078
    %2161 = vmatpush.bf16.msra.mxu0 %v2074
    %2162 = vmatmul.bf16.gmra.mxu0 %v2139
    %v2163 = vpop.f32.mrf.mxu0
    %v2164 = vadd.f32 %v2151, %v2163
    %v2165 = vpop.f32.mrf.mxu0
    %2166 = vdwg.mxu0
    %2167 = vmatpush.bf16.msra.mxu0 %v2071
    %2168 = vmatpush.bf16.msra.mxu0 %v2067
    %2169 = vmatpush.bf16.msra.mxu0 %v2063
    %2170 = vmatpush.bf16.msra.mxu0 %v2059
    %2171 = vmatpush.bf16.msra.mxu0 %v2055
    %2172 = vmatpush.bf16.msra.mxu0 %v2051
    %2173 = vmatpush.bf16.msra.mxu0 %v2047
    %2174 = vmatpush.bf16.msra.mxu0 %v2043
    %2175 = vmatmul.bf16.gmra.mxu0 %v1847
    %v2176 = vpop.f32.mrf.mxu0
    %v2177 = vadd.f32 0.0, %v2176
    %v2178 = vpop.f32.mrf.mxu0
    %2179 = vdwg.mxu0
    %2180 = vmatpush.bf16.msra.mxu0 0
    %2181 = vmatpush.bf16.msra.mxu0 0
    %2182 = vmatpush.bf16.msra.mxu0 0
    %2183 = vmatpush.bf16.msra.mxu0 0
    %2184 = vmatpush.bf16.msra.mxu0 %v2087
    %2185 = vmatpush.bf16.msra.mxu0 %v2083
    %2186 = vmatpush.bf16.msra.mxu0 %v2079
    %2187 = vmatpush.bf16.msra.mxu0 %v2075
    %2188 = vmatmul.bf16.gmra.mxu0 %v2139
    %v2189 = vpop.f32.mrf.mxu0
    %v2190 = vadd.f32 %v2177, %v2189
    %v2191 = vpop.f32.mrf.mxu0
    %2192 = vdwg.mxu0
    %2193 = vmatpush.bf16.msra.mxu0 %v2072
    %2194 = vmatpush.bf16.msra.mxu0 %v2068
    %2195 = vmatpush.bf16.msra.mxu0 %v2064
    %2196 = vmatpush.bf16.msra.mxu0 %v2060
    %2197 = vmatpush.bf16.msra.mxu0 %v2056
    %2198 = vmatpush.bf16.msra.mxu0 %v2052
    %2199 = vmatpush.bf16.msra.mxu0 %v2048
    %2200 = vmatpush.bf16.msra.mxu0 %v2044
    %2201 = vmatmul.bf16.gmra.mxu0 %v1847
    %v2202 = vpop.f32.mrf.mxu0
    %v2203 = vadd.f32 0.0, %v2202
    %v2204 = vpop.f32.mrf.mxu0
    %2205 = vdwg.mxu0
    %2206 = vmatpush.bf16.msra.mxu0 0
    %2207 = vmatpush.bf16.msra.mxu0 0
    %2208 = vmatpush.bf16.msra.mxu0 0
    %2209 = vmatpush.bf16.msra.mxu0 0
    %2210 = vmatpush.bf16.msra.mxu0 %v2088
    %2211 = vmatpush.bf16.msra.mxu0 %v2084
    %2212 = vmatpush.bf16.msra.mxu0 %v2080
    %2213 = vmatpush.bf16.msra.mxu0 %v2076
    %2214 = vmatmul.bf16.gmra.mxu0 %v2139
    %v2215 = vpop.f32.mrf.mxu0
    %v2216 = vadd.f32 %v2203, %v2215
    %v2217 = vpop.f32.mrf.mxu0
    %2218 = vdwg.mxu0
    %2219 = vmatpush.bf16.msra.mxu0 %v2073
    %2220 = vmatpush.bf16.msra.mxu0 %v2069
    %2221 = vmatpush.bf16.msra.mxu0 %v2065
    %2222 = vmatpush.bf16.msra.mxu0 %v2061
    %2223 = vmatpush.bf16.msra.mxu0 %v2057
    %2224 = vmatpush.bf16.msra.mxu0 %v2053
    %2225 = vmatpush.bf16.msra.mxu0 %v2049
    %2226 = vmatpush.bf16.msra.mxu0 %v2045
    %2227 = vmatmul.bf16.gmra.mxu0 %v1847
    %v2228 = vpop.f32.mrf.mxu0
    %v2229 = vadd.f32 0.0, %v2228
    %v2230 = vpop.f32.mrf.mxu0
    %2231 = vdwg.mxu0
    %2232 = vmatpush.bf16.msra.mxu0 0
    %2233 = vmatpush.bf16.msra.mxu0 0
    %2234 = vmatpush.bf16.msra.mxu0 0
    %2235 = vmatpush.bf16.msra.mxu0 0
    %2236 = vmatpush.bf16.msra.mxu0 %v2089
    %2237 = vmatpush.bf16.msra.mxu0 %v2085
    %2238 = vmatpush.bf16.msra.mxu0 %v2081
    %2239 = vmatpush.bf16.msra.mxu0 %v2077
    %2240 = vmatmul.bf16.gmra.mxu0 %v2139
    %v2241 = vpop.f32.mrf.mxu0
    %v2242 = vadd.f32 %v2229, %v2241
    %v2243 = vpop.f32.mrf.mxu0
    %2244 = vdwg.mxu0
    %v2245 = vadd.f32 %v1841, %v2164
    %v2246 = vadd.f32 %v1842, %v2190
    %v2247 = vadd.f32 %v1843, %v2216
    %v2248 = vadd.f32 %v1844, %v2242
    %v2249 = vmul.f32 %v90, %v640
    %v2250 = vmul.f32 %v91, %v641
    %v2251 = vpack.c.bf16 %v2249, %v2249
    %v2252 = vpack.c.bf16 %v2250, %v2250
    %s2253 = scalar_lea.vmem [#allocation6], 1536
    %v2254 = vld [vmem:[%s2253] sm:$0xff]
    %v2255 = vld [vmem:[%s2253 + $0x8] sm:$0xff]
    %v2256 = vld [vmem:[%s2253 + $0x10] sm:$0xff]
    %v2257 = vld [vmem:[%s2253 + $0x18] sm:$0xff]
    %v2258 = vld [vmem:[%s2253 + $0x20] sm:$0xff]
    %v2259 = vld [vmem:[%s2253 + $0x28] sm:$0xff]
    %v2260 = vld [vmem:[%s2253 + $0x30] sm:$0xff]
    %v2261 = vld [vmem:[%s2253 + $0x38] sm:$0xff]
    %v2262 = vld [vmem:[%s2253 + $0x40] sm:$0xff]
    %v2263 = vld [vmem:[%s2253 + $0x48] sm:$0xff]
    %v2264 = vld [vmem:[%s2253 + $0x50] sm:$0xff]
    %v2265 = vld [vmem:[%s2253 + $0x58] sm:$0xff]
    %v2266 = vld [vmem:[%s2253 + $0x60] sm:$0xff]
    %v2267 = vld [vmem:[%s2253 + $0x68] sm:$0xff]
    %v2268 = vld [vmem:[%s2253 + $0x70] sm:$0xff]
    %v2269 = vld [vmem:[%s2253 + $0x78] sm:$0xff]
    %v2270 = vld [vmem:[%s2253 + $0x80] sm:$0xff]
    %v2271 = vld [vmem:[%s2253 + $0x88] sm:$0xff]
    %v2272 = vld [vmem:[%s2253 + $0x90] sm:$0xff]
    %v2273 = vld [vmem:[%s2253 + $0x98] sm:$0xff]
    %v2274 = vld [vmem:[%s2253 + $0xa0] sm:$0xff]
    %v2275 = vld [vmem:[%s2253 + $0xa8] sm:$0xff]
    %v2276 = vld [vmem:[%s2253 + $0xb0] sm:$0xff]
    %v2277 = vld [vmem:[%s2253 + $0xb8] sm:$0xff]
    %v2278 = vld [vmem:[%s2253 + $0xc0] sm:$0xff]
    %v2279 = vld [vmem:[%s2253 + $0xc8] sm:$0xff]
    %v2280 = vld [vmem:[%s2253 + $0xd0] sm:$0xff]
    %v2281 = vld [vmem:[%s2253 + $0xd8] sm:$0xff]
    %v2282 = vld [vmem:[%s2253 + $0xe0] sm:$0xff]
    %v2283 = vld [vmem:[%s2253 + $0xe8] sm:$0xff]
    %v2284 = vld [vmem:[%s2253 + $0xf0] sm:$0xff]
    %v2285 = vld [vmem:[%s2253 + $0xf8] sm:$0xff]
    %v2286 = vld [vmem:[%s2253 + $0x100] sm:$0xff]
    %v2287 = vld [vmem:[%s2253 + $0x108] sm:$0xff]
    %v2288 = vld [vmem:[%s2253 + $0x110] sm:$0xff]
    %v2289 = vld [vmem:[%s2253 + $0x118] sm:$0xff]
    %v2290 = vld [vmem:[%s2253 + $0x120] sm:$0xff]
    %v2291 = vld [vmem:[%s2253 + $0x128] sm:$0xff]
    %v2292 = vld [vmem:[%s2253 + $0x130] sm:$0xff]
    %v2293 = vld [vmem:[%s2253 + $0x138] sm:$0xff]
    %v2294 = vld [vmem:[%s2253 + $0x140] sm:$0xff]
    %v2295 = vld [vmem:[%s2253 + $0x148] sm:$0xff]
    %v2296 = vld [vmem:[%s2253 + $0x150] sm:$0xff]
    %v2297 = vld [vmem:[%s2253 + $0x158] sm:$0xff]
    %v2298 = vld [vmem:[%s2253 + $0x160] sm:$0xff]
    %v2299 = vld [vmem:[%s2253 + $0x168] sm:$0xff]
    %v2300 = vld [vmem:[%s2253 + $0x170] sm:$0xff]
    %v2301 = vld [vmem:[%s2253 + $0x178] sm:$0xff]
    %v2350 = vunpack.c.l.b16 %v2254
    %v2351 = vunpack.c.h.b16 %v2254
    %v2352 = vunpack.c.l.b16 %v2255
    %v2353 = vunpack.c.h.b16 %v2255
    %v2354 = vunpack.c.l.b16 %v2256
    %v2355 = vunpack.c.h.b16 %v2256
    %v2356 = vunpack.c.l.b16 %v2257
    %v2357 = vunpack.c.h.b16 %v2257
    %v2358 = vunpack.c.l.b16 %v2258
    %v2359 = vunpack.c.h.b16 %v2258
    %v2360 = vunpack.c.l.b16 %v2259
    %v2361 = vunpack.c.h.b16 %v2259
    %v2362 = vunpack.c.l.b16 %v2260
    %v2363 = vunpack.c.h.b16 %v2260
    %v2364 = vunpack.c.l.b16 %v2261
    %v2365 = vunpack.c.h.b16 %v2261
    %v2366 = vunpack.c.l.b16 %v2262
    %v2367 = vunpack.c.h.b16 %v2262
    %v2368 = vunpack.c.l.b16 %v2263
    %v2369 = vunpack.c.h.b16 %v2263
    %v2370 = vunpack.c.l.b16 %v2264
    %v2371 = vunpack.c.h.b16 %v2264
    %v2372 = vunpack.c.l.b16 %v2265
    %v2373 = vunpack.c.h.b16 %v2265
    %v2374 = vunpack.c.l.b16 %v2266
    %v2375 = vunpack.c.h.b16 %v2266
    %v2376 = vunpack.c.l.b16 %v2267
    %v2377 = vunpack.c.h.b16 %v2267
    %v2378 = vunpack.c.l.b16 %v2268
    %v2379 = vunpack.c.h.b16 %v2268
    %v2380 = vunpack.c.l.b16 %v2269
    %v2381 = vunpack.c.h.b16 %v2269
    %v2382 = vunpack.c.l.b16 %v2270
    %v2383 = vunpack.c.h.b16 %v2270
    %v2384 = vunpack.c.l.b16 %v2271
    %v2385 = vunpack.c.h.b16 %v2271
    %v2386 = vunpack.c.l.b16 %v2272
    %v2387 = vunpack.c.h.b16 %v2272
    %v2388 = vunpack.c.l.b16 %v2273
    %v2389 = vunpack.c.h.b16 %v2273
    %v2390 = vunpack.c.l.b16 %v2274
    %v2391 = vunpack.c.h.b16 %v2274
    %v2392 = vunpack.c.l.b16 %v2275
    %v2393 = vunpack.c.h.b16 %v2275
    %v2394 = vunpack.c.l.b16 %v2276
    %v2395 = vunpack.c.h.b16 %v2276
    %v2396 = vunpack.c.l.b16 %v2277
    %v2397 = vunpack.c.h.b16 %v2277
    %v2398 = vunpack.c.l.b16 %v2278
    %v2399 = vunpack.c.h.b16 %v2278
    %v2400 = vunpack.c.l.b16 %v2279
    %v2401 = vunpack.c.h.b16 %v2279
    %v2402 = vunpack.c.l.b16 %v2280
    %v2403 = vunpack.c.h.b16 %v2280
    %v2404 = vunpack.c.l.b16 %v2281
    %v2405 = vunpack.c.h.b16 %v2281
    %v2406 = vunpack.c.l.b16 %v2282
    %v2407 = vunpack.c.h.b16 %v2282
    %v2408 = vunpack.c.l.b16 %v2283
    %v2409 = vunpack.c.h.b16 %v2283
    %v2410 = vunpack.c.l.b16 %v2284
    %v2411 = vunpack.c.h.b16 %v2284
    %v2412 = vunpack.c.l.b16 %v2285
    %v2413 = vunpack.c.h.b16 %v2285
    %v2414 = vunpack.c.l.b16 %v2286
    %v2415 = vunpack.c.h.b16 %v2286
    %v2416 = vunpack.c.l.b16 %v2287
    %v2417 = vunpack.c.h.b16 %v2287
    %v2418 = vunpack.c.l.b16 %v2288
    %v2419 = vunpack.c.h.b16 %v2288
    %v2420 = vunpack.c.l.b16 %v2289
    %v2421 = vunpack.c.h.b16 %v2289
    %v2422 = vunpack.c.l.b16 %v2290
    %v2423 = vunpack.c.h.b16 %v2290
    %v2424 = vunpack.c.l.b16 %v2291
    %v2425 = vunpack.c.h.b16 %v2291
    %v2426 = vunpack.c.l.b16 %v2292
    %v2427 = vunpack.c.h.b16 %v2292
    %v2428 = vunpack.c.l.b16 %v2293
    %v2429 = vunpack.c.h.b16 %v2293
    %v2430 = vunpack.c.l.b16 %v2294
    %v2431 = vunpack.c.h.b16 %v2294
    %v2432 = vunpack.c.l.b16 %v2295
    %v2433 = vunpack.c.h.b16 %v2295
    %v2434 = vunpack.c.l.b16 %v2296
    %v2435 = vunpack.c.h.b16 %v2296
    %v2436 = vunpack.c.l.b16 %v2297
    %v2437 = vunpack.c.h.b16 %v2297
    %v2438 = vunpack.c.l.b16 %v2298
    %v2439 = vunpack.c.h.b16 %v2298
    %v2440 = vunpack.c.l.b16 %v2299
    %v2441 = vunpack.c.h.b16 %v2299
    %v2442 = vunpack.c.l.b16 %v2300
    %v2443 = vunpack.c.h.b16 %v2300
    %v2444 = vunpack.c.l.b16 %v2301
    %v2445 = vunpack.c.h.b16 %v2301
    %v2446 = vpack.c.b16 %v2354, %v2350
    %v2447 = vpack.c.b16 %v2355, %v2351
    %v2448 = vpack.c.b16 %v2356, %v2352
    %v2449 = vpack.c.b16 %v2357, %v2353
    %v2450 = vpack.c.b16 %v2362, %v2358
    %v2451 = vpack.c.b16 %v2363, %v2359
    %v2452 = vpack.c.b16 %v2364, %v2360
    %v2453 = vpack.c.b16 %v2365, %v2361
    %v2454 = vpack.c.b16 %v2370, %v2366
    %v2455 = vpack.c.b16 %v2371, %v2367
    %v2456 = vpack.c.b16 %v2372, %v2368
    %v2457 = vpack.c.b16 %v2373, %v2369
    %v2458 = vpack.c.b16 %v2378, %v2374
    %v2459 = vpack.c.b16 %v2379, %v2375
    %v2460 = vpack.c.b16 %v2380, %v2376
    %v2461 = vpack.c.b16 %v2381, %v2377
    %v2462 = vpack.c.b16 %v2386, %v2382
    %v2463 = vpack.c.b16 %v2387, %v2383
    %v2464 = vpack.c.b16 %v2388, %v2384
    %v2465 = vpack.c.b16 %v2389, %v2385
    %v2466 = vpack.c.b16 %v2394, %v2390
    %v2467 = vpack.c.b16 %v2395, %v2391
    %v2468 = vpack.c.b16 %v2396, %v2392
    %v2469 = vpack.c.b16 %v2397, %v2393
    %v2470 = vpack.c.b16 %v2402, %v2398
    %v2471 = vpack.c.b16 %v2403, %v2399
    %v2472 = vpack.c.b16 %v2404, %v2400
    %v2473 = vpack.c.b16 %v2405, %v2401
    %v2474 = vpack.c.b16 %v2410, %v2406
    %v2475 = vpack.c.b16 %v2411, %v2407
    %v2476 = vpack.c.b16 %v2412, %v2408
    %v2477 = vpack.c.b16 %v2413, %v2409
    %v2478 = vpack.c.b16 %v2418, %v2414
    %v2479 = vpack.c.b16 %v2419, %v2415
    %v2480 = vpack.c.b16 %v2420, %v2416
    %v2481 = vpack.c.b16 %v2421, %v2417
    %v2482 = vpack.c.b16 %v2426, %v2422
    %v2483 = vpack.c.b16 %v2427, %v2423
    %v2484 = vpack.c.b16 %v2428, %v2424
    %v2485 = vpack.c.b16 %v2429, %v2425
    %v2486 = vpack.c.b16 %v2434, %v2430
    %v2487 = vpack.c.b16 %v2435, %v2431
    %v2488 = vpack.c.b16 %v2436, %v2432
    %v2489 = vpack.c.b16 %v2437, %v2433
    %v2490 = vpack.c.b16 %v2442, %v2438
    %v2491 = vpack.c.b16 %v2443, %v2439
    %v2492 = vpack.c.b16 %v2444, %v2440
    %v2493 = vpack.c.b16 %v2445, %v2441
    %v2543 = vsel %vm184, %v2252, 0
    %2545 = vmatpush.bf16.msra.mxu0 %v2474
    %2546 = vmatpush.bf16.msra.mxu0 %v2470
    %2547 = vmatpush.bf16.msra.mxu0 %v2466
    %2548 = vmatpush.bf16.msra.mxu0 %v2462
    %2549 = vmatpush.bf16.msra.mxu0 %v2458
    %2550 = vmatpush.bf16.msra.mxu0 %v2454
    %2551 = vmatpush.bf16.msra.mxu0 %v2450
    %2552 = vmatpush.bf16.msra.mxu0 %v2446
    %2553 = vmatmul.bf16.gmra.mxu0 %v2251
    %v2554 = vpop.f32.mrf.mxu0
    %v2555 = vadd.f32 0.0, %v2554
    %v2556 = vpop.f32.mrf.mxu0
    %2557 = vdwg.mxu0
    %2558 = vmatpush.bf16.msra.mxu0 0
    %2559 = vmatpush.bf16.msra.mxu0 0
    %2560 = vmatpush.bf16.msra.mxu0 0
    %2561 = vmatpush.bf16.msra.mxu0 0
    %2562 = vmatpush.bf16.msra.mxu0 %v2490
    %2563 = vmatpush.bf16.msra.mxu0 %v2486
    %2564 = vmatpush.bf16.msra.mxu0 %v2482
    %2565 = vmatpush.bf16.msra.mxu0 %v2478
    %2566 = vmatmul.bf16.gmra.mxu0 %v2543
    %v2567 = vpop.f32.mrf.mxu0
    %v2568 = vadd.f32 %v2555, %v2567
    %v2569 = vpop.f32.mrf.mxu0
    %2570 = vdwg.mxu0
    %2571 = vmatpush.bf16.msra.mxu0 %v2475
    %2572 = vmatpush.bf16.msra.mxu0 %v2471
    %2573 = vmatpush.bf16.msra.mxu0 %v2467
    %2574 = vmatpush.bf16.msra.mxu0 %v2463
    %2575 = vmatpush.bf16.msra.mxu0 %v2459
    %2576 = vmatpush.bf16.msra.mxu0 %v2455
    %2577 = vmatpush.bf16.msra.mxu0 %v2451
    %2578 = vmatpush.bf16.msra.mxu0 %v2447
    %2579 = vmatmul.bf16.gmra.mxu0 %v2251
    %v2580 = vpop.f32.mrf.mxu0
    %v2581 = vadd.f32 0.0, %v2580
    %v2582 = vpop.f32.mrf.mxu0
    %2583 = vdwg.mxu0
    %2584 = vmatpush.bf16.msra.mxu0 0
    %2585 = vmatpush.bf16.msra.mxu0 0
    %2586 = vmatpush.bf16.msra.mxu0 0
    %2587 = vmatpush.bf16.msra.mxu0 0
    %2588 = vmatpush.bf16.msra.mxu0 %v2491
    %2589 = vmatpush.bf16.msra.mxu0 %v2487
    %2590 = vmatpush.bf16.msra.mxu0 %v2483
    %2591 = vmatpush.bf16.msra.mxu0 %v2479
    %2592 = vmatmul.bf16.gmra.mxu0 %v2543
    %v2593 = vpop.f32.mrf.mxu0
    %v2594 = vadd.f32 %v2581, %v2593
    %v2595 = vpop.f32.mrf.mxu0
    %2596 = vdwg.mxu0
    %2597 = vmatpush.bf16.msra.mxu0 %v2476
    %2598 = vmatpush.bf16.msra.mxu0 %v2472
    %2599 = vmatpush.bf16.msra.mxu0 %v2468
    %2600 = vmatpush.bf16.msra.mxu0 %v2464
    %2601 = vmatpush.bf16.msra.mxu0 %v2460
    %2602 = vmatpush.bf16.msra.mxu0 %v2456
    %2603 = vmatpush.bf16.msra.mxu0 %v2452
    %2604 = vmatpush.bf16.msra.mxu0 %v2448
    %2605 = vmatmul.bf16.gmra.mxu0 %v2251
    %v2606 = vpop.f32.mrf.mxu0
    %v2607 = vadd.f32 0.0, %v2606
    %v2608 = vpop.f32.mrf.mxu0
    %2609 = vdwg.mxu0
    %2610 = vmatpush.bf16.msra.mxu0 0
    %2611 = vmatpush.bf16.msra.mxu0 0
    %2612 = vmatpush.bf16.msra.mxu0 0
    %2613 = vmatpush.bf16.msra.mxu0 0
    %2614 = vmatpush.bf16.msra.mxu0 %v2492
    %2615 = vmatpush.bf16.msra.mxu0 %v2488
    %2616 = vmatpush.bf16.msra.mxu0 %v2484
    %2617 = vmatpush.bf16.msra.mxu0 %v2480
    %2618 = vmatmul.bf16.gmra.mxu0 %v2543
    %v2619 = vpop.f32.mrf.mxu0
    %v2620 = vadd.f32 %v2607, %v2619
    %v2621 = vpop.f32.mrf.mxu0
    %2622 = vdwg.mxu0
    %2623 = vmatpush.bf16.msra.mxu0 %v2477
    %2624 = vmatpush.bf16.msra.mxu0 %v2473
    %2625 = vmatpush.bf16.msra.mxu0 %v2469
    %2626 = vmatpush.bf16.msra.mxu0 %v2465
    %2627 = vmatpush.bf16.msra.mxu0 %v2461
    %2628 = vmatpush.bf16.msra.mxu0 %v2457
    %2629 = vmatpush.bf16.msra.mxu0 %v2453
    %2630 = vmatpush.bf16.msra.mxu0 %v2449
    %2631 = vmatmul.bf16.gmra.mxu0 %v2251
    %v2632 = vpop.f32.mrf.mxu0
    %v2633 = vadd.f32 0.0, %v2632
    %v2634 = vpop.f32.mrf.mxu0
    %2635 = vdwg.mxu0
    %2636 = vmatpush.bf16.msra.mxu0 0
    %2637 = vmatpush.bf16.msra.mxu0 0
    %2638 = vmatpush.bf16.msra.mxu0 0
    %2639 = vmatpush.bf16.msra.mxu0 0
    %2640 = vmatpush.bf16.msra.mxu0 %v2493
    %2641 = vmatpush.bf16.msra.mxu0 %v2489
    %2642 = vmatpush.bf16.msra.mxu0 %v2485
    %2643 = vmatpush.bf16.msra.mxu0 %v2481
    %2644 = vmatmul.bf16.gmra.mxu0 %v2543
    %v2645 = vpop.f32.mrf.mxu0
    %v2646 = vadd.f32 %v2633, %v2645
    %v2647 = vpop.f32.mrf.mxu0
    %2648 = vdwg.mxu0
    %v2649 = vadd.f32 %v2245, %v2568
    %v2650 = vadd.f32 %v2246, %v2594
    %v2651 = vadd.f32 %v2247, %v2620
    %v2652 = vadd.f32 %v2248, %v2646
    %v2653 = vmul.f32 %v92, %v640
    %v2654 = vmul.f32 %v93, %v641
    %v2655 = vpack.c.bf16 %v2653, %v2653
    %v2656 = vpack.c.bf16 %v2654, %v2654
    %s2657 = scalar_lea.vmem [#allocation6], 1920
    %v2658 = vld [vmem:[%s2657] sm:$0xff]
    %v2659 = vld [vmem:[%s2657 + $0x8] sm:$0xff]
    %v2660 = vld [vmem:[%s2657 + $0x10] sm:$0xff]
    %v2661 = vld [vmem:[%s2657 + $0x18] sm:$0xff]
    %v2662 = vld [vmem:[%s2657 + $0x20] sm:$0xff]
    %v2663 = vld [vmem:[%s2657 + $0x28] sm:$0xff]
    %v2664 = vld [vmem:[%s2657 + $0x30] sm:$0xff]
    %v2665 = vld [vmem:[%s2657 + $0x38] sm:$0xff]
    %v2666 = vld [vmem:[%s2657 + $0x40] sm:$0xff]
    %v2667 = vld [vmem:[%s2657 + $0x48] sm:$0xff]
    %v2668 = vld [vmem:[%s2657 + $0x50] sm:$0xff]
    %v2669 = vld [vmem:[%s2657 + $0x58] sm:$0xff]
    %v2670 = vld [vmem:[%s2657 + $0x60] sm:$0xff]
    %v2671 = vld [vmem:[%s2657 + $0x68] sm:$0xff]
    %v2672 = vld [vmem:[%s2657 + $0x70] sm:$0xff]
    %v2673 = vld [vmem:[%s2657 + $0x78] sm:$0xff]
    %v2674 = vld [vmem:[%s2657 + $0x80] sm:$0xff]
    %v2675 = vld [vmem:[%s2657 + $0x88] sm:$0xff]
    %v2676 = vld [vmem:[%s2657 + $0x90] sm:$0xff]
    %v2677 = vld [vmem:[%s2657 + $0x98] sm:$0xff]
    %v2678 = vld [vmem:[%s2657 + $0xa0] sm:$0xff]
    %v2679 = vld [vmem:[%s2657 + $0xa8] sm:$0xff]
    %v2680 = vld [vmem:[%s2657 + $0xb0] sm:$0xff]
    %v2681 = vld [vmem:[%s2657 + $0xb8] sm:$0xff]
    %v2682 = vld [vmem:[%s2657 + $0xc0] sm:$0xff]
    %v2683 = vld [vmem:[%s2657 + $0xc8] sm:$0xff]
    %v2684 = vld [vmem:[%s2657 + $0xd0] sm:$0xff]
    %v2685 = vld [vmem:[%s2657 + $0xd8] sm:$0xff]
    %v2686 = vld [vmem:[%s2657 + $0xe0] sm:$0xff]
    %v2687 = vld [vmem:[%s2657 + $0xe8] sm:$0xff]
    %v2688 = vld [vmem:[%s2657 + $0xf0] sm:$0xff]
    %v2689 = vld [vmem:[%s2657 + $0xf8] sm:$0xff]
    %v2690 = vld [vmem:[%s2657 + $0x100] sm:$0xff]
    %v2691 = vld [vmem:[%s2657 + $0x108] sm:$0xff]
    %v2692 = vld [vmem:[%s2657 + $0x110] sm:$0xff]
    %v2693 = vld [vmem:[%s2657 + $0x118] sm:$0xff]
    %v2694 = vld [vmem:[%s2657 + $0x120] sm:$0xff]
    %v2695 = vld [vmem:[%s2657 + $0x128] sm:$0xff]
    %v2696 = vld [vmem:[%s2657 + $0x130] sm:$0xff]
    %v2697 = vld [vmem:[%s2657 + $0x138] sm:$0xff]
    %v2698 = vld [vmem:[%s2657 + $0x140] sm:$0xff]
    %v2699 = vld [vmem:[%s2657 + $0x148] sm:$0xff]
    %v2700 = vld [vmem:[%s2657 + $0x150] sm:$0xff]
    %v2701 = vld [vmem:[%s2657 + $0x158] sm:$0xff]
    %v2702 = vld [vmem:[%s2657 + $0x160] sm:$0xff]
    %v2703 = vld [vmem:[%s2657 + $0x168] sm:$0xff]
    %v2704 = vld [vmem:[%s2657 + $0x170] sm:$0xff]
    %v2705 = vld [vmem:[%s2657 + $0x178] sm:$0xff]
    %v2754 = vunpack.c.l.b16 %v2658
    %v2755 = vunpack.c.h.b16 %v2658
    %v2756 = vunpack.c.l.b16 %v2659
    %v2757 = vunpack.c.h.b16 %v2659
    %v2758 = vunpack.c.l.b16 %v2660
    %v2759 = vunpack.c.h.b16 %v2660
    %v2760 = vunpack.c.l.b16 %v2661
    %v2761 = vunpack.c.h.b16 %v2661
    %v2762 = vunpack.c.l.b16 %v2662
    %v2763 = vunpack.c.h.b16 %v2662
    %v2764 = vunpack.c.l.b16 %v2663
    %v2765 = vunpack.c.h.b16 %v2663
    %v2766 = vunpack.c.l.b16 %v2664
    %v2767 = vunpack.c.h.b16 %v2664
    %v2768 = vunpack.c.l.b16 %v2665
    %v2769 = vunpack.c.h.b16 %v2665
    %v2770 = vunpack.c.l.b16 %v2666
    %v2771 = vunpack.c.h.b16 %v2666
    %v2772 = vunpack.c.l.b16 %v2667
    %v2773 = vunpack.c.h.b16 %v2667
    %v2774 = vunpack.c.l.b16 %v2668
    %v2775 = vunpack.c.h.b16 %v2668
    %v2776 = vunpack.c.l.b16 %v2669
    %v2777 = vunpack.c.h.b16 %v2669
    %v2778 = vunpack.c.l.b16 %v2670
    %v2779 = vunpack.c.h.b16 %v2670
    %v2780 = vunpack.c.l.b16 %v2671
    %v2781 = vunpack.c.h.b16 %v2671
    %v2782 = vunpack.c.l.b16 %v2672
    %v2783 = vunpack.c.h.b16 %v2672
    %v2784 = vunpack.c.l.b16 %v2673
    %v2785 = vunpack.c.h.b16 %v2673
    %v2786 = vunpack.c.l.b16 %v2674
    %v2787 = vunpack.c.h.b16 %v2674
    %v2788 = vunpack.c.l.b16 %v2675
    %v2789 = vunpack.c.h.b16 %v2675
    %v2790 = vunpack.c.l.b16 %v2676
    %v2791 = vunpack.c.h.b16 %v2676
    %v2792 = vunpack.c.l.b16 %v2677
    %v2793 = vunpack.c.h.b16 %v2677
    %v2794 = vunpack.c.l.b16 %v2678
    %v2795 = vunpack.c.h.b16 %v2678
    %v2796 = vunpack.c.l.b16 %v2679
    %v2797 = vunpack.c.h.b16 %v2679
    %v2798 = vunpack.c.l.b16 %v2680
    %v2799 = vunpack.c.h.b16 %v2680
    %v2800 = vunpack.c.l.b16 %v2681
    %v2801 = vunpack.c.h.b16 %v2681
    %v2802 = vunpack.c.l.b16 %v2682
    %v2803 = vunpack.c.h.b16 %v2682
    %v2804 = vunpack.c.l.b16 %v2683
    %v2805 = vunpack.c.h.b16 %v2683
    %v2806 = vunpack.c.l.b16 %v2684
    %v2807 = vunpack.c.h.b16 %v2684
    %v2808 = vunpack.c.l.b16 %v2685
    %v2809 = vunpack.c.h.b16 %v2685
    %v2810 = vunpack.c.l.b16 %v2686
    %v2811 = vunpack.c.h.b16 %v2686
    %v2812 = vunpack.c.l.b16 %v2687
    %v2813 = vunpack.c.h.b16 %v2687
    %v2814 = vunpack.c.l.b16 %v2688
    %v2815 = vunpack.c.h.b16 %v2688
    %v2816 = vunpack.c.l.b16 %v2689
    %v2817 = vunpack.c.h.b16 %v2689
    %v2818 = vunpack.c.l.b16 %v2690
    %v2819 = vunpack.c.h.b16 %v2690
    %v2820 = vunpack.c.l.b16 %v2691
    %v2821 = vunpack.c.h.b16 %v2691
    %v2822 = vunpack.c.l.b16 %v2692
    %v2823 = vunpack.c.h.b16 %v2692
    %v2824 = vunpack.c.l.b16 %v2693
    %v2825 = vunpack.c.h.b16 %v2693
    %v2826 = vunpack.c.l.b16 %v2694
    %v2827 = vunpack.c.h.b16 %v2694
    %v2828 = vunpack.c.l.b16 %v2695
    %v2829 = vunpack.c.h.b16 %v2695
    %v2830 = vunpack.c.l.b16 %v2696
    %v2831 = vunpack.c.h.b16 %v2696
    %v2832 = vunpack.c.l.b16 %v2697
    %v2833 = vunpack.c.h.b16 %v2697
    %v2834 = vunpack.c.l.b16 %v2698
    %v2835 = vunpack.c.h.b16 %v2698
    %v2836 = vunpack.c.l.b16 %v2699
    %v2837 = vunpack.c.h.b16 %v2699
    %v2838 = vunpack.c.l.b16 %v2700
    %v2839 = vunpack.c.h.b16 %v2700
    %v2840 = vunpack.c.l.b16 %v2701
    %v2841 = vunpack.c.h.b16 %v2701
    %v2842 = vunpack.c.l.b16 %v2702
    %v2843 = vunpack.c.h.b16 %v2702
    %v2844 = vunpack.c.l.b16 %v2703
    %v2845 = vunpack.c.h.b16 %v2703
    %v2846 = vunpack.c.l.b16 %v2704
    %v2847 = vunpack.c.h.b16 %v2704
    %v2848 = vunpack.c.l.b16 %v2705
    %v2849 = vunpack.c.h.b16 %v2705
    %v2850 = vpack.c.b16 %v2758, %v2754
    %v2851 = vpack.c.b16 %v2759, %v2755
    %v2852 = vpack.c.b16 %v2760, %v2756
    %v2853 = vpack.c.b16 %v2761, %v2757
    %v2854 = vpack.c.b16 %v2766, %v2762
    %v2855 = vpack.c.b16 %v2767, %v2763
    %v2856 = vpack.c.b16 %v2768, %v2764
    %v2857 = vpack.c.b16 %v2769, %v2765
    %v2858 = vpack.c.b16 %v2774, %v2770
    %v2859 = vpack.c.b16 %v2775, %v2771
    %v2860 = vpack.c.b16 %v2776, %v2772
    %v2861 = vpack.c.b16 %v2777, %v2773
    %v2862 = vpack.c.b16 %v2782, %v2778
    %v2863 = vpack.c.b16 %v2783, %v2779
    %v2864 = vpack.c.b16 %v2784, %v2780
    %v2865 = vpack.c.b16 %v2785, %v2781
    %v2866 = vpack.c.b16 %v2790, %v2786
    %v2867 = vpack.c.b16 %v2791, %v2787
    %v2868 = vpack.c.b16 %v2792, %v2788
    %v2869 = vpack.c.b16 %v2793, %v2789
    %v2870 = vpack.c.b16 %v2798, %v2794
    %v2871 = vpack.c.b16 %v2799, %v2795
    %v2872 = vpack.c.b16 %v2800, %v2796
    %v2873 = vpack.c.b16 %v2801, %v2797
    %v2874 = vpack.c.b16 %v2806, %v2802
    %v2875 = vpack.c.b16 %v2807, %v2803
    %v2876 = vpack.c.b16 %v2808, %v2804
    %v2877 = vpack.c.b16 %v2809, %v2805
    %v2878 = vpack.c.b16 %v2814, %v2810
    %v2879 = vpack.c.b16 %v2815, %v2811
    %v2880 = vpack.c.b16 %v2816, %v2812
    %v2881 = vpack.c.b16 %v2817, %v2813
    %v2882 = vpack.c.b16 %v2822, %v2818
    %v2883 = vpack.c.b16 %v2823, %v2819
    %v2884 = vpack.c.b16 %v2824, %v2820
    %v2885 = vpack.c.b16 %v2825, %v2821
    %v2886 = vpack.c.b16 %v2830, %v2826
    %v2887 = vpack.c.b16 %v2831, %v2827
    %v2888 = vpack.c.b16 %v2832, %v2828
    %v2889 = vpack.c.b16 %v2833, %v2829
    %v2890 = vpack.c.b16 %v2838, %v2834
    %v2891 = vpack.c.b16 %v2839, %v2835
    %v2892 = vpack.c.b16 %v2840, %v2836
    %v2893 = vpack.c.b16 %v2841, %v2837
    %v2894 = vpack.c.b16 %v2846, %v2842
    %v2895 = vpack.c.b16 %v2847, %v2843
    %v2896 = vpack.c.b16 %v2848, %v2844
    %v2897 = vpack.c.b16 %v2849, %v2845
    %v2947 = vsel %vm184, %v2656, 0
    %2949 = vmatpush.bf16.msra.mxu0 %v2878
    %2950 = vmatpush.bf16.msra.mxu0 %v2874
    %2951 = vmatpush.bf16.msra.mxu0 %v2870
    %2952 = vmatpush.bf16.msra.mxu0 %v2866
    %2953 = vmatpush.bf16.msra.mxu0 %v2862
    %2954 = vmatpush.bf16.msra.mxu0 %v2858
    %2955 = vmatpush.bf16.msra.mxu0 %v2854
    %2956 = vmatpush.bf16.msra.mxu0 %v2850
    %2957 = vmatmul.bf16.gmra.mxu0 %v2655
    %v2958 = vpop.f32.mrf.mxu0
    %v2959 = vadd.f32 0.0, %v2958
    %v2960 = vpop.f32.mrf.mxu0
    %2961 = vdwg.mxu0
    %2962 = vmatpush.bf16.msra.mxu0 0
    %2963 = vmatpush.bf16.msra.mxu0 0
    %2964 = vmatpush.bf16.msra.mxu0 0
    %2965 = vmatpush.bf16.msra.mxu0 0
    %2966 = vmatpush.bf16.msra.mxu0 %v2894
    %2967 = vmatpush.bf16.msra.mxu0 %v2890
    %2968 = vmatpush.bf16.msra.mxu0 %v2886
    %2969 = vmatpush.bf16.msra.mxu0 %v2882
    %2970 = vmatmul.bf16.gmra.mxu0 %v2947
    %v2971 = vpop.f32.mrf.mxu0
    %v2972 = vadd.f32 %v2959, %v2971
    %v2973 = vpop.f32.mrf.mxu0
    %2974 = vdwg.mxu0
    %2975 = vmatpush.bf16.msra.mxu0 %v2879
    %2976 = vmatpush.bf16.msra.mxu0 %v2875
    %2977 = vmatpush.bf16.msra.mxu0 %v2871
    %2978 = vmatpush.bf16.msra.mxu0 %v2867
    %2979 = vmatpush.bf16.msra.mxu0 %v2863
    %2980 = vmatpush.bf16.msra.mxu0 %v2859
    %2981 = vmatpush.bf16.msra.mxu0 %v2855
    %2982 = vmatpush.bf16.msra.mxu0 %v2851
    %2983 = vmatmul.bf16.gmra.mxu0 %v2655
    %v2984 = vpop.f32.mrf.mxu0
    %v2985 = vadd.f32 0.0, %v2984
    %v2986 = vpop.f32.mrf.mxu0
    %2987 = vdwg.mxu0
    %2988 = vmatpush.bf16.msra.mxu0 0
    %2989 = vmatpush.bf16.msra.mxu0 0
    %2990 = vmatpush.bf16.msra.mxu0 0
    %2991 = vmatpush.bf16.msra.mxu0 0
    %2992 = vmatpush.bf16.msra.mxu0 %v2895
    %2993 = vmatpush.bf16.msra.mxu0 %v2891
    %2994 = vmatpush.bf16.msra.mxu0 %v2887
    %2995 = vmatpush.bf16.msra.mxu0 %v2883
    %2996 = vmatmul.bf16.gmra.mxu0 %v2947
    %v2997 = vpop.f32.mrf.mxu0
    %v2998 = vadd.f32 %v2985, %v2997
    %v2999 = vpop.f32.mrf.mxu0
    %3000 = vdwg.mxu0
    %3001 = vmatpush.bf16.msra.mxu0 %v2880
    %3002 = vmatpush.bf16.msra.mxu0 %v2876
    %3003 = vmatpush.bf16.msra.mxu0 %v2872
    %3004 = vmatpush.bf16.msra.mxu0 %v2868
    %3005 = vmatpush.bf16.msra.mxu0 %v2864
    %3006 = vmatpush.bf16.msra.mxu0 %v2860
    %3007 = vmatpush.bf16.msra.mxu0 %v2856
    %3008 = vmatpush.bf16.msra.mxu0 %v2852
    %3009 = vmatmul.bf16.gmra.mxu0 %v2655
    %v3010 = vpop.f32.mrf.mxu0
    %v3011 = vadd.f32 0.0, %v3010
    %v3012 = vpop.f32.mrf.mxu0
    %3013 = vdwg.mxu0
    %3014 = vmatpush.bf16.msra.mxu0 0
    %3015 = vmatpush.bf16.msra.mxu0 0
    %3016 = vmatpush.bf16.msra.mxu0 0
    %3017 = vmatpush.bf16.msra.mxu0 0
    %3018 = vmatpush.bf16.msra.mxu0 %v2896
    %3019 = vmatpush.bf16.msra.mxu0 %v2892
    %3020 = vmatpush.bf16.msra.mxu0 %v2888
    %3021 = vmatpush.bf16.msra.mxu0 %v2884
    %3022 = vmatmul.bf16.gmra.mxu0 %v2947
    %v3023 = vpop.f32.mrf.mxu0
    %v3024 = vadd.f32 %v3011, %v3023
    %v3025 = vpop.f32.mrf.mxu0
    %3026 = vdwg.mxu0
    %3027 = vmatpush.bf16.msra.mxu0 %v2881
    %3028 = vmatpush.bf16.msra.mxu0 %v2877
    %3029 = vmatpush.bf16.msra.mxu0 %v2873
    %3030 = vmatpush.bf16.msra.mxu0 %v2869
    %3031 = vmatpush.bf16.msra.mxu0 %v2865
    %3032 = vmatpush.bf16.msra.mxu0 %v2861
    %3033 = vmatpush.bf16.msra.mxu0 %v2857
    %3034 = vmatpush.bf16.msra.mxu0 %v2853
    %3035 = vmatmul.bf16.gmra.mxu0 %v2655
    %v3036 = vpop.f32.mrf.mxu0
    %v3037 = vadd.f32 0.0, %v3036
    %v3038 = vpop.f32.mrf.mxu0
    %3039 = vdwg.mxu0
    %3040 = vmatpush.bf16.msra.mxu0 0
    %3041 = vmatpush.bf16.msra.mxu0 0
    %3042 = vmatpush.bf16.msra.mxu0 0
    %3043 = vmatpush.bf16.msra.mxu0 0
    %3044 = vmatpush.bf16.msra.mxu0 %v2897
    %3045 = vmatpush.bf16.msra.mxu0 %v2893
    %3046 = vmatpush.bf16.msra.mxu0 %v2889
    %3047 = vmatpush.bf16.msra.mxu0 %v2885
    %3048 = vmatmul.bf16.gmra.mxu0 %v2947
    %v3049 = vpop.f32.mrf.mxu0
    %v3050 = vadd.f32 %v3037, %v3049
    %v3051 = vpop.f32.mrf.mxu0
    %3052 = vdwg.mxu0
    %v3053 = vadd.f32 %v2649, %v2972
    %v3054 = vadd.f32 %v2650, %v2998
    %v3055 = vadd.f32 %v2651, %v3024
    %v3056 = vadd.f32 %v2652, %v3050
    %v3057 = vmul.f32 %v94, %v640
    %v3058 = vmul.f32 %v95, %v641
    %v3059 = vpack.c.bf16 %v3057, %v3057
    %v3060 = vpack.c.bf16 %v3058, %v3058
    %s3061 = scalar_lea.vmem [#allocation6], 2304
    %v3062 = vld [vmem:[%s3061] sm:$0xff]
    %v3063 = vld [vmem:[%s3061 + $0x8] sm:$0xff]
    %v3064 = vld [vmem:[%s3061 + $0x10] sm:$0xff]
    %v3065 = vld [vmem:[%s3061 + $0x18] sm:$0xff]
    %v3066 = vld [vmem:[%s3061 + $0x20] sm:$0xff]
    %v3067 = vld [vmem:[%s3061 + $0x28] sm:$0xff]
    %v3068 = vld [vmem:[%s3061 + $0x30] sm:$0xff]
    %v3069 = vld [vmem:[%s3061 + $0x38] sm:$0xff]
    %v3070 = vld [vmem:[%s3061 + $0x40] sm:$0xff]
    %v3071 = vld [vmem:[%s3061 + $0x48] sm:$0xff]
    %v3072 = vld [vmem:[%s3061 + $0x50] sm:$0xff]
    %v3073 = vld [vmem:[%s3061 + $0x58] sm:$0xff]
    %v3074 = vld [vmem:[%s3061 + $0x60] sm:$0xff]
    %v3075 = vld [vmem:[%s3061 + $0x68] sm:$0xff]
    %v3076 = vld [vmem:[%s3061 + $0x70] sm:$0xff]
    %v3077 = vld [vmem:[%s3061 + $0x78] sm:$0xff]
    %v3078 = vld [vmem:[%s3061 + $0x80] sm:$0xff]
    %v3079 = vld [vmem:[%s3061 + $0x88] sm:$0xff]
    %v3080 = vld [vmem:[%s3061 + $0x90] sm:$0xff]
    %v3081 = vld [vmem:[%s3061 + $0x98] sm:$0xff]
    %v3082 = vld [vmem:[%s3061 + $0xa0] sm:$0xff]
    %v3083 = vld [vmem:[%s3061 + $0xa8] sm:$0xff]
    %v3084 = vld [vmem:[%s3061 + $0xb0] sm:$0xff]
    %v3085 = vld [vmem:[%s3061 + $0xb8] sm:$0xff]
    %v3086 = vld [vmem:[%s3061 + $0xc0] sm:$0xff]
    %v3087 = vld [vmem:[%s3061 + $0xc8] sm:$0xff]
    %v3088 = vld [vmem:[%s3061 + $0xd0] sm:$0xff]
    %v3089 = vld [vmem:[%s3061 + $0xd8] sm:$0xff]
    %v3090 = vld [vmem:[%s3061 + $0xe0] sm:$0xff]
    %v3091 = vld [vmem:[%s3061 + $0xe8] sm:$0xff]
    %v3092 = vld [vmem:[%s3061 + $0xf0] sm:$0xff]
    %v3093 = vld [vmem:[%s3061 + $0xf8] sm:$0xff]
    %v3094 = vld [vmem:[%s3061 + $0x100] sm:$0xff]
    %v3095 = vld [vmem:[%s3061 + $0x108] sm:$0xff]
    %v3096 = vld [vmem:[%s3061 + $0x110] sm:$0xff]
    %v3097 = vld [vmem:[%s3061 + $0x118] sm:$0xff]
    %v3098 = vld [vmem:[%s3061 + $0x120] sm:$0xff]
    %v3099 = vld [vmem:[%s3061 + $0x128] sm:$0xff]
    %v3100 = vld [vmem:[%s3061 + $0x130] sm:$0xff]
    %v3101 = vld [vmem:[%s3061 + $0x138] sm:$0xff]
    %v3102 = vld [vmem:[%s3061 + $0x140] sm:$0xff]
    %v3103 = vld [vmem:[%s3061 + $0x148] sm:$0xff]
    %v3104 = vld [vmem:[%s3061 + $0x150] sm:$0xff]
    %v3105 = vld [vmem:[%s3061 + $0x158] sm:$0xff]
    %v3106 = vld [vmem:[%s3061 + $0x160] sm:$0xff]
    %v3107 = vld [vmem:[%s3061 + $0x168] sm:$0xff]
    %v3108 = vld [vmem:[%s3061 + $0x170] sm:$0xff]
    %v3109 = vld [vmem:[%s3061 + $0x178] sm:$0xff]
    %v3158 = vunpack.c.l.b16 %v3062
    %v3159 = vunpack.c.h.b16 %v3062
    %v3160 = vunpack.c.l.b16 %v3063
    %v3161 = vunpack.c.h.b16 %v3063
    %v3162 = vunpack.c.l.b16 %v3064
    %v3163 = vunpack.c.h.b16 %v3064
    %v3164 = vunpack.c.l.b16 %v3065
    %v3165 = vunpack.c.h.b16 %v3065
    %v3166 = vunpack.c.l.b16 %v3066
    %v3167 = vunpack.c.h.b16 %v3066
    %v3168 = vunpack.c.l.b16 %v3067
    %v3169 = vunpack.c.h.b16 %v3067
    %v3170 = vunpack.c.l.b16 %v3068
    %v3171 = vunpack.c.h.b16 %v3068
    %v3172 = vunpack.c.l.b16 %v3069
    %v3173 = vunpack.c.h.b16 %v3069
    %v3174 = vunpack.c.l.b16 %v3070
    %v3175 = vunpack.c.h.b16 %v3070
    %v3176 = vunpack.c.l.b16 %v3071
    %v3177 = vunpack.c.h.b16 %v3071
    %v3178 = vunpack.c.l.b16 %v3072
    %v3179 = vunpack.c.h.b16 %v3072
    %v3180 = vunpack.c.l.b16 %v3073
    %v3181 = vunpack.c.h.b16 %v3073
    %v3182 = vunpack.c.l.b16 %v3074
    %v3183 = vunpack.c.h.b16 %v3074
    %v3184 = vunpack.c.l.b16 %v3075
    %v3185 = vunpack.c.h.b16 %v3075
    %v3186 = vunpack.c.l.b16 %v3076
    %v3187 = vunpack.c.h.b16 %v3076
    %v3188 = vunpack.c.l.b16 %v3077
    %v3189 = vunpack.c.h.b16 %v3077
    %v3190 = vunpack.c.l.b16 %v3078
    %v3191 = vunpack.c.h.b16 %v3078
    %v3192 = vunpack.c.l.b16 %v3079
    %v3193 = vunpack.c.h.b16 %v3079
    %v3194 = vunpack.c.l.b16 %v3080
    %v3195 = vunpack.c.h.b16 %v3080
    %v3196 = vunpack.c.l.b16 %v3081
    %v3197 = vunpack.c.h.b16 %v3081
    %v3198 = vunpack.c.l.b16 %v3082
    %v3199 = vunpack.c.h.b16 %v3082
    %v3200 = vunpack.c.l.b16 %v3083
    %v3201 = vunpack.c.h.b16 %v3083
    %v3202 = vunpack.c.l.b16 %v3084
    %v3203 = vunpack.c.h.b16 %v3084
    %v3204 = vunpack.c.l.b16 %v3085
    %v3205 = vunpack.c.h.b16 %v3085
    %v3206 = vunpack.c.l.b16 %v3086
    %v3207 = vunpack.c.h.b16 %v3086
    %v3208 = vunpack.c.l.b16 %v3087
    %v3209 = vunpack.c.h.b16 %v3087
    %v3210 = vunpack.c.l.b16 %v3088
    %v3211 = vunpack.c.h.b16 %v3088
    %v3212 = vunpack.c.l.b16 %v3089
    %v3213 = vunpack.c.h.b16 %v3089
    %v3214 = vunpack.c.l.b16 %v3090
    %v3215 = vunpack.c.h.b16 %v3090
    %v3216 = vunpack.c.l.b16 %v3091
    %v3217 = vunpack.c.h.b16 %v3091
    %v3218 = vunpack.c.l.b16 %v3092
    %v3219 = vunpack.c.h.b16 %v3092
    %v3220 = vunpack.c.l.b16 %v3093
    %v3221 = vunpack.c.h.b16 %v3093
    %v3222 = vunpack.c.l.b16 %v3094
    %v3223 = vunpack.c.h.b16 %v3094
    %v3224 = vunpack.c.l.b16 %v3095
    %v3225 = vunpack.c.h.b16 %v3095
    %v3226 = vunpack.c.l.b16 %v3096
    %v3227 = vunpack.c.h.b16 %v3096
    %v3228 = vunpack.c.l.b16 %v3097
    %v3229 = vunpack.c.h.b16 %v3097
    %v3230 = vunpack.c.l.b16 %v3098
    %v3231 = vunpack.c.h.b16 %v3098
    %v3232 = vunpack.c.l.b16 %v3099
    %v3233 = vunpack.c.h.b16 %v3099
    %v3234 = vunpack.c.l.b16 %v3100
    %v3235 = vunpack.c.h.b16 %v3100
    %v3236 = vunpack.c.l.b16 %v3101
    %v3237 = vunpack.c.h.b16 %v3101
    %v3238 = vunpack.c.l.b16 %v3102
    %v3239 = vunpack.c.h.b16 %v3102
    %v3240 = vunpack.c.l.b16 %v3103
    %v3241 = vunpack.c.h.b16 %v3103
    %v3242 = vunpack.c.l.b16 %v3104
    %v3243 = vunpack.c.h.b16 %v3104
    %v3244 = vunpack.c.l.b16 %v3105
    %v3245 = vunpack.c.h.b16 %v3105
    %v3246 = vunpack.c.l.b16 %v3106
    %v3247 = vunpack.c.h.b16 %v3106
    %v3248 = vunpack.c.l.b16 %v3107
    %v3249 = vunpack.c.h.b16 %v3107
    %v3250 = vunpack.c.l.b16 %v3108
    %v3251 = vunpack.c.h.b16 %v3108
    %v3252 = vunpack.c.l.b16 %v3109
    %v3253 = vunpack.c.h.b16 %v3109
    %v3254 = vpack.c.b16 %v3162, %v3158
    %v3255 = vpack.c.b16 %v3163, %v3159
    %v3256 = vpack.c.b16 %v3164, %v3160
    %v3257 = vpack.c.b16 %v3165, %v3161
    %v3258 = vpack.c.b16 %v3170, %v3166
    %v3259 = vpack.c.b16 %v3171, %v3167
    %v3260 = vpack.c.b16 %v3172, %v3168
    %v3261 = vpack.c.b16 %v3173, %v3169
    %v3262 = vpack.c.b16 %v3178, %v3174
    %v3263 = vpack.c.b16 %v3179, %v3175
    %v3264 = vpack.c.b16 %v3180, %v3176
    %v3265 = vpack.c.b16 %v3181, %v3177
    %v3266 = vpack.c.b16 %v3186, %v3182
    %v3267 = vpack.c.b16 %v3187, %v3183
    %v3268 = vpack.c.b16 %v3188, %v3184
    %v3269 = vpack.c.b16 %v3189, %v3185
    %v3270 = vpack.c.b16 %v3194, %v3190
    %v3271 = vpack.c.b16 %v3195, %v3191
    %v3272 = vpack.c.b16 %v3196, %v3192
    %v3273 = vpack.c.b16 %v3197, %v3193
    %v3274 = vpack.c.b16 %v3202, %v3198
    %v3275 = vpack.c.b16 %v3203, %v3199
    %v3276 = vpack.c.b16 %v3204, %v3200
    %v3277 = vpack.c.b16 %v3205, %v3201
    %v3278 = vpack.c.b16 %v3210, %v3206
    %v3279 = vpack.c.b16 %v3211, %v3207
    %v3280 = vpack.c.b16 %v3212, %v3208
    %v3281 = vpack.c.b16 %v3213, %v3209
    %v3282 = vpack.c.b16 %v3218, %v3214
    %v3283 = vpack.c.b16 %v3219, %v3215
    %v3284 = vpack.c.b16 %v3220, %v3216
    %v3285 = vpack.c.b16 %v3221, %v3217
    %v3286 = vpack.c.b16 %v3226, %v3222
    %v3287 = vpack.c.b16 %v3227, %v3223
    %v3288 = vpack.c.b16 %v3228, %v3224
    %v3289 = vpack.c.b16 %v3229, %v3225
    %v3290 = vpack.c.b16 %v3234, %v3230
    %v3291 = vpack.c.b16 %v3235, %v3231
    %v3292 = vpack.c.b16 %v3236, %v3232
    %v3293 = vpack.c.b16 %v3237, %v3233
    %v3294 = vpack.c.b16 %v3242, %v3238
    %v3295 = vpack.c.b16 %v3243, %v3239
    %v3296 = vpack.c.b16 %v3244, %v3240
    %v3297 = vpack.c.b16 %v3245, %v3241
    %v3298 = vpack.c.b16 %v3250, %v3246
    %v3299 = vpack.c.b16 %v3251, %v3247
    %v3300 = vpack.c.b16 %v3252, %v3248
    %v3301 = vpack.c.b16 %v3253, %v3249
    %v3351 = vsel %vm184, %v3060, 0
    %3353 = vmatpush.bf16.msra.mxu0 %v3282
    %3354 = vmatpush.bf16.msra.mxu0 %v3278
    %3355 = vmatpush.bf16.msra.mxu0 %v3274
    %3356 = vmatpush.bf16.msra.mxu0 %v3270
    %3357 = vmatpush.bf16.msra.mxu0 %v3266
    %3358 = vmatpush.bf16.msra.mxu0 %v3262
    %3359 = vmatpush.bf16.msra.mxu0 %v3258
    %3360 = vmatpush.bf16.msra.mxu0 %v3254
    %3361 = vmatmul.bf16.gmra.mxu0 %v3059
    %v3362 = vpop.f32.mrf.mxu0
    %v3363 = vadd.f32 0.0, %v3362
    %v3364 = vpop.f32.mrf.mxu0
    %3365 = vdwg.mxu0
    %3366 = vmatpush.bf16.msra.mxu0 0
    %3367 = vmatpush.bf16.msra.mxu0 0
    %3368 = vmatpush.bf16.msra.mxu0 0
    %3369 = vmatpush.bf16.msra.mxu0 0
    %3370 = vmatpush.bf16.msra.mxu0 %v3298
    %3371 = vmatpush.bf16.msra.mxu0 %v3294
    %3372 = vmatpush.bf16.msra.mxu0 %v3290
    %3373 = vmatpush.bf16.msra.mxu0 %v3286
    %3374 = vmatmul.bf16.gmra.mxu0 %v3351
    %v3375 = vpop.f32.mrf.mxu0
    %v3376 = vadd.f32 %v3363, %v3375
    %v3377 = vpop.f32.mrf.mxu0
    %3378 = vdwg.mxu0
    %3379 = vmatpush.bf16.msra.mxu0 %v3283
    %3380 = vmatpush.bf16.msra.mxu0 %v3279
    %3381 = vmatpush.bf16.msra.mxu0 %v3275
    %3382 = vmatpush.bf16.msra.mxu0 %v3271
    %3383 = vmatpush.bf16.msra.mxu0 %v3267
    %3384 = vmatpush.bf16.msra.mxu0 %v3263
    %3385 = vmatpush.bf16.msra.mxu0 %v3259
    %3386 = vmatpush.bf16.msra.mxu0 %v3255
    %3387 = vmatmul.bf16.gmra.mxu0 %v3059
    %v3388 = vpop.f32.mrf.mxu0
    %v3389 = vadd.f32 0.0, %v3388
    %v3390 = vpop.f32.mrf.mxu0
    %3391 = vdwg.mxu0
    %3392 = vmatpush.bf16.msra.mxu0 0
    %3393 = vmatpush.bf16.msra.mxu0 0
    %3394 = vmatpush.bf16.msra.mxu0 0
    %3395 = vmatpush.bf16.msra.mxu0 0
    %3396 = vmatpush.bf16.msra.mxu0 %v3299
    %3397 = vmatpush.bf16.msra.mxu0 %v3295
    %3398 = vmatpush.bf16.msra.mxu0 %v3291
    %3399 = vmatpush.bf16.msra.mxu0 %v3287
    %3400 = vmatmul.bf16.gmra.mxu0 %v3351
    %v3401 = vpop.f32.mrf.mxu0
    %v3402 = vadd.f32 %v3389, %v3401
    %v3403 = vpop.f32.mrf.mxu0
    %3404 = vdwg.mxu0
    %3405 = vmatpush.bf16.msra.mxu0 %v3284
    %3406 = vmatpush.bf16.msra.mxu0 %v3280
    %3407 = vmatpush.bf16.msra.mxu0 %v3276
    %3408 = vmatpush.bf16.msra.mxu0 %v3272
    %3409 = vmatpush.bf16.msra.mxu0 %v3268
    %3410 = vmatpush.bf16.msra.mxu0 %v3264
    %3411 = vmatpush.bf16.msra.mxu0 %v3260
    %3412 = vmatpush.bf16.msra.mxu0 %v3256
    %3413 = vmatmul.bf16.gmra.mxu0 %v3059
    %v3414 = vpop.f32.mrf.mxu0
    %v3415 = vadd.f32 0.0, %v3414
    %v3416 = vpop.f32.mrf.mxu0
    %3417 = vdwg.mxu0
    %3418 = vmatpush.bf16.msra.mxu0 0
    %3419 = vmatpush.bf16.msra.mxu0 0
    %3420 = vmatpush.bf16.msra.mxu0 0
    %3421 = vmatpush.bf16.msra.mxu0 0
    %3422 = vmatpush.bf16.msra.mxu0 %v3300
    %3423 = vmatpush.bf16.msra.mxu0 %v3296
    %3424 = vmatpush.bf16.msra.mxu0 %v3292
    %3425 = vmatpush.bf16.msra.mxu0 %v3288
    %3426 = vmatmul.bf16.gmra.mxu0 %v3351
    %v3427 = vpop.f32.mrf.mxu0
    %v3428 = vadd.f32 %v3415, %v3427
    %v3429 = vpop.f32.mrf.mxu0
    %3430 = vdwg.mxu0
    %3431 = vmatpush.bf16.msra.mxu0 %v3285
    %3432 = vmatpush.bf16.msra.mxu0 %v3281
    %3433 = vmatpush.bf16.msra.mxu0 %v3277
    %3434 = vmatpush.bf16.msra.mxu0 %v3273
    %3435 = vmatpush.bf16.msra.mxu0 %v3269
    %3436 = vmatpush.bf16.msra.mxu0 %v3265
    %3437 = vmatpush.bf16.msra.mxu0 %v3261
    %3438 = vmatpush.bf16.msra.mxu0 %v3257
    %3439 = vmatmul.bf16.gmra.mxu0 %v3059
    %v3440 = vpop.f32.mrf.mxu0
    %v3441 = vadd.f32 0.0, %v3440
    %v3442 = vpop.f32.mrf.mxu0
    %3443 = vdwg.mxu0
    %3444 = vmatpush.bf16.msra.mxu0 0
    %3445 = vmatpush.bf16.msra.mxu0 0
    %3446 = vmatpush.bf16.msra.mxu0 0
    %3447 = vmatpush.bf16.msra.mxu0 0
    %3448 = vmatpush.bf16.msra.mxu0 %v3301
    %3449 = vmatpush.bf16.msra.mxu0 %v3297
    %3450 = vmatpush.bf16.msra.mxu0 %v3293
    %3451 = vmatpush.bf16.msra.mxu0 %v3289
    %3452 = vmatmul.bf16.gmra.mxu0 %v3351
    %v3453 = vpop.f32.mrf.mxu0
    %v3454 = vadd.f32 %v3441, %v3453
    %v3455 = vpop.f32.mrf.mxu0
    %3456 = vdwg.mxu0
    %v3457 = vadd.f32 %v3053, %v3376
    %v3458 = vadd.f32 %v3054, %v3402
    %v3459 = vadd.f32 %v3055, %v3428
    %v3460 = vadd.f32 %v3056, %v3454
    %v3461 = vmul.f32 %v96, %v640
    %v3462 = vmul.f32 %v97, %v641
    %v3463 = vpack.c.bf16 %v3461, %v3461
    %v3464 = vpack.c.bf16 %v3462, %v3462
    %s3465 = scalar_lea.vmem [#allocation6], 2688
    %v3466 = vld [vmem:[%s3465] sm:$0xff]
    %v3467 = vld [vmem:[%s3465 + $0x8] sm:$0xff]
    %v3468 = vld [vmem:[%s3465 + $0x10] sm:$0xff]
    %v3469 = vld [vmem:[%s3465 + $0x18] sm:$0xff]
    %v3470 = vld [vmem:[%s3465 + $0x20] sm:$0xff]
    %v3471 = vld [vmem:[%s3465 + $0x28] sm:$0xff]
    %v3472 = vld [vmem:[%s3465 + $0x30] sm:$0xff]
    %v3473 = vld [vmem:[%s3465 + $0x38] sm:$0xff]
    %v3474 = vld [vmem:[%s3465 + $0x40] sm:$0xff]
    %v3475 = vld [vmem:[%s3465 + $0x48] sm:$0xff]
    %v3476 = vld [vmem:[%s3465 + $0x50] sm:$0xff]
    %v3477 = vld [vmem:[%s3465 + $0x58] sm:$0xff]
    %v3478 = vld [vmem:[%s3465 + $0x60] sm:$0xff]
    %v3479 = vld [vmem:[%s3465 + $0x68] sm:$0xff]
    %v3480 = vld [vmem:[%s3465 + $0x70] sm:$0xff]
    %v3481 = vld [vmem:[%s3465 + $0x78] sm:$0xff]
    %v3482 = vld [vmem:[%s3465 + $0x80] sm:$0xff]
    %v3483 = vld [vmem:[%s3465 + $0x88] sm:$0xff]
    %v3484 = vld [vmem:[%s3465 + $0x90] sm:$0xff]
    %v3485 = vld [vmem:[%s3465 + $0x98] sm:$0xff]
    %v3486 = vld [vmem:[%s3465 + $0xa0] sm:$0xff]
    %v3487 = vld [vmem:[%s3465 + $0xa8] sm:$0xff]
    %v3488 = vld [vmem:[%s3465 + $0xb0] sm:$0xff]
    %v3489 = vld [vmem:[%s3465 + $0xb8] sm:$0xff]
    %v3490 = vld [vmem:[%s3465 + $0xc0] sm:$0xff]
    %v3491 = vld [vmem:[%s3465 + $0xc8] sm:$0xff]
    %v3492 = vld [vmem:[%s3465 + $0xd0] sm:$0xff]
    %v3493 = vld [vmem:[%s3465 + $0xd8] sm:$0xff]
    %v3494 = vld [vmem:[%s3465 + $0xe0] sm:$0xff]
    %v3495 = vld [vmem:[%s3465 + $0xe8] sm:$0xff]
    %v3496 = vld [vmem:[%s3465 + $0xf0] sm:$0xff]
    %v3497 = vld [vmem:[%s3465 + $0xf8] sm:$0xff]
    %v3498 = vld [vmem:[%s3465 + $0x100] sm:$0xff]
    %v3499 = vld [vmem:[%s3465 + $0x108] sm:$0xff]
    %v3500 = vld [vmem:[%s3465 + $0x110] sm:$0xff]
    %v3501 = vld [vmem:[%s3465 + $0x118] sm:$0xff]
    %v3502 = vld [vmem:[%s3465 + $0x120] sm:$0xff]
    %v3503 = vld [vmem:[%s3465 + $0x128] sm:$0xff]
    %v3504 = vld [vmem:[%s3465 + $0x130] sm:$0xff]
    %v3505 = vld [vmem:[%s3465 + $0x138] sm:$0xff]
    %v3506 = vld [vmem:[%s3465 + $0x140] sm:$0xff]
    %v3507 = vld [vmem:[%s3465 + $0x148] sm:$0xff]
    %v3508 = vld [vmem:[%s3465 + $0x150] sm:$0xff]
    %v3509 = vld [vmem:[%s3465 + $0x158] sm:$0xff]
    %v3510 = vld [vmem:[%s3465 + $0x160] sm:$0xff]
    %v3511 = vld [vmem:[%s3465 + $0x168] sm:$0xff]
    %v3512 = vld [vmem:[%s3465 + $0x170] sm:$0xff]
    %v3513 = vld [vmem:[%s3465 + $0x178] sm:$0xff]
    %v3562 = vunpack.c.l.b16 %v3466
    %v3563 = vunpack.c.h.b16 %v3466
    %v3564 = vunpack.c.l.b16 %v3467
    %v3565 = vunpack.c.h.b16 %v3467
    %v3566 = vunpack.c.l.b16 %v3468
    %v3567 = vunpack.c.h.b16 %v3468
    %v3568 = vunpack.c.l.b16 %v3469
    %v3569 = vunpack.c.h.b16 %v3469
    %v3570 = vunpack.c.l.b16 %v3470
    %v3571 = vunpack.c.h.b16 %v3470
    %v3572 = vunpack.c.l.b16 %v3471
    %v3573 = vunpack.c.h.b16 %v3471
    %v3574 = vunpack.c.l.b16 %v3472
    %v3575 = vunpack.c.h.b16 %v3472
    %v3576 = vunpack.c.l.b16 %v3473
    %v3577 = vunpack.c.h.b16 %v3473
    %v3578 = vunpack.c.l.b16 %v3474
    %v3579 = vunpack.c.h.b16 %v3474
    %v3580 = vunpack.c.l.b16 %v3475
    %v3581 = vunpack.c.h.b16 %v3475
    %v3582 = vunpack.c.l.b16 %v3476
    %v3583 = vunpack.c.h.b16 %v3476
    %v3584 = vunpack.c.l.b16 %v3477
    %v3585 = vunpack.c.h.b16 %v3477
    %v3586 = vunpack.c.l.b16 %v3478
    %v3587 = vunpack.c.h.b16 %v3478
    %v3588 = vunpack.c.l.b16 %v3479
    %v3589 = vunpack.c.h.b16 %v3479
    %v3590 = vunpack.c.l.b16 %v3480
    %v3591 = vunpack.c.h.b16 %v3480
    %v3592 = vunpack.c.l.b16 %v3481
    %v3593 = vunpack.c.h.b16 %v3481
    %v3594 = vunpack.c.l.b16 %v3482
    %v3595 = vunpack.c.h.b16 %v3482
    %v3596 = vunpack.c.l.b16 %v3483
    %v3597 = vunpack.c.h.b16 %v3483
    %v3598 = vunpack.c.l.b16 %v3484
    %v3599 = vunpack.c.h.b16 %v3484
    %v3600 = vunpack.c.l.b16 %v3485
    %v3601 = vunpack.c.h.b16 %v3485
    %v3602 = vunpack.c.l.b16 %v3486
    %v3603 = vunpack.c.h.b16 %v3486
    %v3604 = vunpack.c.l.b16 %v3487
    %v3605 = vunpack.c.h.b16 %v3487
    %v3606 = vunpack.c.l.b16 %v3488
    %v3607 = vunpack.c.h.b16 %v3488
    %v3608 = vunpack.c.l.b16 %v3489
    %v3609 = vunpack.c.h.b16 %v3489
    %v3610 = vunpack.c.l.b16 %v3490
    %v3611 = vunpack.c.h.b16 %v3490
    %v3612 = vunpack.c.l.b16 %v3491
    %v3613 = vunpack.c.h.b16 %v3491
    %v3614 = vunpack.c.l.b16 %v3492
    %v3615 = vunpack.c.h.b16 %v3492
    %v3616 = vunpack.c.l.b16 %v3493
    %v3617 = vunpack.c.h.b16 %v3493
    %v3618 = vunpack.c.l.b16 %v3494
    %v3619 = vunpack.c.h.b16 %v3494
    %v3620 = vunpack.c.l.b16 %v3495
    %v3621 = vunpack.c.h.b16 %v3495
    %v3622 = vunpack.c.l.b16 %v3496
    %v3623 = vunpack.c.h.b16 %v3496
    %v3624 = vunpack.c.l.b16 %v3497
    %v3625 = vunpack.c.h.b16 %v3497
    %v3626 = vunpack.c.l.b16 %v3498
    %v3627 = vunpack.c.h.b16 %v3498
    %v3628 = vunpack.c.l.b16 %v3499
    %v3629 = vunpack.c.h.b16 %v3499
    %v3630 = vunpack.c.l.b16 %v3500
    %v3631 = vunpack.c.h.b16 %v3500
    %v3632 = vunpack.c.l.b16 %v3501
    %v3633 = vunpack.c.h.b16 %v3501
    %v3634 = vunpack.c.l.b16 %v3502
    %v3635 = vunpack.c.h.b16 %v3502
    %v3636 = vunpack.c.l.b16 %v3503
    %v3637 = vunpack.c.h.b16 %v3503
    %v3638 = vunpack.c.l.b16 %v3504
    %v3639 = vunpack.c.h.b16 %v3504
    %v3640 = vunpack.c.l.b16 %v3505
    %v3641 = vunpack.c.h.b16 %v3505
    %v3642 = vunpack.c.l.b16 %v3506
    %v3643 = vunpack.c.h.b16 %v3506
    %v3644 = vunpack.c.l.b16 %v3507
    %v3645 = vunpack.c.h.b16 %v3507
    %v3646 = vunpack.c.l.b16 %v3508
    %v3647 = vunpack.c.h.b16 %v3508
    %v3648 = vunpack.c.l.b16 %v3509
    %v3649 = vunpack.c.h.b16 %v3509
    %v3650 = vunpack.c.l.b16 %v3510
    %v3651 = vunpack.c.h.b16 %v3510
    %v3652 = vunpack.c.l.b16 %v3511
    %v3653 = vunpack.c.h.b16 %v3511
    %v3654 = vunpack.c.l.b16 %v3512
    %v3655 = vunpack.c.h.b16 %v3512
    %v3656 = vunpack.c.l.b16 %v3513
    %v3657 = vunpack.c.h.b16 %v3513
    %v3658 = vpack.c.b16 %v3566, %v3562
    %v3659 = vpack.c.b16 %v3567, %v3563
    %v3660 = vpack.c.b16 %v3568, %v3564
    %v3661 = vpack.c.b16 %v3569, %v3565
    %v3662 = vpack.c.b16 %v3574, %v3570
    %v3663 = vpack.c.b16 %v3575, %v3571
    %v3664 = vpack.c.b16 %v3576, %v3572
    %v3665 = vpack.c.b16 %v3577, %v3573
    %v3666 = vpack.c.b16 %v3582, %v3578
    %v3667 = vpack.c.b16 %v3583, %v3579
    %v3668 = vpack.c.b16 %v3584, %v3580
    %v3669 = vpack.c.b16 %v3585, %v3581
    %v3670 = vpack.c.b16 %v3590, %v3586
    %v3671 = vpack.c.b16 %v3591, %v3587
    %v3672 = vpack.c.b16 %v3592, %v3588
    %v3673 = vpack.c.b16 %v3593, %v3589
    %v3674 = vpack.c.b16 %v3598, %v3594
    %v3675 = vpack.c.b16 %v3599, %v3595
    %v3676 = vpack.c.b16 %v3600, %v3596
    %v3677 = vpack.c.b16 %v3601, %v3597
    %v3678 = vpack.c.b16 %v3606, %v3602
    %v3679 = vpack.c.b16 %v3607, %v3603
    %v3680 = vpack.c.b16 %v3608, %v3604
    %v3681 = vpack.c.b16 %v3609, %v3605
    %v3682 = vpack.c.b16 %v3614, %v3610
    %v3683 = vpack.c.b16 %v3615, %v3611
    %v3684 = vpack.c.b16 %v3616, %v3612
    %v3685 = vpack.c.b16 %v3617, %v3613
    %v3686 = vpack.c.b16 %v3622, %v3618
    %v3687 = vpack.c.b16 %v3623, %v3619
    %v3688 = vpack.c.b16 %v3624, %v3620
    %v3689 = vpack.c.b16 %v3625, %v3621
    %v3690 = vpack.c.b16 %v3630, %v3626
    %v3691 = vpack.c.b16 %v3631, %v3627
    %v3692 = vpack.c.b16 %v3632, %v3628
    %v3693 = vpack.c.b16 %v3633, %v3629
    %v3694 = vpack.c.b16 %v3638, %v3634
    %v3695 = vpack.c.b16 %v3639, %v3635
    %v3696 = vpack.c.b16 %v3640, %v3636
    %v3697 = vpack.c.b16 %v3641, %v3637
    %v3698 = vpack.c.b16 %v3646, %v3642
    %v3699 = vpack.c.b16 %v3647, %v3643
    %v3700 = vpack.c.b16 %v3648, %v3644
    %v3701 = vpack.c.b16 %v3649, %v3645
    %v3702 = vpack.c.b16 %v3654, %v3650
    %v3703 = vpack.c.b16 %v3655, %v3651
    %v3704 = vpack.c.b16 %v3656, %v3652
    %v3705 = vpack.c.b16 %v3657, %v3653
    %v3755 = vsel %vm184, %v3464, 0
    %3757 = vmatpush.bf16.msra.mxu0 %v3686
    %3758 = vmatpush.bf16.msra.mxu0 %v3682
    %3759 = vmatpush.bf16.msra.mxu0 %v3678
    %3760 = vmatpush.bf16.msra.mxu0 %v3674
    %3761 = vmatpush.bf16.msra.mxu0 %v3670
    %3762 = vmatpush.bf16.msra.mxu0 %v3666
    %3763 = vmatpush.bf16.msra.mxu0 %v3662
    %3764 = vmatpush.bf16.msra.mxu0 %v3658
    %3765 = vmatmul.bf16.gmra.mxu0 %v3463
    %v3766 = vpop.f32.mrf.mxu0
    %v3767 = vadd.f32 0.0, %v3766
    %v3768 = vpop.f32.mrf.mxu0
    %3769 = vdwg.mxu0
    %3770 = vmatpush.bf16.msra.mxu0 0
    %3771 = vmatpush.bf16.msra.mxu0 0
    %3772 = vmatpush.bf16.msra.mxu0 0
    %3773 = vmatpush.bf16.msra.mxu0 0
    %3774 = vmatpush.bf16.msra.mxu0 %v3702
    %3775 = vmatpush.bf16.msra.mxu0 %v3698
    %3776 = vmatpush.bf16.msra.mxu0 %v3694
    %3777 = vmatpush.bf16.msra.mxu0 %v3690
    %3778 = vmatmul.bf16.gmra.mxu0 %v3755
    %v3779 = vpop.f32.mrf.mxu0
    %v3780 = vadd.f32 %v3767, %v3779
    %v3781 = vpop.f32.mrf.mxu0
    %3782 = vdwg.mxu0
    %3783 = vmatpush.bf16.msra.mxu0 %v3687
    %3784 = vmatpush.bf16.msra.mxu0 %v3683
    %3785 = vmatpush.bf16.msra.mxu0 %v3679
    %3786 = vmatpush.bf16.msra.mxu0 %v3675
    %3787 = vmatpush.bf16.msra.mxu0 %v3671
    %3788 = vmatpush.bf16.msra.mxu0 %v3667
    %3789 = vmatpush.bf16.msra.mxu0 %v3663
    %3790 = vmatpush.bf16.msra.mxu0 %v3659
    %3791 = vmatmul.bf16.gmra.mxu0 %v3463
    %v3792 = vpop.f32.mrf.mxu0
    %v3793 = vadd.f32 0.0, %v3792
    %v3794 = vpop.f32.mrf.mxu0
    %3795 = vdwg.mxu0
    %3796 = vmatpush.bf16.msra.mxu0 0
    %3797 = vmatpush.bf16.msra.mxu0 0
    %3798 = vmatpush.bf16.msra.mxu0 0
    %3799 = vmatpush.bf16.msra.mxu0 0
    %3800 = vmatpush.bf16.msra.mxu0 %v3703
    %3801 = vmatpush.bf16.msra.mxu0 %v3699
    %3802 = vmatpush.bf16.msra.mxu0 %v3695
    %3803 = vmatpush.bf16.msra.mxu0 %v3691
    %3804 = vmatmul.bf16.gmra.mxu0 %v3755
    %v3805 = vpop.f32.mrf.mxu0
    %v3806 = vadd.f32 %v3793, %v3805
    %v3807 = vpop.f32.mrf.mxu0
    %3808 = vdwg.mxu0
    %3809 = vmatpush.bf16.msra.mxu0 %v3688
    %3810 = vmatpush.bf16.msra.mxu0 %v3684
    %3811 = vmatpush.bf16.msra.mxu0 %v3680
    %3812 = vmatpush.bf16.msra.mxu0 %v3676
    %3813 = vmatpush.bf16.msra.mxu0 %v3672
    %3814 = vmatpush.bf16.msra.mxu0 %v3668
    %3815 = vmatpush.bf16.msra.mxu0 %v3664
    %3816 = vmatpush.bf16.msra.mxu0 %v3660
    %3817 = vmatmul.bf16.gmra.mxu0 %v3463
    %v3818 = vpop.f32.mrf.mxu0
    %v3819 = vadd.f32 0.0, %v3818
    %v3820 = vpop.f32.mrf.mxu0
    %3821 = vdwg.mxu0
    %3822 = vmatpush.bf16.msra.mxu0 0
    %3823 = vmatpush.bf16.msra.mxu0 0
    %3824 = vmatpush.bf16.msra.mxu0 0
    %3825 = vmatpush.bf16.msra.mxu0 0
    %3826 = vmatpush.bf16.msra.mxu0 %v3704
    %3827 = vmatpush.bf16.msra.mxu0 %v3700
    %3828 = vmatpush.bf16.msra.mxu0 %v3696
    %3829 = vmatpush.bf16.msra.mxu0 %v3692
    %3830 = vmatmul.bf16.gmra.mxu0 %v3755
    %v3831 = vpop.f32.mrf.mxu0
    %v3832 = vadd.f32 %v3819, %v3831
    %v3833 = vpop.f32.mrf.mxu0
    %3834 = vdwg.mxu0
    %3835 = vmatpush.bf16.msra.mxu0 %v3689
    %3836 = vmatpush.bf16.msra.mxu0 %v3685
    %3837 = vmatpush.bf16.msra.mxu0 %v3681
    %3838 = vmatpush.bf16.msra.mxu0 %v3677
    %3839 = vmatpush.bf16.msra.mxu0 %v3673
    %3840 = vmatpush.bf16.msra.mxu0 %v3669
    %3841 = vmatpush.bf16.msra.mxu0 %v3665
    %3842 = vmatpush.bf16.msra.mxu0 %v3661
    %3843 = vmatmul.bf16.gmra.mxu0 %v3463
    %v3844 = vpop.f32.mrf.mxu0
    %v3845 = vadd.f32 0.0, %v3844
    %v3846 = vpop.f32.mrf.mxu0
    %3847 = vdwg.mxu0
    %3848 = vmatpush.bf16.msra.mxu0 0
    %3849 = vmatpush.bf16.msra.mxu0 0
    %3850 = vmatpush.bf16.msra.mxu0 0
    %3851 = vmatpush.bf16.msra.mxu0 0
    %3852 = vmatpush.bf16.msra.mxu0 %v3705
    %3853 = vmatpush.bf16.msra.mxu0 %v3701
    %3854 = vmatpush.bf16.msra.mxu0 %v3697
    %3855 = vmatpush.bf16.msra.mxu0 %v3693
    %3856 = vmatmul.bf16.gmra.mxu0 %v3755
    %v3857 = vpop.f32.mrf.mxu0
    %v3858 = vadd.f32 %v3845, %v3857
    %v3859 = vpop.f32.mrf.mxu0
    %3860 = vdwg.mxu0
    %v3861 = vadd.f32 %v3457, %v3780
    %v3862 = vadd.f32 %v3458, %v3806
    %v3863 = vadd.f32 %v3459, %v3832
    %v3864 = vadd.f32 %v3460, %v3858
    %v3865 = vmul.f32 %v98, %v640
    %v3866 = vmul.f32 %v99, %v641
    %v3867 = vpack.c.bf16 %v3865, %v3865
    %v3868 = vpack.c.bf16 %v3866, %v3866
    %s3869 = scalar_lea.vmem [#allocation6], 3072
    %v3870 = vld [vmem:[%s3869] sm:$0xff]
    %v3871 = vld [vmem:[%s3869 + $0x8] sm:$0xff]
    %v3872 = vld [vmem:[%s3869 + $0x10] sm:$0xff]
    %v3873 = vld [vmem:[%s3869 + $0x18] sm:$0xff]
    %v3874 = vld [vmem:[%s3869 + $0x20] sm:$0xff]
    %v3875 = vld [vmem:[%s3869 + $0x28] sm:$0xff]
    %v3876 = vld [vmem:[%s3869 + $0x30] sm:$0xff]
    %v3877 = vld [vmem:[%s3869 + $0x38] sm:$0xff]
    %v3878 = vld [vmem:[%s3869 + $0x40] sm:$0xff]
    %v3879 = vld [vmem:[%s3869 + $0x48] sm:$0xff]
    %v3880 = vld [vmem:[%s3869 + $0x50] sm:$0xff]
    %v3881 = vld [vmem:[%s3869 + $0x58] sm:$0xff]
    %v3882 = vld [vmem:[%s3869 + $0x60] sm:$0xff]
    %v3883 = vld [vmem:[%s3869 + $0x68] sm:$0xff]
    %v3884 = vld [vmem:[%s3869 + $0x70] sm:$0xff]
    %v3885 = vld [vmem:[%s3869 + $0x78] sm:$0xff]
    %v3886 = vld [vmem:[%s3869 + $0x80] sm:$0xff]
    %v3887 = vld [vmem:[%s3869 + $0x88] sm:$0xff]
    %v3888 = vld [vmem:[%s3869 + $0x90] sm:$0xff]
    %v3889 = vld [vmem:[%s3869 + $0x98] sm:$0xff]
    %v3890 = vld [vmem:[%s3869 + $0xa0] sm:$0xff]
    %v3891 = vld [vmem:[%s3869 + $0xa8] sm:$0xff]
    %v3892 = vld [vmem:[%s3869 + $0xb0] sm:$0xff]
    %v3893 = vld [vmem:[%s3869 + $0xb8] sm:$0xff]
    %v3894 = vld [vmem:[%s3869 + $0xc0] sm:$0xff]
    %v3895 = vld [vmem:[%s3869 + $0xc8] sm:$0xff]
    %v3896 = vld [vmem:[%s3869 + $0xd0] sm:$0xff]
    %v3897 = vld [vmem:[%s3869 + $0xd8] sm:$0xff]
    %v3898 = vld [vmem:[%s3869 + $0xe0] sm:$0xff]
    %v3899 = vld [vmem:[%s3869 + $0xe8] sm:$0xff]
    %v3900 = vld [vmem:[%s3869 + $0xf0] sm:$0xff]
    %v3901 = vld [vmem:[%s3869 + $0xf8] sm:$0xff]
    %v3902 = vld [vmem:[%s3869 + $0x100] sm:$0xff]
    %v3903 = vld [vmem:[%s3869 + $0x108] sm:$0xff]
    %v3904 = vld [vmem:[%s3869 + $0x110] sm:$0xff]
    %v3905 = vld [vmem:[%s3869 + $0x118] sm:$0xff]
    %v3906 = vld [vmem:[%s3869 + $0x120] sm:$0xff]
    %v3907 = vld [vmem:[%s3869 + $0x128] sm:$0xff]
    %v3908 = vld [vmem:[%s3869 + $0x130] sm:$0xff]
    %v3909 = vld [vmem:[%s3869 + $0x138] sm:$0xff]
    %v3910 = vld [vmem:[%s3869 + $0x140] sm:$0xff]
    %v3911 = vld [vmem:[%s3869 + $0x148] sm:$0xff]
    %v3912 = vld [vmem:[%s3869 + $0x150] sm:$0xff]
    %v3913 = vld [vmem:[%s3869 + $0x158] sm:$0xff]
    %v3914 = vld [vmem:[%s3869 + $0x160] sm:$0xff]
    %v3915 = vld [vmem:[%s3869 + $0x168] sm:$0xff]
    %v3916 = vld [vmem:[%s3869 + $0x170] sm:$0xff]
    %v3917 = vld [vmem:[%s3869 + $0x178] sm:$0xff]
    %v3966 = vunpack.c.l.b16 %v3870
    %v3967 = vunpack.c.h.b16 %v3870
    %v3968 = vunpack.c.l.b16 %v3871
    %v3969 = vunpack.c.h.b16 %v3871
    %v3970 = vunpack.c.l.b16 %v3872
    %v3971 = vunpack.c.h.b16 %v3872
    %v3972 = vunpack.c.l.b16 %v3873
    %v3973 = vunpack.c.h.b16 %v3873
    %v3974 = vunpack.c.l.b16 %v3874
    %v3975 = vunpack.c.h.b16 %v3874
    %v3976 = vunpack.c.l.b16 %v3875
    %v3977 = vunpack.c.h.b16 %v3875
    %v3978 = vunpack.c.l.b16 %v3876
    %v3979 = vunpack.c.h.b16 %v3876
    %v3980 = vunpack.c.l.b16 %v3877
    %v3981 = vunpack.c.h.b16 %v3877
    %v3982 = vunpack.c.l.b16 %v3878
    %v3983 = vunpack.c.h.b16 %v3878
    %v3984 = vunpack.c.l.b16 %v3879
    %v3985 = vunpack.c.h.b16 %v3879
    %v3986 = vunpack.c.l.b16 %v3880
    %v3987 = vunpack.c.h.b16 %v3880
    %v3988 = vunpack.c.l.b16 %v3881
    %v3989 = vunpack.c.h.b16 %v3881
    %v3990 = vunpack.c.l.b16 %v3882
    %v3991 = vunpack.c.h.b16 %v3882
    %v3992 = vunpack.c.l.b16 %v3883
    %v3993 = vunpack.c.h.b16 %v3883
    %v3994 = vunpack.c.l.b16 %v3884
    %v3995 = vunpack.c.h.b16 %v3884
    %v3996 = vunpack.c.l.b16 %v3885
    %v3997 = vunpack.c.h.b16 %v3885
    %v3998 = vunpack.c.l.b16 %v3886
    %v3999 = vunpack.c.h.b16 %v3886
    %v4000 = vunpack.c.l.b16 %v3887
    %v4001 = vunpack.c.h.b16 %v3887
    %v4002 = vunpack.c.l.b16 %v3888
    %v4003 = vunpack.c.h.b16 %v3888
    %v4004 = vunpack.c.l.b16 %v3889
    %v4005 = vunpack.c.h.b16 %v3889
    %v4006 = vunpack.c.l.b16 %v3890
    %v4007 = vunpack.c.h.b16 %v3890
    %v4008 = vunpack.c.l.b16 %v3891
    %v4009 = vunpack.c.h.b16 %v3891
    %v4010 = vunpack.c.l.b16 %v3892
    %v4011 = vunpack.c.h.b16 %v3892
    %v4012 = vunpack.c.l.b16 %v3893
    %v4013 = vunpack.c.h.b16 %v3893
    %v4014 = vunpack.c.l.b16 %v3894
    %v4015 = vunpack.c.h.b16 %v3894
    %v4016 = vunpack.c.l.b16 %v3895
    %v4017 = vunpack.c.h.b16 %v3895
    %v4018 = vunpack.c.l.b16 %v3896
    %v4019 = vunpack.c.h.b16 %v3896
    %v4020 = vunpack.c.l.b16 %v3897
    %v4021 = vunpack.c.h.b16 %v3897
    %v4022 = vunpack.c.l.b16 %v3898
    %v4023 = vunpack.c.h.b16 %v3898
    %v4024 = vunpack.c.l.b16 %v3899
    %v4025 = vunpack.c.h.b16 %v3899
    %v4026 = vunpack.c.l.b16 %v3900
    %v4027 = vunpack.c.h.b16 %v3900
    %v4028 = vunpack.c.l.b16 %v3901
    %v4029 = vunpack.c.h.b16 %v3901
    %v4030 = vunpack.c.l.b16 %v3902
    %v4031 = vunpack.c.h.b16 %v3902
    %v4032 = vunpack.c.l.b16 %v3903
    %v4033 = vunpack.c.h.b16 %v3903
    %v4034 = vunpack.c.l.b16 %v3904
    %v4035 = vunpack.c.h.b16 %v3904
    %v4036 = vunpack.c.l.b16 %v3905
    %v4037 = vunpack.c.h.b16 %v3905
    %v4038 = vunpack.c.l.b16 %v3906
    %v4039 = vunpack.c.h.b16 %v3906
    %v4040 = vunpack.c.l.b16 %v3907
    %v4041 = vunpack.c.h.b16 %v3907
    %v4042 = vunpack.c.l.b16 %v3908
    %v4043 = vunpack.c.h.b16 %v3908
    %v4044 = vunpack.c.l.b16 %v3909
    %v4045 = vunpack.c.h.b16 %v3909
    %v4046 = vunpack.c.l.b16 %v3910
    %v4047 = vunpack.c.h.b16 %v3910
    %v4048 = vunpack.c.l.b16 %v3911
    %v4049 = vunpack.c.h.b16 %v3911
    %v4050 = vunpack.c.l.b16 %v3912
    %v4051 = vunpack.c.h.b16 %v3912
    %v4052 = vunpack.c.l.b16 %v3913
    %v4053 = vunpack.c.h.b16 %v3913
    %v4054 = vunpack.c.l.b16 %v3914
    %v4055 = vunpack.c.h.b16 %v3914
    %v4056 = vunpack.c.l.b16 %v3915
    %v4057 = vunpack.c.h.b16 %v3915
    %v4058 = vunpack.c.l.b16 %v3916
    %v4059 = vunpack.c.h.b16 %v3916
    %v4060 = vunpack.c.l.b16 %v3917
    %v4061 = vunpack.c.h.b16 %v3917
    %v4062 = vpack.c.b16 %v3970, %v3966
    %v4063 = vpack.c.b16 %v3971, %v3967
    %v4064 = vpack.c.b16 %v3972, %v3968
    %v4065 = vpack.c.b16 %v3973, %v3969
    %v4066 = vpack.c.b16 %v3978, %v3974
    %v4067 = vpack.c.b16 %v3979, %v3975
    %v4068 = vpack.c.b16 %v3980, %v3976
    %v4069 = vpack.c.b16 %v3981, %v3977
    %v4070 = vpack.c.b16 %v3986, %v3982
    %v4071 = vpack.c.b16 %v3987, %v3983
    %v4072 = vpack.c.b16 %v3988, %v3984
    %v4073 = vpack.c.b16 %v3989, %v3985
    %v4074 = vpack.c.b16 %v3994, %v3990
    %v4075 = vpack.c.b16 %v3995, %v3991
    %v4076 = vpack.c.b16 %v3996, %v3992
    %v4077 = vpack.c.b16 %v3997, %v3993
    %v4078 = vpack.c.b16 %v4002, %v3998
    %v4079 = vpack.c.b16 %v4003, %v3999
    %v4080 = vpack.c.b16 %v4004, %v4000
    %v4081 = vpack.c.b16 %v4005, %v4001
    %v4082 = vpack.c.b16 %v4010, %v4006
    %v4083 = vpack.c.b16 %v4011, %v4007
    %v4084 = vpack.c.b16 %v4012, %v4008
    %v4085 = vpack.c.b16 %v4013, %v4009
    %v4086 = vpack.c.b16 %v4018, %v4014
    %v4087 = vpack.c.b16 %v4019, %v4015
    %v4088 = vpack.c.b16 %v4020, %v4016
    %v4089 = vpack.c.b16 %v4021, %v4017
    %v4090 = vpack.c.b16 %v4026, %v4022
    %v4091 = vpack.c.b16 %v4027, %v4023
    %v4092 = vpack.c.b16 %v4028, %v4024
    %v4093 = vpack.c.b16 %v4029, %v4025
    %v4094 = vpack.c.b16 %v4034, %v4030
    %v4095 = vpack.c.b16 %v4035, %v4031
    %v4096 = vpack.c.b16 %v4036, %v4032
    %v4097 = vpack.c.b16 %v4037, %v4033
    %v4098 = vpack.c.b16 %v4042, %v4038
    %v4099 = vpack.c.b16 %v4043, %v4039
    %v4100 = vpack.c.b16 %v4044, %v4040
    %v4101 = vpack.c.b16 %v4045, %v4041
    %v4102 = vpack.c.b16 %v4050, %v4046
    %v4103 = vpack.c.b16 %v4051, %v4047
    %v4104 = vpack.c.b16 %v4052, %v4048
    %v4105 = vpack.c.b16 %v4053, %v4049
    %v4106 = vpack.c.b16 %v4058, %v4054
    %v4107 = vpack.c.b16 %v4059, %v4055
    %v4108 = vpack.c.b16 %v4060, %v4056
    %v4109 = vpack.c.b16 %v4061, %v4057
    %v4159 = vsel %vm184, %v3868, 0
    %4161 = vmatpush.bf16.msra.mxu0 %v4090
    %4162 = vmatpush.bf16.msra.mxu0 %v4086
    %4163 = vmatpush.bf16.msra.mxu0 %v4082
    %4164 = vmatpush.bf16.msra.mxu0 %v4078
    %4165 = vmatpush.bf16.msra.mxu0 %v4074
    %4166 = vmatpush.bf16.msra.mxu0 %v4070
    %4167 = vmatpush.bf16.msra.mxu0 %v4066
    %4168 = vmatpush.bf16.msra.mxu0 %v4062
    %4169 = vmatmul.bf16.gmra.mxu0 %v3867
    %v4170 = vpop.f32.mrf.mxu0
    %v4171 = vadd.f32 0.0, %v4170
    %v4172 = vpop.f32.mrf.mxu0
    %4173 = vdwg.mxu0
    %4174 = vmatpush.bf16.msra.mxu0 0
    %4175 = vmatpush.bf16.msra.mxu0 0
    %4176 = vmatpush.bf16.msra.mxu0 0
    %4177 = vmatpush.bf16.msra.mxu0 0
    %4178 = vmatpush.bf16.msra.mxu0 %v4106
    %4179 = vmatpush.bf16.msra.mxu0 %v4102
    %4180 = vmatpush.bf16.msra.mxu0 %v4098
    %4181 = vmatpush.bf16.msra.mxu0 %v4094
    %4182 = vmatmul.bf16.gmra.mxu0 %v4159
    %v4183 = vpop.f32.mrf.mxu0
    %v4184 = vadd.f32 %v4171, %v4183
    %v4185 = vpop.f32.mrf.mxu0
    %4186 = vdwg.mxu0
    %4187 = vmatpush.bf16.msra.mxu0 %v4091
    %4188 = vmatpush.bf16.msra.mxu0 %v4087
    %4189 = vmatpush.bf16.msra.mxu0 %v4083
    %4190 = vmatpush.bf16.msra.mxu0 %v4079
    %4191 = vmatpush.bf16.msra.mxu0 %v4075
    %4192 = vmatpush.bf16.msra.mxu0 %v4071
    %4193 = vmatpush.bf16.msra.mxu0 %v4067
    %4194 = vmatpush.bf16.msra.mxu0 %v4063
    %4195 = vmatmul.bf16.gmra.mxu0 %v3867
    %v4196 = vpop.f32.mrf.mxu0
    %v4197 = vadd.f32 0.0, %v4196
    %v4198 = vpop.f32.mrf.mxu0
    %4199 = vdwg.mxu0
    %4200 = vmatpush.bf16.msra.mxu0 0
    %4201 = vmatpush.bf16.msra.mxu0 0
    %4202 = vmatpush.bf16.msra.mxu0 0
    %4203 = vmatpush.bf16.msra.mxu0 0
    %4204 = vmatpush.bf16.msra.mxu0 %v4107
    %4205 = vmatpush.bf16.msra.mxu0 %v4103
    %4206 = vmatpush.bf16.msra.mxu0 %v4099
    %4207 = vmatpush.bf16.msra.mxu0 %v4095
    %4208 = vmatmul.bf16.gmra.mxu0 %v4159
    %v4209 = vpop.f32.mrf.mxu0
    %v4210 = vadd.f32 %v4197, %v4209
    %v4211 = vpop.f32.mrf.mxu0
    %4212 = vdwg.mxu0
    %4213 = vmatpush.bf16.msra.mxu0 %v4092
    %4214 = vmatpush.bf16.msra.mxu0 %v4088
    %4215 = vmatpush.bf16.msra.mxu0 %v4084
    %4216 = vmatpush.bf16.msra.mxu0 %v4080
    %4217 = vmatpush.bf16.msra.mxu0 %v4076
    %4218 = vmatpush.bf16.msra.mxu0 %v4072
    %4219 = vmatpush.bf16.msra.mxu0 %v4068
    %4220 = vmatpush.bf16.msra.mxu0 %v4064
    %4221 = vmatmul.bf16.gmra.mxu0 %v3867
    %v4222 = vpop.f32.mrf.mxu0
    %v4223 = vadd.f32 0.0, %v4222
    %v4224 = vpop.f32.mrf.mxu0
    %4225 = vdwg.mxu0
    %4226 = vmatpush.bf16.msra.mxu0 0
    %4227 = vmatpush.bf16.msra.mxu0 0
    %4228 = vmatpush.bf16.msra.mxu0 0
    %4229 = vmatpush.bf16.msra.mxu0 0
    %4230 = vmatpush.bf16.msra.mxu0 %v4108
    %4231 = vmatpush.bf16.msra.mxu0 %v4104
    %4232 = vmatpush.bf16.msra.mxu0 %v4100
    %4233 = vmatpush.bf16.msra.mxu0 %v4096
    %4234 = vmatmul.bf16.gmra.mxu0 %v4159
    %v4235 = vpop.f32.mrf.mxu0
    %v4236 = vadd.f32 %v4223, %v4235
    %v4237 = vpop.f32.mrf.mxu0
    %4238 = vdwg.mxu0
    %4239 = vmatpush.bf16.msra.mxu0 %v4093
    %4240 = vmatpush.bf16.msra.mxu0 %v4089
    %4241 = vmatpush.bf16.msra.mxu0 %v4085
    %4242 = vmatpush.bf16.msra.mxu0 %v4081
    %4243 = vmatpush.bf16.msra.mxu0 %v4077
    %4244 = vmatpush.bf16.msra.mxu0 %v4073
    %4245 = vmatpush.bf16.msra.mxu0 %v4069
    %4246 = vmatpush.bf16.msra.mxu0 %v4065
    %4247 = vmatmul.bf16.gmra.mxu0 %v3867
    %v4248 = vpop.f32.mrf.mxu0
    %v4249 = vadd.f32 0.0, %v4248
    %v4250 = vpop.f32.mrf.mxu0
    %4251 = vdwg.mxu0
    %4252 = vmatpush.bf16.msra.mxu0 0
    %4253 = vmatpush.bf16.msra.mxu0 0
    %4254 = vmatpush.bf16.msra.mxu0 0
    %4255 = vmatpush.bf16.msra.mxu0 0
    %4256 = vmatpush.bf16.msra.mxu0 %v4109
    %4257 = vmatpush.bf16.msra.mxu0 %v4105
    %4258 = vmatpush.bf16.msra.mxu0 %v4101
    %4259 = vmatpush.bf16.msra.mxu0 %v4097
    %4260 = vmatmul.bf16.gmra.mxu0 %v4159
    %v4261 = vpop.f32.mrf.mxu0
    %v4262 = vadd.f32 %v4249, %v4261
    %v4263 = vpop.f32.mrf.mxu0
    %4264 = vdwg.mxu0
    %v4265 = vadd.f32 %v3861, %v4184
    %v4266 = vadd.f32 %v3862, %v4210
    %v4267 = vadd.f32 %v3863, %v4236
    %v4268 = vadd.f32 %v3864, %v4262
    %v4269 = vmul.f32 %v100, %v640
    %v4270 = vmul.f32 %v101, %v641
    %v4271 = vpack.c.bf16 %v4269, %v4269
    %v4272 = vpack.c.bf16 %v4270, %v4270
    %s4273 = scalar_lea.vmem [#allocation6], 3456
    %v4274 = vld [vmem:[%s4273] sm:$0xff]
    %v4275 = vld [vmem:[%s4273 + $0x8] sm:$0xff]
    %v4276 = vld [vmem:[%s4273 + $0x10] sm:$0xff]
    %v4277 = vld [vmem:[%s4273 + $0x18] sm:$0xff]
    %v4278 = vld [vmem:[%s4273 + $0x20] sm:$0xff]
    %v4279 = vld [vmem:[%s4273 + $0x28] sm:$0xff]
    %v4280 = vld [vmem:[%s4273 + $0x30] sm:$0xff]
    %v4281 = vld [vmem:[%s4273 + $0x38] sm:$0xff]
    %v4282 = vld [vmem:[%s4273 + $0x40] sm:$0xff]
    %v4283 = vld [vmem:[%s4273 + $0x48] sm:$0xff]
    %v4284 = vld [vmem:[%s4273 + $0x50] sm:$0xff]
    %v4285 = vld [vmem:[%s4273 + $0x58] sm:$0xff]
    %v4286 = vld [vmem:[%s4273 + $0x60] sm:$0xff]
    %v4287 = vld [vmem:[%s4273 + $0x68] sm:$0xff]
    %v4288 = vld [vmem:[%s4273 + $0x70] sm:$0xff]
    %v4289 = vld [vmem:[%s4273 + $0x78] sm:$0xff]
    %v4290 = vld [vmem:[%s4273 + $0x80] sm:$0xff]
    %v4291 = vld [vmem:[%s4273 + $0x88] sm:$0xff]
    %v4292 = vld [vmem:[%s4273 + $0x90] sm:$0xff]
    %v4293 = vld [vmem:[%s4273 + $0x98] sm:$0xff]
    %v4294 = vld [vmem:[%s4273 + $0xa0] sm:$0xff]
    %v4295 = vld [vmem:[%s4273 + $0xa8] sm:$0xff]
    %v4296 = vld [vmem:[%s4273 + $0xb0] sm:$0xff]
    %v4297 = vld [vmem:[%s4273 + $0xb8] sm:$0xff]
    %v4298 = vld [vmem:[%s4273 + $0xc0] sm:$0xff]
    %v4299 = vld [vmem:[%s4273 + $0xc8] sm:$0xff]
    %v4300 = vld [vmem:[%s4273 + $0xd0] sm:$0xff]
    %v4301 = vld [vmem:[%s4273 + $0xd8] sm:$0xff]
    %v4302 = vld [vmem:[%s4273 + $0xe0] sm:$0xff]
    %v4303 = vld [vmem:[%s4273 + $0xe8] sm:$0xff]
    %v4304 = vld [vmem:[%s4273 + $0xf0] sm:$0xff]
    %v4305 = vld [vmem:[%s4273 + $0xf8] sm:$0xff]
    %v4306 = vld [vmem:[%s4273 + $0x100] sm:$0xff]
    %v4307 = vld [vmem:[%s4273 + $0x108] sm:$0xff]
    %v4308 = vld [vmem:[%s4273 + $0x110] sm:$0xff]
    %v4309 = vld [vmem:[%s4273 + $0x118] sm:$0xff]
    %v4310 = vld [vmem:[%s4273 + $0x120] sm:$0xff]
    %v4311 = vld [vmem:[%s4273 + $0x128] sm:$0xff]
    %v4312 = vld [vmem:[%s4273 + $0x130] sm:$0xff]
    %v4313 = vld [vmem:[%s4273 + $0x138] sm:$0xff]
    %v4314 = vld [vmem:[%s4273 + $0x140] sm:$0xff]
    %v4315 = vld [vmem:[%s4273 + $0x148] sm:$0xff]
    %v4316 = vld [vmem:[%s4273 + $0x150] sm:$0xff]
    %v4317 = vld [vmem:[%s4273 + $0x158] sm:$0xff]
    %v4318 = vld [vmem:[%s4273 + $0x160] sm:$0xff]
    %v4319 = vld [vmem:[%s4273 + $0x168] sm:$0xff]
    %v4320 = vld [vmem:[%s4273 + $0x170] sm:$0xff]
    %v4321 = vld [vmem:[%s4273 + $0x178] sm:$0xff]
    %v4370 = vunpack.c.l.b16 %v4274
    %v4371 = vunpack.c.h.b16 %v4274
    %v4372 = vunpack.c.l.b16 %v4275
    %v4373 = vunpack.c.h.b16 %v4275
    %v4374 = vunpack.c.l.b16 %v4276
    %v4375 = vunpack.c.h.b16 %v4276
    %v4376 = vunpack.c.l.b16 %v4277
    %v4377 = vunpack.c.h.b16 %v4277
    %v4378 = vunpack.c.l.b16 %v4278
    %v4379 = vunpack.c.h.b16 %v4278
    %v4380 = vunpack.c.l.b16 %v4279
    %v4381 = vunpack.c.h.b16 %v4279
    %v4382 = vunpack.c.l.b16 %v4280
    %v4383 = vunpack.c.h.b16 %v4280
    %v4384 = vunpack.c.l.b16 %v4281
    %v4385 = vunpack.c.h.b16 %v4281
    %v4386 = vunpack.c.l.b16 %v4282
    %v4387 = vunpack.c.h.b16 %v4282
    %v4388 = vunpack.c.l.b16 %v4283
    %v4389 = vunpack.c.h.b16 %v4283
    %v4390 = vunpack.c.l.b16 %v4284
    %v4391 = vunpack.c.h.b16 %v4284
    %v4392 = vunpack.c.l.b16 %v4285
    %v4393 = vunpack.c.h.b16 %v4285
    %v4394 = vunpack.c.l.b16 %v4286
    %v4395 = vunpack.c.h.b16 %v4286
    %v4396 = vunpack.c.l.b16 %v4287
    %v4397 = vunpack.c.h.b16 %v4287
    %v4398 = vunpack.c.l.b16 %v4288
    %v4399 = vunpack.c.h.b16 %v4288
    %v4400 = vunpack.c.l.b16 %v4289
    %v4401 = vunpack.c.h.b16 %v4289
    %v4402 = vunpack.c.l.b16 %v4290
    %v4403 = vunpack.c.h.b16 %v4290
    %v4404 = vunpack.c.l.b16 %v4291
    %v4405 = vunpack.c.h.b16 %v4291
    %v4406 = vunpack.c.l.b16 %v4292
    %v4407 = vunpack.c.h.b16 %v4292
    %v4408 = vunpack.c.l.b16 %v4293
    %v4409 = vunpack.c.h.b16 %v4293
    %v4410 = vunpack.c.l.b16 %v4294
    %v4411 = vunpack.c.h.b16 %v4294
    %v4412 = vunpack.c.l.b16 %v4295
    %v4413 = vunpack.c.h.b16 %v4295
    %v4414 = vunpack.c.l.b16 %v4296
    %v4415 = vunpack.c.h.b16 %v4296
    %v4416 = vunpack.c.l.b16 %v4297
    %v4417 = vunpack.c.h.b16 %v4297
    %v4418 = vunpack.c.l.b16 %v4298
    %v4419 = vunpack.c.h.b16 %v4298
    %v4420 = vunpack.c.l.b16 %v4299
    %v4421 = vunpack.c.h.b16 %v4299
    %v4422 = vunpack.c.l.b16 %v4300
    %v4423 = vunpack.c.h.b16 %v4300
    %v4424 = vunpack.c.l.b16 %v4301
    %v4425 = vunpack.c.h.b16 %v4301
    %v4426 = vunpack.c.l.b16 %v4302
    %v4427 = vunpack.c.h.b16 %v4302
    %v4428 = vunpack.c.l.b16 %v4303
    %v4429 = vunpack.c.h.b16 %v4303
    %v4430 = vunpack.c.l.b16 %v4304
    %v4431 = vunpack.c.h.b16 %v4304
    %v4432 = vunpack.c.l.b16 %v4305
    %v4433 = vunpack.c.h.b16 %v4305
    %v4434 = vunpack.c.l.b16 %v4306
    %v4435 = vunpack.c.h.b16 %v4306
    %v4436 = vunpack.c.l.b16 %v4307
    %v4437 = vunpack.c.h.b16 %v4307
    %v4438 = vunpack.c.l.b16 %v4308
    %v4439 = vunpack.c.h.b16 %v4308
    %v4440 = vunpack.c.l.b16 %v4309
    %v4441 = vunpack.c.h.b16 %v4309
    %v4442 = vunpack.c.l.b16 %v4310
    %v4443 = vunpack.c.h.b16 %v4310
    %v4444 = vunpack.c.l.b16 %v4311
    %v4445 = vunpack.c.h.b16 %v4311
    %v4446 = vunpack.c.l.b16 %v4312
    %v4447 = vunpack.c.h.b16 %v4312
    %v4448 = vunpack.c.l.b16 %v4313
    %v4449 = vunpack.c.h.b16 %v4313
    %v4450 = vunpack.c.l.b16 %v4314
    %v4451 = vunpack.c.h.b16 %v4314
    %v4452 = vunpack.c.l.b16 %v4315
    %v4453 = vunpack.c.h.b16 %v4315
    %v4454 = vunpack.c.l.b16 %v4316
    %v4455 = vunpack.c.h.b16 %v4316
    %v4456 = vunpack.c.l.b16 %v4317
    %v4457 = vunpack.c.h.b16 %v4317
    %v4458 = vunpack.c.l.b16 %v4318
    %v4459 = vunpack.c.h.b16 %v4318
    %v4460 = vunpack.c.l.b16 %v4319
    %v4461 = vunpack.c.h.b16 %v4319
    %v4462 = vunpack.c.l.b16 %v4320
    %v4463 = vunpack.c.h.b16 %v4320
    %v4464 = vunpack.c.l.b16 %v4321
    %v4465 = vunpack.c.h.b16 %v4321
    %v4466 = vpack.c.b16 %v4374, %v4370
    %v4467 = vpack.c.b16 %v4375, %v4371
    %v4468 = vpack.c.b16 %v4376, %v4372
    %v4469 = vpack.c.b16 %v4377, %v4373
    %v4470 = vpack.c.b16 %v4382, %v4378
    %v4471 = vpack.c.b16 %v4383, %v4379
    %v4472 = vpack.c.b16 %v4384, %v4380
    %v4473 = vpack.c.b16 %v4385, %v4381
    %v4474 = vpack.c.b16 %v4390, %v4386
    %v4475 = vpack.c.b16 %v4391, %v4387
    %v4476 = vpack.c.b16 %v4392, %v4388
    %v4477 = vpack.c.b16 %v4393, %v4389
    %v4478 = vpack.c.b16 %v4398, %v4394
    %v4479 = vpack.c.b16 %v4399, %v4395
    %v4480 = vpack.c.b16 %v4400, %v4396
    %v4481 = vpack.c.b16 %v4401, %v4397
    %v4482 = vpack.c.b16 %v4406, %v4402
    %v4483 = vpack.c.b16 %v4407, %v4403
    %v4484 = vpack.c.b16 %v4408, %v4404
    %v4485 = vpack.c.b16 %v4409, %v4405
    %v4486 = vpack.c.b16 %v4414, %v4410
    %v4487 = vpack.c.b16 %v4415, %v4411
    %v4488 = vpack.c.b16 %v4416, %v4412
    %v4489 = vpack.c.b16 %v4417, %v4413
    %v4490 = vpack.c.b16 %v4422, %v4418
    %v4491 = vpack.c.b16 %v4423, %v4419
    %v4492 = vpack.c.b16 %v4424, %v4420
    %v4493 = vpack.c.b16 %v4425, %v4421
    %v4494 = vpack.c.b16 %v4430, %v4426
    %v4495 = vpack.c.b16 %v4431, %v4427
    %v4496 = vpack.c.b16 %v4432, %v4428
    %v4497 = vpack.c.b16 %v4433, %v4429
    %v4498 = vpack.c.b16 %v4438, %v4434
    %v4499 = vpack.c.b16 %v4439, %v4435
    %v4500 = vpack.c.b16 %v4440, %v4436
    %v4501 = vpack.c.b16 %v4441, %v4437
    %v4502 = vpack.c.b16 %v4446, %v4442
    %v4503 = vpack.c.b16 %v4447, %v4443
    %v4504 = vpack.c.b16 %v4448, %v4444
    %v4505 = vpack.c.b16 %v4449, %v4445
    %v4506 = vpack.c.b16 %v4454, %v4450
    %v4507 = vpack.c.b16 %v4455, %v4451
    %v4508 = vpack.c.b16 %v4456, %v4452
    %v4509 = vpack.c.b16 %v4457, %v4453
    %v4510 = vpack.c.b16 %v4462, %v4458
    %v4511 = vpack.c.b16 %v4463, %v4459
    %v4512 = vpack.c.b16 %v4464, %v4460
    %v4513 = vpack.c.b16 %v4465, %v4461
    %v4563 = vsel %vm184, %v4272, 0
    %4565 = vmatpush.bf16.msra.mxu0 %v4494
    %4566 = vmatpush.bf16.msra.mxu0 %v4490
    %4567 = vmatpush.bf16.msra.mxu0 %v4486
    %4568 = vmatpush.bf16.msra.mxu0 %v4482
    %4569 = vmatpush.bf16.msra.mxu0 %v4478
    %4570 = vmatpush.bf16.msra.mxu0 %v4474
    %4571 = vmatpush.bf16.msra.mxu0 %v4470
    %4572 = vmatpush.bf16.msra.mxu0 %v4466
    %4573 = vmatmul.bf16.gmra.mxu0 %v4271
    %v4574 = vpop.f32.mrf.mxu0
    %v4575 = vadd.f32 0.0, %v4574
    %v4576 = vpop.f32.mrf.mxu0
    %4577 = vdwg.mxu0
    %4578 = vmatpush.bf16.msra.mxu0 0
    %4579 = vmatpush.bf16.msra.mxu0 0
    %4580 = vmatpush.bf16.msra.mxu0 0
    %4581 = vmatpush.bf16.msra.mxu0 0
    %4582 = vmatpush.bf16.msra.mxu0 %v4510
    %4583 = vmatpush.bf16.msra.mxu0 %v4506
    %4584 = vmatpush.bf16.msra.mxu0 %v4502
    %4585 = vmatpush.bf16.msra.mxu0 %v4498
    %4586 = vmatmul.bf16.gmra.mxu0 %v4563
    %v4587 = vpop.f32.mrf.mxu0
    %v4588 = vadd.f32 %v4575, %v4587
    %v4589 = vpop.f32.mrf.mxu0
    %4590 = vdwg.mxu0
    %4591 = vmatpush.bf16.msra.mxu0 %v4495
    %4592 = vmatpush.bf16.msra.mxu0 %v4491
    %4593 = vmatpush.bf16.msra.mxu0 %v4487
    %4594 = vmatpush.bf16.msra.mxu0 %v4483
    %4595 = vmatpush.bf16.msra.mxu0 %v4479
    %4596 = vmatpush.bf16.msra.mxu0 %v4475
    %4597 = vmatpush.bf16.msra.mxu0 %v4471
    %4598 = vmatpush.bf16.msra.mxu0 %v4467
    %4599 = vmatmul.bf16.gmra.mxu0 %v4271
    %v4600 = vpop.f32.mrf.mxu0
    %v4601 = vadd.f32 0.0, %v4600
    %v4602 = vpop.f32.mrf.mxu0
    %4603 = vdwg.mxu0
    %4604 = vmatpush.bf16.msra.mxu0 0
    %4605 = vmatpush.bf16.msra.mxu0 0
    %4606 = vmatpush.bf16.msra.mxu0 0
    %4607 = vmatpush.bf16.msra.mxu0 0
    %4608 = vmatpush.bf16.msra.mxu0 %v4511
    %4609 = vmatpush.bf16.msra.mxu0 %v4507
    %4610 = vmatpush.bf16.msra.mxu0 %v4503
    %4611 = vmatpush.bf16.msra.mxu0 %v4499
    %4612 = vmatmul.bf16.gmra.mxu0 %v4563
    %v4613 = vpop.f32.mrf.mxu0
    %v4614 = vadd.f32 %v4601, %v4613
    %v4615 = vpop.f32.mrf.mxu0
    %4616 = vdwg.mxu0
    %4617 = vmatpush.bf16.msra.mxu0 %v4496
    %4618 = vmatpush.bf16.msra.mxu0 %v4492
    %4619 = vmatpush.bf16.msra.mxu0 %v4488
    %4620 = vmatpush.bf16.msra.mxu0 %v4484
    %4621 = vmatpush.bf16.msra.mxu0 %v4480
    %4622 = vmatpush.bf16.msra.mxu0 %v4476
    %4623 = vmatpush.bf16.msra.mxu0 %v4472
    %4624 = vmatpush.bf16.msra.mxu0 %v4468
    %4625 = vmatmul.bf16.gmra.mxu0 %v4271
    %v4626 = vpop.f32.mrf.mxu0
    %v4627 = vadd.f32 0.0, %v4626
    %v4628 = vpop.f32.mrf.mxu0
    %4629 = vdwg.mxu0
    %4630 = vmatpush.bf16.msra.mxu0 0
    %4631 = vmatpush.bf16.msra.mxu0 0
    %4632 = vmatpush.bf16.msra.mxu0 0
    %4633 = vmatpush.bf16.msra.mxu0 0
    %4634 = vmatpush.bf16.msra.mxu0 %v4512
    %4635 = vmatpush.bf16.msra.mxu0 %v4508
    %4636 = vmatpush.bf16.msra.mxu0 %v4504
    %4637 = vmatpush.bf16.msra.mxu0 %v4500
    %4638 = vmatmul.bf16.gmra.mxu0 %v4563
    %v4639 = vpop.f32.mrf.mxu0
    %v4640 = vadd.f32 %v4627, %v4639
    %v4641 = vpop.f32.mrf.mxu0
    %4642 = vdwg.mxu0
    %4643 = vmatpush.bf16.msra.mxu0 %v4497
    %4644 = vmatpush.bf16.msra.mxu0 %v4493
    %4645 = vmatpush.bf16.msra.mxu0 %v4489
    %4646 = vmatpush.bf16.msra.mxu0 %v4485
    %4647 = vmatpush.bf16.msra.mxu0 %v4481
    %4648 = vmatpush.bf16.msra.mxu0 %v4477
    %4649 = vmatpush.bf16.msra.mxu0 %v4473
    %4650 = vmatpush.bf16.msra.mxu0 %v4469
    %4651 = vmatmul.bf16.gmra.mxu0 %v4271
    %v4652 = vpop.f32.mrf.mxu0
    %v4653 = vadd.f32 0.0, %v4652
    %v4654 = vpop.f32.mrf.mxu0
    %4655 = vdwg.mxu0
    %4656 = vmatpush.bf16.msra.mxu0 0
    %4657 = vmatpush.bf16.msra.mxu0 0
    %4658 = vmatpush.bf16.msra.mxu0 0
    %4659 = vmatpush.bf16.msra.mxu0 0
    %4660 = vmatpush.bf16.msra.mxu0 %v4513
    %4661 = vmatpush.bf16.msra.mxu0 %v4509
    %4662 = vmatpush.bf16.msra.mxu0 %v4505
    %4663 = vmatpush.bf16.msra.mxu0 %v4501
    %4664 = vmatmul.bf16.gmra.mxu0 %v4563
    %v4665 = vpop.f32.mrf.mxu0
    %v4666 = vadd.f32 %v4653, %v4665
    %v4667 = vpop.f32.mrf.mxu0
    %4668 = vdwg.mxu0
    %v4669 = vadd.f32 %v4265, %v4588
    %v4670 = vadd.f32 %v4266, %v4614
    %v4671 = vadd.f32 %v4267, %v4640
    %v4672 = vadd.f32 %v4268, %v4666
    %v4673 = vmul.f32 %v102, %v640
    %v4674 = vmul.f32 %v103, %v641
    %v4675 = vpack.c.bf16 %v4673, %v4673
    %v4676 = vpack.c.bf16 %v4674, %v4674
    %s4677 = scalar_lea.vmem [#allocation6], 3840
    %v4678 = vld [vmem:[%s4677] sm:$0xff]
    %v4679 = vld [vmem:[%s4677 + $0x8] sm:$0xff]
    %v4680 = vld [vmem:[%s4677 + $0x10] sm:$0xff]
    %v4681 = vld [vmem:[%s4677 + $0x18] sm:$0xff]
    %v4682 = vld [vmem:[%s4677 + $0x20] sm:$0xff]
    %v4683 = vld [vmem:[%s4677 + $0x28] sm:$0xff]
    %v4684 = vld [vmem:[%s4677 + $0x30] sm:$0xff]
    %v4685 = vld [vmem:[%s4677 + $0x38] sm:$0xff]
    %v4686 = vld [vmem:[%s4677 + $0x40] sm:$0xff]
    %v4687 = vld [vmem:[%s4677 + $0x48] sm:$0xff]
    %v4688 = vld [vmem:[%s4677 + $0x50] sm:$0xff]
    %v4689 = vld [vmem:[%s4677 + $0x58] sm:$0xff]
    %v4690 = vld [vmem:[%s4677 + $0x60] sm:$0xff]
    %v4691 = vld [vmem:[%s4677 + $0x68] sm:$0xff]
    %v4692 = vld [vmem:[%s4677 + $0x70] sm:$0xff]
    %v4693 = vld [vmem:[%s4677 + $0x78] sm:$0xff]
    %v4694 = vld [vmem:[%s4677 + $0x80] sm:$0xff]
    %v4695 = vld [vmem:[%s4677 + $0x88] sm:$0xff]
    %v4696 = vld [vmem:[%s4677 + $0x90] sm:$0xff]
    %v4697 = vld [vmem:[%s4677 + $0x98] sm:$0xff]
    %v4698 = vld [vmem:[%s4677 + $0xa0] sm:$0xff]
    %v4699 = vld [vmem:[%s4677 + $0xa8] sm:$0xff]
    %v4700 = vld [vmem:[%s4677 + $0xb0] sm:$0xff]
    %v4701 = vld [vmem:[%s4677 + $0xb8] sm:$0xff]
    %v4702 = vld [vmem:[%s4677 + $0xc0] sm:$0xff]
    %v4703 = vld [vmem:[%s4677 + $0xc8] sm:$0xff]
    %v4704 = vld [vmem:[%s4677 + $0xd0] sm:$0xff]
    %v4705 = vld [vmem:[%s4677 + $0xd8] sm:$0xff]
    %v4706 = vld [vmem:[%s4677 + $0xe0] sm:$0xff]
    %v4707 = vld [vmem:[%s4677 + $0xe8] sm:$0xff]
    %v4708 = vld [vmem:[%s4677 + $0xf0] sm:$0xff]
    %v4709 = vld [vmem:[%s4677 + $0xf8] sm:$0xff]
    %v4710 = vld [vmem:[%s4677 + $0x100] sm:$0xff]
    %v4711 = vld [vmem:[%s4677 + $0x108] sm:$0xff]
    %v4712 = vld [vmem:[%s4677 + $0x110] sm:$0xff]
    %v4713 = vld [vmem:[%s4677 + $0x118] sm:$0xff]
    %v4714 = vld [vmem:[%s4677 + $0x120] sm:$0xff]
    %v4715 = vld [vmem:[%s4677 + $0x128] sm:$0xff]
    %v4716 = vld [vmem:[%s4677 + $0x130] sm:$0xff]
    %v4717 = vld [vmem:[%s4677 + $0x138] sm:$0xff]
    %v4718 = vld [vmem:[%s4677 + $0x140] sm:$0xff]
    %v4719 = vld [vmem:[%s4677 + $0x148] sm:$0xff]
    %v4720 = vld [vmem:[%s4677 + $0x150] sm:$0xff]
    %v4721 = vld [vmem:[%s4677 + $0x158] sm:$0xff]
    %v4722 = vld [vmem:[%s4677 + $0x160] sm:$0xff]
    %v4723 = vld [vmem:[%s4677 + $0x168] sm:$0xff]
    %v4724 = vld [vmem:[%s4677 + $0x170] sm:$0xff]
    %v4725 = vld [vmem:[%s4677 + $0x178] sm:$0xff]
    %v4774 = vunpack.c.l.b16 %v4678
    %v4775 = vunpack.c.h.b16 %v4678
    %v4776 = vunpack.c.l.b16 %v4679
    %v4777 = vunpack.c.h.b16 %v4679
    %v4778 = vunpack.c.l.b16 %v4680
    %v4779 = vunpack.c.h.b16 %v4680
    %v4780 = vunpack.c.l.b16 %v4681
    %v4781 = vunpack.c.h.b16 %v4681
    %v4782 = vunpack.c.l.b16 %v4682
    %v4783 = vunpack.c.h.b16 %v4682
    %v4784 = vunpack.c.l.b16 %v4683
    %v4785 = vunpack.c.h.b16 %v4683
    %v4786 = vunpack.c.l.b16 %v4684
    %v4787 = vunpack.c.h.b16 %v4684
    %v4788 = vunpack.c.l.b16 %v4685
    %v4789 = vunpack.c.h.b16 %v4685
    %v4790 = vunpack.c.l.b16 %v4686
    %v4791 = vunpack.c.h.b16 %v4686
    %v4792 = vunpack.c.l.b16 %v4687
    %v4793 = vunpack.c.h.b16 %v4687
    %v4794 = vunpack.c.l.b16 %v4688
    %v4795 = vunpack.c.h.b16 %v4688
    %v4796 = vunpack.c.l.b16 %v4689
    %v4797 = vunpack.c.h.b16 %v4689
    %v4798 = vunpack.c.l.b16 %v4690
    %v4799 = vunpack.c.h.b16 %v4690
    %v4800 = vunpack.c.l.b16 %v4691
    %v4801 = vunpack.c.h.b16 %v4691
    %v4802 = vunpack.c.l.b16 %v4692
    %v4803 = vunpack.c.h.b16 %v4692
    %v4804 = vunpack.c.l.b16 %v4693
    %v4805 = vunpack.c.h.b16 %v4693
    %v4806 = vunpack.c.l.b16 %v4694
    %v4807 = vunpack.c.h.b16 %v4694
    %v4808 = vunpack.c.l.b16 %v4695
    %v4809 = vunpack.c.h.b16 %v4695
    %v4810 = vunpack.c.l.b16 %v4696
    %v4811 = vunpack.c.h.b16 %v4696
    %v4812 = vunpack.c.l.b16 %v4697
    %v4813 = vunpack.c.h.b16 %v4697
    %v4814 = vunpack.c.l.b16 %v4698
    %v4815 = vunpack.c.h.b16 %v4698
    %v4816 = vunpack.c.l.b16 %v4699
    %v4817 = vunpack.c.h.b16 %v4699
    %v4818 = vunpack.c.l.b16 %v4700
    %v4819 = vunpack.c.h.b16 %v4700
    %v4820 = vunpack.c.l.b16 %v4701
    %v4821 = vunpack.c.h.b16 %v4701
    %v4822 = vunpack.c.l.b16 %v4702
    %v4823 = vunpack.c.h.b16 %v4702
    %v4824 = vunpack.c.l.b16 %v4703
    %v4825 = vunpack.c.h.b16 %v4703
    %v4826 = vunpack.c.l.b16 %v4704
    %v4827 = vunpack.c.h.b16 %v4704
    %v4828 = vunpack.c.l.b16 %v4705
    %v4829 = vunpack.c.h.b16 %v4705
    %v4830 = vunpack.c.l.b16 %v4706
    %v4831 = vunpack.c.h.b16 %v4706
    %v4832 = vunpack.c.l.b16 %v4707
    %v4833 = vunpack.c.h.b16 %v4707
    %v4834 = vunpack.c.l.b16 %v4708
    %v4835 = vunpack.c.h.b16 %v4708
    %v4836 = vunpack.c.l.b16 %v4709
    %v4837 = vunpack.c.h.b16 %v4709
    %v4838 = vunpack.c.l.b16 %v4710
    %v4839 = vunpack.c.h.b16 %v4710
    %v4840 = vunpack.c.l.b16 %v4711
    %v4841 = vunpack.c.h.b16 %v4711
    %v4842 = vunpack.c.l.b16 %v4712
    %v4843 = vunpack.c.h.b16 %v4712
    %v4844 = vunpack.c.l.b16 %v4713
    %v4845 = vunpack.c.h.b16 %v4713
    %v4846 = vunpack.c.l.b16 %v4714
    %v4847 = vunpack.c.h.b16 %v4714
    %v4848 = vunpack.c.l.b16 %v4715
    %v4849 = vunpack.c.h.b16 %v4715
    %v4850 = vunpack.c.l.b16 %v4716
    %v4851 = vunpack.c.h.b16 %v4716
    %v4852 = vunpack.c.l.b16 %v4717
    %v4853 = vunpack.c.h.b16 %v4717
    %v4854 = vunpack.c.l.b16 %v4718
    %v4855 = vunpack.c.h.b16 %v4718
    %v4856 = vunpack.c.l.b16 %v4719
    %v4857 = vunpack.c.h.b16 %v4719
    %v4858 = vunpack.c.l.b16 %v4720
    %v4859 = vunpack.c.h.b16 %v4720
    %v4860 = vunpack.c.l.b16 %v4721
    %v4861 = vunpack.c.h.b16 %v4721
    %v4862 = vunpack.c.l.b16 %v4722
    %v4863 = vunpack.c.h.b16 %v4722
    %v4864 = vunpack.c.l.b16 %v4723
    %v4865 = vunpack.c.h.b16 %v4723
    %v4866 = vunpack.c.l.b16 %v4724
    %v4867 = vunpack.c.h.b16 %v4724
    %v4868 = vunpack.c.l.b16 %v4725
    %v4869 = vunpack.c.h.b16 %v4725
    %v4870 = vpack.c.b16 %v4778, %v4774
    %v4871 = vpack.c.b16 %v4779, %v4775
    %v4872 = vpack.c.b16 %v4780, %v4776
    %v4873 = vpack.c.b16 %v4781, %v4777
    %v4874 = vpack.c.b16 %v4786, %v4782
    %v4875 = vpack.c.b16 %v4787, %v4783
    %v4876 = vpack.c.b16 %v4788, %v4784
    %v4877 = vpack.c.b16 %v4789, %v4785
    %v4878 = vpack.c.b16 %v4794, %v4790
    %v4879 = vpack.c.b16 %v4795, %v4791
    %v4880 = vpack.c.b16 %v4796, %v4792
    %v4881 = vpack.c.b16 %v4797, %v4793
    %v4882 = vpack.c.b16 %v4802, %v4798
    %v4883 = vpack.c.b16 %v4803, %v4799
    %v4884 = vpack.c.b16 %v4804, %v4800
    %v4885 = vpack.c.b16 %v4805, %v4801
    %v4886 = vpack.c.b16 %v4810, %v4806
    %v4887 = vpack.c.b16 %v4811, %v4807
    %v4888 = vpack.c.b16 %v4812, %v4808
    %v4889 = vpack.c.b16 %v4813, %v4809
    %v4890 = vpack.c.b16 %v4818, %v4814
    %v4891 = vpack.c.b16 %v4819, %v4815
    %v4892 = vpack.c.b16 %v4820, %v4816
    %v4893 = vpack.c.b16 %v4821, %v4817
    %v4894 = vpack.c.b16 %v4826, %v4822
    %v4895 = vpack.c.b16 %v4827, %v4823
    %v4896 = vpack.c.b16 %v4828, %v4824
    %v4897 = vpack.c.b16 %v4829, %v4825
    %v4898 = vpack.c.b16 %v4834, %v4830
    %v4899 = vpack.c.b16 %v4835, %v4831
    %v4900 = vpack.c.b16 %v4836, %v4832
    %v4901 = vpack.c.b16 %v4837, %v4833
    %v4902 = vpack.c.b16 %v4842, %v4838
    %v4903 = vpack.c.b16 %v4843, %v4839
    %v4904 = vpack.c.b16 %v4844, %v4840
    %v4905 = vpack.c.b16 %v4845, %v4841
    %v4906 = vpack.c.b16 %v4850, %v4846
    %v4907 = vpack.c.b16 %v4851, %v4847
    %v4908 = vpack.c.b16 %v4852, %v4848
    %v4909 = vpack.c.b16 %v4853, %v4849
    %v4910 = vpack.c.b16 %v4858, %v4854
    %v4911 = vpack.c.b16 %v4859, %v4855
    %v4912 = vpack.c.b16 %v4860, %v4856
    %v4913 = vpack.c.b16 %v4861, %v4857
    %v4914 = vpack.c.b16 %v4866, %v4862
    %v4915 = vpack.c.b16 %v4867, %v4863
    %v4916 = vpack.c.b16 %v4868, %v4864
    %v4917 = vpack.c.b16 %v4869, %v4865
    %v4967 = vsel %vm184, %v4676, 0
    %4969 = vmatpush.bf16.msra.mxu0 %v4898
    %4970 = vmatpush.bf16.msra.mxu0 %v4894
    %4971 = vmatpush.bf16.msra.mxu0 %v4890
    %4972 = vmatpush.bf16.msra.mxu0 %v4886
    %4973 = vmatpush.bf16.msra.mxu0 %v4882
    %4974 = vmatpush.bf16.msra.mxu0 %v4878
    %4975 = vmatpush.bf16.msra.mxu0 %v4874
    %4976 = vmatpush.bf16.msra.mxu0 %v4870
    %4977 = vmatmul.bf16.gmra.mxu0 %v4675
    %v4978 = vpop.f32.mrf.mxu0
    %v4979 = vadd.f32 0.0, %v4978
    %v4980 = vpop.f32.mrf.mxu0
    %4981 = vdwg.mxu0
    %4982 = vmatpush.bf16.msra.mxu0 0
    %4983 = vmatpush.bf16.msra.mxu0 0
    %4984 = vmatpush.bf16.msra.mxu0 0
    %4985 = vmatpush.bf16.msra.mxu0 0
    %4986 = vmatpush.bf16.msra.mxu0 %v4914
    %4987 = vmatpush.bf16.msra.mxu0 %v4910
    %4988 = vmatpush.bf16.msra.mxu0 %v4906
    %4989 = vmatpush.bf16.msra.mxu0 %v4902
    %4990 = vmatmul.bf16.gmra.mxu0 %v4967
    %v4991 = vpop.f32.mrf.mxu0
    %v4992 = vadd.f32 %v4979, %v4991
    %v4993 = vpop.f32.mrf.mxu0
    %4994 = vdwg.mxu0
    %4995 = vmatpush.bf16.msra.mxu0 %v4899
    %4996 = vmatpush.bf16.msra.mxu0 %v4895
    %4997 = vmatpush.bf16.msra.mxu0 %v4891
    %4998 = vmatpush.bf16.msra.mxu0 %v4887
    %4999 = vmatpush.bf16.msra.mxu0 %v4883
    %5000 = vmatpush.bf16.msra.mxu0 %v4879
    %5001 = vmatpush.bf16.msra.mxu0 %v4875
    %5002 = vmatpush.bf16.msra.mxu0 %v4871
    %5003 = vmatmul.bf16.gmra.mxu0 %v4675
    %v5004 = vpop.f32.mrf.mxu0
    %v5005 = vadd.f32 0.0, %v5004
    %v5006 = vpop.f32.mrf.mxu0
    %5007 = vdwg.mxu0
    %5008 = vmatpush.bf16.msra.mxu0 0
    %5009 = vmatpush.bf16.msra.mxu0 0
    %5010 = vmatpush.bf16.msra.mxu0 0
    %5011 = vmatpush.bf16.msra.mxu0 0
    %5012 = vmatpush.bf16.msra.mxu0 %v4915
    %5013 = vmatpush.bf16.msra.mxu0 %v4911
    %5014 = vmatpush.bf16.msra.mxu0 %v4907
    %5015 = vmatpush.bf16.msra.mxu0 %v4903
    %5016 = vmatmul.bf16.gmra.mxu0 %v4967
    %v5017 = vpop.f32.mrf.mxu0
    %v5018 = vadd.f32 %v5005, %v5017
    %v5019 = vpop.f32.mrf.mxu0
    %5020 = vdwg.mxu0
    %5021 = vmatpush.bf16.msra.mxu0 %v4900
    %5022 = vmatpush.bf16.msra.mxu0 %v4896
    %5023 = vmatpush.bf16.msra.mxu0 %v4892
    %5024 = vmatpush.bf16.msra.mxu0 %v4888
    %5025 = vmatpush.bf16.msra.mxu0 %v4884
    %5026 = vmatpush.bf16.msra.mxu0 %v4880
    %5027 = vmatpush.bf16.msra.mxu0 %v4876
    %5028 = vmatpush.bf16.msra.mxu0 %v4872
    %5029 = vmatmul.bf16.gmra.mxu0 %v4675
    %v5030 = vpop.f32.mrf.mxu0
    %v5031 = vadd.f32 0.0, %v5030
    %v5032 = vpop.f32.mrf.mxu0
    %5033 = vdwg.mxu0
    %5034 = vmatpush.bf16.msra.mxu0 0
    %5035 = vmatpush.bf16.msra.mxu0 0
    %5036 = vmatpush.bf16.msra.mxu0 0
    %5037 = vmatpush.bf16.msra.mxu0 0
    %5038 = vmatpush.bf16.msra.mxu0 %v4916
    %5039 = vmatpush.bf16.msra.mxu0 %v4912
    %5040 = vmatpush.bf16.msra.mxu0 %v4908
    %5041 = vmatpush.bf16.msra.mxu0 %v4904
    %5042 = vmatmul.bf16.gmra.mxu0 %v4967
    %v5043 = vpop.f32.mrf.mxu0
    %v5044 = vadd.f32 %v5031, %v5043
    %v5045 = vpop.f32.mrf.mxu0
    %5046 = vdwg.mxu0
    %5047 = vmatpush.bf16.msra.mxu0 %v4901
    %5048 = vmatpush.bf16.msra.mxu0 %v4897
    %5049 = vmatpush.bf16.msra.mxu0 %v4893
    %5050 = vmatpush.bf16.msra.mxu0 %v4889
    %5051 = vmatpush.bf16.msra.mxu0 %v4885
    %5052 = vmatpush.bf16.msra.mxu0 %v4881
    %5053 = vmatpush.bf16.msra.mxu0 %v4877
    %5054 = vmatpush.bf16.msra.mxu0 %v4873
    %5055 = vmatmul.bf16.gmra.mxu0 %v4675
    %v5056 = vpop.f32.mrf.mxu0
    %v5057 = vadd.f32 0.0, %v5056
    %v5058 = vpop.f32.mrf.mxu0
    %5059 = vdwg.mxu0
    %5060 = vmatpush.bf16.msra.mxu0 0
    %5061 = vmatpush.bf16.msra.mxu0 0
    %5062 = vmatpush.bf16.msra.mxu0 0
    %5063 = vmatpush.bf16.msra.mxu0 0
    %5064 = vmatpush.bf16.msra.mxu0 %v4917
    %5065 = vmatpush.bf16.msra.mxu0 %v4913
    %5066 = vmatpush.bf16.msra.mxu0 %v4909
    %5067 = vmatpush.bf16.msra.mxu0 %v4905
    %5068 = vmatmul.bf16.gmra.mxu0 %v4967
    %v5069 = vpop.f32.mrf.mxu0
    %v5070 = vadd.f32 %v5057, %v5069
    %v5071 = vpop.f32.mrf.mxu0
    %5072 = vdwg.mxu0
    %v5073 = vadd.f32 %v4669, %v4992
    %v5074 = vadd.f32 %v4670, %v5018
    %v5075 = vadd.f32 %v4671, %v5044
    %v5076 = vadd.f32 %v4672, %v5070
    %v5077 = vmul.f32 %v104, %v640
    %v5078 = vmul.f32 %v105, %v641
    %v5079 = vpack.c.bf16 %v5077, %v5077
    %v5080 = vpack.c.bf16 %v5078, %v5078
    %s5081 = scalar_lea.vmem [#allocation6], 4224
    %v5082 = vld [vmem:[%s5081] sm:$0xff]
    %v5083 = vld [vmem:[%s5081 + $0x8] sm:$0xff]
    %v5084 = vld [vmem:[%s5081 + $0x10] sm:$0xff]
    %v5085 = vld [vmem:[%s5081 + $0x18] sm:$0xff]
    %v5086 = vld [vmem:[%s5081 + $0x20] sm:$0xff]
    %v5087 = vld [vmem:[%s5081 + $0x28] sm:$0xff]
    %v5088 = vld [vmem:[%s5081 + $0x30] sm:$0xff]
    %v5089 = vld [vmem:[%s5081 + $0x38] sm:$0xff]
    %v5090 = vld [vmem:[%s5081 + $0x40] sm:$0xff]
    %v5091 = vld [vmem:[%s5081 + $0x48] sm:$0xff]
    %v5092 = vld [vmem:[%s5081 + $0x50] sm:$0xff]
    %v5093 = vld [vmem:[%s5081 + $0x58] sm:$0xff]
    %v5094 = vld [vmem:[%s5081 + $0x60] sm:$0xff]
    %v5095 = vld [vmem:[%s5081 + $0x68] sm:$0xff]
    %v5096 = vld [vmem:[%s5081 + $0x70] sm:$0xff]
    %v5097 = vld [vmem:[%s5081 + $0x78] sm:$0xff]
    %v5098 = vld [vmem:[%s5081 + $0x80] sm:$0xff]
    %v5099 = vld [vmem:[%s5081 + $0x88] sm:$0xff]
    %v5100 = vld [vmem:[%s5081 + $0x90] sm:$0xff]
    %v5101 = vld [vmem:[%s5081 + $0x98] sm:$0xff]
    %v5102 = vld [vmem:[%s5081 + $0xa0] sm:$0xff]
    %v5103 = vld [vmem:[%s5081 + $0xa8] sm:$0xff]
    %v5104 = vld [vmem:[%s5081 + $0xb0] sm:$0xff]
    %v5105 = vld [vmem:[%s5081 + $0xb8] sm:$0xff]
    %v5106 = vld [vmem:[%s5081 + $0xc0] sm:$0xff]
    %v5107 = vld [vmem:[%s5081 + $0xc8] sm:$0xff]
    %v5108 = vld [vmem:[%s5081 + $0xd0] sm:$0xff]
    %v5109 = vld [vmem:[%s5081 + $0xd8] sm:$0xff]
    %v5110 = vld [vmem:[%s5081 + $0xe0] sm:$0xff]
    %v5111 = vld [vmem:[%s5081 + $0xe8] sm:$0xff]
    %v5112 = vld [vmem:[%s5081 + $0xf0] sm:$0xff]
    %v5113 = vld [vmem:[%s5081 + $0xf8] sm:$0xff]
    %v5114 = vld [vmem:[%s5081 + $0x100] sm:$0xff]
    %v5115 = vld [vmem:[%s5081 + $0x108] sm:$0xff]
    %v5116 = vld [vmem:[%s5081 + $0x110] sm:$0xff]
    %v5117 = vld [vmem:[%s5081 + $0x118] sm:$0xff]
    %v5118 = vld [vmem:[%s5081 + $0x120] sm:$0xff]
    %v5119 = vld [vmem:[%s5081 + $0x128] sm:$0xff]
    %v5120 = vld [vmem:[%s5081 + $0x130] sm:$0xff]
    %v5121 = vld [vmem:[%s5081 + $0x138] sm:$0xff]
    %v5122 = vld [vmem:[%s5081 + $0x140] sm:$0xff]
    %v5123 = vld [vmem:[%s5081 + $0x148] sm:$0xff]
    %v5124 = vld [vmem:[%s5081 + $0x150] sm:$0xff]
    %v5125 = vld [vmem:[%s5081 + $0x158] sm:$0xff]
    %v5126 = vld [vmem:[%s5081 + $0x160] sm:$0xff]
    %v5127 = vld [vmem:[%s5081 + $0x168] sm:$0xff]
    %v5128 = vld [vmem:[%s5081 + $0x170] sm:$0xff]
    %v5129 = vld [vmem:[%s5081 + $0x178] sm:$0xff]
    %v5178 = vunpack.c.l.b16 %v5082
    %v5179 = vunpack.c.h.b16 %v5082
    %v5180 = vunpack.c.l.b16 %v5083
    %v5181 = vunpack.c.h.b16 %v5083
    %v5182 = vunpack.c.l.b16 %v5084
    %v5183 = vunpack.c.h.b16 %v5084
    %v5184 = vunpack.c.l.b16 %v5085
    %v5185 = vunpack.c.h.b16 %v5085
    %v5186 = vunpack.c.l.b16 %v5086
    %v5187 = vunpack.c.h.b16 %v5086
    %v5188 = vunpack.c.l.b16 %v5087
    %v5189 = vunpack.c.h.b16 %v5087
    %v5190 = vunpack.c.l.b16 %v5088
    %v5191 = vunpack.c.h.b16 %v5088
    %v5192 = vunpack.c.l.b16 %v5089
    %v5193 = vunpack.c.h.b16 %v5089
    %v5194 = vunpack.c.l.b16 %v5090
    %v5195 = vunpack.c.h.b16 %v5090
    %v5196 = vunpack.c.l.b16 %v5091
    %v5197 = vunpack.c.h.b16 %v5091
    %v5198 = vunpack.c.l.b16 %v5092
    %v5199 = vunpack.c.h.b16 %v5092
    %v5200 = vunpack.c.l.b16 %v5093
    %v5201 = vunpack.c.h.b16 %v5093
    %v5202 = vunpack.c.l.b16 %v5094
    %v5203 = vunpack.c.h.b16 %v5094
    %v5204 = vunpack.c.l.b16 %v5095
    %v5205 = vunpack.c.h.b16 %v5095
    %v5206 = vunpack.c.l.b16 %v5096
    %v5207 = vunpack.c.h.b16 %v5096
    %v5208 = vunpack.c.l.b16 %v5097
    %v5209 = vunpack.c.h.b16 %v5097
    %v5210 = vunpack.c.l.b16 %v5098
    %v5211 = vunpack.c.h.b16 %v5098
    %v5212 = vunpack.c.l.b16 %v5099
    %v5213 = vunpack.c.h.b16 %v5099
    %v5214 = vunpack.c.l.b16 %v5100
    %v5215 = vunpack.c.h.b16 %v5100
    %v5216 = vunpack.c.l.b16 %v5101
    %v5217 = vunpack.c.h.b16 %v5101
    %v5218 = vunpack.c.l.b16 %v5102
    %v5219 = vunpack.c.h.b16 %v5102
    %v5220 = vunpack.c.l.b16 %v5103
    %v5221 = vunpack.c.h.b16 %v5103
    %v5222 = vunpack.c.l.b16 %v5104
    %v5223 = vunpack.c.h.b16 %v5104
    %v5224 = vunpack.c.l.b16 %v5105
    %v5225 = vunpack.c.h.b16 %v5105
    %v5226 = vunpack.c.l.b16 %v5106
    %v5227 = vunpack.c.h.b16 %v5106
    %v5228 = vunpack.c.l.b16 %v5107
    %v5229 = vunpack.c.h.b16 %v5107
    %v5230 = vunpack.c.l.b16 %v5108
    %v5231 = vunpack.c.h.b16 %v5108
    %v5232 = vunpack.c.l.b16 %v5109
    %v5233 = vunpack.c.h.b16 %v5109
    %v5234 = vunpack.c.l.b16 %v5110
    %v5235 = vunpack.c.h.b16 %v5110
    %v5236 = vunpack.c.l.b16 %v5111
    %v5237 = vunpack.c.h.b16 %v5111
    %v5238 = vunpack.c.l.b16 %v5112
    %v5239 = vunpack.c.h.b16 %v5112
    %v5240 = vunpack.c.l.b16 %v5113
    %v5241 = vunpack.c.h.b16 %v5113
    %v5242 = vunpack.c.l.b16 %v5114
    %v5243 = vunpack.c.h.b16 %v5114
    %v5244 = vunpack.c.l.b16 %v5115
    %v5245 = vunpack.c.h.b16 %v5115
    %v5246 = vunpack.c.l.b16 %v5116
    %v5247 = vunpack.c.h.b16 %v5116
    %v5248 = vunpack.c.l.b16 %v5117
    %v5249 = vunpack.c.h.b16 %v5117
    %v5250 = vunpack.c.l.b16 %v5118
    %v5251 = vunpack.c.h.b16 %v5118
    %v5252 = vunpack.c.l.b16 %v5119
    %v5253 = vunpack.c.h.b16 %v5119
    %v5254 = vunpack.c.l.b16 %v5120
    %v5255 = vunpack.c.h.b16 %v5120
    %v5256 = vunpack.c.l.b16 %v5121
    %v5257 = vunpack.c.h.b16 %v5121
    %v5258 = vunpack.c.l.b16 %v5122
    %v5259 = vunpack.c.h.b16 %v5122
    %v5260 = vunpack.c.l.b16 %v5123
    %v5261 = vunpack.c.h.b16 %v5123
    %v5262 = vunpack.c.l.b16 %v5124
    %v5263 = vunpack.c.h.b16 %v5124
    %v5264 = vunpack.c.l.b16 %v5125
    %v5265 = vunpack.c.h.b16 %v5125
    %v5266 = vunpack.c.l.b16 %v5126
    %v5267 = vunpack.c.h.b16 %v5126
    %v5268 = vunpack.c.l.b16 %v5127
    %v5269 = vunpack.c.h.b16 %v5127
    %v5270 = vunpack.c.l.b16 %v5128
    %v5271 = vunpack.c.h.b16 %v5128
    %v5272 = vunpack.c.l.b16 %v5129
    %v5273 = vunpack.c.h.b16 %v5129
    %v5274 = vpack.c.b16 %v5182, %v5178
    %v5275 = vpack.c.b16 %v5183, %v5179
    %v5276 = vpack.c.b16 %v5184, %v5180
    %v5277 = vpack.c.b16 %v5185, %v5181
    %v5278 = vpack.c.b16 %v5190, %v5186
    %v5279 = vpack.c.b16 %v5191, %v5187
    %v5280 = vpack.c.b16 %v5192, %v5188
    %v5281 = vpack.c.b16 %v5193, %v5189
    %v5282 = vpack.c.b16 %v5198, %v5194
    %v5283 = vpack.c.b16 %v5199, %v5195
    %v5284 = vpack.c.b16 %v5200, %v5196
    %v5285 = vpack.c.b16 %v5201, %v5197
    %v5286 = vpack.c.b16 %v5206, %v5202
    %v5287 = vpack.c.b16 %v5207, %v5203
    %v5288 = vpack.c.b16 %v5208, %v5204
    %v5289 = vpack.c.b16 %v5209, %v5205
    %v5290 = vpack.c.b16 %v5214, %v5210
    %v5291 = vpack.c.b16 %v5215, %v5211
    %v5292 = vpack.c.b16 %v5216, %v5212
    %v5293 = vpack.c.b16 %v5217, %v5213
    %v5294 = vpack.c.b16 %v5222, %v5218
    %v5295 = vpack.c.b16 %v5223, %v5219
    %v5296 = vpack.c.b16 %v5224, %v5220
    %v5297 = vpack.c.b16 %v5225, %v5221
    %v5298 = vpack.c.b16 %v5230, %v5226
    %v5299 = vpack.c.b16 %v5231, %v5227
    %v5300 = vpack.c.b16 %v5232, %v5228
    %v5301 = vpack.c.b16 %v5233, %v5229
    %v5302 = vpack.c.b16 %v5238, %v5234
    %v5303 = vpack.c.b16 %v5239, %v5235
    %v5304 = vpack.c.b16 %v5240, %v5236
    %v5305 = vpack.c.b16 %v5241, %v5237
    %v5306 = vpack.c.b16 %v5246, %v5242
    %v5307 = vpack.c.b16 %v5247, %v5243
    %v5308 = vpack.c.b16 %v5248, %v5244
    %v5309 = vpack.c.b16 %v5249, %v5245
    %v5310 = vpack.c.b16 %v5254, %v5250
    %v5311 = vpack.c.b16 %v5255, %v5251
    %v5312 = vpack.c.b16 %v5256, %v5252
    %v5313 = vpack.c.b16 %v5257, %v5253
    %v5314 = vpack.c.b16 %v5262, %v5258
    %v5315 = vpack.c.b16 %v5263, %v5259
    %v5316 = vpack.c.b16 %v5264, %v5260
    %v5317 = vpack.c.b16 %v5265, %v5261
    %v5318 = vpack.c.b16 %v5270, %v5266
    %v5319 = vpack.c.b16 %v5271, %v5267
    %v5320 = vpack.c.b16 %v5272, %v5268
    %v5321 = vpack.c.b16 %v5273, %v5269
    %v5371 = vsel %vm184, %v5080, 0
    %5373 = vmatpush.bf16.msra.mxu0 %v5302
    %5374 = vmatpush.bf16.msra.mxu0 %v5298
    %5375 = vmatpush.bf16.msra.mxu0 %v5294
    %5376 = vmatpush.bf16.msra.mxu0 %v5290
    %5377 = vmatpush.bf16.msra.mxu0 %v5286
    %5378 = vmatpush.bf16.msra.mxu0 %v5282
    %5379 = vmatpush.bf16.msra.mxu0 %v5278
    %5380 = vmatpush.bf16.msra.mxu0 %v5274
    %5381 = vmatmul.bf16.gmra.mxu0 %v5079
    %v5382 = vpop.f32.mrf.mxu0
    %v5383 = vadd.f32 0.0, %v5382
    %v5384 = vpop.f32.mrf.mxu0
    %5385 = vdwg.mxu0
    %5386 = vmatpush.bf16.msra.mxu0 0
    %5387 = vmatpush.bf16.msra.mxu0 0
    %5388 = vmatpush.bf16.msra.mxu0 0
    %5389 = vmatpush.bf16.msra.mxu0 0
    %5390 = vmatpush.bf16.msra.mxu0 %v5318
    %5391 = vmatpush.bf16.msra.mxu0 %v5314
    %5392 = vmatpush.bf16.msra.mxu0 %v5310
    %5393 = vmatpush.bf16.msra.mxu0 %v5306
    %5394 = vmatmul.bf16.gmra.mxu0 %v5371
    %v5395 = vpop.f32.mrf.mxu0
    %v5396 = vadd.f32 %v5383, %v5395
    %v5397 = vpop.f32.mrf.mxu0
    %5398 = vdwg.mxu0
    %5399 = vmatpush.bf16.msra.mxu0 %v5303
    %5400 = vmatpush.bf16.msra.mxu0 %v5299
    %5401 = vmatpush.bf16.msra.mxu0 %v5295
    %5402 = vmatpush.bf16.msra.mxu0 %v5291
    %5403 = vmatpush.bf16.msra.mxu0 %v5287
    %5404 = vmatpush.bf16.msra.mxu0 %v5283
    %5405 = vmatpush.bf16.msra.mxu0 %v5279
    %5406 = vmatpush.bf16.msra.mxu0 %v5275
    %5407 = vmatmul.bf16.gmra.mxu0 %v5079
    %v5408 = vpop.f32.mrf.mxu0
    %v5409 = vadd.f32 0.0, %v5408
    %v5410 = vpop.f32.mrf.mxu0
    %5411 = vdwg.mxu0
    %5412 = vmatpush.bf16.msra.mxu0 0
    %5413 = vmatpush.bf16.msra.mxu0 0
    %5414 = vmatpush.bf16.msra.mxu0 0
    %5415 = vmatpush.bf16.msra.mxu0 0
    %5416 = vmatpush.bf16.msra.mxu0 %v5319
    %5417 = vmatpush.bf16.msra.mxu0 %v5315
    %5418 = vmatpush.bf16.msra.mxu0 %v5311
    %5419 = vmatpush.bf16.msra.mxu0 %v5307
    %5420 = vmatmul.bf16.gmra.mxu0 %v5371
    %v5421 = vpop.f32.mrf.mxu0
    %v5422 = vadd.f32 %v5409, %v5421
    %v5423 = vpop.f32.mrf.mxu0
    %5424 = vdwg.mxu0
    %5425 = vmatpush.bf16.msra.mxu0 %v5304
    %5426 = vmatpush.bf16.msra.mxu0 %v5300
    %5427 = vmatpush.bf16.msra.mxu0 %v5296
    %5428 = vmatpush.bf16.msra.mxu0 %v5292
    %5429 = vmatpush.bf16.msra.mxu0 %v5288
    %5430 = vmatpush.bf16.msra.mxu0 %v5284
    %5431 = vmatpush.bf16.msra.mxu0 %v5280
    %5432 = vmatpush.bf16.msra.mxu0 %v5276
    %5433 = vmatmul.bf16.gmra.mxu0 %v5079
    %v5434 = vpop.f32.mrf.mxu0
    %v5435 = vadd.f32 0.0, %v5434
    %v5436 = vpop.f32.mrf.mxu0
    %5437 = vdwg.mxu0
    %5438 = vmatpush.bf16.msra.mxu0 0
    %5439 = vmatpush.bf16.msra.mxu0 0
    %5440 = vmatpush.bf16.msra.mxu0 0
    %5441 = vmatpush.bf16.msra.mxu0 0
    %5442 = vmatpush.bf16.msra.mxu0 %v5320
    %5443 = vmatpush.bf16.msra.mxu0 %v5316
    %5444 = vmatpush.bf16.msra.mxu0 %v5312
    %5445 = vmatpush.bf16.msra.mxu0 %v5308
    %5446 = vmatmul.bf16.gmra.mxu0 %v5371
    %v5447 = vpop.f32.mrf.mxu0
    %v5448 = vadd.f32 %v5435, %v5447
    %v5449 = vpop.f32.mrf.mxu0
    %5450 = vdwg.mxu0
    %5451 = vmatpush.bf16.msra.mxu0 %v5305
    %5452 = vmatpush.bf16.msra.mxu0 %v5301
    %5453 = vmatpush.bf16.msra.mxu0 %v5297
    %5454 = vmatpush.bf16.msra.mxu0 %v5293
    %5455 = vmatpush.bf16.msra.mxu0 %v5289
    %5456 = vmatpush.bf16.msra.mxu0 %v5285
    %5457 = vmatpush.bf16.msra.mxu0 %v5281
    %5458 = vmatpush.bf16.msra.mxu0 %v5277
    %5459 = vmatmul.bf16.gmra.mxu0 %v5079
    %v5460 = vpop.f32.mrf.mxu0
    %v5461 = vadd.f32 0.0, %v5460
    %v5462 = vpop.f32.mrf.mxu0
    %5463 = vdwg.mxu0
    %5464 = vmatpush.bf16.msra.mxu0 0
    %5465 = vmatpush.bf16.msra.mxu0 0
    %5466 = vmatpush.bf16.msra.mxu0 0
    %5467 = vmatpush.bf16.msra.mxu0 0
    %5468 = vmatpush.bf16.msra.mxu0 %v5321
    %5469 = vmatpush.bf16.msra.mxu0 %v5317
    %5470 = vmatpush.bf16.msra.mxu0 %v5313
    %5471 = vmatpush.bf16.msra.mxu0 %v5309
    %5472 = vmatmul.bf16.gmra.mxu0 %v5371
    %v5473 = vpop.f32.mrf.mxu0
    %v5474 = vadd.f32 %v5461, %v5473
    %v5475 = vpop.f32.mrf.mxu0
    %5476 = vdwg.mxu0
    %v5477 = vadd.f32 %v5073, %v5396
    %v5478 = vadd.f32 %v5074, %v5422
    %v5479 = vadd.f32 %v5075, %v5448
    %v5480 = vadd.f32 %v5076, %v5474
    %v5481 = vmul.f32 %v106, %v640
    %v5482 = vmul.f32 %v107, %v641
    %v5483 = vpack.c.bf16 %v5481, %v5481
    %v5484 = vpack.c.bf16 %v5482, %v5482
    %s5485 = scalar_lea.vmem [#allocation6], 4608
    %v5486 = vld [vmem:[%s5485] sm:$0xff]
    %v5487 = vld [vmem:[%s5485 + $0x8] sm:$0xff]
    %v5488 = vld [vmem:[%s5485 + $0x10] sm:$0xff]
    %v5489 = vld [vmem:[%s5485 + $0x18] sm:$0xff]
    %v5490 = vld [vmem:[%s5485 + $0x20] sm:$0xff]
    %v5491 = vld [vmem:[%s5485 + $0x28] sm:$0xff]
    %v5492 = vld [vmem:[%s5485 + $0x30] sm:$0xff]
    %v5493 = vld [vmem:[%s5485 + $0x38] sm:$0xff]
    %v5494 = vld [vmem:[%s5485 + $0x40] sm:$0xff]
    %v5495 = vld [vmem:[%s5485 + $0x48] sm:$0xff]
    %v5496 = vld [vmem:[%s5485 + $0x50] sm:$0xff]
    %v5497 = vld [vmem:[%s5485 + $0x58] sm:$0xff]
    %v5498 = vld [vmem:[%s5485 + $0x60] sm:$0xff]
    %v5499 = vld [vmem:[%s5485 + $0x68] sm:$0xff]
    %v5500 = vld [vmem:[%s5485 + $0x70] sm:$0xff]
    %v5501 = vld [vmem:[%s5485 + $0x78] sm:$0xff]
    %v5502 = vld [vmem:[%s5485 + $0x80] sm:$0xff]
    %v5503 = vld [vmem:[%s5485 + $0x88] sm:$0xff]
    %v5504 = vld [vmem:[%s5485 + $0x90] sm:$0xff]
    %v5505 = vld [vmem:[%s5485 + $0x98] sm:$0xff]
    %v5506 = vld [vmem:[%s5485 + $0xa0] sm:$0xff]
    %v5507 = vld [vmem:[%s5485 + $0xa8] sm:$0xff]
    %v5508 = vld [vmem:[%s5485 + $0xb0] sm:$0xff]
    %v5509 = vld [vmem:[%s5485 + $0xb8] sm:$0xff]
    %v5510 = vld [vmem:[%s5485 + $0xc0] sm:$0xff]
    %v5511 = vld [vmem:[%s5485 + $0xc8] sm:$0xff]
    %v5512 = vld [vmem:[%s5485 + $0xd0] sm:$0xff]
    %v5513 = vld [vmem:[%s5485 + $0xd8] sm:$0xff]
    %v5514 = vld [vmem:[%s5485 + $0xe0] sm:$0xff]
    %v5515 = vld [vmem:[%s5485 + $0xe8] sm:$0xff]
    %v5516 = vld [vmem:[%s5485 + $0xf0] sm:$0xff]
    %v5517 = vld [vmem:[%s5485 + $0xf8] sm:$0xff]
    %v5518 = vld [vmem:[%s5485 + $0x100] sm:$0xff]
    %v5519 = vld [vmem:[%s5485 + $0x108] sm:$0xff]
    %v5520 = vld [vmem:[%s5485 + $0x110] sm:$0xff]
    %v5521 = vld [vmem:[%s5485 + $0x118] sm:$0xff]
    %v5522 = vld [vmem:[%s5485 + $0x120] sm:$0xff]
    %v5523 = vld [vmem:[%s5485 + $0x128] sm:$0xff]
    %v5524 = vld [vmem:[%s5485 + $0x130] sm:$0xff]
    %v5525 = vld [vmem:[%s5485 + $0x138] sm:$0xff]
    %v5526 = vld [vmem:[%s5485 + $0x140] sm:$0xff]
    %v5527 = vld [vmem:[%s5485 + $0x148] sm:$0xff]
    %v5528 = vld [vmem:[%s5485 + $0x150] sm:$0xff]
    %v5529 = vld [vmem:[%s5485 + $0x158] sm:$0xff]
    %v5530 = vld [vmem:[%s5485 + $0x160] sm:$0xff]
    %v5531 = vld [vmem:[%s5485 + $0x168] sm:$0xff]
    %v5532 = vld [vmem:[%s5485 + $0x170] sm:$0xff]
    %v5533 = vld [vmem:[%s5485 + $0x178] sm:$0xff]
    %v5582 = vunpack.c.l.b16 %v5486
    %v5583 = vunpack.c.h.b16 %v5486
    %v5584 = vunpack.c.l.b16 %v5487
    %v5585 = vunpack.c.h.b16 %v5487
    %v5586 = vunpack.c.l.b16 %v5488
    %v5587 = vunpack.c.h.b16 %v5488
    %v5588 = vunpack.c.l.b16 %v5489
    %v5589 = vunpack.c.h.b16 %v5489
    %v5590 = vunpack.c.l.b16 %v5490
    %v5591 = vunpack.c.h.b16 %v5490
    %v5592 = vunpack.c.l.b16 %v5491
    %v5593 = vunpack.c.h.b16 %v5491
    %v5594 = vunpack.c.l.b16 %v5492
    %v5595 = vunpack.c.h.b16 %v5492
    %v5596 = vunpack.c.l.b16 %v5493
    %v5597 = vunpack.c.h.b16 %v5493
    %v5598 = vunpack.c.l.b16 %v5494
    %v5599 = vunpack.c.h.b16 %v5494
    %v5600 = vunpack.c.l.b16 %v5495
    %v5601 = vunpack.c.h.b16 %v5495
    %v5602 = vunpack.c.l.b16 %v5496
    %v5603 = vunpack.c.h.b16 %v5496
    %v5604 = vunpack.c.l.b16 %v5497
    %v5605 = vunpack.c.h.b16 %v5497
    %v5606 = vunpack.c.l.b16 %v5498
    %v5607 = vunpack.c.h.b16 %v5498
    %v5608 = vunpack.c.l.b16 %v5499
    %v5609 = vunpack.c.h.b16 %v5499
    %v5610 = vunpack.c.l.b16 %v5500
    %v5611 = vunpack.c.h.b16 %v5500
    %v5612 = vunpack.c.l.b16 %v5501
    %v5613 = vunpack.c.h.b16 %v5501
    %v5614 = vunpack.c.l.b16 %v5502
    %v5615 = vunpack.c.h.b16 %v5502
    %v5616 = vunpack.c.l.b16 %v5503
    %v5617 = vunpack.c.h.b16 %v5503
    %v5618 = vunpack.c.l.b16 %v5504
    %v5619 = vunpack.c.h.b16 %v5504
    %v5620 = vunpack.c.l.b16 %v5505
    %v5621 = vunpack.c.h.b16 %v5505
    %v5622 = vunpack.c.l.b16 %v5506
    %v5623 = vunpack.c.h.b16 %v5506
    %v5624 = vunpack.c.l.b16 %v5507
    %v5625 = vunpack.c.h.b16 %v5507
    %v5626 = vunpack.c.l.b16 %v5508
    %v5627 = vunpack.c.h.b16 %v5508
    %v5628 = vunpack.c.l.b16 %v5509
    %v5629 = vunpack.c.h.b16 %v5509
    %v5630 = vunpack.c.l.b16 %v5510
    %v5631 = vunpack.c.h.b16 %v5510
    %v5632 = vunpack.c.l.b16 %v5511
    %v5633 = vunpack.c.h.b16 %v5511
    %v5634 = vunpack.c.l.b16 %v5512
    %v5635 = vunpack.c.h.b16 %v5512
    %v5636 = vunpack.c.l.b16 %v5513
    %v5637 = vunpack.c.h.b16 %v5513
    %v5638 = vunpack.c.l.b16 %v5514
    %v5639 = vunpack.c.h.b16 %v5514
    %v5640 = vunpack.c.l.b16 %v5515
    %v5641 = vunpack.c.h.b16 %v5515
    %v5642 = vunpack.c.l.b16 %v5516
    %v5643 = vunpack.c.h.b16 %v5516
    %v5644 = vunpack.c.l.b16 %v5517
    %v5645 = vunpack.c.h.b16 %v5517
    %v5646 = vunpack.c.l.b16 %v5518
    %v5647 = vunpack.c.h.b16 %v5518
    %v5648 = vunpack.c.l.b16 %v5519
    %v5649 = vunpack.c.h.b16 %v5519
    %v5650 = vunpack.c.l.b16 %v5520
    %v5651 = vunpack.c.h.b16 %v5520
    %v5652 = vunpack.c.l.b16 %v5521
    %v5653 = vunpack.c.h.b16 %v5521
    %v5654 = vunpack.c.l.b16 %v5522
    %v5655 = vunpack.c.h.b16 %v5522
    %v5656 = vunpack.c.l.b16 %v5523
    %v5657 = vunpack.c.h.b16 %v5523
    %v5658 = vunpack.c.l.b16 %v5524
    %v5659 = vunpack.c.h.b16 %v5524
    %v5660 = vunpack.c.l.b16 %v5525
    %v5661 = vunpack.c.h.b16 %v5525
    %v5662 = vunpack.c.l.b16 %v5526
    %v5663 = vunpack.c.h.b16 %v5526
    %v5664 = vunpack.c.l.b16 %v5527
    %v5665 = vunpack.c.h.b16 %v5527
    %v5666 = vunpack.c.l.b16 %v5528
    %v5667 = vunpack.c.h.b16 %v5528
    %v5668 = vunpack.c.l.b16 %v5529
    %v5669 = vunpack.c.h.b16 %v5529
    %v5670 = vunpack.c.l.b16 %v5530
    %v5671 = vunpack.c.h.b16 %v5530
    %v5672 = vunpack.c.l.b16 %v5531
    %v5673 = vunpack.c.h.b16 %v5531
    %v5674 = vunpack.c.l.b16 %v5532
    %v5675 = vunpack.c.h.b16 %v5532
    %v5676 = vunpack.c.l.b16 %v5533
    %v5677 = vunpack.c.h.b16 %v5533
    %v5678 = vpack.c.b16 %v5586, %v5582
    %v5679 = vpack.c.b16 %v5587, %v5583
    %v5680 = vpack.c.b16 %v5588, %v5584
    %v5681 = vpack.c.b16 %v5589, %v5585
    %v5682 = vpack.c.b16 %v5594, %v5590
    %v5683 = vpack.c.b16 %v5595, %v5591
    %v5684 = vpack.c.b16 %v5596, %v5592
    %v5685 = vpack.c.b16 %v5597, %v5593
    %v5686 = vpack.c.b16 %v5602, %v5598
    %v5687 = vpack.c.b16 %v5603, %v5599
    %v5688 = vpack.c.b16 %v5604, %v5600
    %v5689 = vpack.c.b16 %v5605, %v5601
    %v5690 = vpack.c.b16 %v5610, %v5606
    %v5691 = vpack.c.b16 %v5611, %v5607
    %v5692 = vpack.c.b16 %v5612, %v5608
    %v5693 = vpack.c.b16 %v5613, %v5609
    %v5694 = vpack.c.b16 %v5618, %v5614
    %v5695 = vpack.c.b16 %v5619, %v5615
    %v5696 = vpack.c.b16 %v5620, %v5616
    %v5697 = vpack.c.b16 %v5621, %v5617
    %v5698 = vpack.c.b16 %v5626, %v5622
    %v5699 = vpack.c.b16 %v5627, %v5623
    %v5700 = vpack.c.b16 %v5628, %v5624
    %v5701 = vpack.c.b16 %v5629, %v5625
    %v5702 = vpack.c.b16 %v5634, %v5630
    %v5703 = vpack.c.b16 %v5635, %v5631
    %v5704 = vpack.c.b16 %v5636, %v5632
    %v5705 = vpack.c.b16 %v5637, %v5633
    %v5706 = vpack.c.b16 %v5642, %v5638
    %v5707 = vpack.c.b16 %v5643, %v5639
    %v5708 = vpack.c.b16 %v5644, %v5640
    %v5709 = vpack.c.b16 %v5645, %v5641
    %v5710 = vpack.c.b16 %v5650, %v5646
    %v5711 = vpack.c.b16 %v5651, %v5647
    %v5712 = vpack.c.b16 %v5652, %v5648
    %v5713 = vpack.c.b16 %v5653, %v5649
    %v5714 = vpack.c.b16 %v5658, %v5654
    %v5715 = vpack.c.b16 %v5659, %v5655
    %v5716 = vpack.c.b16 %v5660, %v5656
    %v5717 = vpack.c.b16 %v5661, %v5657
    %v5718 = vpack.c.b16 %v5666, %v5662
    %v5719 = vpack.c.b16 %v5667, %v5663
    %v5720 = vpack.c.b16 %v5668, %v5664
    %v5721 = vpack.c.b16 %v5669, %v5665
    %v5722 = vpack.c.b16 %v5674, %v5670
    %v5723 = vpack.c.b16 %v5675, %v5671
    %v5724 = vpack.c.b16 %v5676, %v5672
    %v5725 = vpack.c.b16 %v5677, %v5673
    %v5775 = vsel %vm184, %v5484, 0
    %5777 = vmatpush.bf16.msra.mxu0 %v5706
    %5778 = vmatpush.bf16.msra.mxu0 %v5702
    %5779 = vmatpush.bf16.msra.mxu0 %v5698
    %5780 = vmatpush.bf16.msra.mxu0 %v5694
    %5781 = vmatpush.bf16.msra.mxu0 %v5690
    %5782 = vmatpush.bf16.msra.mxu0 %v5686
    %5783 = vmatpush.bf16.msra.mxu0 %v5682
    %5784 = vmatpush.bf16.msra.mxu0 %v5678
    %5785 = vmatmul.bf16.gmra.mxu0 %v5483
    %v5786 = vpop.f32.mrf.mxu0
    %v5787 = vadd.f32 0.0, %v5786
    %v5788 = vpop.f32.mrf.mxu0
    %5789 = vdwg.mxu0
    %5790 = vmatpush.bf16.msra.mxu0 0
    %5791 = vmatpush.bf16.msra.mxu0 0
    %5792 = vmatpush.bf16.msra.mxu0 0
    %5793 = vmatpush.bf16.msra.mxu0 0
    %5794 = vmatpush.bf16.msra.mxu0 %v5722
    %5795 = vmatpush.bf16.msra.mxu0 %v5718
    %5796 = vmatpush.bf16.msra.mxu0 %v5714
    %5797 = vmatpush.bf16.msra.mxu0 %v5710
    %5798 = vmatmul.bf16.gmra.mxu0 %v5775
    %v5799 = vpop.f32.mrf.mxu0
    %v5800 = vadd.f32 %v5787, %v5799
    %v5801 = vpop.f32.mrf.mxu0
    %5802 = vdwg.mxu0
    %5803 = vmatpush.bf16.msra.mxu0 %v5707
    %5804 = vmatpush.bf16.msra.mxu0 %v5703
    %5805 = vmatpush.bf16.msra.mxu0 %v5699
    %5806 = vmatpush.bf16.msra.mxu0 %v5695
    %5807 = vmatpush.bf16.msra.mxu0 %v5691
    %5808 = vmatpush.bf16.msra.mxu0 %v5687
    %5809 = vmatpush.bf16.msra.mxu0 %v5683
    %5810 = vmatpush.bf16.msra.mxu0 %v5679
    %5811 = vmatmul.bf16.gmra.mxu0 %v5483
    %v5812 = vpop.f32.mrf.mxu0
    %v5813 = vadd.f32 0.0, %v5812
    %v5814 = vpop.f32.mrf.mxu0
    %5815 = vdwg.mxu0
    %5816 = vmatpush.bf16.msra.mxu0 0
    %5817 = vmatpush.bf16.msra.mxu0 0
    %5818 = vmatpush.bf16.msra.mxu0 0
    %5819 = vmatpush.bf16.msra.mxu0 0
    %5820 = vmatpush.bf16.msra.mxu0 %v5723
    %5821 = vmatpush.bf16.msra.mxu0 %v5719
    %5822 = vmatpush.bf16.msra.mxu0 %v5715
    %5823 = vmatpush.bf16.msra.mxu0 %v5711
    %5824 = vmatmul.bf16.gmra.mxu0 %v5775
    %v5825 = vpop.f32.mrf.mxu0
    %v5826 = vadd.f32 %v5813, %v5825
    %v5827 = vpop.f32.mrf.mxu0
    %5828 = vdwg.mxu0
    %5829 = vmatpush.bf16.msra.mxu0 %v5708
    %5830 = vmatpush.bf16.msra.mxu0 %v5704
    %5831 = vmatpush.bf16.msra.mxu0 %v5700
    %5832 = vmatpush.bf16.msra.mxu0 %v5696
    %5833 = vmatpush.bf16.msra.mxu0 %v5692
    %5834 = vmatpush.bf16.msra.mxu0 %v5688
    %5835 = vmatpush.bf16.msra.mxu0 %v5684
    %5836 = vmatpush.bf16.msra.mxu0 %v5680
    %5837 = vmatmul.bf16.gmra.mxu0 %v5483
    %v5838 = vpop.f32.mrf.mxu0
    %v5839 = vadd.f32 0.0, %v5838
    %v5840 = vpop.f32.mrf.mxu0
    %5841 = vdwg.mxu0
    %5842 = vmatpush.bf16.msra.mxu0 0
    %5843 = vmatpush.bf16.msra.mxu0 0
    %5844 = vmatpush.bf16.msra.mxu0 0
    %5845 = vmatpush.bf16.msra.mxu0 0
    %5846 = vmatpush.bf16.msra.mxu0 %v5724
    %5847 = vmatpush.bf16.msra.mxu0 %v5720
    %5848 = vmatpush.bf16.msra.mxu0 %v5716
    %5849 = vmatpush.bf16.msra.mxu0 %v5712
    %5850 = vmatmul.bf16.gmra.mxu0 %v5775
    %v5851 = vpop.f32.mrf.mxu0
    %v5852 = vadd.f32 %v5839, %v5851
    %v5853 = vpop.f32.mrf.mxu0
    %5854 = vdwg.mxu0
    %5855 = vmatpush.bf16.msra.mxu0 %v5709
    %5856 = vmatpush.bf16.msra.mxu0 %v5705
    %5857 = vmatpush.bf16.msra.mxu0 %v5701
    %5858 = vmatpush.bf16.msra.mxu0 %v5697
    %5859 = vmatpush.bf16.msra.mxu0 %v5693
    %5860 = vmatpush.bf16.msra.mxu0 %v5689
    %5861 = vmatpush.bf16.msra.mxu0 %v5685
    %5862 = vmatpush.bf16.msra.mxu0 %v5681
    %5863 = vmatmul.bf16.gmra.mxu0 %v5483
    %v5864 = vpop.f32.mrf.mxu0
    %v5865 = vadd.f32 0.0, %v5864
    %v5866 = vpop.f32.mrf.mxu0
    %5867 = vdwg.mxu0
    %5868 = vmatpush.bf16.msra.mxu0 0
    %5869 = vmatpush.bf16.msra.mxu0 0
    %5870 = vmatpush.bf16.msra.mxu0 0
    %5871 = vmatpush.bf16.msra.mxu0 0
    %5872 = vmatpush.bf16.msra.mxu0 %v5725
    %5873 = vmatpush.bf16.msra.mxu0 %v5721
    %5874 = vmatpush.bf16.msra.mxu0 %v5717
    %5875 = vmatpush.bf16.msra.mxu0 %v5713
    %5876 = vmatmul.bf16.gmra.mxu0 %v5775
    %v5877 = vpop.f32.mrf.mxu0
    %v5878 = vadd.f32 %v5865, %v5877
    %v5879 = vpop.f32.mrf.mxu0
    %5880 = vdwg.mxu0
    %v5881 = vadd.f32 %v5477, %v5800
    %v5882 = vadd.f32 %v5478, %v5826
    %v5883 = vadd.f32 %v5479, %v5852
    %v5884 = vadd.f32 %v5480, %v5878
    %v5885 = vmul.f32 %v108, %v640
    %v5886 = vmul.f32 %v109, %v641
    %v5887 = vpack.c.bf16 %v5885, %v5885
    %v5888 = vpack.c.bf16 %v5886, %v5886
    %s5889 = scalar_lea.vmem [#allocation6], 4992
    %v5890 = vld [vmem:[%s5889] sm:$0xff]
    %v5891 = vld [vmem:[%s5889 + $0x8] sm:$0xff]
    %v5892 = vld [vmem:[%s5889 + $0x10] sm:$0xff]
    %v5893 = vld [vmem:[%s5889 + $0x18] sm:$0xff]
    %v5894 = vld [vmem:[%s5889 + $0x20] sm:$0xff]
    %v5895 = vld [vmem:[%s5889 + $0x28] sm:$0xff]
    %v5896 = vld [vmem:[%s5889 + $0x30] sm:$0xff]
    %v5897 = vld [vmem:[%s5889 + $0x38] sm:$0xff]
    %v5898 = vld [vmem:[%s5889 + $0x40] sm:$0xff]
    %v5899 = vld [vmem:[%s5889 + $0x48] sm:$0xff]
    %v5900 = vld [vmem:[%s5889 + $0x50] sm:$0xff]
    %v5901 = vld [vmem:[%s5889 + $0x58] sm:$0xff]
    %v5902 = vld [vmem:[%s5889 + $0x60] sm:$0xff]
    %v5903 = vld [vmem:[%s5889 + $0x68] sm:$0xff]
    %v5904 = vld [vmem:[%s5889 + $0x70] sm:$0xff]
    %v5905 = vld [vmem:[%s5889 + $0x78] sm:$0xff]
    %v5906 = vld [vmem:[%s5889 + $0x80] sm:$0xff]
    %v5907 = vld [vmem:[%s5889 + $0x88] sm:$0xff]
    %v5908 = vld [vmem:[%s5889 + $0x90] sm:$0xff]
    %v5909 = vld [vmem:[%s5889 + $0x98] sm:$0xff]
    %v5910 = vld [vmem:[%s5889 + $0xa0] sm:$0xff]
    %v5911 = vld [vmem:[%s5889 + $0xa8] sm:$0xff]
    %v5912 = vld [vmem:[%s5889 + $0xb0] sm:$0xff]
    %v5913 = vld [vmem:[%s5889 + $0xb8] sm:$0xff]
    %v5914 = vld [vmem:[%s5889 + $0xc0] sm:$0xff]
    %v5915 = vld [vmem:[%s5889 + $0xc8] sm:$0xff]
    %v5916 = vld [vmem:[%s5889 + $0xd0] sm:$0xff]
    %v5917 = vld [vmem:[%s5889 + $0xd8] sm:$0xff]
    %v5918 = vld [vmem:[%s5889 + $0xe0] sm:$0xff]
    %v5919 = vld [vmem:[%s5889 + $0xe8] sm:$0xff]
    %v5920 = vld [vmem:[%s5889 + $0xf0] sm:$0xff]
    %v5921 = vld [vmem:[%s5889 + $0xf8] sm:$0xff]
    %v5922 = vld [vmem:[%s5889 + $0x100] sm:$0xff]
    %v5923 = vld [vmem:[%s5889 + $0x108] sm:$0xff]
    %v5924 = vld [vmem:[%s5889 + $0x110] sm:$0xff]
    %v5925 = vld [vmem:[%s5889 + $0x118] sm:$0xff]
    %v5926 = vld [vmem:[%s5889 + $0x120] sm:$0xff]
    %v5927 = vld [vmem:[%s5889 + $0x128] sm:$0xff]
    %v5928 = vld [vmem:[%s5889 + $0x130] sm:$0xff]
    %v5929 = vld [vmem:[%s5889 + $0x138] sm:$0xff]
    %v5930 = vld [vmem:[%s5889 + $0x140] sm:$0xff]
    %v5931 = vld [vmem:[%s5889 + $0x148] sm:$0xff]
    %v5932 = vld [vmem:[%s5889 + $0x150] sm:$0xff]
    %v5933 = vld [vmem:[%s5889 + $0x158] sm:$0xff]
    %v5934 = vld [vmem:[%s5889 + $0x160] sm:$0xff]
    %v5935 = vld [vmem:[%s5889 + $0x168] sm:$0xff]
    %v5936 = vld [vmem:[%s5889 + $0x170] sm:$0xff]
    %v5937 = vld [vmem:[%s5889 + $0x178] sm:$0xff]
    %v5986 = vunpack.c.l.b16 %v5890
    %v5987 = vunpack.c.h.b16 %v5890
    %v5988 = vunpack.c.l.b16 %v5891
    %v5989 = vunpack.c.h.b16 %v5891
    %v5990 = vunpack.c.l.b16 %v5892
    %v5991 = vunpack.c.h.b16 %v5892
    %v5992 = vunpack.c.l.b16 %v5893
    %v5993 = vunpack.c.h.b16 %v5893
    %v5994 = vunpack.c.l.b16 %v5894
    %v5995 = vunpack.c.h.b16 %v5894
    %v5996 = vunpack.c.l.b16 %v5895
    %v5997 = vunpack.c.h.b16 %v5895
    %v5998 = vunpack.c.l.b16 %v5896
    %v5999 = vunpack.c.h.b16 %v5896
    %v6000 = vunpack.c.l.b16 %v5897
    %v6001 = vunpack.c.h.b16 %v5897
    %v6002 = vunpack.c.l.b16 %v5898
    %v6003 = vunpack.c.h.b16 %v5898
    %v6004 = vunpack.c.l.b16 %v5899
    %v6005 = vunpack.c.h.b16 %v5899
    %v6006 = vunpack.c.l.b16 %v5900
    %v6007 = vunpack.c.h.b16 %v5900
    %v6008 = vunpack.c.l.b16 %v5901
    %v6009 = vunpack.c.h.b16 %v5901
    %v6010 = vunpack.c.l.b16 %v5902
    %v6011 = vunpack.c.h.b16 %v5902
    %v6012 = vunpack.c.l.b16 %v5903
    %v6013 = vunpack.c.h.b16 %v5903
    %v6014 = vunpack.c.l.b16 %v5904
    %v6015 = vunpack.c.h.b16 %v5904
    %v6016 = vunpack.c.l.b16 %v5905
    %v6017 = vunpack.c.h.b16 %v5905
    %v6018 = vunpack.c.l.b16 %v5906
    %v6019 = vunpack.c.h.b16 %v5906
    %v6020 = vunpack.c.l.b16 %v5907
    %v6021 = vunpack.c.h.b16 %v5907
    %v6022 = vunpack.c.l.b16 %v5908
    %v6023 = vunpack.c.h.b16 %v5908
    %v6024 = vunpack.c.l.b16 %v5909
    %v6025 = vunpack.c.h.b16 %v5909
    %v6026 = vunpack.c.l.b16 %v5910
    %v6027 = vunpack.c.h.b16 %v5910
    %v6028 = vunpack.c.l.b16 %v5911
    %v6029 = vunpack.c.h.b16 %v5911
    %v6030 = vunpack.c.l.b16 %v5912
    %v6031 = vunpack.c.h.b16 %v5912
    %v6032 = vunpack.c.l.b16 %v5913
    %v6033 = vunpack.c.h.b16 %v5913
    %v6034 = vunpack.c.l.b16 %v5914
    %v6035 = vunpack.c.h.b16 %v5914
    %v6036 = vunpack.c.l.b16 %v5915
    %v6037 = vunpack.c.h.b16 %v5915
    %v6038 = vunpack.c.l.b16 %v5916
    %v6039 = vunpack.c.h.b16 %v5916
    %v6040 = vunpack.c.l.b16 %v5917
    %v6041 = vunpack.c.h.b16 %v5917
    %v6042 = vunpack.c.l.b16 %v5918
    %v6043 = vunpack.c.h.b16 %v5918
    %v6044 = vunpack.c.l.b16 %v5919
    %v6045 = vunpack.c.h.b16 %v5919
    %v6046 = vunpack.c.l.b16 %v5920
    %v6047 = vunpack.c.h.b16 %v5920
    %v6048 = vunpack.c.l.b16 %v5921
    %v6049 = vunpack.c.h.b16 %v5921
    %v6050 = vunpack.c.l.b16 %v5922
    %v6051 = vunpack.c.h.b16 %v5922
    %v6052 = vunpack.c.l.b16 %v5923
    %v6053 = vunpack.c.h.b16 %v5923
    %v6054 = vunpack.c.l.b16 %v5924
    %v6055 = vunpack.c.h.b16 %v5924
    %v6056 = vunpack.c.l.b16 %v5925
    %v6057 = vunpack.c.h.b16 %v5925
    %v6058 = vunpack.c.l.b16 %v5926
    %v6059 = vunpack.c.h.b16 %v5926
    %v6060 = vunpack.c.l.b16 %v5927
    %v6061 = vunpack.c.h.b16 %v5927
    %v6062 = vunpack.c.l.b16 %v5928
    %v6063 = vunpack.c.h.b16 %v5928
    %v6064 = vunpack.c.l.b16 %v5929
    %v6065 = vunpack.c.h.b16 %v5929
    %v6066 = vunpack.c.l.b16 %v5930
    %v6067 = vunpack.c.h.b16 %v5930
    %v6068 = vunpack.c.l.b16 %v5931
    %v6069 = vunpack.c.h.b16 %v5931
    %v6070 = vunpack.c.l.b16 %v5932
    %v6071 = vunpack.c.h.b16 %v5932
    %v6072 = vunpack.c.l.b16 %v5933
    %v6073 = vunpack.c.h.b16 %v5933
    %v6074 = vunpack.c.l.b16 %v5934
    %v6075 = vunpack.c.h.b16 %v5934
    %v6076 = vunpack.c.l.b16 %v5935
    %v6077 = vunpack.c.h.b16 %v5935
    %v6078 = vunpack.c.l.b16 %v5936
    %v6079 = vunpack.c.h.b16 %v5936
    %v6080 = vunpack.c.l.b16 %v5937
    %v6081 = vunpack.c.h.b16 %v5937
    %v6082 = vpack.c.b16 %v5990, %v5986
    %v6083 = vpack.c.b16 %v5991, %v5987
    %v6084 = vpack.c.b16 %v5992, %v5988
    %v6085 = vpack.c.b16 %v5993, %v5989
    %v6086 = vpack.c.b16 %v5998, %v5994
    %v6087 = vpack.c.b16 %v5999, %v5995
    %v6088 = vpack.c.b16 %v6000, %v5996
    %v6089 = vpack.c.b16 %v6001, %v5997
    %v6090 = vpack.c.b16 %v6006, %v6002
    %v6091 = vpack.c.b16 %v6007, %v6003
    %v6092 = vpack.c.b16 %v6008, %v6004
    %v6093 = vpack.c.b16 %v6009, %v6005
    %v6094 = vpack.c.b16 %v6014, %v6010
    %v6095 = vpack.c.b16 %v6015, %v6011
    %v6096 = vpack.c.b16 %v6016, %v6012
    %v6097 = vpack.c.b16 %v6017, %v6013
    %v6098 = vpack.c.b16 %v6022, %v6018
    %v6099 = vpack.c.b16 %v6023, %v6019
    %v6100 = vpack.c.b16 %v6024, %v6020
    %v6101 = vpack.c.b16 %v6025, %v6021
    %v6102 = vpack.c.b16 %v6030, %v6026
    %v6103 = vpack.c.b16 %v6031, %v6027
    %v6104 = vpack.c.b16 %v6032, %v6028
    %v6105 = vpack.c.b16 %v6033, %v6029
    %v6106 = vpack.c.b16 %v6038, %v6034
    %v6107 = vpack.c.b16 %v6039, %v6035
    %v6108 = vpack.c.b16 %v6040, %v6036
    %v6109 = vpack.c.b16 %v6041, %v6037
    %v6110 = vpack.c.b16 %v6046, %v6042
    %v6111 = vpack.c.b16 %v6047, %v6043
    %v6112 = vpack.c.b16 %v6048, %v6044
    %v6113 = vpack.c.b16 %v6049, %v6045
    %v6114 = vpack.c.b16 %v6054, %v6050
    %v6115 = vpack.c.b16 %v6055, %v6051
    %v6116 = vpack.c.b16 %v6056, %v6052
    %v6117 = vpack.c.b16 %v6057, %v6053
    %v6118 = vpack.c.b16 %v6062, %v6058
    %v6119 = vpack.c.b16 %v6063, %v6059
    %v6120 = vpack.c.b16 %v6064, %v6060
    %v6121 = vpack.c.b16 %v6065, %v6061
    %v6122 = vpack.c.b16 %v6070, %v6066
    %v6123 = vpack.c.b16 %v6071, %v6067
    %v6124 = vpack.c.b16 %v6072, %v6068
    %v6125 = vpack.c.b16 %v6073, %v6069
    %v6126 = vpack.c.b16 %v6078, %v6074
    %v6127 = vpack.c.b16 %v6079, %v6075
    %v6128 = vpack.c.b16 %v6080, %v6076
    %v6129 = vpack.c.b16 %v6081, %v6077
    %v6179 = vsel %vm184, %v5888, 0
    %6181 = vmatpush.bf16.msra.mxu0 %v6110
    %6182 = vmatpush.bf16.msra.mxu0 %v6106
    %6183 = vmatpush.bf16.msra.mxu0 %v6102
    %6184 = vmatpush.bf16.msra.mxu0 %v6098
    %6185 = vmatpush.bf16.msra.mxu0 %v6094
    %6186 = vmatpush.bf16.msra.mxu0 %v6090
    %6187 = vmatpush.bf16.msra.mxu0 %v6086
    %6188 = vmatpush.bf16.msra.mxu0 %v6082
    %6189 = vmatmul.bf16.gmra.mxu0 %v5887
    %v6190 = vpop.f32.mrf.mxu0
    %v6191 = vadd.f32 0.0, %v6190
    %v6192 = vpop.f32.mrf.mxu0
    %6193 = vdwg.mxu0
    %6194 = vmatpush.bf16.msra.mxu0 0
    %6195 = vmatpush.bf16.msra.mxu0 0
    %6196 = vmatpush.bf16.msra.mxu0 0
    %6197 = vmatpush.bf16.msra.mxu0 0
    %6198 = vmatpush.bf16.msra.mxu0 %v6126
    %6199 = vmatpush.bf16.msra.mxu0 %v6122
    %6200 = vmatpush.bf16.msra.mxu0 %v6118
    %6201 = vmatpush.bf16.msra.mxu0 %v6114
    %6202 = vmatmul.bf16.gmra.mxu0 %v6179
    %v6203 = vpop.f32.mrf.mxu0
    %v6204 = vadd.f32 %v6191, %v6203
    %v6205 = vpop.f32.mrf.mxu0
    %6206 = vdwg.mxu0
    %6207 = vmatpush.bf16.msra.mxu0 %v6111
    %6208 = vmatpush.bf16.msra.mxu0 %v6107
    %6209 = vmatpush.bf16.msra.mxu0 %v6103
    %6210 = vmatpush.bf16.msra.mxu0 %v6099
    %6211 = vmatpush.bf16.msra.mxu0 %v6095
    %6212 = vmatpush.bf16.msra.mxu0 %v6091
    %6213 = vmatpush.bf16.msra.mxu0 %v6087
    %6214 = vmatpush.bf16.msra.mxu0 %v6083
    %6215 = vmatmul.bf16.gmra.mxu0 %v5887
    %v6216 = vpop.f32.mrf.mxu0
    %v6217 = vadd.f32 0.0, %v6216
    %v6218 = vpop.f32.mrf.mxu0
    %6219 = vdwg.mxu0
    %6220 = vmatpush.bf16.msra.mxu0 0
    %6221 = vmatpush.bf16.msra.mxu0 0
    %6222 = vmatpush.bf16.msra.mxu0 0
    %6223 = vmatpush.bf16.msra.mxu0 0
    %6224 = vmatpush.bf16.msra.mxu0 %v6127
    %6225 = vmatpush.bf16.msra.mxu0 %v6123
    %6226 = vmatpush.bf16.msra.mxu0 %v6119
    %6227 = vmatpush.bf16.msra.mxu0 %v6115
    %6228 = vmatmul.bf16.gmra.mxu0 %v6179
    %v6229 = vpop.f32.mrf.mxu0
    %v6230 = vadd.f32 %v6217, %v6229
    %v6231 = vpop.f32.mrf.mxu0
    %6232 = vdwg.mxu0
    %6233 = vmatpush.bf16.msra.mxu0 %v6112
    %6234 = vmatpush.bf16.msra.mxu0 %v6108
    %6235 = vmatpush.bf16.msra.mxu0 %v6104
    %6236 = vmatpush.bf16.msra.mxu0 %v6100
    %6237 = vmatpush.bf16.msra.mxu0 %v6096
    %6238 = vmatpush.bf16.msra.mxu0 %v6092
    %6239 = vmatpush.bf16.msra.mxu0 %v6088
    %6240 = vmatpush.bf16.msra.mxu0 %v6084
    %6241 = vmatmul.bf16.gmra.mxu0 %v5887
    %v6242 = vpop.f32.mrf.mxu0
    %v6243 = vadd.f32 0.0, %v6242
    %v6244 = vpop.f32.mrf.mxu0
    %6245 = vdwg.mxu0
    %6246 = vmatpush.bf16.msra.mxu0 0
    %6247 = vmatpush.bf16.msra.mxu0 0
    %6248 = vmatpush.bf16.msra.mxu0 0
    %6249 = vmatpush.bf16.msra.mxu0 0
    %6250 = vmatpush.bf16.msra.mxu0 %v6128
    %6251 = vmatpush.bf16.msra.mxu0 %v6124
    %6252 = vmatpush.bf16.msra.mxu0 %v6120
    %6253 = vmatpush.bf16.msra.mxu0 %v6116
    %6254 = vmatmul.bf16.gmra.mxu0 %v6179
    %v6255 = vpop.f32.mrf.mxu0
    %v6256 = vadd.f32 %v6243, %v6255
    %v6257 = vpop.f32.mrf.mxu0
    %6258 = vdwg.mxu0
    %6259 = vmatpush.bf16.msra.mxu0 %v6113
    %6260 = vmatpush.bf16.msra.mxu0 %v6109
    %6261 = vmatpush.bf16.msra.mxu0 %v6105
    %6262 = vmatpush.bf16.msra.mxu0 %v6101
    %6263 = vmatpush.bf16.msra.mxu0 %v6097
    %6264 = vmatpush.bf16.msra.mxu0 %v6093
    %6265 = vmatpush.bf16.msra.mxu0 %v6089
    %6266 = vmatpush.bf16.msra.mxu0 %v6085
    %6267 = vmatmul.bf16.gmra.mxu0 %v5887
    %v6268 = vpop.f32.mrf.mxu0
    %v6269 = vadd.f32 0.0, %v6268
    %v6270 = vpop.f32.mrf.mxu0
    %6271 = vdwg.mxu0
    %6272 = vmatpush.bf16.msra.mxu0 0
    %6273 = vmatpush.bf16.msra.mxu0 0
    %6274 = vmatpush.bf16.msra.mxu0 0
    %6275 = vmatpush.bf16.msra.mxu0 0
    %6276 = vmatpush.bf16.msra.mxu0 %v6129
    %6277 = vmatpush.bf16.msra.mxu0 %v6125
    %6278 = vmatpush.bf16.msra.mxu0 %v6121
    %6279 = vmatpush.bf16.msra.mxu0 %v6117
    %6280 = vmatmul.bf16.gmra.mxu0 %v6179
    %v6281 = vpop.f32.mrf.mxu0
    %v6282 = vadd.f32 %v6269, %v6281
    %v6283 = vpop.f32.mrf.mxu0
    %6284 = vdwg.mxu0
    %v6285 = vadd.f32 %v5881, %v6204
    %v6286 = vadd.f32 %v5882, %v6230
    %v6287 = vadd.f32 %v5883, %v6256
    %v6288 = vadd.f32 %v5884, %v6282
    %v6289 = vmul.f32 %v110, %v640
    %v6290 = vmul.f32 %v111, %v641
    %v6291 = vpack.c.bf16 %v6289, %v6289
    %v6292 = vpack.c.bf16 %v6290, %v6290
    %s6293 = scalar_lea.vmem [#allocation6], 5376
    %v6294 = vld [vmem:[%s6293] sm:$0xff]
    %v6295 = vld [vmem:[%s6293 + $0x8] sm:$0xff]
    %v6296 = vld [vmem:[%s6293 + $0x10] sm:$0xff]
    %v6297 = vld [vmem:[%s6293 + $0x18] sm:$0xff]
    %v6298 = vld [vmem:[%s6293 + $0x20] sm:$0xff]
    %v6299 = vld [vmem:[%s6293 + $0x28] sm:$0xff]
    %v6300 = vld [vmem:[%s6293 + $0x30] sm:$0xff]
    %v6301 = vld [vmem:[%s6293 + $0x38] sm:$0xff]
    %v6302 = vld [vmem:[%s6293 + $0x40] sm:$0xff]
    %v6303 = vld [vmem:[%s6293 + $0x48] sm:$0xff]
    %v6304 = vld [vmem:[%s6293 + $0x50] sm:$0xff]
    %v6305 = vld [vmem:[%s6293 + $0x58] sm:$0xff]
    %v6306 = vld [vmem:[%s6293 + $0x60] sm:$0xff]
    %v6307 = vld [vmem:[%s6293 + $0x68] sm:$0xff]
    %v6308 = vld [vmem:[%s6293 + $0x70] sm:$0xff]
    %v6309 = vld [vmem:[%s6293 + $0x78] sm:$0xff]
    %v6310 = vld [vmem:[%s6293 + $0x80] sm:$0xff]
    %v6311 = vld [vmem:[%s6293 + $0x88] sm:$0xff]
    %v6312 = vld [vmem:[%s6293 + $0x90] sm:$0xff]
    %v6313 = vld [vmem:[%s6293 + $0x98] sm:$0xff]
    %v6314 = vld [vmem:[%s6293 + $0xa0] sm:$0xff]
    %v6315 = vld [vmem:[%s6293 + $0xa8] sm:$0xff]
    %v6316 = vld [vmem:[%s6293 + $0xb0] sm:$0xff]
    %v6317 = vld [vmem:[%s6293 + $0xb8] sm:$0xff]
    %v6318 = vld [vmem:[%s6293 + $0xc0] sm:$0xff]
    %v6319 = vld [vmem:[%s6293 + $0xc8] sm:$0xff]
    %v6320 = vld [vmem:[%s6293 + $0xd0] sm:$0xff]
    %v6321 = vld [vmem:[%s6293 + $0xd8] sm:$0xff]
    %v6322 = vld [vmem:[%s6293 + $0xe0] sm:$0xff]
    %v6323 = vld [vmem:[%s6293 + $0xe8] sm:$0xff]
    %v6324 = vld [vmem:[%s6293 + $0xf0] sm:$0xff]
    %v6325 = vld [vmem:[%s6293 + $0xf8] sm:$0xff]
    %v6326 = vld [vmem:[%s6293 + $0x100] sm:$0xff]
    %v6327 = vld [vmem:[%s6293 + $0x108] sm:$0xff]
    %v6328 = vld [vmem:[%s6293 + $0x110] sm:$0xff]
    %v6329 = vld [vmem:[%s6293 + $0x118] sm:$0xff]
    %v6330 = vld [vmem:[%s6293 + $0x120] sm:$0xff]
    %v6331 = vld [vmem:[%s6293 + $0x128] sm:$0xff]
    %v6332 = vld [vmem:[%s6293 + $0x130] sm:$0xff]
    %v6333 = vld [vmem:[%s6293 + $0x138] sm:$0xff]
    %v6334 = vld [vmem:[%s6293 + $0x140] sm:$0xff]
    %v6335 = vld [vmem:[%s6293 + $0x148] sm:$0xff]
    %v6336 = vld [vmem:[%s6293 + $0x150] sm:$0xff]
    %v6337 = vld [vmem:[%s6293 + $0x158] sm:$0xff]
    %v6338 = vld [vmem:[%s6293 + $0x160] sm:$0xff]
    %v6339 = vld [vmem:[%s6293 + $0x168] sm:$0xff]
    %v6340 = vld [vmem:[%s6293 + $0x170] sm:$0xff]
    %v6341 = vld [vmem:[%s6293 + $0x178] sm:$0xff]
    %v6390 = vunpack.c.l.b16 %v6294
    %v6391 = vunpack.c.h.b16 %v6294
    %v6392 = vunpack.c.l.b16 %v6295
    %v6393 = vunpack.c.h.b16 %v6295
    %v6394 = vunpack.c.l.b16 %v6296
    %v6395 = vunpack.c.h.b16 %v6296
    %v6396 = vunpack.c.l.b16 %v6297
    %v6397 = vunpack.c.h.b16 %v6297
    %v6398 = vunpack.c.l.b16 %v6298
    %v6399 = vunpack.c.h.b16 %v6298
    %v6400 = vunpack.c.l.b16 %v6299
    %v6401 = vunpack.c.h.b16 %v6299
    %v6402 = vunpack.c.l.b16 %v6300
    %v6403 = vunpack.c.h.b16 %v6300
    %v6404 = vunpack.c.l.b16 %v6301
    %v6405 = vunpack.c.h.b16 %v6301
    %v6406 = vunpack.c.l.b16 %v6302
    %v6407 = vunpack.c.h.b16 %v6302
    %v6408 = vunpack.c.l.b16 %v6303
    %v6409 = vunpack.c.h.b16 %v6303
    %v6410 = vunpack.c.l.b16 %v6304
    %v6411 = vunpack.c.h.b16 %v6304
    %v6412 = vunpack.c.l.b16 %v6305
    %v6413 = vunpack.c.h.b16 %v6305
    %v6414 = vunpack.c.l.b16 %v6306
    %v6415 = vunpack.c.h.b16 %v6306
    %v6416 = vunpack.c.l.b16 %v6307
    %v6417 = vunpack.c.h.b16 %v6307
    %v6418 = vunpack.c.l.b16 %v6308
    %v6419 = vunpack.c.h.b16 %v6308
    %v6420 = vunpack.c.l.b16 %v6309
    %v6421 = vunpack.c.h.b16 %v6309
    %v6422 = vunpack.c.l.b16 %v6310
    %v6423 = vunpack.c.h.b16 %v6310
    %v6424 = vunpack.c.l.b16 %v6311
    %v6425 = vunpack.c.h.b16 %v6311
    %v6426 = vunpack.c.l.b16 %v6312
    %v6427 = vunpack.c.h.b16 %v6312
    %v6428 = vunpack.c.l.b16 %v6313
    %v6429 = vunpack.c.h.b16 %v6313
    %v6430 = vunpack.c.l.b16 %v6314
    %v6431 = vunpack.c.h.b16 %v6314
    %v6432 = vunpack.c.l.b16 %v6315
    %v6433 = vunpack.c.h.b16 %v6315
    %v6434 = vunpack.c.l.b16 %v6316
    %v6435 = vunpack.c.h.b16 %v6316
    %v6436 = vunpack.c.l.b16 %v6317
    %v6437 = vunpack.c.h.b16 %v6317
    %v6438 = vunpack.c.l.b16 %v6318
    %v6439 = vunpack.c.h.b16 %v6318
    %v6440 = vunpack.c.l.b16 %v6319
    %v6441 = vunpack.c.h.b16 %v6319
    %v6442 = vunpack.c.l.b16 %v6320
    %v6443 = vunpack.c.h.b16 %v6320
    %v6444 = vunpack.c.l.b16 %v6321
    %v6445 = vunpack.c.h.b16 %v6321
    %v6446 = vunpack.c.l.b16 %v6322
    %v6447 = vunpack.c.h.b16 %v6322
    %v6448 = vunpack.c.l.b16 %v6323
    %v6449 = vunpack.c.h.b16 %v6323
    %v6450 = vunpack.c.l.b16 %v6324
    %v6451 = vunpack.c.h.b16 %v6324
    %v6452 = vunpack.c.l.b16 %v6325
    %v6453 = vunpack.c.h.b16 %v6325
    %v6454 = vunpack.c.l.b16 %v6326
    %v6455 = vunpack.c.h.b16 %v6326
    %v6456 = vunpack.c.l.b16 %v6327
    %v6457 = vunpack.c.h.b16 %v6327
    %v6458 = vunpack.c.l.b16 %v6328
    %v6459 = vunpack.c.h.b16 %v6328
    %v6460 = vunpack.c.l.b16 %v6329
    %v6461 = vunpack.c.h.b16 %v6329
    %v6462 = vunpack.c.l.b16 %v6330
    %v6463 = vunpack.c.h.b16 %v6330
    %v6464 = vunpack.c.l.b16 %v6331
    %v6465 = vunpack.c.h.b16 %v6331
    %v6466 = vunpack.c.l.b16 %v6332
    %v6467 = vunpack.c.h.b16 %v6332
    %v6468 = vunpack.c.l.b16 %v6333
    %v6469 = vunpack.c.h.b16 %v6333
    %v6470 = vunpack.c.l.b16 %v6334
    %v6471 = vunpack.c.h.b16 %v6334
    %v6472 = vunpack.c.l.b16 %v6335
    %v6473 = vunpack.c.h.b16 %v6335
    %v6474 = vunpack.c.l.b16 %v6336
    %v6475 = vunpack.c.h.b16 %v6336
    %v6476 = vunpack.c.l.b16 %v6337
    %v6477 = vunpack.c.h.b16 %v6337
    %v6478 = vunpack.c.l.b16 %v6338
    %v6479 = vunpack.c.h.b16 %v6338
    %v6480 = vunpack.c.l.b16 %v6339
    %v6481 = vunpack.c.h.b16 %v6339
    %v6482 = vunpack.c.l.b16 %v6340
    %v6483 = vunpack.c.h.b16 %v6340
    %v6484 = vunpack.c.l.b16 %v6341
    %v6485 = vunpack.c.h.b16 %v6341
    %v6486 = vpack.c.b16 %v6394, %v6390
    %v6487 = vpack.c.b16 %v6395, %v6391
    %v6488 = vpack.c.b16 %v6396, %v6392
    %v6489 = vpack.c.b16 %v6397, %v6393
    %v6490 = vpack.c.b16 %v6402, %v6398
    %v6491 = vpack.c.b16 %v6403, %v6399
    %v6492 = vpack.c.b16 %v6404, %v6400
    %v6493 = vpack.c.b16 %v6405, %v6401
    %v6494 = vpack.c.b16 %v6410, %v6406
    %v6495 = vpack.c.b16 %v6411, %v6407
    %v6496 = vpack.c.b16 %v6412, %v6408
    %v6497 = vpack.c.b16 %v6413, %v6409
    %v6498 = vpack.c.b16 %v6418, %v6414
    %v6499 = vpack.c.b16 %v6419, %v6415
    %v6500 = vpack.c.b16 %v6420, %v6416
    %v6501 = vpack.c.b16 %v6421, %v6417
    %v6502 = vpack.c.b16 %v6426, %v6422
    %v6503 = vpack.c.b16 %v6427, %v6423
    %v6504 = vpack.c.b16 %v6428, %v6424
    %v6505 = vpack.c.b16 %v6429, %v6425
    %v6506 = vpack.c.b16 %v6434, %v6430
    %v6507 = vpack.c.b16 %v6435, %v6431
    %v6508 = vpack.c.b16 %v6436, %v6432
    %v6509 = vpack.c.b16 %v6437, %v6433
    %v6510 = vpack.c.b16 %v6442, %v6438
    %v6511 = vpack.c.b16 %v6443, %v6439
    %v6512 = vpack.c.b16 %v6444, %v6440
    %v6513 = vpack.c.b16 %v6445, %v6441
    %v6514 = vpack.c.b16 %v6450, %v6446
    %v6515 = vpack.c.b16 %v6451, %v6447
    %v6516 = vpack.c.b16 %v6452, %v6448
    %v6517 = vpack.c.b16 %v6453, %v6449
    %v6518 = vpack.c.b16 %v6458, %v6454
    %v6519 = vpack.c.b16 %v6459, %v6455
    %v6520 = vpack.c.b16 %v6460, %v6456
    %v6521 = vpack.c.b16 %v6461, %v6457
    %v6522 = vpack.c.b16 %v6466, %v6462
    %v6523 = vpack.c.b16 %v6467, %v6463
    %v6524 = vpack.c.b16 %v6468, %v6464
    %v6525 = vpack.c.b16 %v6469, %v6465
    %v6526 = vpack.c.b16 %v6474, %v6470
    %v6527 = vpack.c.b16 %v6475, %v6471
    %v6528 = vpack.c.b16 %v6476, %v6472
    %v6529 = vpack.c.b16 %v6477, %v6473
    %v6530 = vpack.c.b16 %v6482, %v6478
    %v6531 = vpack.c.b16 %v6483, %v6479
    %v6532 = vpack.c.b16 %v6484, %v6480
    %v6533 = vpack.c.b16 %v6485, %v6481
    %v6583 = vsel %vm184, %v6292, 0
    %6585 = vmatpush.bf16.msra.mxu0 %v6514
    %6586 = vmatpush.bf16.msra.mxu0 %v6510
    %6587 = vmatpush.bf16.msra.mxu0 %v6506
    %6588 = vmatpush.bf16.msra.mxu0 %v6502
    %6589 = vmatpush.bf16.msra.mxu0 %v6498
    %6590 = vmatpush.bf16.msra.mxu0 %v6494
    %6591 = vmatpush.bf16.msra.mxu0 %v6490
    %6592 = vmatpush.bf16.msra.mxu0 %v6486
    %6593 = vmatmul.bf16.gmra.mxu0 %v6291
    %v6594 = vpop.f32.mrf.mxu0
    %v6595 = vadd.f32 0.0, %v6594
    %v6596 = vpop.f32.mrf.mxu0
    %6597 = vdwg.mxu0
    %6598 = vmatpush.bf16.msra.mxu0 0
    %6599 = vmatpush.bf16.msra.mxu0 0
    %6600 = vmatpush.bf16.msra.mxu0 0
    %6601 = vmatpush.bf16.msra.mxu0 0
    %6602 = vmatpush.bf16.msra.mxu0 %v6530
    %6603 = vmatpush.bf16.msra.mxu0 %v6526
    %6604 = vmatpush.bf16.msra.mxu0 %v6522
    %6605 = vmatpush.bf16.msra.mxu0 %v6518
    %6606 = vmatmul.bf16.gmra.mxu0 %v6583
    %v6607 = vpop.f32.mrf.mxu0
    %v6608 = vadd.f32 %v6595, %v6607
    %v6609 = vpop.f32.mrf.mxu0
    %6610 = vdwg.mxu0
    %6611 = vmatpush.bf16.msra.mxu0 %v6515
    %6612 = vmatpush.bf16.msra.mxu0 %v6511
    %6613 = vmatpush.bf16.msra.mxu0 %v6507
    %6614 = vmatpush.bf16.msra.mxu0 %v6503
    %6615 = vmatpush.bf16.msra.mxu0 %v6499
    %6616 = vmatpush.bf16.msra.mxu0 %v6495
    %6617 = vmatpush.bf16.msra.mxu0 %v6491
    %6618 = vmatpush.bf16.msra.mxu0 %v6487
    %6619 = vmatmul.bf16.gmra.mxu0 %v6291
    %v6620 = vpop.f32.mrf.mxu0
    %v6621 = vadd.f32 0.0, %v6620
    %v6622 = vpop.f32.mrf.mxu0
    %6623 = vdwg.mxu0
    %6624 = vmatpush.bf16.msra.mxu0 0
    %6625 = vmatpush.bf16.msra.mxu0 0
    %6626 = vmatpush.bf16.msra.mxu0 0
    %6627 = vmatpush.bf16.msra.mxu0 0
    %6628 = vmatpush.bf16.msra.mxu0 %v6531
    %6629 = vmatpush.bf16.msra.mxu0 %v6527
    %6630 = vmatpush.bf16.msra.mxu0 %v6523
    %6631 = vmatpush.bf16.msra.mxu0 %v6519
    %6632 = vmatmul.bf16.gmra.mxu0 %v6583
    %v6633 = vpop.f32.mrf.mxu0
    %v6634 = vadd.f32 %v6621, %v6633
    %v6635 = vpop.f32.mrf.mxu0
    %6636 = vdwg.mxu0
    %6637 = vmatpush.bf16.msra.mxu0 %v6516
    %6638 = vmatpush.bf16.msra.mxu0 %v6512
    %6639 = vmatpush.bf16.msra.mxu0 %v6508
    %6640 = vmatpush.bf16.msra.mxu0 %v6504
    %6641 = vmatpush.bf16.msra.mxu0 %v6500
    %6642 = vmatpush.bf16.msra.mxu0 %v6496
    %6643 = vmatpush.bf16.msra.mxu0 %v6492
    %6644 = vmatpush.bf16.msra.mxu0 %v6488
    %6645 = vmatmul.bf16.gmra.mxu0 %v6291
    %v6646 = vpop.f32.mrf.mxu0
    %v6647 = vadd.f32 0.0, %v6646
    %v6648 = vpop.f32.mrf.mxu0
    %6649 = vdwg.mxu0
    %6650 = vmatpush.bf16.msra.mxu0 0
    %6651 = vmatpush.bf16.msra.mxu0 0
    %6652 = vmatpush.bf16.msra.mxu0 0
    %6653 = vmatpush.bf16.msra.mxu0 0
    %6654 = vmatpush.bf16.msra.mxu0 %v6532
    %6655 = vmatpush.bf16.msra.mxu0 %v6528
    %6656 = vmatpush.bf16.msra.mxu0 %v6524
    %6657 = vmatpush.bf16.msra.mxu0 %v6520
    %6658 = vmatmul.bf16.gmra.mxu0 %v6583
    %v6659 = vpop.f32.mrf.mxu0
    %v6660 = vadd.f32 %v6647, %v6659
    %v6661 = vpop.f32.mrf.mxu0
    %6662 = vdwg.mxu0
    %6663 = vmatpush.bf16.msra.mxu0 %v6517
    %6664 = vmatpush.bf16.msra.mxu0 %v6513
    %6665 = vmatpush.bf16.msra.mxu0 %v6509
    %6666 = vmatpush.bf16.msra.mxu0 %v6505
    %6667 = vmatpush.bf16.msra.mxu0 %v6501
    %6668 = vmatpush.bf16.msra.mxu0 %v6497
    %6669 = vmatpush.bf16.msra.mxu0 %v6493
    %6670 = vmatpush.bf16.msra.mxu0 %v6489
    %6671 = vmatmul.bf16.gmra.mxu0 %v6291
    %v6672 = vpop.f32.mrf.mxu0
    %v6673 = vadd.f32 0.0, %v6672
    %v6674 = vpop.f32.mrf.mxu0
    %6675 = vdwg.mxu0
    %6676 = vmatpush.bf16.msra.mxu0 0
    %6677 = vmatpush.bf16.msra.mxu0 0
    %6678 = vmatpush.bf16.msra.mxu0 0
    %6679 = vmatpush.bf16.msra.mxu0 0
    %6680 = vmatpush.bf16.msra.mxu0 %v6533
    %6681 = vmatpush.bf16.msra.mxu0 %v6529
    %6682 = vmatpush.bf16.msra.mxu0 %v6525
    %6683 = vmatpush.bf16.msra.mxu0 %v6521
    %6684 = vmatmul.bf16.gmra.mxu0 %v6583
    %v6685 = vpop.f32.mrf.mxu0
    %v6686 = vadd.f32 %v6673, %v6685
    %v6687 = vpop.f32.mrf.mxu0
    %6688 = vdwg.mxu0
    %v6689 = vadd.f32 %v6285, %v6608
    %v6690 = vadd.f32 %v6286, %v6634
    %v6691 = vadd.f32 %v6287, %v6660
    %v6692 = vadd.f32 %v6288, %v6686
    %v6693 = vmul.f32 %v112, %v640
    %v6694 = vmul.f32 %v113, %v641
    %v6695 = vpack.c.bf16 %v6693, %v6693
    %v6696 = vpack.c.bf16 %v6694, %v6694
    %s6697 = scalar_lea.vmem [#allocation6], 5760
    %v6698 = vld [vmem:[%s6697] sm:$0xff]
    %v6699 = vld [vmem:[%s6697 + $0x8] sm:$0xff]
    %v6700 = vld [vmem:[%s6697 + $0x10] sm:$0xff]
    %v6701 = vld [vmem:[%s6697 + $0x18] sm:$0xff]
    %v6702 = vld [vmem:[%s6697 + $0x20] sm:$0xff]
    %v6703 = vld [vmem:[%s6697 + $0x28] sm:$0xff]
    %v6704 = vld [vmem:[%s6697 + $0x30] sm:$0xff]
    %v6705 = vld [vmem:[%s6697 + $0x38] sm:$0xff]
    %v6706 = vld [vmem:[%s6697 + $0x40] sm:$0xff]
    %v6707 = vld [vmem:[%s6697 + $0x48] sm:$0xff]
    %v6708 = vld [vmem:[%s6697 + $0x50] sm:$0xff]
    %v6709 = vld [vmem:[%s6697 + $0x58] sm:$0xff]
    %v6710 = vld [vmem:[%s6697 + $0x60] sm:$0xff]
    %v6711 = vld [vmem:[%s6697 + $0x68] sm:$0xff]
    %v6712 = vld [vmem:[%s6697 + $0x70] sm:$0xff]
    %v6713 = vld [vmem:[%s6697 + $0x78] sm:$0xff]
    %v6714 = vld [vmem:[%s6697 + $0x80] sm:$0xff]
    %v6715 = vld [vmem:[%s6697 + $0x88] sm:$0xff]
    %v6716 = vld [vmem:[%s6697 + $0x90] sm:$0xff]
    %v6717 = vld [vmem:[%s6697 + $0x98] sm:$0xff]
    %v6718 = vld [vmem:[%s6697 + $0xa0] sm:$0xff]
    %v6719 = vld [vmem:[%s6697 + $0xa8] sm:$0xff]
    %v6720 = vld [vmem:[%s6697 + $0xb0] sm:$0xff]
    %v6721 = vld [vmem:[%s6697 + $0xb8] sm:$0xff]
    %v6722 = vld [vmem:[%s6697 + $0xc0] sm:$0xff]
    %v6723 = vld [vmem:[%s6697 + $0xc8] sm:$0xff]
    %v6724 = vld [vmem:[%s6697 + $0xd0] sm:$0xff]
    %v6725 = vld [vmem:[%s6697 + $0xd8] sm:$0xff]
    %v6726 = vld [vmem:[%s6697 + $0xe0] sm:$0xff]
    %v6727 = vld [vmem:[%s6697 + $0xe8] sm:$0xff]
    %v6728 = vld [vmem:[%s6697 + $0xf0] sm:$0xff]
    %v6729 = vld [vmem:[%s6697 + $0xf8] sm:$0xff]
    %v6730 = vld [vmem:[%s6697 + $0x100] sm:$0xff]
    %v6731 = vld [vmem:[%s6697 + $0x108] sm:$0xff]
    %v6732 = vld [vmem:[%s6697 + $0x110] sm:$0xff]
    %v6733 = vld [vmem:[%s6697 + $0x118] sm:$0xff]
    %v6734 = vld [vmem:[%s6697 + $0x120] sm:$0xff]
    %v6735 = vld [vmem:[%s6697 + $0x128] sm:$0xff]
    %v6736 = vld [vmem:[%s6697 + $0x130] sm:$0xff]
    %v6737 = vld [vmem:[%s6697 + $0x138] sm:$0xff]
    %v6738 = vld [vmem:[%s6697 + $0x140] sm:$0xff]
    %v6739 = vld [vmem:[%s6697 + $0x148] sm:$0xff]
    %v6740 = vld [vmem:[%s6697 + $0x150] sm:$0xff]
    %v6741 = vld [vmem:[%s6697 + $0x158] sm:$0xff]
    %v6742 = vld [vmem:[%s6697 + $0x160] sm:$0xff]
    %v6743 = vld [vmem:[%s6697 + $0x168] sm:$0xff]
    %v6744 = vld [vmem:[%s6697 + $0x170] sm:$0xff]
    %v6745 = vld [vmem:[%s6697 + $0x178] sm:$0xff]
    %v6794 = vunpack.c.l.b16 %v6698
    %v6795 = vunpack.c.h.b16 %v6698
    %v6796 = vunpack.c.l.b16 %v6699
    %v6797 = vunpack.c.h.b16 %v6699
    %v6798 = vunpack.c.l.b16 %v6700
    %v6799 = vunpack.c.h.b16 %v6700
    %v6800 = vunpack.c.l.b16 %v6701
    %v6801 = vunpack.c.h.b16 %v6701
    %v6802 = vunpack.c.l.b16 %v6702
    %v6803 = vunpack.c.h.b16 %v6702
    %v6804 = vunpack.c.l.b16 %v6703
    %v6805 = vunpack.c.h.b16 %v6703
    %v6806 = vunpack.c.l.b16 %v6704
    %v6807 = vunpack.c.h.b16 %v6704
    %v6808 = vunpack.c.l.b16 %v6705
    %v6809 = vunpack.c.h.b16 %v6705
    %v6810 = vunpack.c.l.b16 %v6706
    %v6811 = vunpack.c.h.b16 %v6706
    %v6812 = vunpack.c.l.b16 %v6707
    %v6813 = vunpack.c.h.b16 %v6707
    %v6814 = vunpack.c.l.b16 %v6708
    %v6815 = vunpack.c.h.b16 %v6708
    %v6816 = vunpack.c.l.b16 %v6709
    %v6817 = vunpack.c.h.b16 %v6709
    %v6818 = vunpack.c.l.b16 %v6710
    %v6819 = vunpack.c.h.b16 %v6710
    %v6820 = vunpack.c.l.b16 %v6711
    %v6821 = vunpack.c.h.b16 %v6711
    %v6822 = vunpack.c.l.b16 %v6712
    %v6823 = vunpack.c.h.b16 %v6712
    %v6824 = vunpack.c.l.b16 %v6713
    %v6825 = vunpack.c.h.b16 %v6713
    %v6826 = vunpack.c.l.b16 %v6714
    %v6827 = vunpack.c.h.b16 %v6714
    %v6828 = vunpack.c.l.b16 %v6715
    %v6829 = vunpack.c.h.b16 %v6715
    %v6830 = vunpack.c.l.b16 %v6716
    %v6831 = vunpack.c.h.b16 %v6716
    %v6832 = vunpack.c.l.b16 %v6717
    %v6833 = vunpack.c.h.b16 %v6717
    %v6834 = vunpack.c.l.b16 %v6718
    %v6835 = vunpack.c.h.b16 %v6718
    %v6836 = vunpack.c.l.b16 %v6719
    %v6837 = vunpack.c.h.b16 %v6719
    %v6838 = vunpack.c.l.b16 %v6720
    %v6839 = vunpack.c.h.b16 %v6720
    %v6840 = vunpack.c.l.b16 %v6721
    %v6841 = vunpack.c.h.b16 %v6721
    %v6842 = vunpack.c.l.b16 %v6722
    %v6843 = vunpack.c.h.b16 %v6722
    %v6844 = vunpack.c.l.b16 %v6723
    %v6845 = vunpack.c.h.b16 %v6723
    %v6846 = vunpack.c.l.b16 %v6724
    %v6847 = vunpack.c.h.b16 %v6724
    %v6848 = vunpack.c.l.b16 %v6725
    %v6849 = vunpack.c.h.b16 %v6725
    %v6850 = vunpack.c.l.b16 %v6726
    %v6851 = vunpack.c.h.b16 %v6726
    %v6852 = vunpack.c.l.b16 %v6727
    %v6853 = vunpack.c.h.b16 %v6727
    %v6854 = vunpack.c.l.b16 %v6728
    %v6855 = vunpack.c.h.b16 %v6728
    %v6856 = vunpack.c.l.b16 %v6729
    %v6857 = vunpack.c.h.b16 %v6729
    %v6858 = vunpack.c.l.b16 %v6730
    %v6859 = vunpack.c.h.b16 %v6730
    %v6860 = vunpack.c.l.b16 %v6731
    %v6861 = vunpack.c.h.b16 %v6731
    %v6862 = vunpack.c.l.b16 %v6732
    %v6863 = vunpack.c.h.b16 %v6732
    %v6864 = vunpack.c.l.b16 %v6733
    %v6865 = vunpack.c.h.b16 %v6733
    %v6866 = vunpack.c.l.b16 %v6734
    %v6867 = vunpack.c.h.b16 %v6734
    %v6868 = vunpack.c.l.b16 %v6735
    %v6869 = vunpack.c.h.b16 %v6735
    %v6870 = vunpack.c.l.b16 %v6736
    %v6871 = vunpack.c.h.b16 %v6736
    %v6872 = vunpack.c.l.b16 %v6737
    %v6873 = vunpack.c.h.b16 %v6737
    %v6874 = vunpack.c.l.b16 %v6738
    %v6875 = vunpack.c.h.b16 %v6738
    %v6876 = vunpack.c.l.b16 %v6739
    %v6877 = vunpack.c.h.b16 %v6739
    %v6878 = vunpack.c.l.b16 %v6740
    %v6879 = vunpack.c.h.b16 %v6740
    %v6880 = vunpack.c.l.b16 %v6741
    %v6881 = vunpack.c.h.b16 %v6741
    %v6882 = vunpack.c.l.b16 %v6742
    %v6883 = vunpack.c.h.b16 %v6742
    %v6884 = vunpack.c.l.b16 %v6743
    %v6885 = vunpack.c.h.b16 %v6743
    %v6886 = vunpack.c.l.b16 %v6744
    %v6887 = vunpack.c.h.b16 %v6744
    %v6888 = vunpack.c.l.b16 %v6745
    %v6889 = vunpack.c.h.b16 %v6745
    %v6890 = vpack.c.b16 %v6798, %v6794
    %v6891 = vpack.c.b16 %v6799, %v6795
    %v6892 = vpack.c.b16 %v6800, %v6796
    %v6893 = vpack.c.b16 %v6801, %v6797
    %v6894 = vpack.c.b16 %v6806, %v6802
    %v6895 = vpack.c.b16 %v6807, %v6803
    %v6896 = vpack.c.b16 %v6808, %v6804
    %v6897 = vpack.c.b16 %v6809, %v6805
    %v6898 = vpack.c.b16 %v6814, %v6810
    %v6899 = vpack.c.b16 %v6815, %v6811
    %v6900 = vpack.c.b16 %v6816, %v6812
    %v6901 = vpack.c.b16 %v6817, %v6813
    %v6902 = vpack.c.b16 %v6822, %v6818
    %v6903 = vpack.c.b16 %v6823, %v6819
    %v6904 = vpack.c.b16 %v6824, %v6820
    %v6905 = vpack.c.b16 %v6825, %v6821
    %v6906 = vpack.c.b16 %v6830, %v6826
    %v6907 = vpack.c.b16 %v6831, %v6827
    %v6908 = vpack.c.b16 %v6832, %v6828
    %v6909 = vpack.c.b16 %v6833, %v6829
    %v6910 = vpack.c.b16 %v6838, %v6834
    %v6911 = vpack.c.b16 %v6839, %v6835
    %v6912 = vpack.c.b16 %v6840, %v6836
    %v6913 = vpack.c.b16 %v6841, %v6837
    %v6914 = vpack.c.b16 %v6846, %v6842
    %v6915 = vpack.c.b16 %v6847, %v6843
    %v6916 = vpack.c.b16 %v6848, %v6844
    %v6917 = vpack.c.b16 %v6849, %v6845
    %v6918 = vpack.c.b16 %v6854, %v6850
    %v6919 = vpack.c.b16 %v6855, %v6851
    %v6920 = vpack.c.b16 %v6856, %v6852
    %v6921 = vpack.c.b16 %v6857, %v6853
    %v6922 = vpack.c.b16 %v6862, %v6858
    %v6923 = vpack.c.b16 %v6863, %v6859
    %v6924 = vpack.c.b16 %v6864, %v6860
    %v6925 = vpack.c.b16 %v6865, %v6861
    %v6926 = vpack.c.b16 %v6870, %v6866
    %v6927 = vpack.c.b16 %v6871, %v6867
    %v6928 = vpack.c.b16 %v6872, %v6868
    %v6929 = vpack.c.b16 %v6873, %v6869
    %v6930 = vpack.c.b16 %v6878, %v6874
    %v6931 = vpack.c.b16 %v6879, %v6875
    %v6932 = vpack.c.b16 %v6880, %v6876
    %v6933 = vpack.c.b16 %v6881, %v6877
    %v6934 = vpack.c.b16 %v6886, %v6882
    %v6935 = vpack.c.b16 %v6887, %v6883
    %v6936 = vpack.c.b16 %v6888, %v6884
    %v6937 = vpack.c.b16 %v6889, %v6885
    %v6987 = vsel %vm184, %v6696, 0
    %6989 = vmatpush.bf16.msra.mxu0 %v6918
    %6990 = vmatpush.bf16.msra.mxu0 %v6914
    %6991 = vmatpush.bf16.msra.mxu0 %v6910
    %6992 = vmatpush.bf16.msra.mxu0 %v6906
    %6993 = vmatpush.bf16.msra.mxu0 %v6902
    %6994 = vmatpush.bf16.msra.mxu0 %v6898
    %6995 = vmatpush.bf16.msra.mxu0 %v6894
    %6996 = vmatpush.bf16.msra.mxu0 %v6890
    %6997 = vmatmul.bf16.gmra.mxu0 %v6695
    %v6998 = vpop.f32.mrf.mxu0
    %v6999 = vadd.f32 0.0, %v6998
    %v7000 = vpop.f32.mrf.mxu0
    %7001 = vdwg.mxu0
    %7002 = vmatpush.bf16.msra.mxu0 0
    %7003 = vmatpush.bf16.msra.mxu0 0
    %7004 = vmatpush.bf16.msra.mxu0 0
    %7005 = vmatpush.bf16.msra.mxu0 0
    %7006 = vmatpush.bf16.msra.mxu0 %v6934
    %7007 = vmatpush.bf16.msra.mxu0 %v6930
    %7008 = vmatpush.bf16.msra.mxu0 %v6926
    %7009 = vmatpush.bf16.msra.mxu0 %v6922
    %7010 = vmatmul.bf16.gmra.mxu0 %v6987
    %v7011 = vpop.f32.mrf.mxu0
    %v7012 = vadd.f32 %v6999, %v7011
    %v7013 = vpop.f32.mrf.mxu0
    %7014 = vdwg.mxu0
    %7015 = vmatpush.bf16.msra.mxu0 %v6919
    %7016 = vmatpush.bf16.msra.mxu0 %v6915
    %7017 = vmatpush.bf16.msra.mxu0 %v6911
    %7018 = vmatpush.bf16.msra.mxu0 %v6907
    %7019 = vmatpush.bf16.msra.mxu0 %v6903
    %7020 = vmatpush.bf16.msra.mxu0 %v6899
    %7021 = vmatpush.bf16.msra.mxu0 %v6895
    %7022 = vmatpush.bf16.msra.mxu0 %v6891
    %7023 = vmatmul.bf16.gmra.mxu0 %v6695
    %v7024 = vpop.f32.mrf.mxu0
    %v7025 = vadd.f32 0.0, %v7024
    %v7026 = vpop.f32.mrf.mxu0
    %7027 = vdwg.mxu0
    %7028 = vmatpush.bf16.msra.mxu0 0
    %7029 = vmatpush.bf16.msra.mxu0 0
    %7030 = vmatpush.bf16.msra.mxu0 0
    %7031 = vmatpush.bf16.msra.mxu0 0
    %7032 = vmatpush.bf16.msra.mxu0 %v6935
    %7033 = vmatpush.bf16.msra.mxu0 %v6931
    %7034 = vmatpush.bf16.msra.mxu0 %v6927
    %7035 = vmatpush.bf16.msra.mxu0 %v6923
    %7036 = vmatmul.bf16.gmra.mxu0 %v6987
    %v7037 = vpop.f32.mrf.mxu0
    %v7038 = vadd.f32 %v7025, %v7037
    %v7039 = vpop.f32.mrf.mxu0
    %7040 = vdwg.mxu0
    %7041 = vmatpush.bf16.msra.mxu0 %v6920
    %7042 = vmatpush.bf16.msra.mxu0 %v6916
    %7043 = vmatpush.bf16.msra.mxu0 %v6912
    %7044 = vmatpush.bf16.msra.mxu0 %v6908
    %7045 = vmatpush.bf16.msra.mxu0 %v6904
    %7046 = vmatpush.bf16.msra.mxu0 %v6900
    %7047 = vmatpush.bf16.msra.mxu0 %v6896
    %7048 = vmatpush.bf16.msra.mxu0 %v6892
    %7049 = vmatmul.bf16.gmra.mxu0 %v6695
    %v7050 = vpop.f32.mrf.mxu0
    %v7051 = vadd.f32 0.0, %v7050
    %v7052 = vpop.f32.mrf.mxu0
    %7053 = vdwg.mxu0
    %7054 = vmatpush.bf16.msra.mxu0 0
    %7055 = vmatpush.bf16.msra.mxu0 0
    %7056 = vmatpush.bf16.msra.mxu0 0
    %7057 = vmatpush.bf16.msra.mxu0 0
    %7058 = vmatpush.bf16.msra.mxu0 %v6936
    %7059 = vmatpush.bf16.msra.mxu0 %v6932
    %7060 = vmatpush.bf16.msra.mxu0 %v6928
    %7061 = vmatpush.bf16.msra.mxu0 %v6924
    %7062 = vmatmul.bf16.gmra.mxu0 %v6987
    %v7063 = vpop.f32.mrf.mxu0
    %v7064 = vadd.f32 %v7051, %v7063
    %v7065 = vpop.f32.mrf.mxu0
    %7066 = vdwg.mxu0
    %7067 = vmatpush.bf16.msra.mxu0 %v6921
    %7068 = vmatpush.bf16.msra.mxu0 %v6917
    %7069 = vmatpush.bf16.msra.mxu0 %v6913
    %7070 = vmatpush.bf16.msra.mxu0 %v6909
    %7071 = vmatpush.bf16.msra.mxu0 %v6905
    %7072 = vmatpush.bf16.msra.mxu0 %v6901
    %7073 = vmatpush.bf16.msra.mxu0 %v6897
    %7074 = vmatpush.bf16.msra.mxu0 %v6893
    %7075 = vmatmul.bf16.gmra.mxu0 %v6695
    %v7076 = vpop.f32.mrf.mxu0
    %v7077 = vadd.f32 0.0, %v7076
    %v7078 = vpop.f32.mrf.mxu0
    %7079 = vdwg.mxu0
    %7080 = vmatpush.bf16.msra.mxu0 0
    %7081 = vmatpush.bf16.msra.mxu0 0
    %7082 = vmatpush.bf16.msra.mxu0 0
    %7083 = vmatpush.bf16.msra.mxu0 0
    %7084 = vmatpush.bf16.msra.mxu0 %v6937
    %7085 = vmatpush.bf16.msra.mxu0 %v6933
    %7086 = vmatpush.bf16.msra.mxu0 %v6929
    %7087 = vmatpush.bf16.msra.mxu0 %v6925
    %7088 = vmatmul.bf16.gmra.mxu0 %v6987
    %v7089 = vpop.f32.mrf.mxu0
    %v7090 = vadd.f32 %v7077, %v7089
    %v7091 = vpop.f32.mrf.mxu0
    %7092 = vdwg.mxu0
    %v7093 = vadd.f32 %v6689, %v7012
    %v7094 = vadd.f32 %v6690, %v7038
    %v7095 = vadd.f32 %v6691, %v7064
    %v7096 = vadd.f32 %v6692, %v7090
    %v7097 = vmul.f32 %v114, %v640
    %v7098 = vmul.f32 %v115, %v641
    %v7099 = vpack.c.bf16 %v7097, %v7097
    %v7100 = vpack.c.bf16 %v7098, %v7098
    %s7101 = scalar_lea.vmem [#allocation6], 6144
    %v7102 = vld [vmem:[%s7101] sm:$0xff]
    %v7103 = vld [vmem:[%s7101 + $0x8] sm:$0xff]
    %v7104 = vld [vmem:[%s7101 + $0x10] sm:$0xff]
    %v7105 = vld [vmem:[%s7101 + $0x18] sm:$0xff]
    %v7106 = vld [vmem:[%s7101 + $0x20] sm:$0xff]
    %v7107 = vld [vmem:[%s7101 + $0x28] sm:$0xff]
    %v7108 = vld [vmem:[%s7101 + $0x30] sm:$0xff]
    %v7109 = vld [vmem:[%s7101 + $0x38] sm:$0xff]
    %v7110 = vld [vmem:[%s7101 + $0x40] sm:$0xff]
    %v7111 = vld [vmem:[%s7101 + $0x48] sm:$0xff]
    %v7112 = vld [vmem:[%s7101 + $0x50] sm:$0xff]
    %v7113 = vld [vmem:[%s7101 + $0x58] sm:$0xff]
    %v7114 = vld [vmem:[%s7101 + $0x60] sm:$0xff]
    %v7115 = vld [vmem:[%s7101 + $0x68] sm:$0xff]
    %v7116 = vld [vmem:[%s7101 + $0x70] sm:$0xff]
    %v7117 = vld [vmem:[%s7101 + $0x78] sm:$0xff]
    %v7118 = vld [vmem:[%s7101 + $0x80] sm:$0xff]
    %v7119 = vld [vmem:[%s7101 + $0x88] sm:$0xff]
    %v7120 = vld [vmem:[%s7101 + $0x90] sm:$0xff]
    %v7121 = vld [vmem:[%s7101 + $0x98] sm:$0xff]
    %v7122 = vld [vmem:[%s7101 + $0xa0] sm:$0xff]
    %v7123 = vld [vmem:[%s7101 + $0xa8] sm:$0xff]
    %v7124 = vld [vmem:[%s7101 + $0xb0] sm:$0xff]
    %v7125 = vld [vmem:[%s7101 + $0xb8] sm:$0xff]
    %v7126 = vld [vmem:[%s7101 + $0xc0] sm:$0xff]
    %v7127 = vld [vmem:[%s7101 + $0xc8] sm:$0xff]
    %v7128 = vld [vmem:[%s7101 + $0xd0] sm:$0xff]
    %v7129 = vld [vmem:[%s7101 + $0xd8] sm:$0xff]
    %v7130 = vld [vmem:[%s7101 + $0xe0] sm:$0xff]
    %v7131 = vld [vmem:[%s7101 + $0xe8] sm:$0xff]
    %v7132 = vld [vmem:[%s7101 + $0xf0] sm:$0xff]
    %v7133 = vld [vmem:[%s7101 + $0xf8] sm:$0xff]
    %v7134 = vld [vmem:[%s7101 + $0x100] sm:$0xff]
    %v7135 = vld [vmem:[%s7101 + $0x108] sm:$0xff]
    %v7136 = vld [vmem:[%s7101 + $0x110] sm:$0xff]
    %v7137 = vld [vmem:[%s7101 + $0x118] sm:$0xff]
    %v7138 = vld [vmem:[%s7101 + $0x120] sm:$0xff]
    %v7139 = vld [vmem:[%s7101 + $0x128] sm:$0xff]
    %v7140 = vld [vmem:[%s7101 + $0x130] sm:$0xff]
    %v7141 = vld [vmem:[%s7101 + $0x138] sm:$0xff]
    %v7142 = vld [vmem:[%s7101 + $0x140] sm:$0xff]
    %v7143 = vld [vmem:[%s7101 + $0x148] sm:$0xff]
    %v7144 = vld [vmem:[%s7101 + $0x150] sm:$0xff]
    %v7145 = vld [vmem:[%s7101 + $0x158] sm:$0xff]
    %v7146 = vld [vmem:[%s7101 + $0x160] sm:$0xff]
    %v7147 = vld [vmem:[%s7101 + $0x168] sm:$0xff]
    %v7148 = vld [vmem:[%s7101 + $0x170] sm:$0xff]
    %v7149 = vld [vmem:[%s7101 + $0x178] sm:$0xff]
    %v7198 = vunpack.c.l.b16 %v7102
    %v7199 = vunpack.c.h.b16 %v7102
    %v7200 = vunpack.c.l.b16 %v7103
    %v7201 = vunpack.c.h.b16 %v7103
    %v7202 = vunpack.c.l.b16 %v7104
    %v7203 = vunpack.c.h.b16 %v7104
    %v7204 = vunpack.c.l.b16 %v7105
    %v7205 = vunpack.c.h.b16 %v7105
    %v7206 = vunpack.c.l.b16 %v7106
    %v7207 = vunpack.c.h.b16 %v7106
    %v7208 = vunpack.c.l.b16 %v7107
    %v7209 = vunpack.c.h.b16 %v7107
    %v7210 = vunpack.c.l.b16 %v7108
    %v7211 = vunpack.c.h.b16 %v7108
    %v7212 = vunpack.c.l.b16 %v7109
    %v7213 = vunpack.c.h.b16 %v7109
    %v7214 = vunpack.c.l.b16 %v7110
    %v7215 = vunpack.c.h.b16 %v7110
    %v7216 = vunpack.c.l.b16 %v7111
    %v7217 = vunpack.c.h.b16 %v7111
    %v7218 = vunpack.c.l.b16 %v7112
    %v7219 = vunpack.c.h.b16 %v7112
    %v7220 = vunpack.c.l.b16 %v7113
    %v7221 = vunpack.c.h.b16 %v7113
    %v7222 = vunpack.c.l.b16 %v7114
    %v7223 = vunpack.c.h.b16 %v7114
    %v7224 = vunpack.c.l.b16 %v7115
    %v7225 = vunpack.c.h.b16 %v7115
    %v7226 = vunpack.c.l.b16 %v7116
    %v7227 = vunpack.c.h.b16 %v7116
    %v7228 = vunpack.c.l.b16 %v7117
    %v7229 = vunpack.c.h.b16 %v7117
    %v7230 = vunpack.c.l.b16 %v7118
    %v7231 = vunpack.c.h.b16 %v7118
    %v7232 = vunpack.c.l.b16 %v7119
    %v7233 = vunpack.c.h.b16 %v7119
    %v7234 = vunpack.c.l.b16 %v7120
    %v7235 = vunpack.c.h.b16 %v7120
    %v7236 = vunpack.c.l.b16 %v7121
    %v7237 = vunpack.c.h.b16 %v7121
    %v7238 = vunpack.c.l.b16 %v7122
    %v7239 = vunpack.c.h.b16 %v7122
    %v7240 = vunpack.c.l.b16 %v7123
    %v7241 = vunpack.c.h.b16 %v7123
    %v7242 = vunpack.c.l.b16 %v7124
    %v7243 = vunpack.c.h.b16 %v7124
    %v7244 = vunpack.c.l.b16 %v7125
    %v7245 = vunpack.c.h.b16 %v7125
    %v7246 = vunpack.c.l.b16 %v7126
    %v7247 = vunpack.c.h.b16 %v7126
    %v7248 = vunpack.c.l.b16 %v7127
    %v7249 = vunpack.c.h.b16 %v7127
    %v7250 = vunpack.c.l.b16 %v7128
    %v7251 = vunpack.c.h.b16 %v7128
    %v7252 = vunpack.c.l.b16 %v7129
    %v7253 = vunpack.c.h.b16 %v7129
    %v7254 = vunpack.c.l.b16 %v7130
    %v7255 = vunpack.c.h.b16 %v7130
    %v7256 = vunpack.c.l.b16 %v7131
    %v7257 = vunpack.c.h.b16 %v7131
    %v7258 = vunpack.c.l.b16 %v7132
    %v7259 = vunpack.c.h.b16 %v7132
    %v7260 = vunpack.c.l.b16 %v7133
    %v7261 = vunpack.c.h.b16 %v7133
    %v7262 = vunpack.c.l.b16 %v7134
    %v7263 = vunpack.c.h.b16 %v7134
    %v7264 = vunpack.c.l.b16 %v7135
    %v7265 = vunpack.c.h.b16 %v7135
    %v7266 = vunpack.c.l.b16 %v7136
    %v7267 = vunpack.c.h.b16 %v7136
    %v7268 = vunpack.c.l.b16 %v7137
    %v7269 = vunpack.c.h.b16 %v7137
    %v7270 = vunpack.c.l.b16 %v7138
    %v7271 = vunpack.c.h.b16 %v7138
    %v7272 = vunpack.c.l.b16 %v7139
    %v7273 = vunpack.c.h.b16 %v7139
    %v7274 = vunpack.c.l.b16 %v7140
    %v7275 = vunpack.c.h.b16 %v7140
    %v7276 = vunpack.c.l.b16 %v7141
    %v7277 = vunpack.c.h.b16 %v7141
    %v7278 = vunpack.c.l.b16 %v7142
    %v7279 = vunpack.c.h.b16 %v7142
    %v7280 = vunpack.c.l.b16 %v7143
    %v7281 = vunpack.c.h.b16 %v7143
    %v7282 = vunpack.c.l.b16 %v7144
    %v7283 = vunpack.c.h.b16 %v7144
    %v7284 = vunpack.c.l.b16 %v7145
    %v7285 = vunpack.c.h.b16 %v7145
    %v7286 = vunpack.c.l.b16 %v7146
    %v7287 = vunpack.c.h.b16 %v7146
    %v7288 = vunpack.c.l.b16 %v7147
    %v7289 = vunpack.c.h.b16 %v7147
    %v7290 = vunpack.c.l.b16 %v7148
    %v7291 = vunpack.c.h.b16 %v7148
    %v7292 = vunpack.c.l.b16 %v7149
    %v7293 = vunpack.c.h.b16 %v7149
    %v7294 = vpack.c.b16 %v7202, %v7198
    %v7295 = vpack.c.b16 %v7203, %v7199
    %v7296 = vpack.c.b16 %v7204, %v7200
    %v7297 = vpack.c.b16 %v7205, %v7201
    %v7298 = vpack.c.b16 %v7210, %v7206
    %v7299 = vpack.c.b16 %v7211, %v7207
    %v7300 = vpack.c.b16 %v7212, %v7208
    %v7301 = vpack.c.b16 %v7213, %v7209
    %v7302 = vpack.c.b16 %v7218, %v7214
    %v7303 = vpack.c.b16 %v7219, %v7215
    %v7304 = vpack.c.b16 %v7220, %v7216
    %v7305 = vpack.c.b16 %v7221, %v7217
    %v7306 = vpack.c.b16 %v7226, %v7222
    %v7307 = vpack.c.b16 %v7227, %v7223
    %v7308 = vpack.c.b16 %v7228, %v7224
    %v7309 = vpack.c.b16 %v7229, %v7225
    %v7310 = vpack.c.b16 %v7234, %v7230
    %v7311 = vpack.c.b16 %v7235, %v7231
    %v7312 = vpack.c.b16 %v7236, %v7232
    %v7313 = vpack.c.b16 %v7237, %v7233
    %v7314 = vpack.c.b16 %v7242, %v7238
    %v7315 = vpack.c.b16 %v7243, %v7239
    %v7316 = vpack.c.b16 %v7244, %v7240
    %v7317 = vpack.c.b16 %v7245, %v7241
    %v7318 = vpack.c.b16 %v7250, %v7246
    %v7319 = vpack.c.b16 %v7251, %v7247
    %v7320 = vpack.c.b16 %v7252, %v7248
    %v7321 = vpack.c.b16 %v7253, %v7249
    %v7322 = vpack.c.b16 %v7258, %v7254
    %v7323 = vpack.c.b16 %v7259, %v7255
    %v7324 = vpack.c.b16 %v7260, %v7256
    %v7325 = vpack.c.b16 %v7261, %v7257
    %v7326 = vpack.c.b16 %v7266, %v7262
    %v7327 = vpack.c.b16 %v7267, %v7263
    %v7328 = vpack.c.b16 %v7268, %v7264
    %v7329 = vpack.c.b16 %v7269, %v7265
    %v7330 = vpack.c.b16 %v7274, %v7270
    %v7331 = vpack.c.b16 %v7275, %v7271
    %v7332 = vpack.c.b16 %v7276, %v7272
    %v7333 = vpack.c.b16 %v7277, %v7273
    %v7334 = vpack.c.b16 %v7282, %v7278
    %v7335 = vpack.c.b16 %v7283, %v7279
    %v7336 = vpack.c.b16 %v7284, %v7280
    %v7337 = vpack.c.b16 %v7285, %v7281
    %v7338 = vpack.c.b16 %v7290, %v7286
    %v7339 = vpack.c.b16 %v7291, %v7287
    %v7340 = vpack.c.b16 %v7292, %v7288
    %v7341 = vpack.c.b16 %v7293, %v7289
    %v7391 = vsel %vm184, %v7100, 0
    %7393 = vmatpush.bf16.msra.mxu0 %v7322
    %7394 = vmatpush.bf16.msra.mxu0 %v7318
    %7395 = vmatpush.bf16.msra.mxu0 %v7314
    %7396 = vmatpush.bf16.msra.mxu0 %v7310
    %7397 = vmatpush.bf16.msra.mxu0 %v7306
    %7398 = vmatpush.bf16.msra.mxu0 %v7302
    %7399 = vmatpush.bf16.msra.mxu0 %v7298
    %7400 = vmatpush.bf16.msra.mxu0 %v7294
    %7401 = vmatmul.bf16.gmra.mxu0 %v7099
    %v7402 = vpop.f32.mrf.mxu0
    %v7403 = vadd.f32 0.0, %v7402
    %v7404 = vpop.f32.mrf.mxu0
    %7405 = vdwg.mxu0
    %7406 = vmatpush.bf16.msra.mxu0 0
    %7407 = vmatpush.bf16.msra.mxu0 0
    %7408 = vmatpush.bf16.msra.mxu0 0
    %7409 = vmatpush.bf16.msra.mxu0 0
    %7410 = vmatpush.bf16.msra.mxu0 %v7338
    %7411 = vmatpush.bf16.msra.mxu0 %v7334
    %7412 = vmatpush.bf16.msra.mxu0 %v7330
    %7413 = vmatpush.bf16.msra.mxu0 %v7326
    %7414 = vmatmul.bf16.gmra.mxu0 %v7391
    %v7415 = vpop.f32.mrf.mxu0
    %v7416 = vadd.f32 %v7403, %v7415
    %v7417 = vpop.f32.mrf.mxu0
    %7418 = vdwg.mxu0
    %7419 = vmatpush.bf16.msra.mxu0 %v7323
    %7420 = vmatpush.bf16.msra.mxu0 %v7319
    %7421 = vmatpush.bf16.msra.mxu0 %v7315
    %7422 = vmatpush.bf16.msra.mxu0 %v7311
    %7423 = vmatpush.bf16.msra.mxu0 %v7307
    %7424 = vmatpush.bf16.msra.mxu0 %v7303
    %7425 = vmatpush.bf16.msra.mxu0 %v7299
    %7426 = vmatpush.bf16.msra.mxu0 %v7295
    %7427 = vmatmul.bf16.gmra.mxu0 %v7099
    %v7428 = vpop.f32.mrf.mxu0
    %v7429 = vadd.f32 0.0, %v7428
    %v7430 = vpop.f32.mrf.mxu0
    %7431 = vdwg.mxu0
    %7432 = vmatpush.bf16.msra.mxu0 0
    %7433 = vmatpush.bf16.msra.mxu0 0
    %7434 = vmatpush.bf16.msra.mxu0 0
    %7435 = vmatpush.bf16.msra.mxu0 0
    %7436 = vmatpush.bf16.msra.mxu0 %v7339
    %7437 = vmatpush.bf16.msra.mxu0 %v7335
    %7438 = vmatpush.bf16.msra.mxu0 %v7331
    %7439 = vmatpush.bf16.msra.mxu0 %v7327
    %7440 = vmatmul.bf16.gmra.mxu0 %v7391
    %v7441 = vpop.f32.mrf.mxu0
    %v7442 = vadd.f32 %v7429, %v7441
    %v7443 = vpop.f32.mrf.mxu0
    %7444 = vdwg.mxu0
    %7445 = vmatpush.bf16.msra.mxu0 %v7324
    %7446 = vmatpush.bf16.msra.mxu0 %v7320
    %7447 = vmatpush.bf16.msra.mxu0 %v7316
    %7448 = vmatpush.bf16.msra.mxu0 %v7312
    %7449 = vmatpush.bf16.msra.mxu0 %v7308
    %7450 = vmatpush.bf16.msra.mxu0 %v7304
    %7451 = vmatpush.bf16.msra.mxu0 %v7300
    %7452 = vmatpush.bf16.msra.mxu0 %v7296
    %7453 = vmatmul.bf16.gmra.mxu0 %v7099
    %v7454 = vpop.f32.mrf.mxu0
    %v7455 = vadd.f32 0.0, %v7454
    %v7456 = vpop.f32.mrf.mxu0
    %7457 = vdwg.mxu0
    %7458 = vmatpush.bf16.msra.mxu0 0
    %7459 = vmatpush.bf16.msra.mxu0 0
    %7460 = vmatpush.bf16.msra.mxu0 0
    %7461 = vmatpush.bf16.msra.mxu0 0
    %7462 = vmatpush.bf16.msra.mxu0 %v7340
    %7463 = vmatpush.bf16.msra.mxu0 %v7336
    %7464 = vmatpush.bf16.msra.mxu0 %v7332
    %7465 = vmatpush.bf16.msra.mxu0 %v7328
    %7466 = vmatmul.bf16.gmra.mxu0 %v7391
    %v7467 = vpop.f32.mrf.mxu0
    %v7468 = vadd.f32 %v7455, %v7467
    %v7469 = vpop.f32.mrf.mxu0
    %7470 = vdwg.mxu0
    %7471 = vmatpush.bf16.msra.mxu0 %v7325
    %7472 = vmatpush.bf16.msra.mxu0 %v7321
    %7473 = vmatpush.bf16.msra.mxu0 %v7317
    %7474 = vmatpush.bf16.msra.mxu0 %v7313
    %7475 = vmatpush.bf16.msra.mxu0 %v7309
    %7476 = vmatpush.bf16.msra.mxu0 %v7305
    %7477 = vmatpush.bf16.msra.mxu0 %v7301
    %7478 = vmatpush.bf16.msra.mxu0 %v7297
    %7479 = vmatmul.bf16.gmra.mxu0 %v7099
    %v7480 = vpop.f32.mrf.mxu0
    %v7481 = vadd.f32 0.0, %v7480
    %v7482 = vpop.f32.mrf.mxu0
    %7483 = vdwg.mxu0
    %7484 = vmatpush.bf16.msra.mxu0 0
    %7485 = vmatpush.bf16.msra.mxu0 0
    %7486 = vmatpush.bf16.msra.mxu0 0
    %7487 = vmatpush.bf16.msra.mxu0 0
    %7488 = vmatpush.bf16.msra.mxu0 %v7341
    %7489 = vmatpush.bf16.msra.mxu0 %v7337
    %7490 = vmatpush.bf16.msra.mxu0 %v7333
    %7491 = vmatpush.bf16.msra.mxu0 %v7329
    %7492 = vmatmul.bf16.gmra.mxu0 %v7391
    %v7493 = vpop.f32.mrf.mxu0
    %v7494 = vadd.f32 %v7481, %v7493
    %v7495 = vpop.f32.mrf.mxu0
    %7496 = vdwg.mxu0
    %v7497 = vadd.f32 %v7093, %v7416
    %v7498 = vadd.f32 %v7094, %v7442
    %v7499 = vadd.f32 %v7095, %v7468
    %v7500 = vadd.f32 %v7096, %v7494
    %v7501 = vmul.f32 %v116, %v640
    %v7502 = vmul.f32 %v117, %v641
    %v7503 = vpack.c.bf16 %v7501, %v7501
    %v7504 = vpack.c.bf16 %v7502, %v7502
    %s7505 = scalar_lea.vmem [#allocation6], 6528
    %v7506 = vld [vmem:[%s7505] sm:$0xff]
    %v7507 = vld [vmem:[%s7505 + $0x8] sm:$0xff]
    %v7508 = vld [vmem:[%s7505 + $0x10] sm:$0xff]
    %v7509 = vld [vmem:[%s7505 + $0x18] sm:$0xff]
    %v7510 = vld [vmem:[%s7505 + $0x20] sm:$0xff]
    %v7511 = vld [vmem:[%s7505 + $0x28] sm:$0xff]
    %v7512 = vld [vmem:[%s7505 + $0x30] sm:$0xff]
    %v7513 = vld [vmem:[%s7505 + $0x38] sm:$0xff]
    %v7514 = vld [vmem:[%s7505 + $0x40] sm:$0xff]
    %v7515 = vld [vmem:[%s7505 + $0x48] sm:$0xff]
    %v7516 = vld [vmem:[%s7505 + $0x50] sm:$0xff]
    %v7517 = vld [vmem:[%s7505 + $0x58] sm:$0xff]
    %v7518 = vld [vmem:[%s7505 + $0x60] sm:$0xff]
    %v7519 = vld [vmem:[%s7505 + $0x68] sm:$0xff]
    %v7520 = vld [vmem:[%s7505 + $0x70] sm:$0xff]
    %v7521 = vld [vmem:[%s7505 + $0x78] sm:$0xff]
    %v7522 = vld [vmem:[%s7505 + $0x80] sm:$0xff]
    %v7523 = vld [vmem:[%s7505 + $0x88] sm:$0xff]
    %v7524 = vld [vmem:[%s7505 + $0x90] sm:$0xff]
    %v7525 = vld [vmem:[%s7505 + $0x98] sm:$0xff]
    %v7526 = vld [vmem:[%s7505 + $0xa0] sm:$0xff]
    %v7527 = vld [vmem:[%s7505 + $0xa8] sm:$0xff]
    %v7528 = vld [vmem:[%s7505 + $0xb0] sm:$0xff]
    %v7529 = vld [vmem:[%s7505 + $0xb8] sm:$0xff]
    %v7530 = vld [vmem:[%s7505 + $0xc0] sm:$0xff]
    %v7531 = vld [vmem:[%s7505 + $0xc8] sm:$0xff]
    %v7532 = vld [vmem:[%s7505 + $0xd0] sm:$0xff]
    %v7533 = vld [vmem:[%s7505 + $0xd8] sm:$0xff]
    %v7534 = vld [vmem:[%s7505 + $0xe0] sm:$0xff]
    %v7535 = vld [vmem:[%s7505 + $0xe8] sm:$0xff]
    %v7536 = vld [vmem:[%s7505 + $0xf0] sm:$0xff]
    %v7537 = vld [vmem:[%s7505 + $0xf8] sm:$0xff]
    %v7538 = vld [vmem:[%s7505 + $0x100] sm:$0xff]
    %v7539 = vld [vmem:[%s7505 + $0x108] sm:$0xff]
    %v7540 = vld [vmem:[%s7505 + $0x110] sm:$0xff]
    %v7541 = vld [vmem:[%s7505 + $0x118] sm:$0xff]
    %v7542 = vld [vmem:[%s7505 + $0x120] sm:$0xff]
    %v7543 = vld [vmem:[%s7505 + $0x128] sm:$0xff]
    %v7544 = vld [vmem:[%s7505 + $0x130] sm:$0xff]
    %v7545 = vld [vmem:[%s7505 + $0x138] sm:$0xff]
    %v7546 = vld [vmem:[%s7505 + $0x140] sm:$0xff]
    %v7547 = vld [vmem:[%s7505 + $0x148] sm:$0xff]
    %v7548 = vld [vmem:[%s7505 + $0x150] sm:$0xff]
    %v7549 = vld [vmem:[%s7505 + $0x158] sm:$0xff]
    %v7550 = vld [vmem:[%s7505 + $0x160] sm:$0xff]
    %v7551 = vld [vmem:[%s7505 + $0x168] sm:$0xff]
    %v7552 = vld [vmem:[%s7505 + $0x170] sm:$0xff]
    %v7553 = vld [vmem:[%s7505 + $0x178] sm:$0xff]
    %v7602 = vunpack.c.l.b16 %v7506
    %v7603 = vunpack.c.h.b16 %v7506
    %v7604 = vunpack.c.l.b16 %v7507
    %v7605 = vunpack.c.h.b16 %v7507
    %v7606 = vunpack.c.l.b16 %v7508
    %v7607 = vunpack.c.h.b16 %v7508
    %v7608 = vunpack.c.l.b16 %v7509
    %v7609 = vunpack.c.h.b16 %v7509
    %v7610 = vunpack.c.l.b16 %v7510
    %v7611 = vunpack.c.h.b16 %v7510
    %v7612 = vunpack.c.l.b16 %v7511
    %v7613 = vunpack.c.h.b16 %v7511
    %v7614 = vunpack.c.l.b16 %v7512
    %v7615 = vunpack.c.h.b16 %v7512
    %v7616 = vunpack.c.l.b16 %v7513
    %v7617 = vunpack.c.h.b16 %v7513
    %v7618 = vunpack.c.l.b16 %v7514
    %v7619 = vunpack.c.h.b16 %v7514
    %v7620 = vunpack.c.l.b16 %v7515
    %v7621 = vunpack.c.h.b16 %v7515
    %v7622 = vunpack.c.l.b16 %v7516
    %v7623 = vunpack.c.h.b16 %v7516
    %v7624 = vunpack.c.l.b16 %v7517
    %v7625 = vunpack.c.h.b16 %v7517
    %v7626 = vunpack.c.l.b16 %v7518
    %v7627 = vunpack.c.h.b16 %v7518
    %v7628 = vunpack.c.l.b16 %v7519
    %v7629 = vunpack.c.h.b16 %v7519
    %v7630 = vunpack.c.l.b16 %v7520
    %v7631 = vunpack.c.h.b16 %v7520
    %v7632 = vunpack.c.l.b16 %v7521
    %v7633 = vunpack.c.h.b16 %v7521
    %v7634 = vunpack.c.l.b16 %v7522
    %v7635 = vunpack.c.h.b16 %v7522
    %v7636 = vunpack.c.l.b16 %v7523
    %v7637 = vunpack.c.h.b16 %v7523
    %v7638 = vunpack.c.l.b16 %v7524
    %v7639 = vunpack.c.h.b16 %v7524
    %v7640 = vunpack.c.l.b16 %v7525
    %v7641 = vunpack.c.h.b16 %v7525
    %v7642 = vunpack.c.l.b16 %v7526
    %v7643 = vunpack.c.h.b16 %v7526
    %v7644 = vunpack.c.l.b16 %v7527
    %v7645 = vunpack.c.h.b16 %v7527
    %v7646 = vunpack.c.l.b16 %v7528
    %v7647 = vunpack.c.h.b16 %v7528
    %v7648 = vunpack.c.l.b16 %v7529
    %v7649 = vunpack.c.h.b16 %v7529
    %v7650 = vunpack.c.l.b16 %v7530
    %v7651 = vunpack.c.h.b16 %v7530
    %v7652 = vunpack.c.l.b16 %v7531
    %v7653 = vunpack.c.h.b16 %v7531
    %v7654 = vunpack.c.l.b16 %v7532
    %v7655 = vunpack.c.h.b16 %v7532
    %v7656 = vunpack.c.l.b16 %v7533
    %v7657 = vunpack.c.h.b16 %v7533
    %v7658 = vunpack.c.l.b16 %v7534
    %v7659 = vunpack.c.h.b16 %v7534
    %v7660 = vunpack.c.l.b16 %v7535
    %v7661 = vunpack.c.h.b16 %v7535
    %v7662 = vunpack.c.l.b16 %v7536
    %v7663 = vunpack.c.h.b16 %v7536
    %v7664 = vunpack.c.l.b16 %v7537
    %v7665 = vunpack.c.h.b16 %v7537
    %v7666 = vunpack.c.l.b16 %v7538
    %v7667 = vunpack.c.h.b16 %v7538
    %v7668 = vunpack.c.l.b16 %v7539
    %v7669 = vunpack.c.h.b16 %v7539
    %v7670 = vunpack.c.l.b16 %v7540
    %v7671 = vunpack.c.h.b16 %v7540
    %v7672 = vunpack.c.l.b16 %v7541
    %v7673 = vunpack.c.h.b16 %v7541
    %v7674 = vunpack.c.l.b16 %v7542
    %v7675 = vunpack.c.h.b16 %v7542
    %v7676 = vunpack.c.l.b16 %v7543
    %v7677 = vunpack.c.h.b16 %v7543
    %v7678 = vunpack.c.l.b16 %v7544
    %v7679 = vunpack.c.h.b16 %v7544
    %v7680 = vunpack.c.l.b16 %v7545
    %v7681 = vunpack.c.h.b16 %v7545
    %v7682 = vunpack.c.l.b16 %v7546
    %v7683 = vunpack.c.h.b16 %v7546
    %v7684 = vunpack.c.l.b16 %v7547
    %v7685 = vunpack.c.h.b16 %v7547
    %v7686 = vunpack.c.l.b16 %v7548
    %v7687 = vunpack.c.h.b16 %v7548
    %v7688 = vunpack.c.l.b16 %v7549
    %v7689 = vunpack.c.h.b16 %v7549
    %v7690 = vunpack.c.l.b16 %v7550
    %v7691 = vunpack.c.h.b16 %v7550
    %v7692 = vunpack.c.l.b16 %v7551
    %v7693 = vunpack.c.h.b16 %v7551
    %v7694 = vunpack.c.l.b16 %v7552
    %v7695 = vunpack.c.h.b16 %v7552
    %v7696 = vunpack.c.l.b16 %v7553
    %v7697 = vunpack.c.h.b16 %v7553
    %v7698 = vpack.c.b16 %v7606, %v7602
    %v7699 = vpack.c.b16 %v7607, %v7603
    %v7700 = vpack.c.b16 %v7608, %v7604
    %v7701 = vpack.c.b16 %v7609, %v7605
    %v7702 = vpack.c.b16 %v7614, %v7610
    %v7703 = vpack.c.b16 %v7615, %v7611
    %v7704 = vpack.c.b16 %v7616, %v7612
    %v7705 = vpack.c.b16 %v7617, %v7613
    %v7706 = vpack.c.b16 %v7622, %v7618
    %v7707 = vpack.c.b16 %v7623, %v7619
    %v7708 = vpack.c.b16 %v7624, %v7620
    %v7709 = vpack.c.b16 %v7625, %v7621
    %v7710 = vpack.c.b16 %v7630, %v7626
    %v7711 = vpack.c.b16 %v7631, %v7627
    %v7712 = vpack.c.b16 %v7632, %v7628
    %v7713 = vpack.c.b16 %v7633, %v7629
    %v7714 = vpack.c.b16 %v7638, %v7634
    %v7715 = vpack.c.b16 %v7639, %v7635
    %v7716 = vpack.c.b16 %v7640, %v7636
    %v7717 = vpack.c.b16 %v7641, %v7637
    %v7718 = vpack.c.b16 %v7646, %v7642
    %v7719 = vpack.c.b16 %v7647, %v7643
    %v7720 = vpack.c.b16 %v7648, %v7644
    %v7721 = vpack.c.b16 %v7649, %v7645
    %v7722 = vpack.c.b16 %v7654, %v7650
    %v7723 = vpack.c.b16 %v7655, %v7651
    %v7724 = vpack.c.b16 %v7656, %v7652
    %v7725 = vpack.c.b16 %v7657, %v7653
    %v7726 = vpack.c.b16 %v7662, %v7658
    %v7727 = vpack.c.b16 %v7663, %v7659
    %v7728 = vpack.c.b16 %v7664, %v7660
    %v7729 = vpack.c.b16 %v7665, %v7661
    %v7730 = vpack.c.b16 %v7670, %v7666
    %v7731 = vpack.c.b16 %v7671, %v7667
    %v7732 = vpack.c.b16 %v7672, %v7668
    %v7733 = vpack.c.b16 %v7673, %v7669
    %v7734 = vpack.c.b16 %v7678, %v7674
    %v7735 = vpack.c.b16 %v7679, %v7675
    %v7736 = vpack.c.b16 %v7680, %v7676
    %v7737 = vpack.c.b16 %v7681, %v7677
    %v7738 = vpack.c.b16 %v7686, %v7682
    %v7739 = vpack.c.b16 %v7687, %v7683
    %v7740 = vpack.c.b16 %v7688, %v7684
    %v7741 = vpack.c.b16 %v7689, %v7685
    %v7742 = vpack.c.b16 %v7694, %v7690
    %v7743 = vpack.c.b16 %v7695, %v7691
    %v7744 = vpack.c.b16 %v7696, %v7692
    %v7745 = vpack.c.b16 %v7697, %v7693
    %v7795 = vsel %vm184, %v7504, 0
    %7797 = vmatpush.bf16.msra.mxu0 %v7726
    %7798 = vmatpush.bf16.msra.mxu0 %v7722
    %7799 = vmatpush.bf16.msra.mxu0 %v7718
    %7800 = vmatpush.bf16.msra.mxu0 %v7714
    %7801 = vmatpush.bf16.msra.mxu0 %v7710
    %7802 = vmatpush.bf16.msra.mxu0 %v7706
    %7803 = vmatpush.bf16.msra.mxu0 %v7702
    %7804 = vmatpush.bf16.msra.mxu0 %v7698
    %7805 = vmatmul.bf16.gmra.mxu0 %v7503
    %v7806 = vpop.f32.mrf.mxu0
    %v7807 = vadd.f32 0.0, %v7806
    %v7808 = vpop.f32.mrf.mxu0
    %7809 = vdwg.mxu0
    %7810 = vmatpush.bf16.msra.mxu0 0
    %7811 = vmatpush.bf16.msra.mxu0 0
    %7812 = vmatpush.bf16.msra.mxu0 0
    %7813 = vmatpush.bf16.msra.mxu0 0
    %7814 = vmatpush.bf16.msra.mxu0 %v7742
    %7815 = vmatpush.bf16.msra.mxu0 %v7738
    %7816 = vmatpush.bf16.msra.mxu0 %v7734
    %7817 = vmatpush.bf16.msra.mxu0 %v7730
    %7818 = vmatmul.bf16.gmra.mxu0 %v7795
    %v7819 = vpop.f32.mrf.mxu0
    %v7820 = vadd.f32 %v7807, %v7819
    %v7821 = vpop.f32.mrf.mxu0
    %7822 = vdwg.mxu0
    %7823 = vmatpush.bf16.msra.mxu0 %v7727
    %7824 = vmatpush.bf16.msra.mxu0 %v7723
    %7825 = vmatpush.bf16.msra.mxu0 %v7719
    %7826 = vmatpush.bf16.msra.mxu0 %v7715
    %7827 = vmatpush.bf16.msra.mxu0 %v7711
    %7828 = vmatpush.bf16.msra.mxu0 %v7707
    %7829 = vmatpush.bf16.msra.mxu0 %v7703
    %7830 = vmatpush.bf16.msra.mxu0 %v7699
    %7831 = vmatmul.bf16.gmra.mxu0 %v7503
    %v7832 = vpop.f32.mrf.mxu0
    %v7833 = vadd.f32 0.0, %v7832
    %v7834 = vpop.f32.mrf.mxu0
    %7835 = vdwg.mxu0
    %7836 = vmatpush.bf16.msra.mxu0 0
    %7837 = vmatpush.bf16.msra.mxu0 0
    %7838 = vmatpush.bf16.msra.mxu0 0
    %7839 = vmatpush.bf16.msra.mxu0 0
    %7840 = vmatpush.bf16.msra.mxu0 %v7743
    %7841 = vmatpush.bf16.msra.mxu0 %v7739
    %7842 = vmatpush.bf16.msra.mxu0 %v7735
    %7843 = vmatpush.bf16.msra.mxu0 %v7731
    %7844 = vmatmul.bf16.gmra.mxu0 %v7795
    %v7845 = vpop.f32.mrf.mxu0
    %v7846 = vadd.f32 %v7833, %v7845
    %v7847 = vpop.f32.mrf.mxu0
    %7848 = vdwg.mxu0
    %7849 = vmatpush.bf16.msra.mxu0 %v7728
    %7850 = vmatpush.bf16.msra.mxu0 %v7724
    %7851 = vmatpush.bf16.msra.mxu0 %v7720
    %7852 = vmatpush.bf16.msra.mxu0 %v7716
    %7853 = vmatpush.bf16.msra.mxu0 %v7712
    %7854 = vmatpush.bf16.msra.mxu0 %v7708
    %7855 = vmatpush.bf16.msra.mxu0 %v7704
    %7856 = vmatpush.bf16.msra.mxu0 %v7700
    %7857 = vmatmul.bf16.gmra.mxu0 %v7503
    %v7858 = vpop.f32.mrf.mxu0
    %v7859 = vadd.f32 0.0, %v7858
    %v7860 = vpop.f32.mrf.mxu0
    %7861 = vdwg.mxu0
    %7862 = vmatpush.bf16.msra.mxu0 0
    %7863 = vmatpush.bf16.msra.mxu0 0
    %7864 = vmatpush.bf16.msra.mxu0 0
    %7865 = vmatpush.bf16.msra.mxu0 0
    %7866 = vmatpush.bf16.msra.mxu0 %v7744
    %7867 = vmatpush.bf16.msra.mxu0 %v7740
    %7868 = vmatpush.bf16.msra.mxu0 %v7736
    %7869 = vmatpush.bf16.msra.mxu0 %v7732
    %7870 = vmatmul.bf16.gmra.mxu0 %v7795
    %v7871 = vpop.f32.mrf.mxu0
    %v7872 = vadd.f32 %v7859, %v7871
    %v7873 = vpop.f32.mrf.mxu0
    %7874 = vdwg.mxu0
    %7875 = vmatpush.bf16.msra.mxu0 %v7729
    %7876 = vmatpush.bf16.msra.mxu0 %v7725
    %7877 = vmatpush.bf16.msra.mxu0 %v7721
    %7878 = vmatpush.bf16.msra.mxu0 %v7717
    %7879 = vmatpush.bf16.msra.mxu0 %v7713
    %7880 = vmatpush.bf16.msra.mxu0 %v7709
    %7881 = vmatpush.bf16.msra.mxu0 %v7705
    %7882 = vmatpush.bf16.msra.mxu0 %v7701
    %7883 = vmatmul.bf16.gmra.mxu0 %v7503
    %v7884 = vpop.f32.mrf.mxu0
    %v7885 = vadd.f32 0.0, %v7884
    %v7886 = vpop.f32.mrf.mxu0
    %7887 = vdwg.mxu0
    %7888 = vmatpush.bf16.msra.mxu0 0
    %7889 = vmatpush.bf16.msra.mxu0 0
    %7890 = vmatpush.bf16.msra.mxu0 0
    %7891 = vmatpush.bf16.msra.mxu0 0
    %7892 = vmatpush.bf16.msra.mxu0 %v7745
    %7893 = vmatpush.bf16.msra.mxu0 %v7741
    %7894 = vmatpush.bf16.msra.mxu0 %v7737
    %7895 = vmatpush.bf16.msra.mxu0 %v7733
    %7896 = vmatmul.bf16.gmra.mxu0 %v7795
    %v7897 = vpop.f32.mrf.mxu0
    %v7898 = vadd.f32 %v7885, %v7897
    %v7899 = vpop.f32.mrf.mxu0
    %7900 = vdwg.mxu0
    %v7901 = vadd.f32 %v7497, %v7820
    %v7902 = vadd.f32 %v7498, %v7846
    %v7903 = vadd.f32 %v7499, %v7872
    %v7904 = vadd.f32 %v7500, %v7898
    %v7905 = vmul.f32 %v118, %v640
    %v7906 = vmul.f32 %v119, %v641
    %v7907 = vpack.c.bf16 %v7905, %v7905
    %v7908 = vpack.c.bf16 %v7906, %v7906
    %s7909 = scalar_lea.vmem [#allocation6], 6912
    %v7910 = vld [vmem:[%s7909] sm:$0xff]
    %v7911 = vld [vmem:[%s7909 + $0x8] sm:$0xff]
    %v7912 = vld [vmem:[%s7909 + $0x10] sm:$0xff]
    %v7913 = vld [vmem:[%s7909 + $0x18] sm:$0xff]
    %v7914 = vld [vmem:[%s7909 + $0x20] sm:$0xff]
    %v7915 = vld [vmem:[%s7909 + $0x28] sm:$0xff]
    %v7916 = vld [vmem:[%s7909 + $0x30] sm:$0xff]
    %v7917 = vld [vmem:[%s7909 + $0x38] sm:$0xff]
    %v7918 = vld [vmem:[%s7909 + $0x40] sm:$0xff]
    %v7919 = vld [vmem:[%s7909 + $0x48] sm:$0xff]
    %v7920 = vld [vmem:[%s7909 + $0x50] sm:$0xff]
    %v7921 = vld [vmem:[%s7909 + $0x58] sm:$0xff]
    %v7922 = vld [vmem:[%s7909 + $0x60] sm:$0xff]
    %v7923 = vld [vmem:[%s7909 + $0x68] sm:$0xff]
    %v7924 = vld [vmem:[%s7909 + $0x70] sm:$0xff]
    %v7925 = vld [vmem:[%s7909 + $0x78] sm:$0xff]
    %v7926 = vld [vmem:[%s7909 + $0x80] sm:$0xff]
    %v7927 = vld [vmem:[%s7909 + $0x88] sm:$0xff]
    %v7928 = vld [vmem:[%s7909 + $0x90] sm:$0xff]
    %v7929 = vld [vmem:[%s7909 + $0x98] sm:$0xff]
    %v7930 = vld [vmem:[%s7909 + $0xa0] sm:$0xff]
    %v7931 = vld [vmem:[%s7909 + $0xa8] sm:$0xff]
    %v7932 = vld [vmem:[%s7909 + $0xb0] sm:$0xff]
    %v7933 = vld [vmem:[%s7909 + $0xb8] sm:$0xff]
    %v7934 = vld [vmem:[%s7909 + $0xc0] sm:$0xff]
    %v7935 = vld [vmem:[%s7909 + $0xc8] sm:$0xff]
    %v7936 = vld [vmem:[%s7909 + $0xd0] sm:$0xff]
    %v7937 = vld [vmem:[%s7909 + $0xd8] sm:$0xff]
    %v7938 = vld [vmem:[%s7909 + $0xe0] sm:$0xff]
    %v7939 = vld [vmem:[%s7909 + $0xe8] sm:$0xff]
    %v7940 = vld [vmem:[%s7909 + $0xf0] sm:$0xff]
    %v7941 = vld [vmem:[%s7909 + $0xf8] sm:$0xff]
    %v7942 = vld [vmem:[%s7909 + $0x100] sm:$0xff]
    %v7943 = vld [vmem:[%s7909 + $0x108] sm:$0xff]
    %v7944 = vld [vmem:[%s7909 + $0x110] sm:$0xff]
    %v7945 = vld [vmem:[%s7909 + $0x118] sm:$0xff]
    %v7946 = vld [vmem:[%s7909 + $0x120] sm:$0xff]
    %v7947 = vld [vmem:[%s7909 + $0x128] sm:$0xff]
    %v7948 = vld [vmem:[%s7909 + $0x130] sm:$0xff]
    %v7949 = vld [vmem:[%s7909 + $0x138] sm:$0xff]
    %v7950 = vld [vmem:[%s7909 + $0x140] sm:$0xff]
    %v7951 = vld [vmem:[%s7909 + $0x148] sm:$0xff]
    %v7952 = vld [vmem:[%s7909 + $0x150] sm:$0xff]
    %v7953 = vld [vmem:[%s7909 + $0x158] sm:$0xff]
    %v7954 = vld [vmem:[%s7909 + $0x160] sm:$0xff]
    %v7955 = vld [vmem:[%s7909 + $0x168] sm:$0xff]
    %v7956 = vld [vmem:[%s7909 + $0x170] sm:$0xff]
    %v7957 = vld [vmem:[%s7909 + $0x178] sm:$0xff]
    %v8006 = vunpack.c.l.b16 %v7910
    %v8007 = vunpack.c.h.b16 %v7910
    %v8008 = vunpack.c.l.b16 %v7911
    %v8009 = vunpack.c.h.b16 %v7911
    %v8010 = vunpack.c.l.b16 %v7912
    %v8011 = vunpack.c.h.b16 %v7912
    %v8012 = vunpack.c.l.b16 %v7913
    %v8013 = vunpack.c.h.b16 %v7913
    %v8014 = vunpack.c.l.b16 %v7914
    %v8015 = vunpack.c.h.b16 %v7914
    %v8016 = vunpack.c.l.b16 %v7915
    %v8017 = vunpack.c.h.b16 %v7915
    %v8018 = vunpack.c.l.b16 %v7916
    %v8019 = vunpack.c.h.b16 %v7916
    %v8020 = vunpack.c.l.b16 %v7917
    %v8021 = vunpack.c.h.b16 %v7917
    %v8022 = vunpack.c.l.b16 %v7918
    %v8023 = vunpack.c.h.b16 %v7918
    %v8024 = vunpack.c.l.b16 %v7919
    %v8025 = vunpack.c.h.b16 %v7919
    %v8026 = vunpack.c.l.b16 %v7920
    %v8027 = vunpack.c.h.b16 %v7920
    %v8028 = vunpack.c.l.b16 %v7921
    %v8029 = vunpack.c.h.b16 %v7921
    %v8030 = vunpack.c.l.b16 %v7922
    %v8031 = vunpack.c.h.b16 %v7922
    %v8032 = vunpack.c.l.b16 %v7923
    %v8033 = vunpack.c.h.b16 %v7923
    %v8034 = vunpack.c.l.b16 %v7924
    %v8035 = vunpack.c.h.b16 %v7924
    %v8036 = vunpack.c.l.b16 %v7925
    %v8037 = vunpack.c.h.b16 %v7925
    %v8038 = vunpack.c.l.b16 %v7926
    %v8039 = vunpack.c.h.b16 %v7926
    %v8040 = vunpack.c.l.b16 %v7927
    %v8041 = vunpack.c.h.b16 %v7927
    %v8042 = vunpack.c.l.b16 %v7928
    %v8043 = vunpack.c.h.b16 %v7928
    %v8044 = vunpack.c.l.b16 %v7929
    %v8045 = vunpack.c.h.b16 %v7929
    %v8046 = vunpack.c.l.b16 %v7930
    %v8047 = vunpack.c.h.b16 %v7930
    %v8048 = vunpack.c.l.b16 %v7931
    %v8049 = vunpack.c.h.b16 %v7931
    %v8050 = vunpack.c.l.b16 %v7932
    %v8051 = vunpack.c.h.b16 %v7932
    %v8052 = vunpack.c.l.b16 %v7933
    %v8053 = vunpack.c.h.b16 %v7933
    %v8054 = vunpack.c.l.b16 %v7934
    %v8055 = vunpack.c.h.b16 %v7934
    %v8056 = vunpack.c.l.b16 %v7935
    %v8057 = vunpack.c.h.b16 %v7935
    %v8058 = vunpack.c.l.b16 %v7936
    %v8059 = vunpack.c.h.b16 %v7936
    %v8060 = vunpack.c.l.b16 %v7937
    %v8061 = vunpack.c.h.b16 %v7937
    %v8062 = vunpack.c.l.b16 %v7938
    %v8063 = vunpack.c.h.b16 %v7938
    %v8064 = vunpack.c.l.b16 %v7939
    %v8065 = vunpack.c.h.b16 %v7939
    %v8066 = vunpack.c.l.b16 %v7940
    %v8067 = vunpack.c.h.b16 %v7940
    %v8068 = vunpack.c.l.b16 %v7941
    %v8069 = vunpack.c.h.b16 %v7941
    %v8070 = vunpack.c.l.b16 %v7942
    %v8071 = vunpack.c.h.b16 %v7942
    %v8072 = vunpack.c.l.b16 %v7943
    %v8073 = vunpack.c.h.b16 %v7943
    %v8074 = vunpack.c.l.b16 %v7944
    %v8075 = vunpack.c.h.b16 %v7944
    %v8076 = vunpack.c.l.b16 %v7945
    %v8077 = vunpack.c.h.b16 %v7945
    %v8078 = vunpack.c.l.b16 %v7946
    %v8079 = vunpack.c.h.b16 %v7946
    %v8080 = vunpack.c.l.b16 %v7947
    %v8081 = vunpack.c.h.b16 %v7947
    %v8082 = vunpack.c.l.b16 %v7948
    %v8083 = vunpack.c.h.b16 %v7948
    %v8084 = vunpack.c.l.b16 %v7949
    %v8085 = vunpack.c.h.b16 %v7949
    %v8086 = vunpack.c.l.b16 %v7950
    %v8087 = vunpack.c.h.b16 %v7950
    %v8088 = vunpack.c.l.b16 %v7951
    %v8089 = vunpack.c.h.b16 %v7951
    %v8090 = vunpack.c.l.b16 %v7952
    %v8091 = vunpack.c.h.b16 %v7952
    %v8092 = vunpack.c.l.b16 %v7953
    %v8093 = vunpack.c.h.b16 %v7953
    %v8094 = vunpack.c.l.b16 %v7954
    %v8095 = vunpack.c.h.b16 %v7954
    %v8096 = vunpack.c.l.b16 %v7955
    %v8097 = vunpack.c.h.b16 %v7955
    %v8098 = vunpack.c.l.b16 %v7956
    %v8099 = vunpack.c.h.b16 %v7956
    %v8100 = vunpack.c.l.b16 %v7957
    %v8101 = vunpack.c.h.b16 %v7957
    %v8102 = vpack.c.b16 %v8010, %v8006
    %v8103 = vpack.c.b16 %v8011, %v8007
    %v8104 = vpack.c.b16 %v8012, %v8008
    %v8105 = vpack.c.b16 %v8013, %v8009
    %v8106 = vpack.c.b16 %v8018, %v8014
    %v8107 = vpack.c.b16 %v8019, %v8015
    %v8108 = vpack.c.b16 %v8020, %v8016
    %v8109 = vpack.c.b16 %v8021, %v8017
    %v8110 = vpack.c.b16 %v8026, %v8022
    %v8111 = vpack.c.b16 %v8027, %v8023
    %v8112 = vpack.c.b16 %v8028, %v8024
    %v8113 = vpack.c.b16 %v8029, %v8025
    %v8114 = vpack.c.b16 %v8034, %v8030
    %v8115 = vpack.c.b16 %v8035, %v8031
    %v8116 = vpack.c.b16 %v8036, %v8032
    %v8117 = vpack.c.b16 %v8037, %v8033
    %v8118 = vpack.c.b16 %v8042, %v8038
    %v8119 = vpack.c.b16 %v8043, %v8039
    %v8120 = vpack.c.b16 %v8044, %v8040
    %v8121 = vpack.c.b16 %v8045, %v8041
    %v8122 = vpack.c.b16 %v8050, %v8046
    %v8123 = vpack.c.b16 %v8051, %v8047
    %v8124 = vpack.c.b16 %v8052, %v8048
    %v8125 = vpack.c.b16 %v8053, %v8049
    %v8126 = vpack.c.b16 %v8058, %v8054
    %v8127 = vpack.c.b16 %v8059, %v8055
    %v8128 = vpack.c.b16 %v8060, %v8056
    %v8129 = vpack.c.b16 %v8061, %v8057
    %v8130 = vpack.c.b16 %v8066, %v8062
    %v8131 = vpack.c.b16 %v8067, %v8063
    %v8132 = vpack.c.b16 %v8068, %v8064
    %v8133 = vpack.c.b16 %v8069, %v8065
    %v8134 = vpack.c.b16 %v8074, %v8070
    %v8135 = vpack.c.b16 %v8075, %v8071
    %v8136 = vpack.c.b16 %v8076, %v8072
    %v8137 = vpack.c.b16 %v8077, %v8073
    %v8138 = vpack.c.b16 %v8082, %v8078
    %v8139 = vpack.c.b16 %v8083, %v8079
    %v8140 = vpack.c.b16 %v8084, %v8080
    %v8141 = vpack.c.b16 %v8085, %v8081
    %v8142 = vpack.c.b16 %v8090, %v8086
    %v8143 = vpack.c.b16 %v8091, %v8087
    %v8144 = vpack.c.b16 %v8092, %v8088
    %v8145 = vpack.c.b16 %v8093, %v8089
    %v8146 = vpack.c.b16 %v8098, %v8094
    %v8147 = vpack.c.b16 %v8099, %v8095
    %v8148 = vpack.c.b16 %v8100, %v8096
    %v8149 = vpack.c.b16 %v8101, %v8097
    %v8199 = vsel %vm184, %v7908, 0
    %8201 = vmatpush.bf16.msra.mxu0 %v8130
    %8202 = vmatpush.bf16.msra.mxu0 %v8126
    %8203 = vmatpush.bf16.msra.mxu0 %v8122
    %8204 = vmatpush.bf16.msra.mxu0 %v8118
    %8205 = vmatpush.bf16.msra.mxu0 %v8114
    %8206 = vmatpush.bf16.msra.mxu0 %v8110
    %8207 = vmatpush.bf16.msra.mxu0 %v8106
    %8208 = vmatpush.bf16.msra.mxu0 %v8102
    %8209 = vmatmul.bf16.gmra.mxu0 %v7907
    %v8210 = vpop.f32.mrf.mxu0
    %v8211 = vadd.f32 0.0, %v8210
    %v8212 = vpop.f32.mrf.mxu0
    %8213 = vdwg.mxu0
    %8214 = vmatpush.bf16.msra.mxu0 0
    %8215 = vmatpush.bf16.msra.mxu0 0
    %8216 = vmatpush.bf16.msra.mxu0 0
    %8217 = vmatpush.bf16.msra.mxu0 0
    %8218 = vmatpush.bf16.msra.mxu0 %v8146
    %8219 = vmatpush.bf16.msra.mxu0 %v8142
    %8220 = vmatpush.bf16.msra.mxu0 %v8138
    %8221 = vmatpush.bf16.msra.mxu0 %v8134
    %8222 = vmatmul.bf16.gmra.mxu0 %v8199
    %v8223 = vpop.f32.mrf.mxu0
    %v8224 = vadd.f32 %v8211, %v8223
    %v8225 = vpop.f32.mrf.mxu0
    %8226 = vdwg.mxu0
    %8227 = vmatpush.bf16.msra.mxu0 %v8131
    %8228 = vmatpush.bf16.msra.mxu0 %v8127
    %8229 = vmatpush.bf16.msra.mxu0 %v8123
    %8230 = vmatpush.bf16.msra.mxu0 %v8119
    %8231 = vmatpush.bf16.msra.mxu0 %v8115
    %8232 = vmatpush.bf16.msra.mxu0 %v8111
    %8233 = vmatpush.bf16.msra.mxu0 %v8107
    %8234 = vmatpush.bf16.msra.mxu0 %v8103
    %8235 = vmatmul.bf16.gmra.mxu0 %v7907
    %v8236 = vpop.f32.mrf.mxu0
    %v8237 = vadd.f32 0.0, %v8236
    %v8238 = vpop.f32.mrf.mxu0
    %8239 = vdwg.mxu0
    %8240 = vmatpush.bf16.msra.mxu0 0
    %8241 = vmatpush.bf16.msra.mxu0 0
    %8242 = vmatpush.bf16.msra.mxu0 0
    %8243 = vmatpush.bf16.msra.mxu0 0
    %8244 = vmatpush.bf16.msra.mxu0 %v8147
    %8245 = vmatpush.bf16.msra.mxu0 %v8143
    %8246 = vmatpush.bf16.msra.mxu0 %v8139
    %8247 = vmatpush.bf16.msra.mxu0 %v8135
    %8248 = vmatmul.bf16.gmra.mxu0 %v8199
    %v8249 = vpop.f32.mrf.mxu0
    %v8250 = vadd.f32 %v8237, %v8249
    %v8251 = vpop.f32.mrf.mxu0
    %8252 = vdwg.mxu0
    %8253 = vmatpush.bf16.msra.mxu0 %v8132
    %8254 = vmatpush.bf16.msra.mxu0 %v8128
    %8255 = vmatpush.bf16.msra.mxu0 %v8124
    %8256 = vmatpush.bf16.msra.mxu0 %v8120
    %8257 = vmatpush.bf16.msra.mxu0 %v8116
    %8258 = vmatpush.bf16.msra.mxu0 %v8112
    %8259 = vmatpush.bf16.msra.mxu0 %v8108
    %8260 = vmatpush.bf16.msra.mxu0 %v8104
    %8261 = vmatmul.bf16.gmra.mxu0 %v7907
    %v8262 = vpop.f32.mrf.mxu0
    %v8263 = vadd.f32 0.0, %v8262
    %v8264 = vpop.f32.mrf.mxu0
    %8265 = vdwg.mxu0
    %8266 = vmatpush.bf16.msra.mxu0 0
    %8267 = vmatpush.bf16.msra.mxu0 0
    %8268 = vmatpush.bf16.msra.mxu0 0
    %8269 = vmatpush.bf16.msra.mxu0 0
    %8270 = vmatpush.bf16.msra.mxu0 %v8148
    %8271 = vmatpush.bf16.msra.mxu0 %v8144
    %8272 = vmatpush.bf16.msra.mxu0 %v8140
    %8273 = vmatpush.bf16.msra.mxu0 %v8136
    %8274 = vmatmul.bf16.gmra.mxu0 %v8199
    %v8275 = vpop.f32.mrf.mxu0
    %v8276 = vadd.f32 %v8263, %v8275
    %v8277 = vpop.f32.mrf.mxu0
    %8278 = vdwg.mxu0
    %8279 = vmatpush.bf16.msra.mxu0 %v8133
    %8280 = vmatpush.bf16.msra.mxu0 %v8129
    %8281 = vmatpush.bf16.msra.mxu0 %v8125
    %8282 = vmatpush.bf16.msra.mxu0 %v8121
    %8283 = vmatpush.bf16.msra.mxu0 %v8117
    %8284 = vmatpush.bf16.msra.mxu0 %v8113
    %8285 = vmatpush.bf16.msra.mxu0 %v8109
    %8286 = vmatpush.bf16.msra.mxu0 %v8105
    %8287 = vmatmul.bf16.gmra.mxu0 %v7907
    %v8288 = vpop.f32.mrf.mxu0
    %v8289 = vadd.f32 0.0, %v8288
    %v8290 = vpop.f32.mrf.mxu0
    %8291 = vdwg.mxu0
    %8292 = vmatpush.bf16.msra.mxu0 0
    %8293 = vmatpush.bf16.msra.mxu0 0
    %8294 = vmatpush.bf16.msra.mxu0 0
    %8295 = vmatpush.bf16.msra.mxu0 0
    %8296 = vmatpush.bf16.msra.mxu0 %v8149
    %8297 = vmatpush.bf16.msra.mxu0 %v8145
    %8298 = vmatpush.bf16.msra.mxu0 %v8141
    %8299 = vmatpush.bf16.msra.mxu0 %v8137
    %8300 = vmatmul.bf16.gmra.mxu0 %v8199
    %v8301 = vpop.f32.mrf.mxu0
    %v8302 = vadd.f32 %v8289, %v8301
    %v8303 = vpop.f32.mrf.mxu0
    %8304 = vdwg.mxu0
    %v8305 = vadd.f32 %v7901, %v8224
    %v8306 = vadd.f32 %v7902, %v8250
    %v8307 = vadd.f32 %v7903, %v8276
    %v8308 = vadd.f32 %v7904, %v8302
    %v8309 = vmul.f32 %v120, %v640
    %v8310 = vmul.f32 %v121, %v641
    %v8311 = vpack.c.bf16 %v8309, %v8309
    %v8312 = vpack.c.bf16 %v8310, %v8310
    %s8313 = scalar_lea.vmem [#allocation6], 7296
    %v8314 = vld [vmem:[%s8313] sm:$0xff]
    %v8315 = vld [vmem:[%s8313 + $0x8] sm:$0xff]
    %v8316 = vld [vmem:[%s8313 + $0x10] sm:$0xff]
    %v8317 = vld [vmem:[%s8313 + $0x18] sm:$0xff]
    %v8318 = vld [vmem:[%s8313 + $0x20] sm:$0xff]
    %v8319 = vld [vmem:[%s8313 + $0x28] sm:$0xff]
    %v8320 = vld [vmem:[%s8313 + $0x30] sm:$0xff]
    %v8321 = vld [vmem:[%s8313 + $0x38] sm:$0xff]
    %v8322 = vld [vmem:[%s8313 + $0x40] sm:$0xff]
    %v8323 = vld [vmem:[%s8313 + $0x48] sm:$0xff]
    %v8324 = vld [vmem:[%s8313 + $0x50] sm:$0xff]
    %v8325 = vld [vmem:[%s8313 + $0x58] sm:$0xff]
    %v8326 = vld [vmem:[%s8313 + $0x60] sm:$0xff]
    %v8327 = vld [vmem:[%s8313 + $0x68] sm:$0xff]
    %v8328 = vld [vmem:[%s8313 + $0x70] sm:$0xff]
    %v8329 = vld [vmem:[%s8313 + $0x78] sm:$0xff]
    %v8330 = vld [vmem:[%s8313 + $0x80] sm:$0xff]
    %v8331 = vld [vmem:[%s8313 + $0x88] sm:$0xff]
    %v8332 = vld [vmem:[%s8313 + $0x90] sm:$0xff]
    %v8333 = vld [vmem:[%s8313 + $0x98] sm:$0xff]
    %v8334 = vld [vmem:[%s8313 + $0xa0] sm:$0xff]
    %v8335 = vld [vmem:[%s8313 + $0xa8] sm:$0xff]
    %v8336 = vld [vmem:[%s8313 + $0xb0] sm:$0xff]
    %v8337 = vld [vmem:[%s8313 + $0xb8] sm:$0xff]
    %v8338 = vld [vmem:[%s8313 + $0xc0] sm:$0xff]
    %v8339 = vld [vmem:[%s8313 + $0xc8] sm:$0xff]
    %v8340 = vld [vmem:[%s8313 + $0xd0] sm:$0xff]
    %v8341 = vld [vmem:[%s8313 + $0xd8] sm:$0xff]
    %v8342 = vld [vmem:[%s8313 + $0xe0] sm:$0xff]
    %v8343 = vld [vmem:[%s8313 + $0xe8] sm:$0xff]
    %v8344 = vld [vmem:[%s8313 + $0xf0] sm:$0xff]
    %v8345 = vld [vmem:[%s8313 + $0xf8] sm:$0xff]
    %v8346 = vld [vmem:[%s8313 + $0x100] sm:$0xff]
    %v8347 = vld [vmem:[%s8313 + $0x108] sm:$0xff]
    %v8348 = vld [vmem:[%s8313 + $0x110] sm:$0xff]
    %v8349 = vld [vmem:[%s8313 + $0x118] sm:$0xff]
    %v8350 = vld [vmem:[%s8313 + $0x120] sm:$0xff]
    %v8351 = vld [vmem:[%s8313 + $0x128] sm:$0xff]
    %v8352 = vld [vmem:[%s8313 + $0x130] sm:$0xff]
    %v8353 = vld [vmem:[%s8313 + $0x138] sm:$0xff]
    %v8354 = vld [vmem:[%s8313 + $0x140] sm:$0xff]
    %v8355 = vld [vmem:[%s8313 + $0x148] sm:$0xff]
    %v8356 = vld [vmem:[%s8313 + $0x150] sm:$0xff]
    %v8357 = vld [vmem:[%s8313 + $0x158] sm:$0xff]
    %v8358 = vld [vmem:[%s8313 + $0x160] sm:$0xff]
    %v8359 = vld [vmem:[%s8313 + $0x168] sm:$0xff]
    %v8360 = vld [vmem:[%s8313 + $0x170] sm:$0xff]
    %v8361 = vld [vmem:[%s8313 + $0x178] sm:$0xff]
    %v8410 = vunpack.c.l.b16 %v8314
    %v8411 = vunpack.c.h.b16 %v8314
    %v8412 = vunpack.c.l.b16 %v8315
    %v8413 = vunpack.c.h.b16 %v8315
    %v8414 = vunpack.c.l.b16 %v8316
    %v8415 = vunpack.c.h.b16 %v8316
    %v8416 = vunpack.c.l.b16 %v8317
    %v8417 = vunpack.c.h.b16 %v8317
    %v8418 = vunpack.c.l.b16 %v8318
    %v8419 = vunpack.c.h.b16 %v8318
    %v8420 = vunpack.c.l.b16 %v8319
    %v8421 = vunpack.c.h.b16 %v8319
    %v8422 = vunpack.c.l.b16 %v8320
    %v8423 = vunpack.c.h.b16 %v8320
    %v8424 = vunpack.c.l.b16 %v8321
    %v8425 = vunpack.c.h.b16 %v8321
    %v8426 = vunpack.c.l.b16 %v8322
    %v8427 = vunpack.c.h.b16 %v8322
    %v8428 = vunpack.c.l.b16 %v8323
    %v8429 = vunpack.c.h.b16 %v8323
    %v8430 = vunpack.c.l.b16 %v8324
    %v8431 = vunpack.c.h.b16 %v8324
    %v8432 = vunpack.c.l.b16 %v8325
    %v8433 = vunpack.c.h.b16 %v8325
    %v8434 = vunpack.c.l.b16 %v8326
    %v8435 = vunpack.c.h.b16 %v8326
    %v8436 = vunpack.c.l.b16 %v8327
    %v8437 = vunpack.c.h.b16 %v8327
    %v8438 = vunpack.c.l.b16 %v8328
    %v8439 = vunpack.c.h.b16 %v8328
    %v8440 = vunpack.c.l.b16 %v8329
    %v8441 = vunpack.c.h.b16 %v8329
    %v8442 = vunpack.c.l.b16 %v8330
    %v8443 = vunpack.c.h.b16 %v8330
    %v8444 = vunpack.c.l.b16 %v8331
    %v8445 = vunpack.c.h.b16 %v8331
    %v8446 = vunpack.c.l.b16 %v8332
    %v8447 = vunpack.c.h.b16 %v8332
    %v8448 = vunpack.c.l.b16 %v8333
    %v8449 = vunpack.c.h.b16 %v8333
    %v8450 = vunpack.c.l.b16 %v8334
    %v8451 = vunpack.c.h.b16 %v8334
    %v8452 = vunpack.c.l.b16 %v8335
    %v8453 = vunpack.c.h.b16 %v8335
    %v8454 = vunpack.c.l.b16 %v8336
    %v8455 = vunpack.c.h.b16 %v8336
    %v8456 = vunpack.c.l.b16 %v8337
    %v8457 = vunpack.c.h.b16 %v8337
    %v8458 = vunpack.c.l.b16 %v8338
    %v8459 = vunpack.c.h.b16 %v8338
    %v8460 = vunpack.c.l.b16 %v8339
    %v8461 = vunpack.c.h.b16 %v8339
    %v8462 = vunpack.c.l.b16 %v8340
    %v8463 = vunpack.c.h.b16 %v8340
    %v8464 = vunpack.c.l.b16 %v8341
    %v8465 = vunpack.c.h.b16 %v8341
    %v8466 = vunpack.c.l.b16 %v8342
    %v8467 = vunpack.c.h.b16 %v8342
    %v8468 = vunpack.c.l.b16 %v8343
    %v8469 = vunpack.c.h.b16 %v8343
    %v8470 = vunpack.c.l.b16 %v8344
    %v8471 = vunpack.c.h.b16 %v8344
    %v8472 = vunpack.c.l.b16 %v8345
    %v8473 = vunpack.c.h.b16 %v8345
    %v8474 = vunpack.c.l.b16 %v8346
    %v8475 = vunpack.c.h.b16 %v8346
    %v8476 = vunpack.c.l.b16 %v8347
    %v8477 = vunpack.c.h.b16 %v8347
    %v8478 = vunpack.c.l.b16 %v8348
    %v8479 = vunpack.c.h.b16 %v8348
    %v8480 = vunpack.c.l.b16 %v8349
    %v8481 = vunpack.c.h.b16 %v8349
    %v8482 = vunpack.c.l.b16 %v8350
    %v8483 = vunpack.c.h.b16 %v8350
    %v8484 = vunpack.c.l.b16 %v8351
    %v8485 = vunpack.c.h.b16 %v8351
    %v8486 = vunpack.c.l.b16 %v8352
    %v8487 = vunpack.c.h.b16 %v8352
    %v8488 = vunpack.c.l.b16 %v8353
    %v8489 = vunpack.c.h.b16 %v8353
    %v8490 = vunpack.c.l.b16 %v8354
    %v8491 = vunpack.c.h.b16 %v8354
    %v8492 = vunpack.c.l.b16 %v8355
    %v8493 = vunpack.c.h.b16 %v8355
    %v8494 = vunpack.c.l.b16 %v8356
    %v8495 = vunpack.c.h.b16 %v8356
    %v8496 = vunpack.c.l.b16 %v8357
    %v8497 = vunpack.c.h.b16 %v8357
    %v8498 = vunpack.c.l.b16 %v8358
    %v8499 = vunpack.c.h.b16 %v8358
    %v8500 = vunpack.c.l.b16 %v8359
    %v8501 = vunpack.c.h.b16 %v8359
    %v8502 = vunpack.c.l.b16 %v8360
    %v8503 = vunpack.c.h.b16 %v8360
    %v8504 = vunpack.c.l.b16 %v8361
    %v8505 = vunpack.c.h.b16 %v8361
    %v8506 = vpack.c.b16 %v8414, %v8410
    %v8507 = vpack.c.b16 %v8415, %v8411
    %v8508 = vpack.c.b16 %v8416, %v8412
    %v8509 = vpack.c.b16 %v8417, %v8413
    %v8510 = vpack.c.b16 %v8422, %v8418
    %v8511 = vpack.c.b16 %v8423, %v8419
    %v8512 = vpack.c.b16 %v8424, %v8420
    %v8513 = vpack.c.b16 %v8425, %v8421
    %v8514 = vpack.c.b16 %v8430, %v8426
    %v8515 = vpack.c.b16 %v8431, %v8427
    %v8516 = vpack.c.b16 %v8432, %v8428
    %v8517 = vpack.c.b16 %v8433, %v8429
    %v8518 = vpack.c.b16 %v8438, %v8434
    %v8519 = vpack.c.b16 %v8439, %v8435
    %v8520 = vpack.c.b16 %v8440, %v8436
    %v8521 = vpack.c.b16 %v8441, %v8437
    %v8522 = vpack.c.b16 %v8446, %v8442
    %v8523 = vpack.c.b16 %v8447, %v8443
    %v8524 = vpack.c.b16 %v8448, %v8444
    %v8525 = vpack.c.b16 %v8449, %v8445
    %v8526 = vpack.c.b16 %v8454, %v8450
    %v8527 = vpack.c.b16 %v8455, %v8451
    %v8528 = vpack.c.b16 %v8456, %v8452
    %v8529 = vpack.c.b16 %v8457, %v8453
    %v8530 = vpack.c.b16 %v8462, %v8458
    %v8531 = vpack.c.b16 %v8463, %v8459
    %v8532 = vpack.c.b16 %v8464, %v8460
    %v8533 = vpack.c.b16 %v8465, %v8461
    %v8534 = vpack.c.b16 %v8470, %v8466
    %v8535 = vpack.c.b16 %v8471, %v8467
    %v8536 = vpack.c.b16 %v8472, %v8468
    %v8537 = vpack.c.b16 %v8473, %v8469
    %v8538 = vpack.c.b16 %v8478, %v8474
    %v8539 = vpack.c.b16 %v8479, %v8475
    %v8540 = vpack.c.b16 %v8480, %v8476
    %v8541 = vpack.c.b16 %v8481, %v8477
    %v8542 = vpack.c.b16 %v8486, %v8482
    %v8543 = vpack.c.b16 %v8487, %v8483
    %v8544 = vpack.c.b16 %v8488, %v8484
    %v8545 = vpack.c.b16 %v8489, %v8485
    %v8546 = vpack.c.b16 %v8494, %v8490
    %v8547 = vpack.c.b16 %v8495, %v8491
    %v8548 = vpack.c.b16 %v8496, %v8492
    %v8549 = vpack.c.b16 %v8497, %v8493
    %v8550 = vpack.c.b16 %v8502, %v8498
    %v8551 = vpack.c.b16 %v8503, %v8499
    %v8552 = vpack.c.b16 %v8504, %v8500
    %v8553 = vpack.c.b16 %v8505, %v8501
    %v8603 = vsel %vm184, %v8312, 0
    %8605 = vmatpush.bf16.msra.mxu0 %v8534
    %8606 = vmatpush.bf16.msra.mxu0 %v8530
    %8607 = vmatpush.bf16.msra.mxu0 %v8526
    %8608 = vmatpush.bf16.msra.mxu0 %v8522
    %8609 = vmatpush.bf16.msra.mxu0 %v8518
    %8610 = vmatpush.bf16.msra.mxu0 %v8514
    %8611 = vmatpush.bf16.msra.mxu0 %v8510
    %8612 = vmatpush.bf16.msra.mxu0 %v8506
    %8613 = vmatmul.bf16.gmra.mxu0 %v8311
    %v8614 = vpop.f32.mrf.mxu0
    %v8615 = vadd.f32 0.0, %v8614
    %v8616 = vpop.f32.mrf.mxu0
    %8617 = vdwg.mxu0
    %8618 = vmatpush.bf16.msra.mxu0 0
    %8619 = vmatpush.bf16.msra.mxu0 0
    %8620 = vmatpush.bf16.msra.mxu0 0
    %8621 = vmatpush.bf16.msra.mxu0 0
    %8622 = vmatpush.bf16.msra.mxu0 %v8550
    %8623 = vmatpush.bf16.msra.mxu0 %v8546
    %8624 = vmatpush.bf16.msra.mxu0 %v8542
    %8625 = vmatpush.bf16.msra.mxu0 %v8538
    %8626 = vmatmul.bf16.gmra.mxu0 %v8603
    %v8627 = vpop.f32.mrf.mxu0
    %v8628 = vadd.f32 %v8615, %v8627
    %v8629 = vpop.f32.mrf.mxu0
    %8630 = vdwg.mxu0
    %8631 = vmatpush.bf16.msra.mxu0 %v8535
    %8632 = vmatpush.bf16.msra.mxu0 %v8531
    %8633 = vmatpush.bf16.msra.mxu0 %v8527
    %8634 = vmatpush.bf16.msra.mxu0 %v8523
    %8635 = vmatpush.bf16.msra.mxu0 %v8519
    %8636 = vmatpush.bf16.msra.mxu0 %v8515
    %8637 = vmatpush.bf16.msra.mxu0 %v8511
    %8638 = vmatpush.bf16.msra.mxu0 %v8507
    %8639 = vmatmul.bf16.gmra.mxu0 %v8311
    %v8640 = vpop.f32.mrf.mxu0
    %v8641 = vadd.f32 0.0, %v8640
    %v8642 = vpop.f32.mrf.mxu0
    %8643 = vdwg.mxu0
    %8644 = vmatpush.bf16.msra.mxu0 0
    %8645 = vmatpush.bf16.msra.mxu0 0
    %8646 = vmatpush.bf16.msra.mxu0 0
    %8647 = vmatpush.bf16.msra.mxu0 0
    %8648 = vmatpush.bf16.msra.mxu0 %v8551
    %8649 = vmatpush.bf16.msra.mxu0 %v8547
    %8650 = vmatpush.bf16.msra.mxu0 %v8543
    %8651 = vmatpush.bf16.msra.mxu0 %v8539
    %8652 = vmatmul.bf16.gmra.mxu0 %v8603
    %v8653 = vpop.f32.mrf.mxu0
    %v8654 = vadd.f32 %v8641, %v8653
    %v8655 = vpop.f32.mrf.mxu0
    %8656 = vdwg.mxu0
    %8657 = vmatpush.bf16.msra.mxu0 %v8536
    %8658 = vmatpush.bf16.msra.mxu0 %v8532
    %8659 = vmatpush.bf16.msra.mxu0 %v8528
    %8660 = vmatpush.bf16.msra.mxu0 %v8524
    %8661 = vmatpush.bf16.msra.mxu0 %v8520
    %8662 = vmatpush.bf16.msra.mxu0 %v8516
    %8663 = vmatpush.bf16.msra.mxu0 %v8512
    %8664 = vmatpush.bf16.msra.mxu0 %v8508
    %8665 = vmatmul.bf16.gmra.mxu0 %v8311
    %v8666 = vpop.f32.mrf.mxu0
    %v8667 = vadd.f32 0.0, %v8666
    %v8668 = vpop.f32.mrf.mxu0
    %8669 = vdwg.mxu0
    %8670 = vmatpush.bf16.msra.mxu0 0
    %8671 = vmatpush.bf16.msra.mxu0 0
    %8672 = vmatpush.bf16.msra.mxu0 0
    %8673 = vmatpush.bf16.msra.mxu0 0
    %8674 = vmatpush.bf16.msra.mxu0 %v8552
    %8675 = vmatpush.bf16.msra.mxu0 %v8548
    %8676 = vmatpush.bf16.msra.mxu0 %v8544
    %8677 = vmatpush.bf16.msra.mxu0 %v8540
    %8678 = vmatmul.bf16.gmra.mxu0 %v8603
    %v8679 = vpop.f32.mrf.mxu0
    %v8680 = vadd.f32 %v8667, %v8679
    %v8681 = vpop.f32.mrf.mxu0
    %8682 = vdwg.mxu0
    %8683 = vmatpush.bf16.msra.mxu0 %v8537
    %8684 = vmatpush.bf16.msra.mxu0 %v8533
    %8685 = vmatpush.bf16.msra.mxu0 %v8529
    %8686 = vmatpush.bf16.msra.mxu0 %v8525
    %8687 = vmatpush.bf16.msra.mxu0 %v8521
    %8688 = vmatpush.bf16.msra.mxu0 %v8517
    %8689 = vmatpush.bf16.msra.mxu0 %v8513
    %8690 = vmatpush.bf16.msra.mxu0 %v8509
    %8691 = vmatmul.bf16.gmra.mxu0 %v8311
    %v8692 = vpop.f32.mrf.mxu0
    %v8693 = vadd.f32 0.0, %v8692
    %v8694 = vpop.f32.mrf.mxu0
    %8695 = vdwg.mxu0
    %8696 = vmatpush.bf16.msra.mxu0 0
    %8697 = vmatpush.bf16.msra.mxu0 0
    %8698 = vmatpush.bf16.msra.mxu0 0
    %8699 = vmatpush.bf16.msra.mxu0 0
    %8700 = vmatpush.bf16.msra.mxu0 %v8553
    %8701 = vmatpush.bf16.msra.mxu0 %v8549
    %8702 = vmatpush.bf16.msra.mxu0 %v8545
    %8703 = vmatpush.bf16.msra.mxu0 %v8541
    %8704 = vmatmul.bf16.gmra.mxu0 %v8603
    %v8705 = vpop.f32.mrf.mxu0
    %v8706 = vadd.f32 %v8693, %v8705
    %v8707 = vpop.f32.mrf.mxu0
    %8708 = vdwg.mxu0
    %v8709 = vadd.f32 %v8305, %v8628
    %v8710 = vadd.f32 %v8306, %v8654
    %v8711 = vadd.f32 %v8307, %v8680
    %v8712 = vadd.f32 %v8308, %v8706
    %v8713 = vmul.f32 %v122, %v640
    %v8714 = vmul.f32 %v123, %v641
    %v8715 = vpack.c.bf16 %v8713, %v8713
    %v8716 = vpack.c.bf16 %v8714, %v8714
    %s8717 = scalar_lea.vmem [#allocation6], 7680
    %v8718 = vld [vmem:[%s8717] sm:$0xff]
    %v8719 = vld [vmem:[%s8717 + $0x8] sm:$0xff]
    %v8720 = vld [vmem:[%s8717 + $0x10] sm:$0xff]
    %v8721 = vld [vmem:[%s8717 + $0x18] sm:$0xff]
    %v8722 = vld [vmem:[%s8717 + $0x20] sm:$0xff]
    %v8723 = vld [vmem:[%s8717 + $0x28] sm:$0xff]
    %v8724 = vld [vmem:[%s8717 + $0x30] sm:$0xff]
    %v8725 = vld [vmem:[%s8717 + $0x38] sm:$0xff]
    %v8726 = vld [vmem:[%s8717 + $0x40] sm:$0xff]
    %v8727 = vld [vmem:[%s8717 + $0x48] sm:$0xff]
    %v8728 = vld [vmem:[%s8717 + $0x50] sm:$0xff]
    %v8729 = vld [vmem:[%s8717 + $0x58] sm:$0xff]
    %v8730 = vld [vmem:[%s8717 + $0x60] sm:$0xff]
    %v8731 = vld [vmem:[%s8717 + $0x68] sm:$0xff]
    %v8732 = vld [vmem:[%s8717 + $0x70] sm:$0xff]
    %v8733 = vld [vmem:[%s8717 + $0x78] sm:$0xff]
    %v8734 = vld [vmem:[%s8717 + $0x80] sm:$0xff]
    %v8735 = vld [vmem:[%s8717 + $0x88] sm:$0xff]
    %v8736 = vld [vmem:[%s8717 + $0x90] sm:$0xff]
    %v8737 = vld [vmem:[%s8717 + $0x98] sm:$0xff]
    %v8738 = vld [vmem:[%s8717 + $0xa0] sm:$0xff]
    %v8739 = vld [vmem:[%s8717 + $0xa8] sm:$0xff]
    %v8740 = vld [vmem:[%s8717 + $0xb0] sm:$0xff]
    %v8741 = vld [vmem:[%s8717 + $0xb8] sm:$0xff]
    %v8742 = vld [vmem:[%s8717 + $0xc0] sm:$0xff]
    %v8743 = vld [vmem:[%s8717 + $0xc8] sm:$0xff]
    %v8744 = vld [vmem:[%s8717 + $0xd0] sm:$0xff]
    %v8745 = vld [vmem:[%s8717 + $0xd8] sm:$0xff]
    %v8746 = vld [vmem:[%s8717 + $0xe0] sm:$0xff]
    %v8747 = vld [vmem:[%s8717 + $0xe8] sm:$0xff]
    %v8748 = vld [vmem:[%s8717 + $0xf0] sm:$0xff]
    %v8749 = vld [vmem:[%s8717 + $0xf8] sm:$0xff]
    %v8750 = vld [vmem:[%s8717 + $0x100] sm:$0xff]
    %v8751 = vld [vmem:[%s8717 + $0x108] sm:$0xff]
    %v8752 = vld [vmem:[%s8717 + $0x110] sm:$0xff]
    %v8753 = vld [vmem:[%s8717 + $0x118] sm:$0xff]
    %v8754 = vld [vmem:[%s8717 + $0x120] sm:$0xff]
    %v8755 = vld [vmem:[%s8717 + $0x128] sm:$0xff]
    %v8756 = vld [vmem:[%s8717 + $0x130] sm:$0xff]
    %v8757 = vld [vmem:[%s8717 + $0x138] sm:$0xff]
    %v8758 = vld [vmem:[%s8717 + $0x140] sm:$0xff]
    %v8759 = vld [vmem:[%s8717 + $0x148] sm:$0xff]
    %v8760 = vld [vmem:[%s8717 + $0x150] sm:$0xff]
    %v8761 = vld [vmem:[%s8717 + $0x158] sm:$0xff]
    %v8762 = vld [vmem:[%s8717 + $0x160] sm:$0xff]
    %v8763 = vld [vmem:[%s8717 + $0x168] sm:$0xff]
    %v8764 = vld [vmem:[%s8717 + $0x170] sm:$0xff]
    %v8765 = vld [vmem:[%s8717 + $0x178] sm:$0xff]
    %v8814 = vunpack.c.l.b16 %v8718
    %v8815 = vunpack.c.h.b16 %v8718
    %v8816 = vunpack.c.l.b16 %v8719
    %v8817 = vunpack.c.h.b16 %v8719
    %v8818 = vunpack.c.l.b16 %v8720
    %v8819 = vunpack.c.h.b16 %v8720
    %v8820 = vunpack.c.l.b16 %v8721
    %v8821 = vunpack.c.h.b16 %v8721
    %v8822 = vunpack.c.l.b16 %v8722
    %v8823 = vunpack.c.h.b16 %v8722
    %v8824 = vunpack.c.l.b16 %v8723
    %v8825 = vunpack.c.h.b16 %v8723
    %v8826 = vunpack.c.l.b16 %v8724
    %v8827 = vunpack.c.h.b16 %v8724
    %v8828 = vunpack.c.l.b16 %v8725
    %v8829 = vunpack.c.h.b16 %v8725
    %v8830 = vunpack.c.l.b16 %v8726
    %v8831 = vunpack.c.h.b16 %v8726
    %v8832 = vunpack.c.l.b16 %v8727
    %v8833 = vunpack.c.h.b16 %v8727
    %v8834 = vunpack.c.l.b16 %v8728
    %v8835 = vunpack.c.h.b16 %v8728
    %v8836 = vunpack.c.l.b16 %v8729
    %v8837 = vunpack.c.h.b16 %v8729
    %v8838 = vunpack.c.l.b16 %v8730
    %v8839 = vunpack.c.h.b16 %v8730
    %v8840 = vunpack.c.l.b16 %v8731
    %v8841 = vunpack.c.h.b16 %v8731
    %v8842 = vunpack.c.l.b16 %v8732
    %v8843 = vunpack.c.h.b16 %v8732
    %v8844 = vunpack.c.l.b16 %v8733
    %v8845 = vunpack.c.h.b16 %v8733
    %v8846 = vunpack.c.l.b16 %v8734
    %v8847 = vunpack.c.h.b16 %v8734
    %v8848 = vunpack.c.l.b16 %v8735
    %v8849 = vunpack.c.h.b16 %v8735
    %v8850 = vunpack.c.l.b16 %v8736
    %v8851 = vunpack.c.h.b16 %v8736
    %v8852 = vunpack.c.l.b16 %v8737
    %v8853 = vunpack.c.h.b16 %v8737
    %v8854 = vunpack.c.l.b16 %v8738
    %v8855 = vunpack.c.h.b16 %v8738
    %v8856 = vunpack.c.l.b16 %v8739
    %v8857 = vunpack.c.h.b16 %v8739
    %v8858 = vunpack.c.l.b16 %v8740
    %v8859 = vunpack.c.h.b16 %v8740
    %v8860 = vunpack.c.l.b16 %v8741
    %v8861 = vunpack.c.h.b16 %v8741
    %v8862 = vunpack.c.l.b16 %v8742
    %v8863 = vunpack.c.h.b16 %v8742
    %v8864 = vunpack.c.l.b16 %v8743
    %v8865 = vunpack.c.h.b16 %v8743
    %v8866 = vunpack.c.l.b16 %v8744
    %v8867 = vunpack.c.h.b16 %v8744
    %v8868 = vunpack.c.l.b16 %v8745
    %v8869 = vunpack.c.h.b16 %v8745
    %v8870 = vunpack.c.l.b16 %v8746
    %v8871 = vunpack.c.h.b16 %v8746
    %v8872 = vunpack.c.l.b16 %v8747
    %v8873 = vunpack.c.h.b16 %v8747
    %v8874 = vunpack.c.l.b16 %v8748
    %v8875 = vunpack.c.h.b16 %v8748
    %v8876 = vunpack.c.l.b16 %v8749
    %v8877 = vunpack.c.h.b16 %v8749
    %v8878 = vunpack.c.l.b16 %v8750
    %v8879 = vunpack.c.h.b16 %v8750
    %v8880 = vunpack.c.l.b16 %v8751
    %v8881 = vunpack.c.h.b16 %v8751
    %v8882 = vunpack.c.l.b16 %v8752
    %v8883 = vunpack.c.h.b16 %v8752
    %v8884 = vunpack.c.l.b16 %v8753
    %v8885 = vunpack.c.h.b16 %v8753
    %v8886 = vunpack.c.l.b16 %v8754
    %v8887 = vunpack.c.h.b16 %v8754
    %v8888 = vunpack.c.l.b16 %v8755
    %v8889 = vunpack.c.h.b16 %v8755
    %v8890 = vunpack.c.l.b16 %v8756
    %v8891 = vunpack.c.h.b16 %v8756
    %v8892 = vunpack.c.l.b16 %v8757
    %v8893 = vunpack.c.h.b16 %v8757
    %v8894 = vunpack.c.l.b16 %v8758
    %v8895 = vunpack.c.h.b16 %v8758
    %v8896 = vunpack.c.l.b16 %v8759
    %v8897 = vunpack.c.h.b16 %v8759
    %v8898 = vunpack.c.l.b16 %v8760
    %v8899 = vunpack.c.h.b16 %v8760
    %v8900 = vunpack.c.l.b16 %v8761
    %v8901 = vunpack.c.h.b16 %v8761
    %v8902 = vunpack.c.l.b16 %v8762
    %v8903 = vunpack.c.h.b16 %v8762
    %v8904 = vunpack.c.l.b16 %v8763
    %v8905 = vunpack.c.h.b16 %v8763
    %v8906 = vunpack.c.l.b16 %v8764
    %v8907 = vunpack.c.h.b16 %v8764
    %v8908 = vunpack.c.l.b16 %v8765
    %v8909 = vunpack.c.h.b16 %v8765
    %v8910 = vpack.c.b16 %v8818, %v8814
    %v8911 = vpack.c.b16 %v8819, %v8815
    %v8912 = vpack.c.b16 %v8820, %v8816
    %v8913 = vpack.c.b16 %v8821, %v8817
    %v8914 = vpack.c.b16 %v8826, %v8822
    %v8915 = vpack.c.b16 %v8827, %v8823
    %v8916 = vpack.c.b16 %v8828, %v8824
    %v8917 = vpack.c.b16 %v8829, %v8825
    %v8918 = vpack.c.b16 %v8834, %v8830
    %v8919 = vpack.c.b16 %v8835, %v8831
    %v8920 = vpack.c.b16 %v8836, %v8832
    %v8921 = vpack.c.b16 %v8837, %v8833
    %v8922 = vpack.c.b16 %v8842, %v8838
    %v8923 = vpack.c.b16 %v8843, %v8839
    %v8924 = vpack.c.b16 %v8844, %v8840
    %v8925 = vpack.c.b16 %v8845, %v8841
    %v8926 = vpack.c.b16 %v8850, %v8846
    %v8927 = vpack.c.b16 %v8851, %v8847
    %v8928 = vpack.c.b16 %v8852, %v8848
    %v8929 = vpack.c.b16 %v8853, %v8849
    %v8930 = vpack.c.b16 %v8858, %v8854
    %v8931 = vpack.c.b16 %v8859, %v8855
    %v8932 = vpack.c.b16 %v8860, %v8856
    %v8933 = vpack.c.b16 %v8861, %v8857
    %v8934 = vpack.c.b16 %v8866, %v8862
    %v8935 = vpack.c.b16 %v8867, %v8863
    %v8936 = vpack.c.b16 %v8868, %v8864
    %v8937 = vpack.c.b16 %v8869, %v8865
    %v8938 = vpack.c.b16 %v8874, %v8870
    %v8939 = vpack.c.b16 %v8875, %v8871
    %v8940 = vpack.c.b16 %v8876, %v8872
    %v8941 = vpack.c.b16 %v8877, %v8873
    %v8942 = vpack.c.b16 %v8882, %v8878
    %v8943 = vpack.c.b16 %v8883, %v8879
    %v8944 = vpack.c.b16 %v8884, %v8880
    %v8945 = vpack.c.b16 %v8885, %v8881
    %v8946 = vpack.c.b16 %v8890, %v8886
    %v8947 = vpack.c.b16 %v8891, %v8887
    %v8948 = vpack.c.b16 %v8892, %v8888
    %v8949 = vpack.c.b16 %v8893, %v8889
    %v8950 = vpack.c.b16 %v8898, %v8894
    %v8951 = vpack.c.b16 %v8899, %v8895
    %v8952 = vpack.c.b16 %v8900, %v8896
    %v8953 = vpack.c.b16 %v8901, %v8897
    %v8954 = vpack.c.b16 %v8906, %v8902
    %v8955 = vpack.c.b16 %v8907, %v8903
    %v8956 = vpack.c.b16 %v8908, %v8904
    %v8957 = vpack.c.b16 %v8909, %v8905
    %v9007 = vsel %vm184, %v8716, 0
    %9009 = vmatpush.bf16.msra.mxu0 %v8938
    %9010 = vmatpush.bf16.msra.mxu0 %v8934
    %9011 = vmatpush.bf16.msra.mxu0 %v8930
    %9012 = vmatpush.bf16.msra.mxu0 %v8926
    %9013 = vmatpush.bf16.msra.mxu0 %v8922
    %9014 = vmatpush.bf16.msra.mxu0 %v8918
    %9015 = vmatpush.bf16.msra.mxu0 %v8914
    %9016 = vmatpush.bf16.msra.mxu0 %v8910
    %9017 = vmatmul.bf16.gmra.mxu0 %v8715
    %v9018 = vpop.f32.mrf.mxu0
    %v9019 = vadd.f32 0.0, %v9018
    %v9020 = vpop.f32.mrf.mxu0
    %9021 = vdwg.mxu0
    %9022 = vmatpush.bf16.msra.mxu0 0
    %9023 = vmatpush.bf16.msra.mxu0 0
    %9024 = vmatpush.bf16.msra.mxu0 0
    %9025 = vmatpush.bf16.msra.mxu0 0
    %9026 = vmatpush.bf16.msra.mxu0 %v8954
    %9027 = vmatpush.bf16.msra.mxu0 %v8950
    %9028 = vmatpush.bf16.msra.mxu0 %v8946
    %9029 = vmatpush.bf16.msra.mxu0 %v8942
    %9030 = vmatmul.bf16.gmra.mxu0 %v9007
    %v9031 = vpop.f32.mrf.mxu0
    %v9032 = vadd.f32 %v9019, %v9031
    %v9033 = vpop.f32.mrf.mxu0
    %9034 = vdwg.mxu0
    %9035 = vmatpush.bf16.msra.mxu0 %v8939
    %9036 = vmatpush.bf16.msra.mxu0 %v8935
    %9037 = vmatpush.bf16.msra.mxu0 %v8931
    %9038 = vmatpush.bf16.msra.mxu0 %v8927
    %9039 = vmatpush.bf16.msra.mxu0 %v8923
    %9040 = vmatpush.bf16.msra.mxu0 %v8919
    %9041 = vmatpush.bf16.msra.mxu0 %v8915
    %9042 = vmatpush.bf16.msra.mxu0 %v8911
    %9043 = vmatmul.bf16.gmra.mxu0 %v8715
    %v9044 = vpop.f32.mrf.mxu0
    %v9045 = vadd.f32 0.0, %v9044
    %v9046 = vpop.f32.mrf.mxu0
    %9047 = vdwg.mxu0
    %9048 = vmatpush.bf16.msra.mxu0 0
    %9049 = vmatpush.bf16.msra.mxu0 0
    %9050 = vmatpush.bf16.msra.mxu0 0
    %9051 = vmatpush.bf16.msra.mxu0 0
    %9052 = vmatpush.bf16.msra.mxu0 %v8955
    %9053 = vmatpush.bf16.msra.mxu0 %v8951
    %9054 = vmatpush.bf16.msra.mxu0 %v8947
    %9055 = vmatpush.bf16.msra.mxu0 %v8943
    %9056 = vmatmul.bf16.gmra.mxu0 %v9007
    %v9057 = vpop.f32.mrf.mxu0
    %v9058 = vadd.f32 %v9045, %v9057
    %v9059 = vpop.f32.mrf.mxu0
    %9060 = vdwg.mxu0
    %9061 = vmatpush.bf16.msra.mxu0 %v8940
    %9062 = vmatpush.bf16.msra.mxu0 %v8936
    %9063 = vmatpush.bf16.msra.mxu0 %v8932
    %9064 = vmatpush.bf16.msra.mxu0 %v8928
    %9065 = vmatpush.bf16.msra.mxu0 %v8924
    %9066 = vmatpush.bf16.msra.mxu0 %v8920
    %9067 = vmatpush.bf16.msra.mxu0 %v8916
    %9068 = vmatpush.bf16.msra.mxu0 %v8912
    %9069 = vmatmul.bf16.gmra.mxu0 %v8715
    %v9070 = vpop.f32.mrf.mxu0
    %v9071 = vadd.f32 0.0, %v9070
    %v9072 = vpop.f32.mrf.mxu0
    %9073 = vdwg.mxu0
    %9074 = vmatpush.bf16.msra.mxu0 0
    %9075 = vmatpush.bf16.msra.mxu0 0
    %9076 = vmatpush.bf16.msra.mxu0 0
    %9077 = vmatpush.bf16.msra.mxu0 0
    %9078 = vmatpush.bf16.msra.mxu0 %v8956
    %9079 = vmatpush.bf16.msra.mxu0 %v8952
    %9080 = vmatpush.bf16.msra.mxu0 %v8948
    %9081 = vmatpush.bf16.msra.mxu0 %v8944
    %9082 = vmatmul.bf16.gmra.mxu0 %v9007
    %v9083 = vpop.f32.mrf.mxu0
    %v9084 = vadd.f32 %v9071, %v9083
    %v9085 = vpop.f32.mrf.mxu0
    %9086 = vdwg.mxu0
    %9087 = vmatpush.bf16.msra.mxu0 %v8941
    %9088 = vmatpush.bf16.msra.mxu0 %v8937
    %9089 = vmatpush.bf16.msra.mxu0 %v8933
    %9090 = vmatpush.bf16.msra.mxu0 %v8929
    %9091 = vmatpush.bf16.msra.mxu0 %v8925
    %9092 = vmatpush.bf16.msra.mxu0 %v8921
    %9093 = vmatpush.bf16.msra.mxu0 %v8917
    %9094 = vmatpush.bf16.msra.mxu0 %v8913
    %9095 = vmatmul.bf16.gmra.mxu0 %v8715
    %v9096 = vpop.f32.mrf.mxu0
    %v9097 = vadd.f32 0.0, %v9096
    %v9098 = vpop.f32.mrf.mxu0
    %9099 = vdwg.mxu0
    %9100 = vmatpush.bf16.msra.mxu0 0
    %9101 = vmatpush.bf16.msra.mxu0 0
    %9102 = vmatpush.bf16.msra.mxu0 0
    %9103 = vmatpush.bf16.msra.mxu0 0
    %9104 = vmatpush.bf16.msra.mxu0 %v8957
    %9105 = vmatpush.bf16.msra.mxu0 %v8953
    %9106 = vmatpush.bf16.msra.mxu0 %v8949
    %9107 = vmatpush.bf16.msra.mxu0 %v8945
    %9108 = vmatmul.bf16.gmra.mxu0 %v9007
    %v9109 = vpop.f32.mrf.mxu0
    %v9110 = vadd.f32 %v9097, %v9109
    %v9111 = vpop.f32.mrf.mxu0
    %9112 = vdwg.mxu0
    %v9113 = vadd.f32 %v8709, %v9032
    %v9114 = vadd.f32 %v8710, %v9058
    %v9115 = vadd.f32 %v8711, %v9084
    %v9116 = vadd.f32 %v8712, %v9110
    %v9117 = vmul.f32 %v124, %v640
    %v9118 = vmul.f32 %v125, %v641
    %v9119 = vpack.c.bf16 %v9117, %v9117
    %v9120 = vpack.c.bf16 %v9118, %v9118
    %s9121 = scalar_lea.vmem [#allocation6], 8064
    %v9122 = vld [vmem:[%s9121] sm:$0xff]
    %v9123 = vld [vmem:[%s9121 + $0x8] sm:$0xff]
    %v9124 = vld [vmem:[%s9121 + $0x10] sm:$0xff]
    %v9125 = vld [vmem:[%s9121 + $0x18] sm:$0xff]
    %v9126 = vld [vmem:[%s9121 + $0x20] sm:$0xff]
    %v9127 = vld [vmem:[%s9121 + $0x28] sm:$0xff]
    %v9128 = vld [vmem:[%s9121 + $0x30] sm:$0xff]
    %v9129 = vld [vmem:[%s9121 + $0x38] sm:$0xff]
    %v9130 = vld [vmem:[%s9121 + $0x40] sm:$0xff]
    %v9131 = vld [vmem:[%s9121 + $0x48] sm:$0xff]
    %v9132 = vld [vmem:[%s9121 + $0x50] sm:$0xff]
    %v9133 = vld [vmem:[%s9121 + $0x58] sm:$0xff]
    %v9134 = vld [vmem:[%s9121 + $0x60] sm:$0xff]
    %v9135 = vld [vmem:[%s9121 + $0x68] sm:$0xff]
    %v9136 = vld [vmem:[%s9121 + $0x70] sm:$0xff]
    %v9137 = vld [vmem:[%s9121 + $0x78] sm:$0xff]
    %v9138 = vld [vmem:[%s9121 + $0x80] sm:$0xff]
    %v9139 = vld [vmem:[%s9121 + $0x88] sm:$0xff]
    %v9140 = vld [vmem:[%s9121 + $0x90] sm:$0xff]
    %v9141 = vld [vmem:[%s9121 + $0x98] sm:$0xff]
    %v9142 = vld [vmem:[%s9121 + $0xa0] sm:$0xff]
    %v9143 = vld [vmem:[%s9121 + $0xa8] sm:$0xff]
    %v9144 = vld [vmem:[%s9121 + $0xb0] sm:$0xff]
    %v9145 = vld [vmem:[%s9121 + $0xb8] sm:$0xff]
    %v9146 = vld [vmem:[%s9121 + $0xc0] sm:$0xff]
    %v9147 = vld [vmem:[%s9121 + $0xc8] sm:$0xff]
    %v9148 = vld [vmem:[%s9121 + $0xd0] sm:$0xff]
    %v9149 = vld [vmem:[%s9121 + $0xd8] sm:$0xff]
    %v9150 = vld [vmem:[%s9121 + $0xe0] sm:$0xff]
    %v9151 = vld [vmem:[%s9121 + $0xe8] sm:$0xff]
    %v9152 = vld [vmem:[%s9121 + $0xf0] sm:$0xff]
    %v9153 = vld [vmem:[%s9121 + $0xf8] sm:$0xff]
    %v9154 = vld [vmem:[%s9121 + $0x100] sm:$0xff]
    %v9155 = vld [vmem:[%s9121 + $0x108] sm:$0xff]
    %v9156 = vld [vmem:[%s9121 + $0x110] sm:$0xff]
    %v9157 = vld [vmem:[%s9121 + $0x118] sm:$0xff]
    %v9158 = vld [vmem:[%s9121 + $0x120] sm:$0xff]
    %v9159 = vld [vmem:[%s9121 + $0x128] sm:$0xff]
    %v9160 = vld [vmem:[%s9121 + $0x130] sm:$0xff]
    %v9161 = vld [vmem:[%s9121 + $0x138] sm:$0xff]
    %v9162 = vld [vmem:[%s9121 + $0x140] sm:$0xff]
    %v9163 = vld [vmem:[%s9121 + $0x148] sm:$0xff]
    %v9164 = vld [vmem:[%s9121 + $0x150] sm:$0xff]
    %v9165 = vld [vmem:[%s9121 + $0x158] sm:$0xff]
    %v9166 = vld [vmem:[%s9121 + $0x160] sm:$0xff]
    %v9167 = vld [vmem:[%s9121 + $0x168] sm:$0xff]
    %v9168 = vld [vmem:[%s9121 + $0x170] sm:$0xff]
    %v9169 = vld [vmem:[%s9121 + $0x178] sm:$0xff]
    %v9218 = vunpack.c.l.b16 %v9122
    %v9219 = vunpack.c.h.b16 %v9122
    %v9220 = vunpack.c.l.b16 %v9123
    %v9221 = vunpack.c.h.b16 %v9123
    %v9222 = vunpack.c.l.b16 %v9124
    %v9223 = vunpack.c.h.b16 %v9124
    %v9224 = vunpack.c.l.b16 %v9125
    %v9225 = vunpack.c.h.b16 %v9125
    %v9226 = vunpack.c.l.b16 %v9126
    %v9227 = vunpack.c.h.b16 %v9126
    %v9228 = vunpack.c.l.b16 %v9127
    %v9229 = vunpack.c.h.b16 %v9127
    %v9230 = vunpack.c.l.b16 %v9128
    %v9231 = vunpack.c.h.b16 %v9128
    %v9232 = vunpack.c.l.b16 %v9129
    %v9233 = vunpack.c.h.b16 %v9129
    %v9234 = vunpack.c.l.b16 %v9130
    %v9235 = vunpack.c.h.b16 %v9130
    %v9236 = vunpack.c.l.b16 %v9131
    %v9237 = vunpack.c.h.b16 %v9131
    %v9238 = vunpack.c.l.b16 %v9132
    %v9239 = vunpack.c.h.b16 %v9132
    %v9240 = vunpack.c.l.b16 %v9133
    %v9241 = vunpack.c.h.b16 %v9133
    %v9242 = vunpack.c.l.b16 %v9134
    %v9243 = vunpack.c.h.b16 %v9134
    %v9244 = vunpack.c.l.b16 %v9135
    %v9245 = vunpack.c.h.b16 %v9135
    %v9246 = vunpack.c.l.b16 %v9136
    %v9247 = vunpack.c.h.b16 %v9136
    %v9248 = vunpack.c.l.b16 %v9137
    %v9249 = vunpack.c.h.b16 %v9137
    %v9250 = vunpack.c.l.b16 %v9138
    %v9251 = vunpack.c.h.b16 %v9138
    %v9252 = vunpack.c.l.b16 %v9139
    %v9253 = vunpack.c.h.b16 %v9139
    %v9254 = vunpack.c.l.b16 %v9140
    %v9255 = vunpack.c.h.b16 %v9140
    %v9256 = vunpack.c.l.b16 %v9141
    %v9257 = vunpack.c.h.b16 %v9141
    %v9258 = vunpack.c.l.b16 %v9142
    %v9259 = vunpack.c.h.b16 %v9142
    %v9260 = vunpack.c.l.b16 %v9143
    %v9261 = vunpack.c.h.b16 %v9143
    %v9262 = vunpack.c.l.b16 %v9144
    %v9263 = vunpack.c.h.b16 %v9144
    %v9264 = vunpack.c.l.b16 %v9145
    %v9265 = vunpack.c.h.b16 %v9145
    %v9266 = vunpack.c.l.b16 %v9146
    %v9267 = vunpack.c.h.b16 %v9146
    %v9268 = vunpack.c.l.b16 %v9147
    %v9269 = vunpack.c.h.b16 %v9147
    %v9270 = vunpack.c.l.b16 %v9148
    %v9271 = vunpack.c.h.b16 %v9148
    %v9272 = vunpack.c.l.b16 %v9149
    %v9273 = vunpack.c.h.b16 %v9149
    %v9274 = vunpack.c.l.b16 %v9150
    %v9275 = vunpack.c.h.b16 %v9150
    %v9276 = vunpack.c.l.b16 %v9151
    %v9277 = vunpack.c.h.b16 %v9151
    %v9278 = vunpack.c.l.b16 %v9152
    %v9279 = vunpack.c.h.b16 %v9152
    %v9280 = vunpack.c.l.b16 %v9153
    %v9281 = vunpack.c.h.b16 %v9153
    %v9282 = vunpack.c.l.b16 %v9154
    %v9283 = vunpack.c.h.b16 %v9154
    %v9284 = vunpack.c.l.b16 %v9155
    %v9285 = vunpack.c.h.b16 %v9155
    %v9286 = vunpack.c.l.b16 %v9156
    %v9287 = vunpack.c.h.b16 %v9156
    %v9288 = vunpack.c.l.b16 %v9157
    %v9289 = vunpack.c.h.b16 %v9157
    %v9290 = vunpack.c.l.b16 %v9158
    %v9291 = vunpack.c.h.b16 %v9158
    %v9292 = vunpack.c.l.b16 %v9159
    %v9293 = vunpack.c.h.b16 %v9159
    %v9294 = vunpack.c.l.b16 %v9160
    %v9295 = vunpack.c.h.b16 %v9160
    %v9296 = vunpack.c.l.b16 %v9161
    %v9297 = vunpack.c.h.b16 %v9161
    %v9298 = vunpack.c.l.b16 %v9162
    %v9299 = vunpack.c.h.b16 %v9162
    %v9300 = vunpack.c.l.b16 %v9163
    %v9301 = vunpack.c.h.b16 %v9163
    %v9302 = vunpack.c.l.b16 %v9164
    %v9303 = vunpack.c.h.b16 %v9164
    %v9304 = vunpack.c.l.b16 %v9165
    %v9305 = vunpack.c.h.b16 %v9165
    %v9306 = vunpack.c.l.b16 %v9166
    %v9307 = vunpack.c.h.b16 %v9166
    %v9308 = vunpack.c.l.b16 %v9167
    %v9309 = vunpack.c.h.b16 %v9167
    %v9310 = vunpack.c.l.b16 %v9168
    %v9311 = vunpack.c.h.b16 %v9168
    %v9312 = vunpack.c.l.b16 %v9169
    %v9313 = vunpack.c.h.b16 %v9169
    %v9314 = vpack.c.b16 %v9222, %v9218
    %v9315 = vpack.c.b16 %v9223, %v9219
    %v9316 = vpack.c.b16 %v9224, %v9220
    %v9317 = vpack.c.b16 %v9225, %v9221
    %v9318 = vpack.c.b16 %v9230, %v9226
    %v9319 = vpack.c.b16 %v9231, %v9227
    %v9320 = vpack.c.b16 %v9232, %v9228
    %v9321 = vpack.c.b16 %v9233, %v9229
    %v9322 = vpack.c.b16 %v9238, %v9234
    %v9323 = vpack.c.b16 %v9239, %v9235
    %v9324 = vpack.c.b16 %v9240, %v9236
    %v9325 = vpack.c.b16 %v9241, %v9237
    %v9326 = vpack.c.b16 %v9246, %v9242
    %v9327 = vpack.c.b16 %v9247, %v9243
    %v9328 = vpack.c.b16 %v9248, %v9244
    %v9329 = vpack.c.b16 %v9249, %v9245
    %v9330 = vpack.c.b16 %v9254, %v9250
    %v9331 = vpack.c.b16 %v9255, %v9251
    %v9332 = vpack.c.b16 %v9256, %v9252
    %v9333 = vpack.c.b16 %v9257, %v9253
    %v9334 = vpack.c.b16 %v9262, %v9258
    %v9335 = vpack.c.b16 %v9263, %v9259
    %v9336 = vpack.c.b16 %v9264, %v9260
    %v9337 = vpack.c.b16 %v9265, %v9261
    %v9338 = vpack.c.b16 %v9270, %v9266
    %v9339 = vpack.c.b16 %v9271, %v9267
    %v9340 = vpack.c.b16 %v9272, %v9268
    %v9341 = vpack.c.b16 %v9273, %v9269
    %v9342 = vpack.c.b16 %v9278, %v9274
    %v9343 = vpack.c.b16 %v9279, %v9275
    %v9344 = vpack.c.b16 %v9280, %v9276
    %v9345 = vpack.c.b16 %v9281, %v9277
    %v9346 = vpack.c.b16 %v9286, %v9282
    %v9347 = vpack.c.b16 %v9287, %v9283
    %v9348 = vpack.c.b16 %v9288, %v9284
    %v9349 = vpack.c.b16 %v9289, %v9285
    %v9350 = vpack.c.b16 %v9294, %v9290
    %v9351 = vpack.c.b16 %v9295, %v9291
    %v9352 = vpack.c.b16 %v9296, %v9292
    %v9353 = vpack.c.b16 %v9297, %v9293
    %v9354 = vpack.c.b16 %v9302, %v9298
    %v9355 = vpack.c.b16 %v9303, %v9299
    %v9356 = vpack.c.b16 %v9304, %v9300
    %v9357 = vpack.c.b16 %v9305, %v9301
    %v9358 = vpack.c.b16 %v9310, %v9306
    %v9359 = vpack.c.b16 %v9311, %v9307
    %v9360 = vpack.c.b16 %v9312, %v9308
    %v9361 = vpack.c.b16 %v9313, %v9309
    %v9411 = vsel %vm184, %v9120, 0
    %9413 = vmatpush.bf16.msra.mxu0 %v9342
    %9414 = vmatpush.bf16.msra.mxu0 %v9338
    %9415 = vmatpush.bf16.msra.mxu0 %v9334
    %9416 = vmatpush.bf16.msra.mxu0 %v9330
    %9417 = vmatpush.bf16.msra.mxu0 %v9326
    %9418 = vmatpush.bf16.msra.mxu0 %v9322
    %9419 = vmatpush.bf16.msra.mxu0 %v9318
    %9420 = vmatpush.bf16.msra.mxu0 %v9314
    %9421 = vmatmul.bf16.gmra.mxu0 %v9119
    %v9422 = vpop.f32.mrf.mxu0
    %v9423 = vadd.f32 0.0, %v9422
    %v9424 = vpop.f32.mrf.mxu0
    %9425 = vdwg.mxu0
    %9426 = vmatpush.bf16.msra.mxu0 0
    %9427 = vmatpush.bf16.msra.mxu0 0
    %9428 = vmatpush.bf16.msra.mxu0 0
    %9429 = vmatpush.bf16.msra.mxu0 0
    %9430 = vmatpush.bf16.msra.mxu0 %v9358
    %9431 = vmatpush.bf16.msra.mxu0 %v9354
    %9432 = vmatpush.bf16.msra.mxu0 %v9350
    %9433 = vmatpush.bf16.msra.mxu0 %v9346
    %9434 = vmatmul.bf16.gmra.mxu0 %v9411
    %v9435 = vpop.f32.mrf.mxu0
    %v9436 = vadd.f32 %v9423, %v9435
    %v9437 = vpop.f32.mrf.mxu0
    %9438 = vdwg.mxu0
    %9439 = vmatpush.bf16.msra.mxu0 %v9343
    %9440 = vmatpush.bf16.msra.mxu0 %v9339
    %9441 = vmatpush.bf16.msra.mxu0 %v9335
    %9442 = vmatpush.bf16.msra.mxu0 %v9331
    %9443 = vmatpush.bf16.msra.mxu0 %v9327
    %9444 = vmatpush.bf16.msra.mxu0 %v9323
    %9445 = vmatpush.bf16.msra.mxu0 %v9319
    %9446 = vmatpush.bf16.msra.mxu0 %v9315
    %9447 = vmatmul.bf16.gmra.mxu0 %v9119
    %v9448 = vpop.f32.mrf.mxu0
    %v9449 = vadd.f32 0.0, %v9448
    %v9450 = vpop.f32.mrf.mxu0
    %9451 = vdwg.mxu0
    %9452 = vmatpush.bf16.msra.mxu0 0
    %9453 = vmatpush.bf16.msra.mxu0 0
    %9454 = vmatpush.bf16.msra.mxu0 0
    %9455 = vmatpush.bf16.msra.mxu0 0
    %9456 = vmatpush.bf16.msra.mxu0 %v9359
    %9457 = vmatpush.bf16.msra.mxu0 %v9355
    %9458 = vmatpush.bf16.msra.mxu0 %v9351
    %9459 = vmatpush.bf16.msra.mxu0 %v9347
    %9460 = vmatmul.bf16.gmra.mxu0 %v9411
    %v9461 = vpop.f32.mrf.mxu0
    %v9462 = vadd.f32 %v9449, %v9461
    %v9463 = vpop.f32.mrf.mxu0
    %9464 = vdwg.mxu0
    %9465 = vmatpush.bf16.msra.mxu0 %v9344
    %9466 = vmatpush.bf16.msra.mxu0 %v9340
    %9467 = vmatpush.bf16.msra.mxu0 %v9336
    %9468 = vmatpush.bf16.msra.mxu0 %v9332
    %9469 = vmatpush.bf16.msra.mxu0 %v9328
    %9470 = vmatpush.bf16.msra.mxu0 %v9324
    %9471 = vmatpush.bf16.msra.mxu0 %v9320
    %9472 = vmatpush.bf16.msra.mxu0 %v9316
    %9473 = vmatmul.bf16.gmra.mxu0 %v9119
    %v9474 = vpop.f32.mrf.mxu0
    %v9475 = vadd.f32 0.0, %v9474
    %v9476 = vpop.f32.mrf.mxu0
    %9477 = vdwg.mxu0
    %9478 = vmatpush.bf16.msra.mxu0 0
    %9479 = vmatpush.bf16.msra.mxu0 0
    %9480 = vmatpush.bf16.msra.mxu0 0
    %9481 = vmatpush.bf16.msra.mxu0 0
    %9482 = vmatpush.bf16.msra.mxu0 %v9360
    %9483 = vmatpush.bf16.msra.mxu0 %v9356
    %9484 = vmatpush.bf16.msra.mxu0 %v9352
    %9485 = vmatpush.bf16.msra.mxu0 %v9348
    %9486 = vmatmul.bf16.gmra.mxu0 %v9411
    %v9487 = vpop.f32.mrf.mxu0
    %v9488 = vadd.f32 %v9475, %v9487
    %v9489 = vpop.f32.mrf.mxu0
    %9490 = vdwg.mxu0
    %9491 = vmatpush.bf16.msra.mxu0 %v9345
    %9492 = vmatpush.bf16.msra.mxu0 %v9341
    %9493 = vmatpush.bf16.msra.mxu0 %v9337
    %9494 = vmatpush.bf16.msra.mxu0 %v9333
    %9495 = vmatpush.bf16.msra.mxu0 %v9329
    %9496 = vmatpush.bf16.msra.mxu0 %v9325
    %9497 = vmatpush.bf16.msra.mxu0 %v9321
    %9498 = vmatpush.bf16.msra.mxu0 %v9317
    %9499 = vmatmul.bf16.gmra.mxu0 %v9119
    %v9500 = vpop.f32.mrf.mxu0
    %v9501 = vadd.f32 0.0, %v9500
    %v9502 = vpop.f32.mrf.mxu0
    %9503 = vdwg.mxu0
    %9504 = vmatpush.bf16.msra.mxu0 0
    %9505 = vmatpush.bf16.msra.mxu0 0
    %9506 = vmatpush.bf16.msra.mxu0 0
    %9507 = vmatpush.bf16.msra.mxu0 0
    %9508 = vmatpush.bf16.msra.mxu0 %v9361
    %9509 = vmatpush.bf16.msra.mxu0 %v9357
    %9510 = vmatpush.bf16.msra.mxu0 %v9353
    %9511 = vmatpush.bf16.msra.mxu0 %v9349
    %9512 = vmatmul.bf16.gmra.mxu0 %v9411
    %v9513 = vpop.f32.mrf.mxu0
    %v9514 = vadd.f32 %v9501, %v9513
    %v9515 = vpop.f32.mrf.mxu0
    %9516 = vdwg.mxu0
    %v9517 = vadd.f32 %v9113, %v9436
    %v9518 = vadd.f32 %v9114, %v9462
    %v9519 = vadd.f32 %v9115, %v9488
    %v9520 = vadd.f32 %v9116, %v9514
    %v9521 = vmul.f32 %v126, %v640
    %v9522 = vmul.f32 %v127, %v641
    %v9523 = vpack.c.bf16 %v9521, %v9521
    %v9524 = vpack.c.bf16 %v9522, %v9522
    %s9525 = scalar_lea.vmem [#allocation6], 8448
    %v9526 = vld [vmem:[%s9525] sm:$0xff]
    %v9527 = vld [vmem:[%s9525 + $0x8] sm:$0xff]
    %v9528 = vld [vmem:[%s9525 + $0x10] sm:$0xff]
    %v9529 = vld [vmem:[%s9525 + $0x18] sm:$0xff]
    %v9530 = vld [vmem:[%s9525 + $0x20] sm:$0xff]
    %v9531 = vld [vmem:[%s9525 + $0x28] sm:$0xff]
    %v9532 = vld [vmem:[%s9525 + $0x30] sm:$0xff]
    %v9533 = vld [vmem:[%s9525 + $0x38] sm:$0xff]
    %v9534 = vld [vmem:[%s9525 + $0x40] sm:$0xff]
    %v9535 = vld [vmem:[%s9525 + $0x48] sm:$0xff]
    %v9536 = vld [vmem:[%s9525 + $0x50] sm:$0xff]
    %v9537 = vld [vmem:[%s9525 + $0x58] sm:$0xff]
    %v9538 = vld [vmem:[%s9525 + $0x60] sm:$0xff]
    %v9539 = vld [vmem:[%s9525 + $0x68] sm:$0xff]
    %v9540 = vld [vmem:[%s9525 + $0x70] sm:$0xff]
    %v9541 = vld [vmem:[%s9525 + $0x78] sm:$0xff]
    %v9542 = vld [vmem:[%s9525 + $0x80] sm:$0xff]
    %v9543 = vld [vmem:[%s9525 + $0x88] sm:$0xff]
    %v9544 = vld [vmem:[%s9525 + $0x90] sm:$0xff]
    %v9545 = vld [vmem:[%s9525 + $0x98] sm:$0xff]
    %v9546 = vld [vmem:[%s9525 + $0xa0] sm:$0xff]
    %v9547 = vld [vmem:[%s9525 + $0xa8] sm:$0xff]
    %v9548 = vld [vmem:[%s9525 + $0xb0] sm:$0xff]
    %v9549 = vld [vmem:[%s9525 + $0xb8] sm:$0xff]
    %v9550 = vld [vmem:[%s9525 + $0xc0] sm:$0xff]
    %v9551 = vld [vmem:[%s9525 + $0xc8] sm:$0xff]
    %v9552 = vld [vmem:[%s9525 + $0xd0] sm:$0xff]
    %v9553 = vld [vmem:[%s9525 + $0xd8] sm:$0xff]
    %v9554 = vld [vmem:[%s9525 + $0xe0] sm:$0xff]
    %v9555 = vld [vmem:[%s9525 + $0xe8] sm:$0xff]
    %v9556 = vld [vmem:[%s9525 + $0xf0] sm:$0xff]
    %v9557 = vld [vmem:[%s9525 + $0xf8] sm:$0xff]
    %v9558 = vld [vmem:[%s9525 + $0x100] sm:$0xff]
    %v9559 = vld [vmem:[%s9525 + $0x108] sm:$0xff]
    %v9560 = vld [vmem:[%s9525 + $0x110] sm:$0xff]
    %v9561 = vld [vmem:[%s9525 + $0x118] sm:$0xff]
    %v9562 = vld [vmem:[%s9525 + $0x120] sm:$0xff]
    %v9563 = vld [vmem:[%s9525 + $0x128] sm:$0xff]
    %v9564 = vld [vmem:[%s9525 + $0x130] sm:$0xff]
    %v9565 = vld [vmem:[%s9525 + $0x138] sm:$0xff]
    %v9566 = vld [vmem:[%s9525 + $0x140] sm:$0xff]
    %v9567 = vld [vmem:[%s9525 + $0x148] sm:$0xff]
    %v9568 = vld [vmem:[%s9525 + $0x150] sm:$0xff]
    %v9569 = vld [vmem:[%s9525 + $0x158] sm:$0xff]
    %v9570 = vld [vmem:[%s9525 + $0x160] sm:$0xff]
    %v9571 = vld [vmem:[%s9525 + $0x168] sm:$0xff]
    %v9572 = vld [vmem:[%s9525 + $0x170] sm:$0xff]
    %v9573 = vld [vmem:[%s9525 + $0x178] sm:$0xff]
    %v9622 = vunpack.c.l.b16 %v9526
    %v9623 = vunpack.c.h.b16 %v9526
    %v9624 = vunpack.c.l.b16 %v9527
    %v9625 = vunpack.c.h.b16 %v9527
    %v9626 = vunpack.c.l.b16 %v9528
    %v9627 = vunpack.c.h.b16 %v9528
    %v9628 = vunpack.c.l.b16 %v9529
    %v9629 = vunpack.c.h.b16 %v9529
    %v9630 = vunpack.c.l.b16 %v9530
    %v9631 = vunpack.c.h.b16 %v9530
    %v9632 = vunpack.c.l.b16 %v9531
    %v9633 = vunpack.c.h.b16 %v9531
    %v9634 = vunpack.c.l.b16 %v9532
    %v9635 = vunpack.c.h.b16 %v9532
    %v9636 = vunpack.c.l.b16 %v9533
    %v9637 = vunpack.c.h.b16 %v9533
    %v9638 = vunpack.c.l.b16 %v9534
    %v9639 = vunpack.c.h.b16 %v9534
    %v9640 = vunpack.c.l.b16 %v9535
    %v9641 = vunpack.c.h.b16 %v9535
    %v9642 = vunpack.c.l.b16 %v9536
    %v9643 = vunpack.c.h.b16 %v9536
    %v9644 = vunpack.c.l.b16 %v9537
    %v9645 = vunpack.c.h.b16 %v9537
    %v9646 = vunpack.c.l.b16 %v9538
    %v9647 = vunpack.c.h.b16 %v9538
    %v9648 = vunpack.c.l.b16 %v9539
    %v9649 = vunpack.c.h.b16 %v9539
    %v9650 = vunpack.c.l.b16 %v9540
    %v9651 = vunpack.c.h.b16 %v9540
    %v9652 = vunpack.c.l.b16 %v9541
    %v9653 = vunpack.c.h.b16 %v9541
    %v9654 = vunpack.c.l.b16 %v9542
    %v9655 = vunpack.c.h.b16 %v9542
    %v9656 = vunpack.c.l.b16 %v9543
    %v9657 = vunpack.c.h.b16 %v9543
    %v9658 = vunpack.c.l.b16 %v9544
    %v9659 = vunpack.c.h.b16 %v9544
    %v9660 = vunpack.c.l.b16 %v9545
    %v9661 = vunpack.c.h.b16 %v9545
    %v9662 = vunpack.c.l.b16 %v9546
    %v9663 = vunpack.c.h.b16 %v9546
    %v9664 = vunpack.c.l.b16 %v9547
    %v9665 = vunpack.c.h.b16 %v9547
    %v9666 = vunpack.c.l.b16 %v9548
    %v9667 = vunpack.c.h.b16 %v9548
    %v9668 = vunpack.c.l.b16 %v9549
    %v9669 = vunpack.c.h.b16 %v9549
    %v9670 = vunpack.c.l.b16 %v9550
    %v9671 = vunpack.c.h.b16 %v9550
    %v9672 = vunpack.c.l.b16 %v9551
    %v9673 = vunpack.c.h.b16 %v9551
    %v9674 = vunpack.c.l.b16 %v9552
    %v9675 = vunpack.c.h.b16 %v9552
    %v9676 = vunpack.c.l.b16 %v9553
    %v9677 = vunpack.c.h.b16 %v9553
    %v9678 = vunpack.c.l.b16 %v9554
    %v9679 = vunpack.c.h.b16 %v9554
    %v9680 = vunpack.c.l.b16 %v9555
    %v9681 = vunpack.c.h.b16 %v9555
    %v9682 = vunpack.c.l.b16 %v9556
    %v9683 = vunpack.c.h.b16 %v9556
    %v9684 = vunpack.c.l.b16 %v9557
    %v9685 = vunpack.c.h.b16 %v9557
    %v9686 = vunpack.c.l.b16 %v9558
    %v9687 = vunpack.c.h.b16 %v9558
    %v9688 = vunpack.c.l.b16 %v9559
    %v9689 = vunpack.c.h.b16 %v9559
    %v9690 = vunpack.c.l.b16 %v9560
    %v9691 = vunpack.c.h.b16 %v9560
    %v9692 = vunpack.c.l.b16 %v9561
    %v9693 = vunpack.c.h.b16 %v9561
    %v9694 = vunpack.c.l.b16 %v9562
    %v9695 = vunpack.c.h.b16 %v9562
    %v9696 = vunpack.c.l.b16 %v9563
    %v9697 = vunpack.c.h.b16 %v9563
    %v9698 = vunpack.c.l.b16 %v9564
    %v9699 = vunpack.c.h.b16 %v9564
    %v9700 = vunpack.c.l.b16 %v9565
    %v9701 = vunpack.c.h.b16 %v9565
    %v9702 = vunpack.c.l.b16 %v9566
    %v9703 = vunpack.c.h.b16 %v9566
    %v9704 = vunpack.c.l.b16 %v9567
    %v9705 = vunpack.c.h.b16 %v9567
    %v9706 = vunpack.c.l.b16 %v9568
    %v9707 = vunpack.c.h.b16 %v9568
    %v9708 = vunpack.c.l.b16 %v9569
    %v9709 = vunpack.c.h.b16 %v9569
    %v9710 = vunpack.c.l.b16 %v9570
    %v9711 = vunpack.c.h.b16 %v9570
    %v9712 = vunpack.c.l.b16 %v9571
    %v9713 = vunpack.c.h.b16 %v9571
    %v9714 = vunpack.c.l.b16 %v9572
    %v9715 = vunpack.c.h.b16 %v9572
    %v9716 = vunpack.c.l.b16 %v9573
    %v9717 = vunpack.c.h.b16 %v9573
    %v9718 = vpack.c.b16 %v9626, %v9622
    %v9719 = vpack.c.b16 %v9627, %v9623
    %v9720 = vpack.c.b16 %v9628, %v9624
    %v9721 = vpack.c.b16 %v9629, %v9625
    %v9722 = vpack.c.b16 %v9634, %v9630
    %v9723 = vpack.c.b16 %v9635, %v9631
    %v9724 = vpack.c.b16 %v9636, %v9632
    %v9725 = vpack.c.b16 %v9637, %v9633
    %v9726 = vpack.c.b16 %v9642, %v9638
    %v9727 = vpack.c.b16 %v9643, %v9639
    %v9728 = vpack.c.b16 %v9644, %v9640
    %v9729 = vpack.c.b16 %v9645, %v9641
    %v9730 = vpack.c.b16 %v9650, %v9646
    %v9731 = vpack.c.b16 %v9651, %v9647
    %v9732 = vpack.c.b16 %v9652, %v9648
    %v9733 = vpack.c.b16 %v9653, %v9649
    %v9734 = vpack.c.b16 %v9658, %v9654
    %v9735 = vpack.c.b16 %v9659, %v9655
    %v9736 = vpack.c.b16 %v9660, %v9656
    %v9737 = vpack.c.b16 %v9661, %v9657
    %v9738 = vpack.c.b16 %v9666, %v9662
    %v9739 = vpack.c.b16 %v9667, %v9663
    %v9740 = vpack.c.b16 %v9668, %v9664
    %v9741 = vpack.c.b16 %v9669, %v9665
    %v9742 = vpack.c.b16 %v9674, %v9670
    %v9743 = vpack.c.b16 %v9675, %v9671
    %v9744 = vpack.c.b16 %v9676, %v9672
    %v9745 = vpack.c.b16 %v9677, %v9673
    %v9746 = vpack.c.b16 %v9682, %v9678
    %v9747 = vpack.c.b16 %v9683, %v9679
    %v9748 = vpack.c.b16 %v9684, %v9680
    %v9749 = vpack.c.b16 %v9685, %v9681
    %v9750 = vpack.c.b16 %v9690, %v9686
    %v9751 = vpack.c.b16 %v9691, %v9687
    %v9752 = vpack.c.b16 %v9692, %v9688
    %v9753 = vpack.c.b16 %v9693, %v9689
    %v9754 = vpack.c.b16 %v9698, %v9694
    %v9755 = vpack.c.b16 %v9699, %v9695
    %v9756 = vpack.c.b16 %v9700, %v9696
    %v9757 = vpack.c.b16 %v9701, %v9697
    %v9758 = vpack.c.b16 %v9706, %v9702
    %v9759 = vpack.c.b16 %v9707, %v9703
    %v9760 = vpack.c.b16 %v9708, %v9704
    %v9761 = vpack.c.b16 %v9709, %v9705
    %v9762 = vpack.c.b16 %v9714, %v9710
    %v9763 = vpack.c.b16 %v9715, %v9711
    %v9764 = vpack.c.b16 %v9716, %v9712
    %v9765 = vpack.c.b16 %v9717, %v9713
    %v9815 = vsel %vm184, %v9524, 0
    %9817 = vmatpush.bf16.msra.mxu0 %v9746
    %9818 = vmatpush.bf16.msra.mxu0 %v9742
    %9819 = vmatpush.bf16.msra.mxu0 %v9738
    %9820 = vmatpush.bf16.msra.mxu0 %v9734
    %9821 = vmatpush.bf16.msra.mxu0 %v9730
    %9822 = vmatpush.bf16.msra.mxu0 %v9726
    %9823 = vmatpush.bf16.msra.mxu0 %v9722
    %9824 = vmatpush.bf16.msra.mxu0 %v9718
    %9825 = vmatmul.bf16.gmra.mxu0 %v9523
    %v9826 = vpop.f32.mrf.mxu0
    %v9827 = vadd.f32 0.0, %v9826
    %v9828 = vpop.f32.mrf.mxu0
    %9829 = vdwg.mxu0
    %9830 = vmatpush.bf16.msra.mxu0 0
    %9831 = vmatpush.bf16.msra.mxu0 0
    %9832 = vmatpush.bf16.msra.mxu0 0
    %9833 = vmatpush.bf16.msra.mxu0 0
    %9834 = vmatpush.bf16.msra.mxu0 %v9762
    %9835 = vmatpush.bf16.msra.mxu0 %v9758
    %9836 = vmatpush.bf16.msra.mxu0 %v9754
    %9837 = vmatpush.bf16.msra.mxu0 %v9750
    %9838 = vmatmul.bf16.gmra.mxu0 %v9815
    %v9839 = vpop.f32.mrf.mxu0
    %v9840 = vadd.f32 %v9827, %v9839
    %v9841 = vpop.f32.mrf.mxu0
    %9842 = vdwg.mxu0
    %9843 = vmatpush.bf16.msra.mxu0 %v9747
    %9844 = vmatpush.bf16.msra.mxu0 %v9743
    %9845 = vmatpush.bf16.msra.mxu0 %v9739
    %9846 = vmatpush.bf16.msra.mxu0 %v9735
    %9847 = vmatpush.bf16.msra.mxu0 %v9731
    %9848 = vmatpush.bf16.msra.mxu0 %v9727
    %9849 = vmatpush.bf16.msra.mxu0 %v9723
    %9850 = vmatpush.bf16.msra.mxu0 %v9719
    %9851 = vmatmul.bf16.gmra.mxu0 %v9523
    %v9852 = vpop.f32.mrf.mxu0
    %v9853 = vadd.f32 0.0, %v9852
    %v9854 = vpop.f32.mrf.mxu0
    %9855 = vdwg.mxu0
    %9856 = vmatpush.bf16.msra.mxu0 0
    %9857 = vmatpush.bf16.msra.mxu0 0
    %9858 = vmatpush.bf16.msra.mxu0 0
    %9859 = vmatpush.bf16.msra.mxu0 0
    %9860 = vmatpush.bf16.msra.mxu0 %v9763
    %9861 = vmatpush.bf16.msra.mxu0 %v9759
    %9862 = vmatpush.bf16.msra.mxu0 %v9755
    %9863 = vmatpush.bf16.msra.mxu0 %v9751
    %9864 = vmatmul.bf16.gmra.mxu0 %v9815
    %v9865 = vpop.f32.mrf.mxu0
    %v9866 = vadd.f32 %v9853, %v9865
    %v9867 = vpop.f32.mrf.mxu0
    %9868 = vdwg.mxu0
    %9869 = vmatpush.bf16.msra.mxu0 %v9748
    %9870 = vmatpush.bf16.msra.mxu0 %v9744
    %9871 = vmatpush.bf16.msra.mxu0 %v9740
    %9872 = vmatpush.bf16.msra.mxu0 %v9736
    %9873 = vmatpush.bf16.msra.mxu0 %v9732
    %9874 = vmatpush.bf16.msra.mxu0 %v9728
    %9875 = vmatpush.bf16.msra.mxu0 %v9724
    %9876 = vmatpush.bf16.msra.mxu0 %v9720
    %9877 = vmatmul.bf16.gmra.mxu0 %v9523
    %v9878 = vpop.f32.mrf.mxu0
    %v9879 = vadd.f32 0.0, %v9878
    %v9880 = vpop.f32.mrf.mxu0
    %9881 = vdwg.mxu0
    %9882 = vmatpush.bf16.msra.mxu0 0
    %9883 = vmatpush.bf16.msra.mxu0 0
    %9884 = vmatpush.bf16.msra.mxu0 0
    %9885 = vmatpush.bf16.msra.mxu0 0
    %9886 = vmatpush.bf16.msra.mxu0 %v9764
    %9887 = vmatpush.bf16.msra.mxu0 %v9760
    %9888 = vmatpush.bf16.msra.mxu0 %v9756
    %9889 = vmatpush.bf16.msra.mxu0 %v9752
    %9890 = vmatmul.bf16.gmra.mxu0 %v9815
    %v9891 = vpop.f32.mrf.mxu0
    %v9892 = vadd.f32 %v9879, %v9891
    %v9893 = vpop.f32.mrf.mxu0
    %9894 = vdwg.mxu0
    %9895 = vmatpush.bf16.msra.mxu0 %v9749
    %9896 = vmatpush.bf16.msra.mxu0 %v9745
    %9897 = vmatpush.bf16.msra.mxu0 %v9741
    %9898 = vmatpush.bf16.msra.mxu0 %v9737
    %9899 = vmatpush.bf16.msra.mxu0 %v9733
    %9900 = vmatpush.bf16.msra.mxu0 %v9729
    %9901 = vmatpush.bf16.msra.mxu0 %v9725
    %9902 = vmatpush.bf16.msra.mxu0 %v9721
    %9903 = vmatmul.bf16.gmra.mxu0 %v9523
    %v9904 = vpop.f32.mrf.mxu0
    %v9905 = vadd.f32 0.0, %v9904
    %v9906 = vpop.f32.mrf.mxu0
    %9907 = vdwg.mxu0
    %9908 = vmatpush.bf16.msra.mxu0 0
    %9909 = vmatpush.bf16.msra.mxu0 0
    %9910 = vmatpush.bf16.msra.mxu0 0
    %9911 = vmatpush.bf16.msra.mxu0 0
    %9912 = vmatpush.bf16.msra.mxu0 %v9765
    %9913 = vmatpush.bf16.msra.mxu0 %v9761
    %9914 = vmatpush.bf16.msra.mxu0 %v9757
    %9915 = vmatpush.bf16.msra.mxu0 %v9753
    %9916 = vmatmul.bf16.gmra.mxu0 %v9815
    %v9917 = vpop.f32.mrf.mxu0
    %v9918 = vadd.f32 %v9905, %v9917
    %v9919 = vpop.f32.mrf.mxu0
    %9920 = vdwg.mxu0
    %v9921 = vadd.f32 %v9517, %v9840
    %v9922 = vadd.f32 %v9518, %v9866
    %v9923 = vadd.f32 %v9519, %v9892
    %v9924 = vadd.f32 %v9520, %v9918
    %v9925 = vmul.f32 %v128, %v640
    %v9926 = vmul.f32 %v129, %v641
    %v9927 = vpack.c.bf16 %v9925, %v9925
    %v9928 = vpack.c.bf16 %v9926, %v9926
    %s9929 = scalar_lea.vmem [#allocation6], 8832
    %v9930 = vld [vmem:[%s9929] sm:$0xff]
    %v9931 = vld [vmem:[%s9929 + $0x8] sm:$0xff]
    %v9932 = vld [vmem:[%s9929 + $0x10] sm:$0xff]
    %v9933 = vld [vmem:[%s9929 + $0x18] sm:$0xff]
    %v9934 = vld [vmem:[%s9929 + $0x20] sm:$0xff]
    %v9935 = vld [vmem:[%s9929 + $0x28] sm:$0xff]
    %v9936 = vld [vmem:[%s9929 + $0x30] sm:$0xff]
    %v9937 = vld [vmem:[%s9929 + $0x38] sm:$0xff]
    %v9938 = vld [vmem:[%s9929 + $0x40] sm:$0xff]
    %v9939 = vld [vmem:[%s9929 + $0x48] sm:$0xff]
    %v9940 = vld [vmem:[%s9929 + $0x50] sm:$0xff]
    %v9941 = vld [vmem:[%s9929 + $0x58] sm:$0xff]
    %v9942 = vld [vmem:[%s9929 + $0x60] sm:$0xff]
    %v9943 = vld [vmem:[%s9929 + $0x68] sm:$0xff]
    %v9944 = vld [vmem:[%s9929 + $0x70] sm:$0xff]
    %v9945 = vld [vmem:[%s9929 + $0x78] sm:$0xff]
    %v9946 = vld [vmem:[%s9929 + $0x80] sm:$0xff]
    %v9947 = vld [vmem:[%s9929 + $0x88] sm:$0xff]
    %v9948 = vld [vmem:[%s9929 + $0x90] sm:$0xff]
    %v9949 = vld [vmem:[%s9929 + $0x98] sm:$0xff]
    %v9950 = vld [vmem:[%s9929 + $0xa0] sm:$0xff]
    %v9951 = vld [vmem:[%s9929 + $0xa8] sm:$0xff]
    %v9952 = vld [vmem:[%s9929 + $0xb0] sm:$0xff]
    %v9953 = vld [vmem:[%s9929 + $0xb8] sm:$0xff]
    %v9954 = vld [vmem:[%s9929 + $0xc0] sm:$0xff]
    %v9955 = vld [vmem:[%s9929 + $0xc8] sm:$0xff]
    %v9956 = vld [vmem:[%s9929 + $0xd0] sm:$0xff]
    %v9957 = vld [vmem:[%s9929 + $0xd8] sm:$0xff]
    %v9958 = vld [vmem:[%s9929 + $0xe0] sm:$0xff]
    %v9959 = vld [vmem:[%s9929 + $0xe8] sm:$0xff]
    %v9960 = vld [vmem:[%s9929 + $0xf0] sm:$0xff]
    %v9961 = vld [vmem:[%s9929 + $0xf8] sm:$0xff]
    %v9962 = vld [vmem:[%s9929 + $0x100] sm:$0xff]
    %v9963 = vld [vmem:[%s9929 + $0x108] sm:$0xff]
    %v9964 = vld [vmem:[%s9929 + $0x110] sm:$0xff]
    %v9965 = vld [vmem:[%s9929 + $0x118] sm:$0xff]
    %v9966 = vld [vmem:[%s9929 + $0x120] sm:$0xff]
    %v9967 = vld [vmem:[%s9929 + $0x128] sm:$0xff]
    %v9968 = vld [vmem:[%s9929 + $0x130] sm:$0xff]
    %v9969 = vld [vmem:[%s9929 + $0x138] sm:$0xff]
    %v9970 = vld [vmem:[%s9929 + $0x140] sm:$0xff]
    %v9971 = vld [vmem:[%s9929 + $0x148] sm:$0xff]
    %v9972 = vld [vmem:[%s9929 + $0x150] sm:$0xff]
    %v9973 = vld [vmem:[%s9929 + $0x158] sm:$0xff]
    %v9974 = vld [vmem:[%s9929 + $0x160] sm:$0xff]
    %v9975 = vld [vmem:[%s9929 + $0x168] sm:$0xff]
    %v9976 = vld [vmem:[%s9929 + $0x170] sm:$0xff]
    %v9977 = vld [vmem:[%s9929 + $0x178] sm:$0xff]
    %v10026 = vunpack.c.l.b16 %v9930
    %v10027 = vunpack.c.h.b16 %v9930
    %v10028 = vunpack.c.l.b16 %v9931
    %v10029 = vunpack.c.h.b16 %v9931
    %v10030 = vunpack.c.l.b16 %v9932
    %v10031 = vunpack.c.h.b16 %v9932
    %v10032 = vunpack.c.l.b16 %v9933
    %v10033 = vunpack.c.h.b16 %v9933
    %v10034 = vunpack.c.l.b16 %v9934
    %v10035 = vunpack.c.h.b16 %v9934
    %v10036 = vunpack.c.l.b16 %v9935
    %v10037 = vunpack.c.h.b16 %v9935
    %v10038 = vunpack.c.l.b16 %v9936
    %v10039 = vunpack.c.h.b16 %v9936
    %v10040 = vunpack.c.l.b16 %v9937
    %v10041 = vunpack.c.h.b16 %v9937
    %v10042 = vunpack.c.l.b16 %v9938
    %v10043 = vunpack.c.h.b16 %v9938
    %v10044 = vunpack.c.l.b16 %v9939
    %v10045 = vunpack.c.h.b16 %v9939
    %v10046 = vunpack.c.l.b16 %v9940
    %v10047 = vunpack.c.h.b16 %v9940
    %v10048 = vunpack.c.l.b16 %v9941
    %v10049 = vunpack.c.h.b16 %v9941
    %v10050 = vunpack.c.l.b16 %v9942
    %v10051 = vunpack.c.h.b16 %v9942
    %v10052 = vunpack.c.l.b16 %v9943
    %v10053 = vunpack.c.h.b16 %v9943
    %v10054 = vunpack.c.l.b16 %v9944
    %v10055 = vunpack.c.h.b16 %v9944
    %v10056 = vunpack.c.l.b16 %v9945
    %v10057 = vunpack.c.h.b16 %v9945
    %v10058 = vunpack.c.l.b16 %v9946
    %v10059 = vunpack.c.h.b16 %v9946
    %v10060 = vunpack.c.l.b16 %v9947
    %v10061 = vunpack.c.h.b16 %v9947
    %v10062 = vunpack.c.l.b16 %v9948
    %v10063 = vunpack.c.h.b16 %v9948
    %v10064 = vunpack.c.l.b16 %v9949
    %v10065 = vunpack.c.h.b16 %v9949
    %v10066 = vunpack.c.l.b16 %v9950
    %v10067 = vunpack.c.h.b16 %v9950
    %v10068 = vunpack.c.l.b16 %v9951
    %v10069 = vunpack.c.h.b16 %v9951
    %v10070 = vunpack.c.l.b16 %v9952
    %v10071 = vunpack.c.h.b16 %v9952
    %v10072 = vunpack.c.l.b16 %v9953
    %v10073 = vunpack.c.h.b16 %v9953
    %v10074 = vunpack.c.l.b16 %v9954
    %v10075 = vunpack.c.h.b16 %v9954
    %v10076 = vunpack.c.l.b16 %v9955
    %v10077 = vunpack.c.h.b16 %v9955
    %v10078 = vunpack.c.l.b16 %v9956
    %v10079 = vunpack.c.h.b16 %v9956
    %v10080 = vunpack.c.l.b16 %v9957
    %v10081 = vunpack.c.h.b16 %v9957
    %v10082 = vunpack.c.l.b16 %v9958
    %v10083 = vunpack.c.h.b16 %v9958
    %v10084 = vunpack.c.l.b16 %v9959
    %v10085 = vunpack.c.h.b16 %v9959
    %v10086 = vunpack.c.l.b16 %v9960
    %v10087 = vunpack.c.h.b16 %v9960
    %v10088 = vunpack.c.l.b16 %v9961
    %v10089 = vunpack.c.h.b16 %v9961
    %v10090 = vunpack.c.l.b16 %v9962
    %v10091 = vunpack.c.h.b16 %v9962
    %v10092 = vunpack.c.l.b16 %v9963
    %v10093 = vunpack.c.h.b16 %v9963
    %v10094 = vunpack.c.l.b16 %v9964
    %v10095 = vunpack.c.h.b16 %v9964
    %v10096 = vunpack.c.l.b16 %v9965
    %v10097 = vunpack.c.h.b16 %v9965
    %v10098 = vunpack.c.l.b16 %v9966
    %v10099 = vunpack.c.h.b16 %v9966
    %v10100 = vunpack.c.l.b16 %v9967
    %v10101 = vunpack.c.h.b16 %v9967
    %v10102 = vunpack.c.l.b16 %v9968
    %v10103 = vunpack.c.h.b16 %v9968
    %v10104 = vunpack.c.l.b16 %v9969
    %v10105 = vunpack.c.h.b16 %v9969
    %v10106 = vunpack.c.l.b16 %v9970
    %v10107 = vunpack.c.h.b16 %v9970
    %v10108 = vunpack.c.l.b16 %v9971
    %v10109 = vunpack.c.h.b16 %v9971
    %v10110 = vunpack.c.l.b16 %v9972
    %v10111 = vunpack.c.h.b16 %v9972
    %v10112 = vunpack.c.l.b16 %v9973
    %v10113 = vunpack.c.h.b16 %v9973
    %v10114 = vunpack.c.l.b16 %v9974
    %v10115 = vunpack.c.h.b16 %v9974
    %v10116 = vunpack.c.l.b16 %v9975
    %v10117 = vunpack.c.h.b16 %v9975
    %v10118 = vunpack.c.l.b16 %v9976
    %v10119 = vunpack.c.h.b16 %v9976
    %v10120 = vunpack.c.l.b16 %v9977
    %v10121 = vunpack.c.h.b16 %v9977
    %v10122 = vpack.c.b16 %v10030, %v10026
    %v10123 = vpack.c.b16 %v10031, %v10027
    %v10124 = vpack.c.b16 %v10032, %v10028
    %v10125 = vpack.c.b16 %v10033, %v10029
    %v10126 = vpack.c.b16 %v10038, %v10034
    %v10127 = vpack.c.b16 %v10039, %v10035
    %v10128 = vpack.c.b16 %v10040, %v10036
    %v10129 = vpack.c.b16 %v10041, %v10037
    %v10130 = vpack.c.b16 %v10046, %v10042
    %v10131 = vpack.c.b16 %v10047, %v10043
    %v10132 = vpack.c.b16 %v10048, %v10044
    %v10133 = vpack.c.b16 %v10049, %v10045
    %v10134 = vpack.c.b16 %v10054, %v10050
    %v10135 = vpack.c.b16 %v10055, %v10051
    %v10136 = vpack.c.b16 %v10056, %v10052
    %v10137 = vpack.c.b16 %v10057, %v10053
    %v10138 = vpack.c.b16 %v10062, %v10058
    %v10139 = vpack.c.b16 %v10063, %v10059
    %v10140 = vpack.c.b16 %v10064, %v10060
    %v10141 = vpack.c.b16 %v10065, %v10061
    %v10142 = vpack.c.b16 %v10070, %v10066
    %v10143 = vpack.c.b16 %v10071, %v10067
    %v10144 = vpack.c.b16 %v10072, %v10068
    %v10145 = vpack.c.b16 %v10073, %v10069
    %v10146 = vpack.c.b16 %v10078, %v10074
    %v10147 = vpack.c.b16 %v10079, %v10075
    %v10148 = vpack.c.b16 %v10080, %v10076
    %v10149 = vpack.c.b16 %v10081, %v10077
    %v10150 = vpack.c.b16 %v10086, %v10082
    %v10151 = vpack.c.b16 %v10087, %v10083
    %v10152 = vpack.c.b16 %v10088, %v10084
    %v10153 = vpack.c.b16 %v10089, %v10085
    %v10154 = vpack.c.b16 %v10094, %v10090
    %v10155 = vpack.c.b16 %v10095, %v10091
    %v10156 = vpack.c.b16 %v10096, %v10092
    %v10157 = vpack.c.b16 %v10097, %v10093
    %v10158 = vpack.c.b16 %v10102, %v10098
    %v10159 = vpack.c.b16 %v10103, %v10099
    %v10160 = vpack.c.b16 %v10104, %v10100
    %v10161 = vpack.c.b16 %v10105, %v10101
    %v10162 = vpack.c.b16 %v10110, %v10106
    %v10163 = vpack.c.b16 %v10111, %v10107
    %v10164 = vpack.c.b16 %v10112, %v10108
    %v10165 = vpack.c.b16 %v10113, %v10109
    %v10166 = vpack.c.b16 %v10118, %v10114
    %v10167 = vpack.c.b16 %v10119, %v10115
    %v10168 = vpack.c.b16 %v10120, %v10116
    %v10169 = vpack.c.b16 %v10121, %v10117
    %v10219 = vsel %vm184, %v9928, 0
    %10221 = vmatpush.bf16.msra.mxu0 %v10150
    %10222 = vmatpush.bf16.msra.mxu0 %v10146
    %10223 = vmatpush.bf16.msra.mxu0 %v10142
    %10224 = vmatpush.bf16.msra.mxu0 %v10138
    %10225 = vmatpush.bf16.msra.mxu0 %v10134
    %10226 = vmatpush.bf16.msra.mxu0 %v10130
    %10227 = vmatpush.bf16.msra.mxu0 %v10126
    %10228 = vmatpush.bf16.msra.mxu0 %v10122
    %10229 = vmatmul.bf16.gmra.mxu0 %v9927
    %v10230 = vpop.f32.mrf.mxu0
    %v10231 = vadd.f32 0.0, %v10230
    %v10232 = vpop.f32.mrf.mxu0
    %10233 = vdwg.mxu0
    %10234 = vmatpush.bf16.msra.mxu0 0
    %10235 = vmatpush.bf16.msra.mxu0 0
    %10236 = vmatpush.bf16.msra.mxu0 0
    %10237 = vmatpush.bf16.msra.mxu0 0
    %10238 = vmatpush.bf16.msra.mxu0 %v10166
    %10239 = vmatpush.bf16.msra.mxu0 %v10162
    %10240 = vmatpush.bf16.msra.mxu0 %v10158
    %10241 = vmatpush.bf16.msra.mxu0 %v10154
    %10242 = vmatmul.bf16.gmra.mxu0 %v10219
    %v10243 = vpop.f32.mrf.mxu0
    %v10244 = vadd.f32 %v10231, %v10243
    %v10245 = vpop.f32.mrf.mxu0
    %10246 = vdwg.mxu0
    %10247 = vmatpush.bf16.msra.mxu0 %v10151
    %10248 = vmatpush.bf16.msra.mxu0 %v10147
    %10249 = vmatpush.bf16.msra.mxu0 %v10143
    %10250 = vmatpush.bf16.msra.mxu0 %v10139
    %10251 = vmatpush.bf16.msra.mxu0 %v10135
    %10252 = vmatpush.bf16.msra.mxu0 %v10131
    %10253 = vmatpush.bf16.msra.mxu0 %v10127
    %10254 = vmatpush.bf16.msra.mxu0 %v10123
    %10255 = vmatmul.bf16.gmra.mxu0 %v9927
    %v10256 = vpop.f32.mrf.mxu0
    %v10257 = vadd.f32 0.0, %v10256
    %v10258 = vpop.f32.mrf.mxu0
    %10259 = vdwg.mxu0
    %10260 = vmatpush.bf16.msra.mxu0 0
    %10261 = vmatpush.bf16.msra.mxu0 0
    %10262 = vmatpush.bf16.msra.mxu0 0
    %10263 = vmatpush.bf16.msra.mxu0 0
    %10264 = vmatpush.bf16.msra.mxu0 %v10167
    %10265 = vmatpush.bf16.msra.mxu0 %v10163
    %10266 = vmatpush.bf16.msra.mxu0 %v10159
    %10267 = vmatpush.bf16.msra.mxu0 %v10155
    %10268 = vmatmul.bf16.gmra.mxu0 %v10219
    %v10269 = vpop.f32.mrf.mxu0
    %v10270 = vadd.f32 %v10257, %v10269
    %v10271 = vpop.f32.mrf.mxu0
    %10272 = vdwg.mxu0
    %10273 = vmatpush.bf16.msra.mxu0 %v10152
    %10274 = vmatpush.bf16.msra.mxu0 %v10148
    %10275 = vmatpush.bf16.msra.mxu0 %v10144
    %10276 = vmatpush.bf16.msra.mxu0 %v10140
    %10277 = vmatpush.bf16.msra.mxu0 %v10136
    %10278 = vmatpush.bf16.msra.mxu0 %v10132
    %10279 = vmatpush.bf16.msra.mxu0 %v10128
    %10280 = vmatpush.bf16.msra.mxu0 %v10124
    %10281 = vmatmul.bf16.gmra.mxu0 %v9927
    %v10282 = vpop.f32.mrf.mxu0
    %v10283 = vadd.f32 0.0, %v10282
    %v10284 = vpop.f32.mrf.mxu0
    %10285 = vdwg.mxu0
    %10286 = vmatpush.bf16.msra.mxu0 0
    %10287 = vmatpush.bf16.msra.mxu0 0
    %10288 = vmatpush.bf16.msra.mxu0 0
    %10289 = vmatpush.bf16.msra.mxu0 0
    %10290 = vmatpush.bf16.msra.mxu0 %v10168
    %10291 = vmatpush.bf16.msra.mxu0 %v10164
    %10292 = vmatpush.bf16.msra.mxu0 %v10160
    %10293 = vmatpush.bf16.msra.mxu0 %v10156
    %10294 = vmatmul.bf16.gmra.mxu0 %v10219
    %v10295 = vpop.f32.mrf.mxu0
    %v10296 = vadd.f32 %v10283, %v10295
    %v10297 = vpop.f32.mrf.mxu0
    %10298 = vdwg.mxu0
    %10299 = vmatpush.bf16.msra.mxu0 %v10153
    %10300 = vmatpush.bf16.msra.mxu0 %v10149
    %10301 = vmatpush.bf16.msra.mxu0 %v10145
    %10302 = vmatpush.bf16.msra.mxu0 %v10141
    %10303 = vmatpush.bf16.msra.mxu0 %v10137
    %10304 = vmatpush.bf16.msra.mxu0 %v10133
    %10305 = vmatpush.bf16.msra.mxu0 %v10129
    %10306 = vmatpush.bf16.msra.mxu0 %v10125
    %10307 = vmatmul.bf16.gmra.mxu0 %v9927
    %v10308 = vpop.f32.mrf.mxu0
    %v10309 = vadd.f32 0.0, %v10308
    %v10310 = vpop.f32.mrf.mxu0
    %10311 = vdwg.mxu0
    %10312 = vmatpush.bf16.msra.mxu0 0
    %10313 = vmatpush.bf16.msra.mxu0 0
    %10314 = vmatpush.bf16.msra.mxu0 0
    %10315 = vmatpush.bf16.msra.mxu0 0
    %10316 = vmatpush.bf16.msra.mxu0 %v10169
    %10317 = vmatpush.bf16.msra.mxu0 %v10165
    %10318 = vmatpush.bf16.msra.mxu0 %v10161
    %10319 = vmatpush.bf16.msra.mxu0 %v10157
    %10320 = vmatmul.bf16.gmra.mxu0 %v10219
    %v10321 = vpop.f32.mrf.mxu0
    %v10322 = vadd.f32 %v10309, %v10321
    %v10323 = vpop.f32.mrf.mxu0
    %10324 = vdwg.mxu0
    %v10325 = vadd.f32 %v9921, %v10244
    %v10326 = vadd.f32 %v9922, %v10270
    %v10327 = vadd.f32 %v9923, %v10296
    %v10328 = vadd.f32 %v9924, %v10322
    %v10329 = vmul.f32 %v130, %v640
    %v10330 = vmul.f32 %v131, %v641
    %v10331 = vpack.c.bf16 %v10329, %v10329
    %v10332 = vpack.c.bf16 %v10330, %v10330
    %s10333 = scalar_lea.vmem [#allocation6], 9216
    %v10334 = vld [vmem:[%s10333] sm:$0xff]
    %v10335 = vld [vmem:[%s10333 + $0x8] sm:$0xff]
    %v10336 = vld [vmem:[%s10333 + $0x10] sm:$0xff]
    %v10337 = vld [vmem:[%s10333 + $0x18] sm:$0xff]
    %v10338 = vld [vmem:[%s10333 + $0x20] sm:$0xff]
    %v10339 = vld [vmem:[%s10333 + $0x28] sm:$0xff]
    %v10340 = vld [vmem:[%s10333 + $0x30] sm:$0xff]
    %v10341 = vld [vmem:[%s10333 + $0x38] sm:$0xff]
    %v10342 = vld [vmem:[%s10333 + $0x40] sm:$0xff]
    %v10343 = vld [vmem:[%s10333 + $0x48] sm:$0xff]
    %v10344 = vld [vmem:[%s10333 + $0x50] sm:$0xff]
    %v10345 = vld [vmem:[%s10333 + $0x58] sm:$0xff]
    %v10346 = vld [vmem:[%s10333 + $0x60] sm:$0xff]
    %v10347 = vld [vmem:[%s10333 + $0x68] sm:$0xff]
    %v10348 = vld [vmem:[%s10333 + $0x70] sm:$0xff]
    %v10349 = vld [vmem:[%s10333 + $0x78] sm:$0xff]
    %v10350 = vld [vmem:[%s10333 + $0x80] sm:$0xff]
    %v10351 = vld [vmem:[%s10333 + $0x88] sm:$0xff]
    %v10352 = vld [vmem:[%s10333 + $0x90] sm:$0xff]
    %v10353 = vld [vmem:[%s10333 + $0x98] sm:$0xff]
    %v10354 = vld [vmem:[%s10333 + $0xa0] sm:$0xff]
    %v10355 = vld [vmem:[%s10333 + $0xa8] sm:$0xff]
    %v10356 = vld [vmem:[%s10333 + $0xb0] sm:$0xff]
    %v10357 = vld [vmem:[%s10333 + $0xb8] sm:$0xff]
    %v10358 = vld [vmem:[%s10333 + $0xc0] sm:$0xff]
    %v10359 = vld [vmem:[%s10333 + $0xc8] sm:$0xff]
    %v10360 = vld [vmem:[%s10333 + $0xd0] sm:$0xff]
    %v10361 = vld [vmem:[%s10333 + $0xd8] sm:$0xff]
    %v10362 = vld [vmem:[%s10333 + $0xe0] sm:$0xff]
    %v10363 = vld [vmem:[%s10333 + $0xe8] sm:$0xff]
    %v10364 = vld [vmem:[%s10333 + $0xf0] sm:$0xff]
    %v10365 = vld [vmem:[%s10333 + $0xf8] sm:$0xff]
    %v10366 = vld [vmem:[%s10333 + $0x100] sm:$0xff]
    %v10367 = vld [vmem:[%s10333 + $0x108] sm:$0xff]
    %v10368 = vld [vmem:[%s10333 + $0x110] sm:$0xff]
    %v10369 = vld [vmem:[%s10333 + $0x118] sm:$0xff]
    %v10370 = vld [vmem:[%s10333 + $0x120] sm:$0xff]
    %v10371 = vld [vmem:[%s10333 + $0x128] sm:$0xff]
    %v10372 = vld [vmem:[%s10333 + $0x130] sm:$0xff]
    %v10373 = vld [vmem:[%s10333 + $0x138] sm:$0xff]
    %v10374 = vld [vmem:[%s10333 + $0x140] sm:$0xff]
    %v10375 = vld [vmem:[%s10333 + $0x148] sm:$0xff]
    %v10376 = vld [vmem:[%s10333 + $0x150] sm:$0xff]
    %v10377 = vld [vmem:[%s10333 + $0x158] sm:$0xff]
    %v10378 = vld [vmem:[%s10333 + $0x160] sm:$0xff]
    %v10379 = vld [vmem:[%s10333 + $0x168] sm:$0xff]
    %v10380 = vld [vmem:[%s10333 + $0x170] sm:$0xff]
    %v10381 = vld [vmem:[%s10333 + $0x178] sm:$0xff]
    %v10430 = vunpack.c.l.b16 %v10334
    %v10431 = vunpack.c.h.b16 %v10334
    %v10432 = vunpack.c.l.b16 %v10335
    %v10433 = vunpack.c.h.b16 %v10335
    %v10434 = vunpack.c.l.b16 %v10336
    %v10435 = vunpack.c.h.b16 %v10336
    %v10436 = vunpack.c.l.b16 %v10337
    %v10437 = vunpack.c.h.b16 %v10337
    %v10438 = vunpack.c.l.b16 %v10338
    %v10439 = vunpack.c.h.b16 %v10338
    %v10440 = vunpack.c.l.b16 %v10339
    %v10441 = vunpack.c.h.b16 %v10339
    %v10442 = vunpack.c.l.b16 %v10340
    %v10443 = vunpack.c.h.b16 %v10340
    %v10444 = vunpack.c.l.b16 %v10341
    %v10445 = vunpack.c.h.b16 %v10341
    %v10446 = vunpack.c.l.b16 %v10342
    %v10447 = vunpack.c.h.b16 %v10342
    %v10448 = vunpack.c.l.b16 %v10343
    %v10449 = vunpack.c.h.b16 %v10343
    %v10450 = vunpack.c.l.b16 %v10344
    %v10451 = vunpack.c.h.b16 %v10344
    %v10452 = vunpack.c.l.b16 %v10345
    %v10453 = vunpack.c.h.b16 %v10345
    %v10454 = vunpack.c.l.b16 %v10346
    %v10455 = vunpack.c.h.b16 %v10346
    %v10456 = vunpack.c.l.b16 %v10347
    %v10457 = vunpack.c.h.b16 %v10347
    %v10458 = vunpack.c.l.b16 %v10348
    %v10459 = vunpack.c.h.b16 %v10348
    %v10460 = vunpack.c.l.b16 %v10349
    %v10461 = vunpack.c.h.b16 %v10349
    %v10462 = vunpack.c.l.b16 %v10350
    %v10463 = vunpack.c.h.b16 %v10350
    %v10464 = vunpack.c.l.b16 %v10351
    %v10465 = vunpack.c.h.b16 %v10351
    %v10466 = vunpack.c.l.b16 %v10352
    %v10467 = vunpack.c.h.b16 %v10352
    %v10468 = vunpack.c.l.b16 %v10353
    %v10469 = vunpack.c.h.b16 %v10353
    %v10470 = vunpack.c.l.b16 %v10354
    %v10471 = vunpack.c.h.b16 %v10354
    %v10472 = vunpack.c.l.b16 %v10355
    %v10473 = vunpack.c.h.b16 %v10355
    %v10474 = vunpack.c.l.b16 %v10356
    %v10475 = vunpack.c.h.b16 %v10356
    %v10476 = vunpack.c.l.b16 %v10357
    %v10477 = vunpack.c.h.b16 %v10357
    %v10478 = vunpack.c.l.b16 %v10358
    %v10479 = vunpack.c.h.b16 %v10358
    %v10480 = vunpack.c.l.b16 %v10359
    %v10481 = vunpack.c.h.b16 %v10359
    %v10482 = vunpack.c.l.b16 %v10360
    %v10483 = vunpack.c.h.b16 %v10360
    %v10484 = vunpack.c.l.b16 %v10361
    %v10485 = vunpack.c.h.b16 %v10361
    %v10486 = vunpack.c.l.b16 %v10362
    %v10487 = vunpack.c.h.b16 %v10362
    %v10488 = vunpack.c.l.b16 %v10363
    %v10489 = vunpack.c.h.b16 %v10363
    %v10490 = vunpack.c.l.b16 %v10364
    %v10491 = vunpack.c.h.b16 %v10364
    %v10492 = vunpack.c.l.b16 %v10365
    %v10493 = vunpack.c.h.b16 %v10365
    %v10494 = vunpack.c.l.b16 %v10366
    %v10495 = vunpack.c.h.b16 %v10366
    %v10496 = vunpack.c.l.b16 %v10367
    %v10497 = vunpack.c.h.b16 %v10367
    %v10498 = vunpack.c.l.b16 %v10368
    %v10499 = vunpack.c.h.b16 %v10368
    %v10500 = vunpack.c.l.b16 %v10369
    %v10501 = vunpack.c.h.b16 %v10369
    %v10502 = vunpack.c.l.b16 %v10370
    %v10503 = vunpack.c.h.b16 %v10370
    %v10504 = vunpack.c.l.b16 %v10371
    %v10505 = vunpack.c.h.b16 %v10371
    %v10506 = vunpack.c.l.b16 %v10372
    %v10507 = vunpack.c.h.b16 %v10372
    %v10508 = vunpack.c.l.b16 %v10373
    %v10509 = vunpack.c.h.b16 %v10373
    %v10510 = vunpack.c.l.b16 %v10374
    %v10511 = vunpack.c.h.b16 %v10374
    %v10512 = vunpack.c.l.b16 %v10375
    %v10513 = vunpack.c.h.b16 %v10375
    %v10514 = vunpack.c.l.b16 %v10376
    %v10515 = vunpack.c.h.b16 %v10376
    %v10516 = vunpack.c.l.b16 %v10377
    %v10517 = vunpack.c.h.b16 %v10377
    %v10518 = vunpack.c.l.b16 %v10378
    %v10519 = vunpack.c.h.b16 %v10378
    %v10520 = vunpack.c.l.b16 %v10379
    %v10521 = vunpack.c.h.b16 %v10379
    %v10522 = vunpack.c.l.b16 %v10380
    %v10523 = vunpack.c.h.b16 %v10380
    %v10524 = vunpack.c.l.b16 %v10381
    %v10525 = vunpack.c.h.b16 %v10381
    %v10526 = vpack.c.b16 %v10434, %v10430
    %v10527 = vpack.c.b16 %v10435, %v10431
    %v10528 = vpack.c.b16 %v10436, %v10432
    %v10529 = vpack.c.b16 %v10437, %v10433
    %v10530 = vpack.c.b16 %v10442, %v10438
    %v10531 = vpack.c.b16 %v10443, %v10439
    %v10532 = vpack.c.b16 %v10444, %v10440
    %v10533 = vpack.c.b16 %v10445, %v10441
    %v10534 = vpack.c.b16 %v10450, %v10446
    %v10535 = vpack.c.b16 %v10451, %v10447
    %v10536 = vpack.c.b16 %v10452, %v10448
    %v10537 = vpack.c.b16 %v10453, %v10449
    %v10538 = vpack.c.b16 %v10458, %v10454
    %v10539 = vpack.c.b16 %v10459, %v10455
    %v10540 = vpack.c.b16 %v10460, %v10456
    %v10541 = vpack.c.b16 %v10461, %v10457
    %v10542 = vpack.c.b16 %v10466, %v10462
    %v10543 = vpack.c.b16 %v10467, %v10463
    %v10544 = vpack.c.b16 %v10468, %v10464
    %v10545 = vpack.c.b16 %v10469, %v10465
    %v10546 = vpack.c.b16 %v10474, %v10470
    %v10547 = vpack.c.b16 %v10475, %v10471
    %v10548 = vpack.c.b16 %v10476, %v10472
    %v10549 = vpack.c.b16 %v10477, %v10473
    %v10550 = vpack.c.b16 %v10482, %v10478
    %v10551 = vpack.c.b16 %v10483, %v10479
    %v10552 = vpack.c.b16 %v10484, %v10480
    %v10553 = vpack.c.b16 %v10485, %v10481
    %v10554 = vpack.c.b16 %v10490, %v10486
    %v10555 = vpack.c.b16 %v10491, %v10487
    %v10556 = vpack.c.b16 %v10492, %v10488
    %v10557 = vpack.c.b16 %v10493, %v10489
    %v10558 = vpack.c.b16 %v10498, %v10494
    %v10559 = vpack.c.b16 %v10499, %v10495
    %v10560 = vpack.c.b16 %v10500, %v10496
    %v10561 = vpack.c.b16 %v10501, %v10497
    %v10562 = vpack.c.b16 %v10506, %v10502
    %v10563 = vpack.c.b16 %v10507, %v10503
    %v10564 = vpack.c.b16 %v10508, %v10504
    %v10565 = vpack.c.b16 %v10509, %v10505
    %v10566 = vpack.c.b16 %v10514, %v10510
    %v10567 = vpack.c.b16 %v10515, %v10511
    %v10568 = vpack.c.b16 %v10516, %v10512
    %v10569 = vpack.c.b16 %v10517, %v10513
    %v10570 = vpack.c.b16 %v10522, %v10518
    %v10571 = vpack.c.b16 %v10523, %v10519
    %v10572 = vpack.c.b16 %v10524, %v10520
    %v10573 = vpack.c.b16 %v10525, %v10521
    %v10623 = vsel %vm184, %v10332, 0
    %10625 = vmatpush.bf16.msra.mxu0 %v10554
    %10626 = vmatpush.bf16.msra.mxu0 %v10550
    %10627 = vmatpush.bf16.msra.mxu0 %v10546
    %10628 = vmatpush.bf16.msra.mxu0 %v10542
    %10629 = vmatpush.bf16.msra.mxu0 %v10538
    %10630 = vmatpush.bf16.msra.mxu0 %v10534
    %10631 = vmatpush.bf16.msra.mxu0 %v10530
    %10632 = vmatpush.bf16.msra.mxu0 %v10526
    %10633 = vmatmul.bf16.gmra.mxu0 %v10331
    %v10634 = vpop.f32.mrf.mxu0
    %v10635 = vadd.f32 0.0, %v10634
    %v10636 = vpop.f32.mrf.mxu0
    %10637 = vdwg.mxu0
    %10638 = vmatpush.bf16.msra.mxu0 0
    %10639 = vmatpush.bf16.msra.mxu0 0
    %10640 = vmatpush.bf16.msra.mxu0 0
    %10641 = vmatpush.bf16.msra.mxu0 0
    %10642 = vmatpush.bf16.msra.mxu0 %v10570
    %10643 = vmatpush.bf16.msra.mxu0 %v10566
    %10644 = vmatpush.bf16.msra.mxu0 %v10562
    %10645 = vmatpush.bf16.msra.mxu0 %v10558
    %10646 = vmatmul.bf16.gmra.mxu0 %v10623
    %v10647 = vpop.f32.mrf.mxu0
    %v10648 = vadd.f32 %v10635, %v10647
    %v10649 = vpop.f32.mrf.mxu0
    %10650 = vdwg.mxu0
    %10651 = vmatpush.bf16.msra.mxu0 %v10555
    %10652 = vmatpush.bf16.msra.mxu0 %v10551
    %10653 = vmatpush.bf16.msra.mxu0 %v10547
    %10654 = vmatpush.bf16.msra.mxu0 %v10543
    %10655 = vmatpush.bf16.msra.mxu0 %v10539
    %10656 = vmatpush.bf16.msra.mxu0 %v10535
    %10657 = vmatpush.bf16.msra.mxu0 %v10531
    %10658 = vmatpush.bf16.msra.mxu0 %v10527
    %10659 = vmatmul.bf16.gmra.mxu0 %v10331
    %v10660 = vpop.f32.mrf.mxu0
    %v10661 = vadd.f32 0.0, %v10660
    %v10662 = vpop.f32.mrf.mxu0
    %10663 = vdwg.mxu0
    %10664 = vmatpush.bf16.msra.mxu0 0
    %10665 = vmatpush.bf16.msra.mxu0 0
    %10666 = vmatpush.bf16.msra.mxu0 0
    %10667 = vmatpush.bf16.msra.mxu0 0
    %10668 = vmatpush.bf16.msra.mxu0 %v10571
    %10669 = vmatpush.bf16.msra.mxu0 %v10567
    %10670 = vmatpush.bf16.msra.mxu0 %v10563
    %10671 = vmatpush.bf16.msra.mxu0 %v10559
    %10672 = vmatmul.bf16.gmra.mxu0 %v10623
    %v10673 = vpop.f32.mrf.mxu0
    %v10674 = vadd.f32 %v10661, %v10673
    %v10675 = vpop.f32.mrf.mxu0
    %10676 = vdwg.mxu0
    %10677 = vmatpush.bf16.msra.mxu0 %v10556
    %10678 = vmatpush.bf16.msra.mxu0 %v10552
    %10679 = vmatpush.bf16.msra.mxu0 %v10548
    %10680 = vmatpush.bf16.msra.mxu0 %v10544
    %10681 = vmatpush.bf16.msra.mxu0 %v10540
    %10682 = vmatpush.bf16.msra.mxu0 %v10536
    %10683 = vmatpush.bf16.msra.mxu0 %v10532
    %10684 = vmatpush.bf16.msra.mxu0 %v10528
    %10685 = vmatmul.bf16.gmra.mxu0 %v10331
    %v10686 = vpop.f32.mrf.mxu0
    %v10687 = vadd.f32 0.0, %v10686
    %v10688 = vpop.f32.mrf.mxu0
    %10689 = vdwg.mxu0
    %10690 = vmatpush.bf16.msra.mxu0 0
    %10691 = vmatpush.bf16.msra.mxu0 0
    %10692 = vmatpush.bf16.msra.mxu0 0
    %10693 = vmatpush.bf16.msra.mxu0 0
    %10694 = vmatpush.bf16.msra.mxu0 %v10572
    %10695 = vmatpush.bf16.msra.mxu0 %v10568
    %10696 = vmatpush.bf16.msra.mxu0 %v10564
    %10697 = vmatpush.bf16.msra.mxu0 %v10560
    %10698 = vmatmul.bf16.gmra.mxu0 %v10623
    %v10699 = vpop.f32.mrf.mxu0
    %v10700 = vadd.f32 %v10687, %v10699
    %v10701 = vpop.f32.mrf.mxu0
    %10702 = vdwg.mxu0
    %10703 = vmatpush.bf16.msra.mxu0 %v10557
    %10704 = vmatpush.bf16.msra.mxu0 %v10553
    %10705 = vmatpush.bf16.msra.mxu0 %v10549
    %10706 = vmatpush.bf16.msra.mxu0 %v10545
    %10707 = vmatpush.bf16.msra.mxu0 %v10541
    %10708 = vmatpush.bf16.msra.mxu0 %v10537
    %10709 = vmatpush.bf16.msra.mxu0 %v10533
    %10710 = vmatpush.bf16.msra.mxu0 %v10529
    %10711 = vmatmul.bf16.gmra.mxu0 %v10331
    %v10712 = vpop.f32.mrf.mxu0
    %v10713 = vadd.f32 0.0, %v10712
    %v10714 = vpop.f32.mrf.mxu0
    %10715 = vdwg.mxu0
    %10716 = vmatpush.bf16.msra.mxu0 0
    %10717 = vmatpush.bf16.msra.mxu0 0
    %10718 = vmatpush.bf16.msra.mxu0 0
    %10719 = vmatpush.bf16.msra.mxu0 0
    %10720 = vmatpush.bf16.msra.mxu0 %v10573
    %10721 = vmatpush.bf16.msra.mxu0 %v10569
    %10722 = vmatpush.bf16.msra.mxu0 %v10565
    %10723 = vmatpush.bf16.msra.mxu0 %v10561
    %10724 = vmatmul.bf16.gmra.mxu0 %v10623
    %v10725 = vpop.f32.mrf.mxu0
    %v10726 = vadd.f32 %v10713, %v10725
    %v10727 = vpop.f32.mrf.mxu0
    %10728 = vdwg.mxu0
    %v10729 = vadd.f32 %v10325, %v10648
    %v10730 = vadd.f32 %v10326, %v10674
    %v10731 = vadd.f32 %v10327, %v10700
    %v10732 = vadd.f32 %v10328, %v10726
    %v10733 = vld [vmem:[#allocation7] sm:$0xf]
    %v10735 = vperm.slane %v10733, 0
    %v10736 = vperm.slane %v10733, 1
    %v10737 = vperm.slane %v10733, 2
    %v10738 = vperm.slane %v10733, 3
    %v10743 = vadd.f32 %v10729, %v10735
    %v10744 = vadd.f32 %v10730, %v10736
    %v10745 = vadd.f32 %v10731, %v10737
    %v10746 = vadd.f32 %v10732, %v10738
    %v10747 = vmax.f32 %v10743, %v10745
    %v10748 = vmax.f32 %v10744, %v10746
    %v10749 = vpack.c.bf16 %v10748, %v10747
    %10750 = vst [vmem:[%s5] sm:$0xff] %v10749
    // Predicated region
    $region38: #{_lambda_.2} parent=1 // pred_check
      _
    $region39: #{_lambda_.2} parent=1 // pred_check_branch
      %10752 = sbr.rel (0) target = $region41
    $region40: #{_lambda_.2} parent=1 // pred_region
      _
    $region41: #{_lambda_.2} parent=1 // pred_fallthru
      _
    // Predicated region
    $region42: #{_lambda_.2} parent=1 // pred_check
      _
    $region43: #{_lambda_.2} parent=1 // pred_check_branch
      %10754 = sbr.rel (0) target = $region45
    $region44: #{_lambda_.2} parent=1 // pred_region
      _
    $region45: #{_lambda_.2} parent=1 // pred_fallthru
      _
    %10755 = vsyncpa [#allocation3], 1
    %10756 = vsyncpa [#allocation5], 1
    %10757 = vsyncpa [#allocation8], 1

</llo_original>
